<compile_context>
chip_gen: v5e
topology: v5e:2x2
jax: 0.10.0
libtpu: 0.0.40
codegen_flags: <defaults>
</compile_context>

<pallas_src>
import functools  # noqa: F401  (kept for parity with typical kernel wrappers)

import jax
import jax.numpy as jnp
from jax import lax
from jax.experimental import pallas as pl
from jax.experimental.pallas import tpu as pltpu

# ----------------------------- model dims -----------------------------------
D_MODEL = 128          # unet.config.cross_attention_dim (small synthetic value)
CLIP_DIM = 768         # RetrievalFusion(clip_dim=768, ...)
ID_DIM = 512           # RetrievalFusion(id_dim=512, ...)
HIDDEN_DIM = 1024      # RetrievalFusion(hidden_dim=1024)
NUM_ID_TOKENS = 4      # tokens produced by id_proj_high / id_proj_low


def _vmem():
    return pl.BlockSpec(memory_space=pltpu.MemorySpace.VMEM)


def _l2n(x):
    # F.normalize(x, dim=-1): x / max(||x||, 1e-12) == x * rsqrt(max(||x||^2, 1e-24))
    x = x.astype(jnp.float32)
    ss = jnp.sum(x * x, axis=-1, keepdims=True)
    return x * lax.rsqrt(jnp.maximum(ss, 1e-24))


# ============================ kernel 1: token path ============================
def _tokens_kernel(
    highf_ref, lowf_ref, clip_ref, idf_ref,              # data
    wph_ref, bph_ref, wpl_ref, bpl_ref,                  # id projections (NT,512,128)/(NT,128)
    wc1_ref, bc1_ref, wc2_ref, bc2_ref,                  # fusion clip MLP
    wi1_ref, bi1_ref, wi2_ref, bi2_ref,                  # fusion id MLP
    wt_ref, bt_ref,                                      # transformer q/k/v/o packed (4,128,128)/(4,128)
    wr_ref, br_ref,                                      # retrieval projection
    ret_out_ref, high_out_ref, low_out_ref,              # outputs, each (B, NT, 128)
):
    f32 = jnp.float32
    bf16 = jnp.bfloat16
    batch = highf_ref.shape[0]
    num_ret = clip_ref.shape[0] // batch
    nt = wph_ref.shape[0]
    d = wr_ref.shape[0]

    high = highf_ref[...].astype(bf16)       # (B, 512)
    low = lowf_ref[...].astype(bf16)         # (B, 512)

    # ---- id projections, one weight slice per token (avoids in-kernel lane->sublane reshape)
    high_toks, low_toks = [], []
    for t in range(nt):
        ht = jnp.dot(high, wph_ref[t], preferred_element_type=f32) + bph_ref[t:t + 1, :]
        lt = jnp.dot(low, wpl_ref[t], preferred_element_type=f32) + bpl_ref[t:t + 1, :]
        high_toks.append(_l2n(ht))           # (B, 128)
        low_toks.append(_l2n(lt))            # (B, 128)

    # ---- RetrievalFusion MLPs on flattened (B*K) rows
    # TODO(synk): PyTorch nn.GELU defaults to exact erf; tanh approximation used here.
    clip = clip_ref[...].astype(bf16)        # (B*K, 768)
    idf = idf_ref[...].astype(bf16)          # (B*K, 512)
    hc = jnp.dot(clip, wc1_ref[...], preferred_element_type=f32) + bc1_ref[...]
    hc = jax.nn.gelu(hc, approximate=True)
    clip_tok = jnp.dot(hc.astype(bf16), wc2_ref[...], preferred_element_type=f32) + bc2_ref[...]
    hi = jnp.dot(idf, wi1_ref[...], preferred_element_type=f32) + bi1_ref[...]
    hi = jax.nn.gelu(hi, approximate=True)
    id_tok = jnp.dot(hi.astype(bf16), wi2_ref[...], preferred_element_type=f32) + bi2_ref[...]

    # ---- aggregator transformer weights (hoisted once)
    wq, wk, wv, wo = wt_ref[0], wt_ref[1], wt_ref[2], wt_ref[3]
    bq, bk, bv, bo = (bt_ref[0:1, :], bt_ref[1:2, :], bt_ref[2:3, :], bt_ref[3:4, :])
    wr = wr_ref[...]
    br = br_ref[...]

    # K/V projections over all retrieval tokens at once (row-wise, batch-agnostic)
    kv = jnp.concatenate([clip_tok, id_tok], axis=0)              # (2*B*K, 128): clip rows then id rows
    kv16 = kv.astype(bf16)
    k_all = jnp.dot(kv16, wk, preferred_element_type=f32) + bk
    v_all = jnp.dot(kv16, wv, preferred_element_type=f32) + bv

    scale = 1.0 / (d ** 0.5)
    for b in range(batch):                                        # B is tiny & static -> unrolled
        high_b = jnp.concatenate([high_toks[t][b:b + 1, :] for t in range(nt)], axis=0)
        low_b = jnp.concatenate([low_toks[t][b:b + 1, :] for t in range(nt)], axis=0)
        high_out_ref[b] = high_b
        low_out_ref[b] = low_b

        q_b = jnp.dot(low_b.astype(bf16), wq, preferred_element_type=f32) + bq     # (NT, 128)
        k_b = jnp.concatenate(
            [k_all[b * num_ret:(b + 1) * num_ret, :],
             k_all[batch * num_ret + b * num_ret: batch * num_ret + (b + 1) * num_ret, :]],
            axis=0)                                                                  # (2K, 128)
        v_b = jnp.concatenate(
            [v_all[b * num_ret:(b + 1) * num_ret, :],
             v_all[batch * num_ret + b * num_ret: batch * num_ret + (b + 1) * num_ret, :]],
            axis=0)

        s = lax.dot_general(q_b.astype(bf16), k_b.astype(bf16),
                            (((1,), (1,)), ((), ())),
                            preferred_element_type=f32) * scale                     # (NT, 2K)
        m = jnp.max(s, axis=-1, keepdims=True)
        p = jnp.exp(s - m)
        l = jnp.sum(p, axis=-1, keepdims=True)
        p = p * pl.reciprocal(l, approx=True)
        attn = jnp.dot(p.astype(bf16), v_b.astype(bf16), preferred_element_type=f32)  # (NT, 128)
        out_b = jnp.dot(attn.astype(bf16), wo, preferred_element_type=f32) + bo
        agg_b = low_b + out_b                                                        # residual
        # TODO(synk): train-time random retrieval-token dropout (p_drop_ret=0.05) not
        # implemented; this is the eval-mode forward.
        ret_b = jnp.dot(agg_b.astype(bf16), wr, preferred_element_type=f32) + br
        ret_out_ref[b] = _l2n(ret_b)


# ============================ kernel 2: UNet surrogate ========================
def _unet_kernel(lat_ref, temb_ref, text_ref, ret_ref, low_ref,
                 w_in_ref, b_in_ref, w_t_ref, b_t_ref,
                 w_k_ref, b_k_ref, w_v_ref, b_v_ref,
                 w_out_ref, b_out_ref, out_ref):
    # TODO(synk): real diffusers UNet2DConditionModel + IP-Adapter attention
    # processors are not translatable; this is a minimal single cross-attention
    # block with the same (sample, timestep, encoder_hidden_states) interface.
    f32 = jnp.float32
    bf16 = jnp.bfloat16
    d = w_k_ref.shape[0]

    lat = lat_ref[0]                                               # (C, HW) f32 (lane-dense, HW on lanes)

    # input projection, feature-major x[d, hw] = (D x C) @ (C x HW)
    x = jnp.dot(w_in_ref[...], lat.astype(bf16), preferred_element_type=f32)   # (D, HW)
    x = x + b_in_ref[...]                                          # (D,1) column bias

    # timestep-embedding projection as a VPU broadcast-reduce (no N=1 matmul needed)
    temb_row = temb_ref[0]                                         # (1, D) f32
    temb_col = jnp.sum(w_t_ref[...] * temb_row, axis=1, keepdims=True) + b_t_ref[...]   # (D, 1)
    x = x + temb_col

    # combined encoder context assembled in VMEM: [text, retrieval, low-id]
    ctx = jnp.concatenate([text_ref[0], ret_ref[0], low_ref[0]], axis=0)       # (T_ctx, D) f32
    ctx16 = ctx.astype(bf16)
    k_ctx = jnp.dot(ctx16, w_k_ref[...], preferred_element_type=f32) + b_k_ref[...]     # (T_ctx, D)
    v_ctx = jnp.dot(ctx16, w_v_ref[...], preferred_element_type=f32) + b_v_ref[...]

    # cross-attention: queries = HW tokens (columns of x), softmax over context tokens
    scale = 1.0 / (d ** 0.5)
    s = jnp.dot(k_ctx.astype(bf16), x.astype(bf16), preferred_element_type=f32) * scale  # (T_ctx, HW)
    m = jnp.max(s, axis=0, keepdims=True)
    p = jnp.exp(s - m)
    l = jnp.sum(p, axis=0, keepdims=True)
    p = p * pl.reciprocal(l, approx=True)
    attn = lax.dot_general(v_ctx.astype(bf16), p.astype(bf16),
                           dimension_numbers=(((0,), (0,)), ((), ())),
                           preferred_element_type=f32)             # (D, HW)
    x = x + attn

    # output projection back to channels, still lane-dense (C, HW), + residual
    out = jnp.dot(w_out_ref[...], x.astype(bf16), preferred_element_type=f32) + b_out_ref[...]
    out_ref[0] = lat + out


# ----------------------------- glue / wrappers --------------------------------
def timestep_embedding(t, dim):
    half = dim // 2
    freqs = jnp.exp(-jnp.log(10000.0) * jnp.arange(half, dtype=jnp.float32) / half)
    args = t.astype(jnp.float32)[:, None] * freqs[None, :]
    return jnp.concatenate([jnp.sin(args), jnp.cos(args)], axis=-1)


def ip_retrieval_forward(params, noisy_latents, timesteps, encoder_hidden_states,
                         low_id_features, high_id_features,
                         retrieval_clip_features, retrieval_id_features):
    b, c, h, w = noisy_latents.shape
    k_ret = retrieval_clip_features.shape[1]
    t_text = encoder_hidden_states.shape[1]
    hw = h * w

    ph = params["id_proj_high"]
    plo = params["id_proj_low"]
    fu = params["fusion"]
    tr = params["transformer"]
    rp = params["retrieval_proj"]
    up = params["unet"]

    # ---- kernel 1: everything up to (retrieval, high-id, low-id) tokens, fully fused
    ret_tok, high_tok, low_tok = pl.pallas_call(
        _tokens_kernel,
        out_shape=(
            jax.ShapeDtypeStruct((b, NUM_ID_TOKENS, D_MODEL), jnp.float32),
            jax.ShapeDtypeStruct((b, NUM_ID_TOKENS, D_MODEL), jnp.float32),
            jax.ShapeDtypeStruct((b, NUM_ID_TOKENS, D_MODEL), jnp.float32),
        ),
        in_specs=[_vmem() for _ in range(20)],
        out_specs=(_vmem(), _vmem(), _vmem()),
        compiler_params=pltpu.CompilerParams(vmem_limit_bytes=32 * 1024 * 1024),
    )(
        high_id_features, low_id_features,
        retrieval_clip_features.reshape(b * k_ret, CLIP_DIM),
        retrieval_id_features.reshape(b * k_ret, ID_DIM),
        ph["w"], ph["b"], plo["w"], plo["b"],
        fu["wc1"], fu["bc1"], fu["wc2"], fu["bc2"],
        fu["wi1"], fu["bi1"], fu["wi2"], fu["bi2"],
        tr["w"], tr["b"],
        rp["w"], rp["b"],
    )

    # ---- kernel 2: fused surrogate UNet, gridded over batch (megacore-parallel on v7x)
    lat = noisy_latents.reshape(b, c, hw)                 # free reshape, NCHW stays channel-major
    temb = timestep_embedding(timesteps, D_MODEL)[:, None, :]   # (B, 1, D)

    grid_spec = pltpu.PrefetchScalarGridSpec(
        num_scalar_prefetch=0,
        grid=(b,),
        in_specs=[
            pl.BlockSpec((1, c, hw), lambda i: (i, 0, 0)),                  # latents
            pl.BlockSpec((1, 1, D_MODEL), lambda i: (i, 0, 0)),             # timestep emb
            pl.BlockSpec((1, t_text, D_MODEL), lambda i: (i, 0, 0)),        # text tokens
            pl.BlockSpec((1, NUM_ID_TOKENS, D_MODEL), lambda i: (i, 0, 0)), # retrieval tokens
            pl.BlockSpec((1, NUM_ID_TOKENS, D_MODEL), lambda i: (i, 0, 0)), # low-id tokens
            pl.BlockSpec((D_MODEL, c), lambda i: (0, 0)),                   # w_in (D,C)
            pl.BlockSpec((D_MODEL, 1), lambda i: (0, 0)),                   # b_in (D,1)
            pl.BlockSpec((D_MODEL, D_MODEL), lambda i: (0, 0)),             # w_t^T
            pl.BlockSpec((D_MODEL, 1), lambda i: (0, 0)),                   # b_t (D,1)
            pl.BlockSpec((D_MODEL, D_MODEL), lambda i: (0, 0)),             # w_k
            pl.BlockSpec((1, D_MODEL), lambda i: (0, 0)),                   # b_k
            pl.BlockSpec((D_MODEL, D_MODEL), lambda i: (0, 0)),             # w_v
            pl.BlockSpec((1, D_MODEL), lambda i: (0, 0)),                   # b_v
            pl.BlockSpec((c, D_MODEL), lambda i: (0, 0)),                   # w_out (C,D)
            pl.BlockSpec((c, 1), lambda i: (0, 0)),                         # b_out (C,1)
        ],
        out_specs=pl.BlockSpec((1, c, hw), lambda i: (i, 0, 0)),
    )
    noise = pl.pallas_call(
        _unet_kernel,
        out_shape=jax.ShapeDtypeStruct((b, c, hw), jnp.float32),
        grid_spec=grid_spec,
        compiler_params=pltpu.CompilerParams(
            dimension_semantics=("parallel",),
            vmem_limit_bytes=32 * 1024 * 1024),
    )(lat, temb, encoder_hidden_states, ret_tok, low_tok,
      up["w_in_t"], up["b_in"], up["w_t_t"], up["b_t"],
      up["w_k"], up["b_k"], up["w_v"], up["b_v"],
      up["w_out_t"], up["b_out"])

    noise_pred = noise.reshape(b, c, h, w)
    return noise_pred, ret_tok, high_tok, low_tok


# ----------------------------- parameter init --------------------------------
def init_params(key, latent_channels):
    ks = jax.random.split(key, 16)

    def wgt(i, shape):
        # bf16 weight storage: native MXU dtype on v5e/v6e/v7x, half the DMA bytes
        return (jax.random.normal(ks[i], shape, jnp.float32) * 0.02).astype(jnp.bfloat16)

    def zb(shape):
        return jnp.zeros(shape, jnp.float32)

    return {
        "id_proj_high": {"w": wgt(0, (NUM_ID_TOKENS, ID_DIM, D_MODEL)),
                         "b": zb((NUM_ID_TOKENS, D_MODEL))},
        "id_proj_low": {"w": wgt(1, (NUM_ID_TOKENS, ID_DIM, D_MODEL)),
                        "b": zb((NUM_ID_TOKENS, D_MODEL))},
        "fusion": {
            "wc1": wgt(2, (CLIP_DIM, HIDDEN_DIM)), "bc1": zb((1, HIDDEN_DIM)),
            "wc2": wgt(3, (HIDDEN_DIM, D_MODEL)), "bc2": zb((1, D_MODEL)),
            "wi1": wgt(4, (ID_DIM, HIDDEN_DIM)), "bi1": zb((1, HIDDEN_DIM)),
            "wi2": wgt(5, (HIDDEN_DIM, D_MODEL)), "bi2": zb((1, D_MODEL)),
        },
        # packed q,k,v,o
        "transformer": {"w": wgt(6, (4, D_MODEL, D_MODEL)), "b": zb((4, D_MODEL))},
        "retrieval_proj": {"w": wgt(7, (D_MODEL, D_MODEL)), "b": zb((1, D_MODEL))},
        "unet": {
            "w_in_t": wgt(8, (D_MODEL, latent_channels)), "b_in": zb((D_MODEL, 1)),
            "w_t_t": wgt(9, (D_MODEL, D_MODEL)), "b_t": zb((D_MODEL, 1)),
            "w_k": wgt(10, (D_MODEL, D_MODEL)), "b_k": zb((1, D_MODEL)),
            "w_v": wgt(11, (D_MODEL, D_MODEL)), "b_v": zb((1, D_MODEL)),
            "w_out_t": wgt(12, (latent_channels, D_MODEL)), "b_out": zb((latent_channels, 1)),
        },
    }


# ----------------------------- main -------------------------------------------
if __name__ == "__main__":
    B, C, H, W = 2, 4, 16, 16      # noisy latents (NCHW)
    T_TEXT = 8                     # text tokens
    K_RET = 8                      # retrieved items

    key = jax.random.PRNGKey(0)
    k_par, k1, k2, k3, k4, k5, k6 = jax.random.split(key, 7)

    params = init_params(k_par, C)

    noisy_latents = jax.random.normal(k1, (B, C, H, W), jnp.float32)
    timesteps = jnp.array([10, 500], dtype=jnp.int32)
    encoder_hidden_states = jax.random.normal(k2, (B, T_TEXT, D_MODEL), jnp.float32)
    low_id_features = jax.random.normal(k3, (B, ID_DIM), jnp.float32)
    high_id_features = jax.random.normal(k4, (B, ID_DIM), jnp.float32)
    retrieval_clip_features = jax.random.normal(k5, (B, K_RET, CLIP_DIM), jnp.float32)
    retrieval_id_features = jax.random.normal(k6, (B, K_RET, ID_DIM), jnp.float32)

    fwd = jax.jit(ip_retrieval_forward)
    outs = fwd(params, noisy_latents, timesteps, encoder_hidden_states,
               low_id_features, high_id_features,
               retrieval_clip_features, retrieval_id_features)
    jax.block_until_ready(outs)
    noise_pred, retrieval_tokens, high_id_tokens, low_id_tokens = outs

    assert noise_pred.shape == (B, C, H, W)
    assert retrieval_tokens.shape == (B, NUM_ID_TOKENS, D_MODEL)
    assert high_id_tokens.shape == (B, NUM_ID_TOKENS, D_MODEL)
    assert low_id_tokens.shape == (B, NUM_ID_TOKENS, D_MODEL)
    assert bool(jnp.all(jnp.isfinite(noise_pred)))
    assert bool(jnp.all(jnp.isfinite(retrieval_tokens)))
    print("KERNEL_OK")
</pallas_src>

<mosaic_0001>
module attributes {stable_mosaic.version = 11 : i64} {
  func.func @_unet_kernel(%arg0: i32, %arg1: memref<1x4x256xf32, #tpu.memory_space<vmem>>, %arg2: memref<1x1x128xf32, #tpu.memory_space<vmem>>, %arg3: memref<1x8x128xf32, #tpu.memory_space<vmem>>, %arg4: memref<1x4x128xf32, #tpu.memory_space<vmem>>, %arg5: memref<1x4x128xf32, #tpu.memory_space<vmem>>, %arg6: memref<128x4xbf16, #tpu.memory_space<vmem>>, %arg7: memref<128x1xf32, #tpu.memory_space<vmem>>, %arg8: memref<128x128xbf16, #tpu.memory_space<vmem>>, %arg9: memref<128x1xf32, #tpu.memory_space<vmem>>, %arg10: memref<128x128xbf16, #tpu.memory_space<vmem>>, %arg11: memref<1x128xf32, #tpu.memory_space<vmem>>, %arg12: memref<128x128xbf16, #tpu.memory_space<vmem>>, %arg13: memref<1x128xf32, #tpu.memory_space<vmem>>, %arg14: memref<4x128xbf16, #tpu.memory_space<vmem>>, %arg15: memref<4x1xf32, #tpu.memory_space<vmem>>, %arg16: memref<1x4x256xf32, #tpu.memory_space<vmem>>) attributes {dimension_semantics = [#tpu.dimension_semantics<parallel>], iteration_bounds = array<i64: 2>, scalar_prefetch = 0 : i64, scratch_operands = 0 : i64, tpu.core_type = #tpu.core_type<tc>, window_params = [{transform_indices = @transform_0, window_bounds = array<i64: 1, 4, 256>}, {transform_indices = @transform_1, window_bounds = array<i64: 1, 1, 128>}, {transform_indices = @transform_2, window_bounds = array<i64: 1, 8, 128>}, {transform_indices = @transform_3, window_bounds = array<i64: 1, 4, 128>}, {transform_indices = @transform_4, window_bounds = array<i64: 1, 4, 128>}, {pipeline_mode = #tpu.pipeline_mode<synchronous>, transform_indices = @transform_5, window_bounds = array<i64: 128, 4>}, {pipeline_mode = #tpu.pipeline_mode<synchronous>, transform_indices = @transform_6, window_bounds = array<i64: 128, 1>}, {pipeline_mode = #tpu.pipeline_mode<synchronous>, transform_indices = @transform_7, window_bounds = array<i64: 128, 128>}, {pipeline_mode = #tpu.pipeline_mode<synchronous>, transform_indices = @transform_8, window_bounds = array<i64: 128, 1>}, {pipeline_mode = #tpu.pipeline_mode<synchronous>, transform_indices = @transform_9, window_bounds = array<i64: 128, 128>}, {pipeline_mode = #tpu.pipeline_mode<synchronous>, transform_indices = @transform_10, window_bounds = array<i64: 1, 128>}, {pipeline_mode = #tpu.pipeline_mode<synchronous>, transform_indices = @transform_11, window_bounds = array<i64: 128, 128>}, {pipeline_mode = #tpu.pipeline_mode<synchronous>, transform_indices = @transform_12, window_bounds = array<i64: 1, 128>}, {pipeline_mode = #tpu.pipeline_mode<synchronous>, transform_indices = @transform_13, window_bounds = array<i64: 4, 128>}, {pipeline_mode = #tpu.pipeline_mode<synchronous>, transform_indices = @transform_14, window_bounds = array<i64: 4, 1>}, {transform_indices = @transform_15, window_bounds = array<i64: 1, 4, 256>}]} {
    %c0 = arith.constant 0 : index
    %c0_0 = arith.constant 0 : index
    %c0_1 = arith.constant 0 : index
    %0 = vector.load %arg1[%c0, %c0_0, %c0_1] : memref<1x4x256xf32, #tpu.memory_space<vmem>>, vector<1x4x256xf32>
    %1 = vector.shape_cast %0 : vector<1x4x256xf32> to vector<4x256xf32>
    %c0_2 = arith.constant 0 : index
    %c0_3 = arith.constant 0 : index
    %2 = vector.load %arg6[%c0_2, %c0_3] : memref<128x4xbf16, #tpu.memory_space<vmem>>, vector<128x4xbf16>
    %3 = arith.truncf %1 : vector<4x256xf32> to vector<4x256xbf16>
    %cst = arith.constant dense<0.000000e+00> : vector<128x256xf32>
    %4 = tpu.matmul %2, %3, %cst {dimension_numbers = #tpu.dot_dimension_numbers<[1], [0], [0], [1], [0, 0, 1, 1], [], []>} : vector<128x4xbf16>, vector<4x256xbf16>, vector<128x256xf32> -> vector<128x256xf32>
    %c0_4 = arith.constant 0 : index
    %c0_5 = arith.constant 0 : index
    %5 = vector.load %arg7[%c0_4, %c0_5] : memref<128x1xf32, #tpu.memory_space<vmem>>, vector<128x1xf32>
    %6 = vector.broadcast %5 : vector<128x1xf32> to vector<128x256xf32>
    %7 = arith.addf %4, %6 : vector<128x256xf32>
    %c0_6 = arith.constant 0 : index
    %c0_7 = arith.constant 0 : index
    %c0_8 = arith.constant 0 : index
    %8 = vector.load %arg2[%c0_6, %c0_7, %c0_8] : memref<1x1x128xf32, #tpu.memory_space<vmem>>, vector<1x1x128xf32>
    %9 = vector.shape_cast %8 : vector<1x1x128xf32> to vector<1x128xf32>
    %c0_9 = arith.constant 0 : index
    %c0_10 = arith.constant 0 : index
    %10 = vector.load %arg8[%c0_9, %c0_10] : memref<128x128xbf16, #tpu.memory_space<vmem>>, vector<128x128xbf16>
    %11 = arith.extf %10 : vector<128x128xbf16> to vector<128x128xf32>
    %12 = vector.broadcast %9 : vector<1x128xf32> to vector<128x128xf32>
    %13 = arith.mulf %11, %12 : vector<128x128xf32>
    %cst_11 = arith.constant dense<0.000000e+00> : vector<128xf32>
    %14 = vector.multi_reduction <add>, %13, %cst_11 [1] : vector<128x128xf32> to vector<128xf32>
    %15 = vector.shape_cast %14 : vector<128xf32> to vector<128x1xf32>
    %c0_12 = arith.constant 0 : index
    %c0_13 = arith.constant 0 : index
    %16 = vector.load %arg9[%c0_12, %c0_13] : memref<128x1xf32, #tpu.memory_space<vmem>>, vector<128x1xf32>
    %17 = arith.addf %15, %16 : vector<128x1xf32>
    %18 = vector.broadcast %17 : vector<128x1xf32> to vector<128x256xf32>
    %19 = arith.addf %7, %18 : vector<128x256xf32>
    %c0_14 = arith.constant 0 : index
    %c0_15 = arith.constant 0 : index
    %c0_16 = arith.constant 0 : index
    %20 = vector.load %arg3[%c0_14, %c0_15, %c0_16] : memref<1x8x128xf32, #tpu.memory_space<vmem>>, vector<1x8x128xf32>
    %21 = vector.shape_cast %20 : vector<1x8x128xf32> to vector<8x128xf32>
    %c0_17 = arith.constant 0 : index
    %c0_18 = arith.constant 0 : index
    %c0_19 = arith.constant 0 : index
    %22 = vector.load %arg4[%c0_17, %c0_18, %c0_19] : memref<1x4x128xf32, #tpu.memory_space<vmem>>, vector<1x4x128xf32>
    %23 = vector.shape_cast %22 : vector<1x4x128xf32> to vector<4x128xf32>
    %c0_20 = arith.constant 0 : index
    %c0_21 = arith.constant 0 : index
    %c0_22 = arith.constant 0 : index
    %24 = vector.load %arg5[%c0_20, %c0_21, %c0_22] : memref<1x4x128xf32, #tpu.memory_space<vmem>>, vector<1x4x128xf32>
    %25 = vector.shape_cast %24 : vector<1x4x128xf32> to vector<4x128xf32>
    %26 = tpu.concatenate %21, %23, %25 in 0 : vector<8x128xf32>, vector<4x128xf32>, vector<4x128xf32> -> vector<16x128xf32>
    %27 = arith.truncf %26 : vector<16x128xf32> to vector<16x128xbf16>
    %c0_23 = arith.constant 0 : index
    %c0_24 = arith.constant 0 : index
    %28 = vector.load %arg10[%c0_23, %c0_24] : memref<128x128xbf16, #tpu.memory_space<vmem>>, vector<128x128xbf16>
    %cst_25 = arith.constant dense<0.000000e+00> : vector<16x128xf32>
    %29 = tpu.matmul %27, %28, %cst_25 {dimension_numbers = #tpu.dot_dimension_numbers<[1], [0], [0], [1], [0, 0, 1, 1], [], []>} : vector<16x128xbf16>, vector<128x128xbf16>, vector<16x128xf32> -> vector<16x128xf32>
    %c0_26 = arith.constant 0 : index
    %c0_27 = arith.constant 0 : index
    %30 = vector.load %arg11[%c0_26, %c0_27] : memref<1x128xf32, #tpu.memory_space<vmem>>, vector<1x128xf32>
    %31 = vector.broadcast %30 : vector<1x128xf32> to vector<16x128xf32>
    %32 = arith.addf %29, %31 : vector<16x128xf32>
    %c0_28 = arith.constant 0 : index
    %c0_29 = arith.constant 0 : index
    %33 = vector.load %arg12[%c0_28, %c0_29] : memref<128x128xbf16, #tpu.memory_space<vmem>>, vector<128x128xbf16>
    %cst_30 = arith.constant dense<0.000000e+00> : vector<16x128xf32>
    %34 = tpu.matmul %27, %33, %cst_30 {dimension_numbers = #tpu.dot_dimension_numbers<[1], [0], [0], [1], [0, 0, 1, 1], [], []>} : vector<16x128xbf16>, vector<128x128xbf16>, vector<16x128xf32> -> vector<16x128xf32>
    %c0_31 = arith.constant 0 : index
    %c0_32 = arith.constant 0 : index
    %35 = vector.load %arg13[%c0_31, %c0_32] : memref<1x128xf32, #tpu.memory_space<vmem>>, vector<1x128xf32>
    %36 = vector.broadcast %35 : vector<1x128xf32> to vector<16x128xf32>
    %37 = arith.addf %34, %36 : vector<16x128xf32>
    %38 = arith.truncf %32 : vector<16x128xf32> to vector<16x128xbf16>
    %39 = arith.truncf %19 : vector<128x256xf32> to vector<128x256xbf16>
    %cst_33 = arith.constant dense<0.000000e+00> : vector<16x256xf32>
    %40 = tpu.matmul %38, %39, %cst_33 {dimension_numbers = #tpu.dot_dimension_numbers<[1], [0], [0], [1], [0, 0, 1, 1], [], []>} : vector<16x128xbf16>, vector<128x256xbf16>, vector<16x256xf32> -> vector<16x256xf32>
    %cst_34 = arith.constant 0.0883883461 : f32
    %41 = vector.broadcast %cst_34 : f32 to vector<16x256xf32>
    %42 = arith.mulf %40, %41 : vector<16x256xf32>
    %cst_35 = arith.constant dense<0xFF800000> : vector<256xf32>
    %43 = vector.multi_reduction <maximumf>, %42, %cst_35 [0] : vector<16x256xf32> to vector<256xf32>
    %44 = vector.shape_cast %43 : vector<256xf32> to vector<1x256xf32>
    %45 = vector.broadcast %44 : vector<1x256xf32> to vector<16x256xf32>
    %46 = arith.subf %42, %45 : vector<16x256xf32>
    %47 = math.exp %46 : vector<16x256xf32>
    %cst_36 = arith.constant dense<0.000000e+00> : vector<256xf32>
    %48 = vector.multi_reduction <add>, %47, %cst_36 [0] : vector<16x256xf32> to vector<256xf32>
    %49 = vector.shape_cast %48 : vector<256xf32> to vector<1x256xf32>
    %50 = tpu.reciprocal %49 {approx = true} : vector<1x256xf32> -> vector<1x256xf32>
    %51 = vector.broadcast %50 : vector<1x256xf32> to vector<16x256xf32>
    %52 = arith.mulf %47, %51 : vector<16x256xf32>
    %53 = arith.truncf %37 : vector<16x128xf32> to vector<16x128xbf16>
    %54 = arith.truncf %52 : vector<16x256xf32> to vector<16x256xbf16>
    %cst_37 = arith.constant dense<0.000000e+00> : vector<128x256xf32>
    %55 = tpu.matmul %53, %54, %cst_37 {dimension_numbers = #tpu.dot_dimension_numbers<[0], [0], [1], [1], [0, 1, 1, 1], [], []>} : vector<16x128xbf16>, vector<16x256xbf16>, vector<128x256xf32> -> vector<128x256xf32>
    %56 = arith.addf %19, %55 : vector<128x256xf32>
    %c0_38 = arith.constant 0 : index
    %c0_39 = arith.constant 0 : index
    %57 = vector.load %arg14[%c0_38, %c0_39] : memref<4x128xbf16, #tpu.memory_space<vmem>>, vector<4x128xbf16>
    %58 = arith.truncf %56 : vector<128x256xf32> to vector<128x256xbf16>
    %cst_40 = arith.constant dense<0.000000e+00> : vector<4x256xf32>
    %59 = tpu.matmul %57, %58, %cst_40 {dimension_numbers = #tpu.dot_dimension_numbers<[1], [0], [0], [1], [0, 0, 1, 1], [], []>} : vector<4x128xbf16>, vector<128x256xbf16>, vector<4x256xf32> -> vector<4x256xf32>
    %c0_41 = arith.constant 0 : index
    %c0_42 = arith.constant 0 : index
    %60 = vector.load %arg15[%c0_41, %c0_42] : memref<4x1xf32, #tpu.memory_space<vmem>>, vector<4x1xf32>
    %61 = vector.broadcast %60 : vector<4x1xf32> to vector<4x256xf32>
    %62 = arith.addf %59, %61 : vector<4x256xf32>
    %63 = arith.addf %1, %62 : vector<4x256xf32>
    %c0_43 = arith.constant 0 : index
    %c0_44 = arith.constant 0 : index
    %c0_45 = arith.constant 0 : index
    %64 = vector.load %arg16[%c0_43, %c0_44, %c0_45] : memref<1x4x256xf32, #tpu.memory_space<vmem>>, vector<1x4x256xf32>
    %65 = vector.shape_cast %64 : vector<1x4x256xf32> to vector<4x256xf32>
    %66 = vector.shape_cast %63 : vector<4x256xf32> to vector<1x4x256xf32>
    tpu.vector_store %arg16[%c0_43, %c0_44, %c0_45], %66 {strides = array<i32>} : memref<1x4x256xf32, #tpu.memory_space<vmem>>, vector<1x4x256xf32>,
    return
  }
  func.func @transform_0(%arg0: i32) -> (i32, i32, i32) {
    %c0_i32 = arith.constant 0 : i32
    %c0_i32_0 = arith.constant 0 : i32
    %c0_i32_1 = arith.constant 0 : i32
    return %arg0, %c0_i32, %c0_i32_0 : i32, i32, i32
  }
  func.func @transform_1(%arg0: i32) -> (i32, i32, i32) {
    %c0_i32 = arith.constant 0 : i32
    %c0_i32_0 = arith.constant 0 : i32
    %c0_i32_1 = arith.constant 0 : i32
    return %arg0, %c0_i32, %c0_i32_0 : i32, i32, i32
  }
  func.func @transform_2(%arg0: i32) -> (i32, i32, i32) {
    %c0_i32 = arith.constant 0 : i32
    %c0_i32_0 = arith.constant 0 : i32
    %c0_i32_1 = arith.constant 0 : i32
    return %arg0, %c0_i32, %c0_i32_0 : i32, i32, i32
  }
  func.func @transform_3(%arg0: i32) -> (i32, i32, i32) {
    %c0_i32 = arith.constant 0 : i32
    %c0_i32_0 = arith.constant 0 : i32
    %c0_i32_1 = arith.constant 0 : i32
    return %arg0, %c0_i32, %c0_i32_0 : i32, i32, i32
  }
  func.func @transform_4(%arg0: i32) -> (i32, i32, i32) {
    %c0_i32 = arith.constant 0 : i32
    %c0_i32_0 = arith.constant 0 : i32
    %c0_i32_1 = arith.constant 0 : i32
    return %arg0, %c0_i32, %c0_i32_0 : i32, i32, i32
  }
  func.func @transform_5(%arg0: i32) -> (i32, i32) {
    %c0_i32 = arith.constant 0 : i32
    %c0_i32_0 = arith.constant 0 : i32
    %c0_i32_1 = arith.constant 0 : i32
    return %c0_i32, %c0_i32_0 : i32, i32
  }
  func.func @transform_6(%arg0: i32) -> (i32, i32) {
    %c0_i32 = arith.constant 0 : i32
    %c0_i32_0 = arith.constant 0 : i32
    %c0_i32_1 = arith.constant 0 : i32
    return %c0_i32, %c0_i32_0 : i32, i32
  }
  func.func @transform_7(%arg0: i32) -> (i32, i32) {
    %c0_i32 = arith.constant 0 : i32
    %c0_i32_0 = arith.constant 0 : i32
    %c0_i32_1 = arith.constant 0 : i32
    return %c0_i32, %c0_i32_0 : i32, i32
  }
  func.func @transform_8(%arg0: i32) -> (i32, i32) {
    %c0_i32 = arith.constant 0 : i32
    %c0_i32_0 = arith.constant 0 : i32
    %c0_i32_1 = arith.constant 0 : i32
    return %c0_i32, %c0_i32_0 : i32, i32
  }
  func.func @transform_9(%arg0: i32) -> (i32, i32) {
    %c0_i32 = arith.constant 0 : i32
    %c0_i32_0 = arith.constant 0 : i32
    %c0_i32_1 = arith.constant 0 : i32
    return %c0_i32, %c0_i32_0 : i32, i32
  }
  func.func @transform_10(%arg0: i32) -> (i32, i32) {
    %c0_i32 = arith.constant 0 : i32
    %c0_i32_0 = arith.constant 0 : i32
    %c0_i32_1 = arith.constant 0 : i32
    return %c0_i32, %c0_i32_0 : i32, i32
  }
  func.func @transform_11(%arg0: i32) -> (i32, i32) {
    %c0_i32 = arith.constant 0 : i32
    %c0_i32_0 = arith.constant 0 : i32
    %c0_i32_1 = arith.constant 0 : i32
    return %c0_i32, %c0_i32_0 : i32, i32
  }
  func.func @transform_12(%arg0: i32) -> (i32, i32) {
    %c0_i32 = arith.constant 0 : i32
    %c0_i32_0 = arith.constant 0 : i32
    %c0_i32_1 = arith.constant 0 : i32
    return %c0_i32, %c0_i32_0 : i32, i32
  }
  func.func @transform_13(%arg0: i32) -> (i32, i32) {
    %c0_i32 = arith.constant 0 : i32
    %c0_i32_0 = arith.constant 0 : i32
    %c0_i32_1 = arith.constant 0 : i32
    return %c0_i32, %c0_i32_0 : i32, i32
  }
  func.func @transform_14(%arg0: i32) -> (i32, i32) {
    %c0_i32 = arith.constant 0 : i32
    %c0_i32_0 = arith.constant 0 : i32
    %c0_i32_1 = arith.constant 0 : i32
    return %c0_i32, %c0_i32_0 : i32, i32
  }
  func.func @transform_15(%arg0: i32) -> (i32, i32, i32) {
    %c0_i32 = arith.constant 0 : i32
    %c0_i32_0 = arith.constant 0 : i32
    %c0_i32_1 = arith.constant 0 : i32
    return %arg0, %c0_i32, %c0_i32_0 : i32, i32, i32
  }
}

module attributes {stable_mosaic.version = 11 : i64} {
  func.func @_tokens_kernel(%arg0: memref<2x512xf32, #tpu.memory_space<vmem>>, %arg1: memref<2x512xf32, #tpu.memory_space<vmem>>, %arg2: memref<16x768xf32, #tpu.memory_space<vmem>>, %arg3: memref<16x512xf32, #tpu.memory_space<vmem>>, %arg4: memref<4x512x128xbf16, #tpu.memory_space<vmem>>, %arg5: memref<4x128xf32, #tpu.memory_space<vmem>>, %arg6: memref<4x512x128xbf16, #tpu.memory_space<vmem>>, %arg7: memref<4x128xf32, #tpu.memory_space<vmem>>, %arg8: memref<768x1024xbf16, #tpu.memory_space<vmem>>, %arg9: memref<1x1024xf32, #tpu.memory_space<vmem>>, %arg10: memref<1024x128xbf16, #tpu.memory_space<vmem>>, %arg11: memref<1x128xf32, #tpu.memory_space<vmem>>, %arg12: memref<512x1024xbf16, #tpu.memory_space<vmem>>, %arg13: memref<1x1024xf32, #tpu.memory_space<vmem>>, %arg14: memref<1024x128xbf16, #tpu.memory_space<vmem>>, %arg15: memref<1x128xf32, #tpu.memory_space<vmem>>, %arg16: memref<4x128x128xbf16, #tpu.memory_space<vmem>>, %arg17: memref<4x128xf32, #tpu.memory_space<vmem>>, %arg18: memref<128x128xbf16, #tpu.memory_space<vmem>>, %arg19: memref<1x128xf32, #tpu.memory_space<vmem>>, %arg20: memref<2x4x128xf32, #tpu.memory_space<vmem>>, %arg21: memref<2x4x128xf32, #tpu.memory_space<vmem>>, %arg22: memref<2x4x128xf32, #tpu.memory_space<vmem>>) attributes {dimension_semantics = [], scalar_prefetch = 0 : i64, scratch_operands = 0 : i64, tpu.core_type = #tpu.core_type<tc>} {
    %c0 = arith.constant 0 : index
    %c0_0 = arith.constant 0 : index
    %0 = vector.load %arg0[%c0, %c0_0] : memref<2x512xf32, #tpu.memory_space<vmem>>, vector<2x512xf32>
    %1 = arith.truncf %0 : vector<2x512xf32> to vector<2x512xbf16>
    %c0_1 = arith.constant 0 : index
    %c0_2 = arith.constant 0 : index
    %2 = vector.load %arg1[%c0_1, %c0_2] : memref<2x512xf32, #tpu.memory_space<vmem>>, vector<2x512xf32>
    %3 = arith.truncf %2 : vector<2x512xf32> to vector<2x512xbf16>
    %c0_3 = arith.constant 0 : index
    %c0_4 = arith.constant 0 : index
    %c0_5 = arith.constant 0 : index
    %4 = vector.load %arg4[%c0_3, %c0_4, %c0_5] : memref<4x512x128xbf16, #tpu.memory_space<vmem>>, vector<1x512x128xbf16>
    %5 = vector.shape_cast %4 : vector<1x512x128xbf16> to vector<512x128xbf16>
    %cst = arith.constant dense<0.000000e+00> : vector<2x128xf32>
    %6 = tpu.matmul %1, %5, %cst {dimension_numbers = #tpu.dot_dimension_numbers<[1], [0], [0], [1], [0, 0, 1, 1], [], []>} : vector<2x512xbf16>, vector<512x128xbf16>, vector<2x128xf32> -> vector<2x128xf32>
    %c0_6 = arith.constant 0 : index
    %c0_7 = arith.constant 0 : index
    %7 = vector.load %arg5[%c0_6, %c0_7] : memref<4x128xf32, #tpu.memory_space<vmem>>, vector<1x128xf32>
    %8 = vector.broadcast %7 : vector<1x128xf32> to vector<2x128xf32>
    %9 = arith.addf %6, %8 : vector<2x128xf32>
    %c0_8 = arith.constant 0 : index
    %c0_9 = arith.constant 0 : index
    %c0_10 = arith.constant 0 : index
    %10 = vector.load %arg6[%c0_8, %c0_9, %c0_10] : memref<4x512x128xbf16, #tpu.memory_space<vmem>>, vector<1x512x128xbf16>
    %11 = vector.shape_cast %10 : vector<1x512x128xbf16> to vector<512x128xbf16>
    %cst_11 = arith.constant dense<0.000000e+00> : vector<2x128xf32>
    %12 = tpu.matmul %3, %11, %cst_11 {dimension_numbers = #tpu.dot_dimension_numbers<[1], [0], [0], [1], [0, 0, 1, 1], [], []>} : vector<2x512xbf16>, vector<512x128xbf16>, vector<2x128xf32> -> vector<2x128xf32>
    %c0_12 = arith.constant 0 : index
    %c0_13 = arith.constant 0 : index
    %13 = vector.load %arg7[%c0_12, %c0_13] : memref<4x128xf32, #tpu.memory_space<vmem>>, vector<1x128xf32>
    %14 = vector.broadcast %13 : vector<1x128xf32> to vector<2x128xf32>
    %15 = arith.addf %12, %14 : vector<2x128xf32>
    %16 = arith.mulf %9, %9 : vector<2x128xf32>
    %cst_14 = arith.constant dense<0.000000e+00> : vector<2xf32>
    %17 = vector.multi_reduction <add>, %16, %cst_14 [1] : vector<2x128xf32> to vector<2xf32>
    %18 = vector.shape_cast %17 : vector<2xf32> to vector<2x1xf32>
    %cst_15 = arith.constant 1.000000e-24 : f32
    %19 = vector.broadcast %cst_15 : f32 to vector<2x1xf32>
    %20 = arith.maximumf %18, %19 : vector<2x1xf32>
    %21 = math.rsqrt %20 : vector<2x1xf32>
    %22 = vector.broadcast %21 : vector<2x1xf32> to vector<2x128xf32>
    %23 = arith.mulf %9, %22 : vector<2x128xf32>
    %24 = arith.mulf %15, %15 : vector<2x128xf32>
    %cst_16 = arith.constant dense<0.000000e+00> : vector<2xf32>
    %25 = vector.multi_reduction <add>, %24, %cst_16 [1] : vector<2x128xf32> to vector<2xf32>
    %26 = vector.shape_cast %25 : vector<2xf32> to vector<2x1xf32>
    %cst_17 = arith.constant 1.000000e-24 : f32
    %27 = vector.broadcast %cst_17 : f32 to vector<2x1xf32>
    %28 = arith.maximumf %26, %27 : vector<2x1xf32>
    %29 = math.rsqrt %28 : vector<2x1xf32>
    %30 = vector.broadcast %29 : vector<2x1xf32> to vector<2x128xf32>
    %31 = arith.mulf %15, %30 : vector<2x128xf32>
    %c1 = arith.constant 1 : index
    %c0_18 = arith.constant 0 : index
    %c0_19 = arith.constant 0 : index
    %32 = vector.load %arg4[%c1, %c0_18, %c0_19] : memref<4x512x128xbf16, #tpu.memory_space<vmem>>, vector<1x512x128xbf16>
    %33 = vector.shape_cast %32 : vector<1x512x128xbf16> to vector<512x128xbf16>
    %cst_20 = arith.constant dense<0.000000e+00> : vector<2x128xf32>
    %34 = tpu.matmul %1, %33, %cst_20 {dimension_numbers = #tpu.dot_dimension_numbers<[1], [0], [0], [1], [0, 0, 1, 1], [], []>} : vector<2x512xbf16>, vector<512x128xbf16>, vector<2x128xf32> -> vector<2x128xf32>
    %c1_21 = arith.constant 1 : index
    %c0_22 = arith.constant 0 : index
    %35 = vector.load %arg5[%c1_21, %c0_22] : memref<4x128xf32, #tpu.memory_space<vmem>>, vector<1x128xf32>
    %36 = vector.broadcast %35 : vector<1x128xf32> to vector<2x128xf32>
    %37 = arith.addf %34, %36 : vector<2x128xf32>
    %c1_23 = arith.constant 1 : index
    %c0_24 = arith.constant 0 : index
    %c0_25 = arith.constant 0 : index
    %38 = vector.load %arg6[%c1_23, %c0_24, %c0_25] : memref<4x512x128xbf16, #tpu.memory_space<vmem>>, vector<1x512x128xbf16>
    %39 = vector.shape_cast %38 : vector<1x512x128xbf16> to vector<512x128xbf16>
    %cst_26 = arith.constant dense<0.000000e+00> : vector<2x128xf32>
    %40 = tpu.matmul %3, %39, %cst_26 {dimension_numbers = #tpu.dot_dimension_numbers<[1], [0], [0], [1], [0, 0, 1, 1], [], []>} : vector<2x512xbf16>, vector<512x128xbf16>, vector<2x128xf32> -> vector<2x128xf32>
    %c1_27 = arith.constant 1 : index
    %c0_28 = arith.constant 0 : index
    %41 = vector.load %arg7[%c1_27, %c0_28] : memref<4x128xf32, #tpu.memory_space<vmem>>, vector<1x128xf32>
    %42 = vector.broadcast %41 : vector<1x128xf32> to vector<2x128xf32>
    %43 = arith.addf %40, %42 : vector<2x128xf32>
    %44 = arith.mulf %37, %37 : vector<2x128xf32>
    %cst_29 = arith.constant dense<0.000000e+00> : vector<2xf32>
    %45 = vector.multi_reduction <add>, %44, %cst_29 [1] : vector<2x128xf32> to vector<2xf32>
    %46 = vector.shape_cast %45 : vector<2xf32> to vector<2x1xf32>
    %cst_30 = arith.constant 1.000000e-24 : f32
    %47 = vector.broadcast %cst_30 : f32 to vector<2x1xf32>
    %48 = arith.maximumf %46, %47 : vector<2x1xf32>
    %49 = math.rsqrt %48 : vector<2x1xf32>
    %50 = vector.broadcast %49 : vector<2x1xf32> to vector<2x128xf32>
    %51 = arith.mulf %37, %50 : vector<2x128xf32>
    %52 = arith.mulf %43, %43 : vector<2x128xf32>
    %cst_31 = arith.constant dense<0.000000e+00> : vector<2xf32>
    %53 = vector.multi_reduction <add>, %52, %cst_31 [1] : vector<2x128xf32> to vector<2xf32>
    %54 = vector.shape_cast %53 : vector<2xf32> to vector<2x1xf32>
    %cst_32 = arith.constant 1.000000e-24 : f32
    %55 = vector.broadcast %cst_32 : f32 to vector<2x1xf32>
    %56 = arith.maximumf %54, %55 : vector<2x1xf32>
    %57 = math.rsqrt %56 : vector<2x1xf32>
    %58 = vector.broadcast %57 : vector<2x1xf32> to vector<2x128xf32>
    %59 = arith.mulf %43, %58 : vector<2x128xf32>
    %c2 = arith.constant 2 : index
    %c0_33 = arith.constant 0 : index
    %c0_34 = arith.constant 0 : index
    %60 = vector.load %arg4[%c2, %c0_33, %c0_34] : memref<4x512x128xbf16, #tpu.memory_space<vmem>>, vector<1x512x128xbf16>
    %61 = vector.shape_cast %60 : vector<1x512x128xbf16> to vector<512x128xbf16>
    %cst_35 = arith.constant dense<0.000000e+00> : vector<2x128xf32>
    %62 = tpu.matmul %1, %61, %cst_35 {dimension_numbers = #tpu.dot_dimension_numbers<[1], [0], [0], [1], [0, 0, 1, 1], [], []>} : vector<2x512xbf16>, vector<512x128xbf16>, vector<2x128xf32> -> vector<2x128xf32>
    %c2_36 = arith.constant 2 : index
    %c0_37 = arith.constant 0 : index
    %63 = vector.load %arg5[%c2_36, %c0_37] : memref<4x128xf32, #tpu.memory_space<vmem>>, vector<1x128xf32>
    %64 = vector.broadcast %63 : vector<1x128xf32> to vector<2x128xf32>
    %65 = arith.addf %62, %64 : vector<2x128xf32>
    %c2_38 = arith.constant 2 : index
    %c0_39 = arith.constant 0 : index
    %c0_40 = arith.constant 0 : index
    %66 = vector.load %arg6[%c2_38, %c0_39, %c0_40] : memref<4x512x128xbf16, #tpu.memory_space<vmem>>, vector<1x512x128xbf16>
    %67 = vector.shape_cast %66 : vector<1x512x128xbf16> to vector<512x128xbf16>
    %cst_41 = arith.constant dense<0.000000e+00> : vector<2x128xf32>
    %68 = tpu.matmul %3, %67, %cst_41 {dimension_numbers = #tpu.dot_dimension_numbers<[1], [0], [0], [1], [0, 0, 1, 1], [], []>} : vector<2x512xbf16>, vector<512x128xbf16>, vector<2x128xf32> -> vector<2x128xf32>
    %c2_42 = arith.constant 2 : index
    %c0_43 = arith.constant 0 : index
    %69 = vector.load %arg7[%c2_42, %c0_43] : memref<4x128xf32, #tpu.memory_space<vmem>>, vector<1x128xf32>
    %70 = vector.broadcast %69 : vector<1x128xf32> to vector<2x128xf32>
    %71 = arith.addf %68, %70 : vector<2x128xf32>
    %72 = arith.mulf %65, %65 : vector<2x128xf32>
    %cst_44 = arith.constant dense<0.000000e+00> : vector<2xf32>
    %73 = vector.multi_reduction <add>, %72, %cst_44 [1] : vector<2x128xf32> to vector<2xf32>
    %74 = vector.shape_cast %73 : vector<2xf32> to vector<2x1xf32>
    %cst_45 = arith.constant 1.000000e-24 : f32
    %75 = vector.broadcast %cst_45 : f32 to vector<2x1xf32>
    %76 = arith.maximumf %74, %75 : vector<2x1xf32>
    %77 = math.rsqrt %76 : vector<2x1xf32>
    %78 = vector.broadcast %77 : vector<2x1xf32> to vector<2x128xf32>
    %79 = arith.mulf %65, %78 : vector<2x128xf32>
    %80 = arith.mulf %71, %71 : vector<2x128xf32>
    %cst_46 = arith.constant dense<0.000000e+00> : vector<2xf32>
    %81 = vector.multi_reduction <add>, %80, %cst_46 [1] : vector<2x128xf32> to vector<2xf32>
    %82 = vector.shape_cast %81 : vector<2xf32> to vector<2x1xf32>
    %cst_47 = arith.constant 1.000000e-24 : f32
    %83 = vector.broadcast %cst_47 : f32 to vector<2x1xf32>
    %84 = arith.maximumf %82, %83 : vector<2x1xf32>
    %85 = math.rsqrt %84 : vector<2x1xf32>
    %86 = vector.broadcast %85 : vector<2x1xf32> to vector<2x128xf32>
    %87 = arith.mulf %71, %86 : vector<2x128xf32>
    %c3 = arith.constant 3 : index
    %c0_48 = arith.constant 0 : index
    %c0_49 = arith.constant 0 : index
    %88 = vector.load %arg4[%c3, %c0_48, %c0_49] : memref<4x512x128xbf16, #tpu.memory_space<vmem>>, vector<1x512x128xbf16>
    %89 = vector.shape_cast %88 : vector<1x512x128xbf16> to vector<512x128xbf16>
    %cst_50 = arith.constant dense<0.000000e+00> : vector<2x128xf32>
    %90 = tpu.matmul %1, %89, %cst_50 {dimension_numbers = #tpu.dot_dimension_numbers<[1], [0], [0], [1], [0, 0, 1, 1], [], []>} : vector<2x512xbf16>, vector<512x128xbf16>, vector<2x128xf32> -> vector<2x128xf32>
    %c3_51 = arith.constant 3 : index
    %c0_52 = arith.constant 0 : index
    %91 = vector.load %arg5[%c3_51, %c0_52] : memref<4x128xf32, #tpu.memory_space<vmem>>, vector<1x128xf32>
    %92 = vector.broadcast %91 : vector<1x128xf32> to vector<2x128xf32>
    %93 = arith.addf %90, %92 : vector<2x128xf32>
    %c3_53 = arith.constant 3 : index
    %c0_54 = arith.constant 0 : index
    %c0_55 = arith.constant 0 : index
    %94 = vector.load %arg6[%c3_53, %c0_54, %c0_55] : memref<4x512x128xbf16, #tpu.memory_space<vmem>>, vector<1x512x128xbf16>
    %95 = vector.shape_cast %94 : vector<1x512x128xbf16> to vector<512x128xbf16>
    %cst_56 = arith.constant dense<0.000000e+00> : vector<2x128xf32>
    %96 = tpu.matmul %3, %95, %cst_56 {dimension_numbers = #tpu.dot_dimension_numbers<[1], [0], [0], [1], [0, 0, 1, 1], [], []>} : vector<2x512xbf16>, vector<512x128xbf16>, vector<2x128xf32> -> vector<2x128xf32>
    %c3_57 = arith.constant 3 : index
    %c0_58 = arith.constant 0 : index
    %97 = vector.load %arg7[%c3_57, %c0_58] : memref<4x128xf32, #tpu.memory_space<vmem>>, vector<1x128xf32>
    %98 = vector.broadcast %97 : vector<1x128xf32> to vector<2x128xf32>
    %99 = arith.addf %96, %98 : vector<2x128xf32>
    %100 = arith.mulf %93, %93 : vector<2x128xf32>
    %cst_59 = arith.constant dense<0.000000e+00> : vector<2xf32>
    %101 = vector.multi_reduction <add>, %100, %cst_59 [1] : vector<2x128xf32> to vector<2xf32>
    %102 = vector.shape_cast %101 : vector<2xf32> to vector<2x1xf32>
    %cst_60 = arith.constant 1.000000e-24 : f32
    %103 = vector.broadcast %cst_60 : f32 to vector<2x1xf32>
    %104 = arith.maximumf %102, %103 : vector<2x1xf32>
    %105 = math.rsqrt %104 : vector<2x1xf32>
    %106 = vector.broadcast %105 : vector<2x1xf32> to vector<2x128xf32>
    %107 = arith.mulf %93, %106 : vector<2x128xf32>
    %108 = arith.mulf %99, %99 : vector<2x128xf32>
    %cst_61 = arith.constant dense<0.000000e+00> : vector<2xf32>
    %109 = vector.multi_reduction <add>, %108, %cst_61 [1] : vector<2x128xf32> to vector<2xf32>
    %110 = vector.shape_cast %109 : vector<2xf32> to vector<2x1xf32>
    %cst_62 = arith.constant 1.000000e-24 : f32
    %111 = vector.broadcast %cst_62 : f32 to vector<2x1xf32>
    %112 = arith.maximumf %110, %111 : vector<2x1xf32>
    %113 = math.rsqrt %112 : vector<2x1xf32>
    %114 = vector.broadcast %113 : vector<2x1xf32> to vector<2x128xf32>
    %115 = arith.mulf %99, %114 : vector<2x128xf32>
    %c0_63 = arith.constant 0 : index
    %c0_64 = arith.constant 0 : index
    %116 = vector.load %arg2[%c0_63, %c0_64] : memref<16x768xf32, #tpu.memory_space<vmem>>, vector<16x768xf32>
    %117 = arith.truncf %116 : vector<16x768xf32> to vector<16x768xbf16>
    %c0_65 = arith.constant 0 : index
    %c0_66 = arith.constant 0 : index
    %118 = vector.load %arg3[%c0_65, %c0_66] : memref<16x512xf32, #tpu.memory_space<vmem>>, vector<16x512xf32>
    %119 = arith.truncf %118 : vector<16x512xf32> to vector<16x512xbf16>
    %c0_67 = arith.constant 0 : index
    %c0_68 = arith.constant 0 : index
    %120 = vector.load %arg8[%c0_67, %c0_68] : memref<768x1024xbf16, #tpu.memory_space<vmem>>, vector<768x1024xbf16>
    %cst_69 = arith.constant dense<0.000000e+00> : vector<16x1024xf32>
    %121 = tpu.matmul %117, %120, %cst_69 {dimension_numbers = #tpu.dot_dimension_numbers<[1], [0], [0], [1], [0, 0, 1, 1], [], []>} : vector<16x768xbf16>, vector<768x1024xbf16>, vector<16x1024xf32> -> vector<16x1024xf32>
    %c0_70 = arith.constant 0 : index
    %c0_71 = arith.constant 0 : index
    %122 = vector.load %arg9[%c0_70, %c0_71] : memref<1x1024xf32, #tpu.memory_space<vmem>>, vector<1x1024xf32>
    %123 = vector.broadcast %122 : vector<1x1024xf32> to vector<16x1024xf32>
    %124 = arith.addf %121, %123 : vector<16x1024xf32>
    %125 = arith.mulf %124, %124 : vector<16x1024xf32>
    %126 = arith.mulf %124, %125 : vector<16x1024xf32>
    %cst_72 = arith.constant 4.471500e-02 : f32
    %127 = vector.broadcast %cst_72 : f32 to vector<16x1024xf32>
    %128 = arith.mulf %127, %126 : vector<16x1024xf32>
    %129 = arith.addf %124, %128 : vector<16x1024xf32>
    %cst_73 = arith.constant 0.797884583 : f32
    %130 = vector.broadcast %cst_73 : f32 to vector<16x1024xf32>
    %131 = arith.mulf %130, %129 : vector<16x1024xf32>
    %132 = math.tanh %131 : vector<16x1024xf32>
    %cst_74 = arith.constant 1.000000e+00 : f32
    %133 = vector.broadcast %cst_74 : f32 to vector<16x1024xf32>
    %134 = arith.addf %133, %132 : vector<16x1024xf32>
    %cst_75 = arith.constant 5.000000e-01 : f32
    %135 = vector.broadcast %cst_75 : f32 to vector<16x1024xf32>
    %136 = arith.mulf %135, %134 : vector<16x1024xf32>
    %137 = arith.mulf %124, %136 : vector<16x1024xf32>
    %138 = arith.truncf %137 : vector<16x1024xf32> to vector<16x1024xbf16>
    %c0_76 = arith.constant 0 : index
    %c0_77 = arith.constant 0 : index
    %139 = vector.load %arg10[%c0_76, %c0_77] : memref<1024x128xbf16, #tpu.memory_space<vmem>>, vector<1024x128xbf16>
    %cst_78 = arith.constant dense<0.000000e+00> : vector<16x128xf32>
    %140 = tpu.matmul %138, %139, %cst_78 {dimension_numbers = #tpu.dot_dimension_numbers<[1], [0], [0], [1], [0, 0, 1, 1], [], []>} : vector<16x1024xbf16>, vector<1024x128xbf16>, vector<16x128xf32> -> vector<16x128xf32>
    %c0_79 = arith.constant 0 : index
    %c0_80 = arith.constant 0 : index
    %141 = vector.load %arg11[%c0_79, %c0_80] : memref<1x128xf32, #tpu.memory_space<vmem>>, vector<1x128xf32>
    %142 = vector.broadcast %141 : vector<1x128xf32> to vector<16x128xf32>
    %143 = arith.addf %140, %142 : vector<16x128xf32>
    %c0_81 = arith.constant 0 : index
    %c0_82 = arith.constant 0 : index
    %144 = vector.load %arg12[%c0_81, %c0_82] : memref<512x1024xbf16, #tpu.memory_space<vmem>>, vector<512x1024xbf16>
    %cst_83 = arith.constant dense<0.000000e+00> : vector<16x1024xf32>
    %145 = tpu.matmul %119, %144, %cst_83 {dimension_numbers = #tpu.dot_dimension_numbers<[1], [0], [0], [1], [0, 0, 1, 1], [], []>} : vector<16x512xbf16>, vector<512x1024xbf16>, vector<16x1024xf32> -> vector<16x1024xf32>
    %c0_84 = arith.constant 0 : index
    %c0_85 = arith.constant 0 : index
    %146 = vector.load %arg13[%c0_84, %c0_85] : memref<1x1024xf32, #tpu.memory_space<vmem>>, vector<1x1024xf32>
    %147 = vector.broadcast %146 : vector<1x1024xf32> to vector<16x1024xf32>
    %148 = arith.addf %145, %147 : vector<16x1024xf32>
    %149 = arith.mulf %148, %148 : vector<16x1024xf32>
    %150 = arith.mulf %148, %149 : vector<16x1024xf32>
    %cst_86 = arith.constant 4.471500e-02 : f32
    %151 = vector.broadcast %cst_86 : f32 to vector<16x1024xf32>
    %152 = arith.mulf %151, %150 : vector<16x1024xf32>
    %153 = arith.addf %148, %152 : vector<16x1024xf32>
    %cst_87 = arith.constant 0.797884583 : f32
    %154 = vector.broadcast %cst_87 : f32 to vector<16x1024xf32>
    %155 = arith.mulf %154, %153 : vector<16x1024xf32>
    %156 = math.tanh %155 : vector<16x1024xf32>
    %cst_88 = arith.constant 1.000000e+00 : f32
    %157 = vector.broadcast %cst_88 : f32 to vector<16x1024xf32>
    %158 = arith.addf %157, %156 : vector<16x1024xf32>
    %cst_89 = arith.constant 5.000000e-01 : f32
    %159 = vector.broadcast %cst_89 : f32 to vector<16x1024xf32>
    %160 = arith.mulf %159, %158 : vector<16x1024xf32>
    %161 = arith.mulf %148, %160 : vector<16x1024xf32>
    %162 = arith.truncf %161 : vector<16x1024xf32> to vector<16x1024xbf16>
    %c0_90 = arith.constant 0 : index
    %c0_91 = arith.constant 0 : index
    %163 = vector.load %arg14[%c0_90, %c0_91] : memref<1024x128xbf16, #tpu.memory_space<vmem>>, vector<1024x128xbf16>
    %cst_92 = arith.constant dense<0.000000e+00> : vector<16x128xf32>
    %164 = tpu.matmul %162, %163, %cst_92 {dimension_numbers = #tpu.dot_dimension_numbers<[1], [0], [0], [1], [0, 0, 1, 1], [], []>} : vector<16x1024xbf16>, vector<1024x128xbf16>, vector<16x128xf32> -> vector<16x128xf32>
    %c0_93 = arith.constant 0 : index
    %c0_94 = arith.constant 0 : index
    %165 = vector.load %arg15[%c0_93, %c0_94] : memref<1x128xf32, #tpu.memory_space<vmem>>, vector<1x128xf32>
    %166 = vector.broadcast %165 : vector<1x128xf32> to vector<16x128xf32>
    %167 = arith.addf %164, %166 : vector<16x128xf32>
    %c0_95 = arith.constant 0 : index
    %c0_96 = arith.constant 0 : index
    %c0_97 = arith.constant 0 : index
    %168 = vector.load %arg16[%c0_95, %c0_96, %c0_97] : memref<4x128x128xbf16, #tpu.memory_space<vmem>>, vector<1x128x128xbf16>
    %169 = vector.shape_cast %168 : vector<1x128x128xbf16> to vector<128x128xbf16>
    %c1_98 = arith.constant 1 : index
    %c0_99 = arith.constant 0 : index
    %c0_100 = arith.constant 0 : index
    %170 = vector.load %arg16[%c1_98, %c0_99, %c0_100] : memref<4x128x128xbf16, #tpu.memory_space<vmem>>, vector<1x128x128xbf16>
    %171 = vector.shape_cast %170 : vector<1x128x128xbf16> to vector<128x128xbf16>
    %c2_101 = arith.constant 2 : index
    %c0_102 = arith.constant 0 : index
    %c0_103 = arith.constant 0 : index
    %172 = vector.load %arg16[%c2_101, %c0_102, %c0_103] : memref<4x128x128xbf16, #tpu.memory_space<vmem>>, vector<1x128x128xbf16>
    %173 = vector.shape_cast %172 : vector<1x128x128xbf16> to vector<128x128xbf16>
    %c3_104 = arith.constant 3 : index
    %c0_105 = arith.constant 0 : index
    %c0_106 = arith.constant 0 : index
    %174 = vector.load %arg16[%c3_104, %c0_105, %c0_106] : memref<4x128x128xbf16, #tpu.memory_space<vmem>>, vector<1x128x128xbf16>
    %175 = vector.shape_cast %174 : vector<1x128x128xbf16> to vector<128x128xbf16>
    %c0_107 = arith.constant 0 : index
    %c0_108 = arith.constant 0 : index
    %176 = vector.load %arg17[%c0_107, %c0_108] : memref<4x128xf32, #tpu.memory_space<vmem>>, vector<1x128xf32>
    %c1_109 = arith.constant 1 : index
    %c0_110 = arith.constant 0 : index
    %177 = vector.load %arg17[%c1_109, %c0_110] : memref<4x128xf32, #tpu.memory_space<vmem>>, vector<1x128xf32>
    %c2_111 = arith.constant 2 : index
    %c0_112 = arith.constant 0 : index
    %178 = vector.load %arg17[%c2_111, %c0_112] : memref<4x128xf32, #tpu.memory_space<vmem>>, vector<1x128xf32>
    %c3_113 = arith.constant 3 : index
    %c0_114 = arith.constant 0 : index
    %179 = vector.load %arg17[%c3_113, %c0_114] : memref<4x128xf32, #tpu.memory_space<vmem>>, vector<1x128xf32>
    %c0_115 = arith.constant 0 : index
    %c0_116 = arith.constant 0 : index
    %180 = vector.load %arg18[%c0_115, %c0_116] : memref<128x128xbf16, #tpu.memory_space<vmem>>, vector<128x128xbf16>
    %c0_117 = arith.constant 0 : index
    %c0_118 = arith.constant 0 : index
    %181 = vector.load %arg19[%c0_117, %c0_118] : memref<1x128xf32, #tpu.memory_space<vmem>>, vector<1x128xf32>
    %182 = tpu.concatenate %143, %167 in 0 : vector<16x128xf32>, vector<16x128xf32> -> vector<32x128xf32>
    %183 = arith.truncf %182 : vector<32x128xf32> to vector<32x128xbf16>
    %cst_119 = arith.constant dense<0.000000e+00> : vector<32x128xf32>
    %184 = tpu.matmul %183, %171, %cst_119 {dimension_numbers = #tpu.dot_dimension_numbers<[1], [0], [0], [1], [0, 0, 1, 1], [], []>} : vector<32x128xbf16>, vector<128x128xbf16>, vector<32x128xf32> -> vector<32x128xf32>
    %185 = vector.broadcast %177 : vector<1x128xf32> to vector<32x128xf32>
    %186 = arith.addf %184, %185 : vector<32x128xf32>
    %cst_120 = arith.constant dense<0.000000e+00> : vector<32x128xf32>
    %187 = tpu.matmul %183, %173, %cst_120 {dimension_numbers = #tpu.dot_dimension_numbers<[1], [0], [0], [1], [0, 0, 1, 1], [], []>} : vector<32x128xbf16>, vector<128x128xbf16>, vector<32x128xf32> -> vector<32x128xf32>
    %188 = vector.broadcast %178 : vector<1x128xf32> to vector<32x128xf32>
    %189 = arith.addf %187, %188 : vector<32x128xf32>
    %190 = vector.extract_strided_slice %23 {offsets = [0, 0], sizes = [1, 128], strides = [1, 1]} : vector<2x128xf32> to vector<1x128xf32>
    %191 = vector.extract_strided_slice %51 {offsets = [0, 0], sizes = [1, 128], strides = [1, 1]} : vector<2x128xf32> to vector<1x128xf32>
    %192 = vector.extract_strided_slice %79 {offsets = [0, 0], sizes = [1, 128], strides = [1, 1]} : vector<2x128xf32> to vector<1x128xf32>
    %193 = vector.extract_strided_slice %107 {offsets = [0, 0], sizes = [1, 128], strides = [1, 1]} : vector<2x128xf32> to vector<1x128xf32>
    %194 = tpu.concatenate %190, %191, %192, %193 in 0 : vector<1x128xf32>, vector<1x128xf32>, vector<1x128xf32>, vector<1x128xf32> -> vector<4x128xf32>
    %195 = vector.extract_strided_slice %31 {offsets = [0, 0], sizes = [1, 128], strides = [1, 1]} : vector<2x128xf32> to vector<1x128xf32>
    %196 = vector.extract_strided_slice %59 {offsets = [0, 0], sizes = [1, 128], strides = [1, 1]} : vector<2x128xf32> to vector<1x128xf32>
    %197 = vector.extract_strided_slice %87 {offsets = [0, 0], sizes = [1, 128], strides = [1, 1]} : vector<2x128xf32> to vector<1x128xf32>
    %198 = vector.extract_strided_slice %115 {offsets = [0, 0], sizes = [1, 128], strides = [1, 1]} : vector<2x128xf32> to vector<1x128xf32>
    %199 = tpu.concatenate %195, %196, %197, %198 in 0 : vector<1x128xf32>, vector<1x128xf32>, vector<1x128xf32>, vector<1x128xf32> -> vector<4x128xf32>
    %c0_121 = arith.constant 0 : index
    %c0_122 = arith.constant 0 : index
    %c0_123 = arith.constant 0 : index
    %200 = vector.load %arg21[%c0_121, %c0_122, %c0_123] : memref<2x4x128xf32, #tpu.memory_space<vmem>>, vector<1x4x128xf32>
    %201 = vector.shape_cast %200 : vector<1x4x128xf32> to vector<4x128xf32>
    %202 = vector.shape_cast %194 : vector<4x128xf32> to vector<1x4x128xf32>
    tpu.vector_store %arg21[%c0_121, %c0_122, %c0_123], %202 {strides = array<i32>} : memref<2x4x128xf32, #tpu.memory_space<vmem>>, vector<1x4x128xf32>,
    %c0_124 = arith.constant 0 : index
    %c0_125 = arith.constant 0 : index
    %c0_126 = arith.constant 0 : index
    %203 = vector.load %arg22[%c0_124, %c0_125, %c0_126] : memref<2x4x128xf32, #tpu.memory_space<vmem>>, vector<1x4x128xf32>
    %204 = vector.shape_cast %203 : vector<1x4x128xf32> to vector<4x128xf32>
    %205 = vector.shape_cast %199 : vector<4x128xf32> to vector<1x4x128xf32>
    tpu.vector_store %arg22[%c0_124, %c0_125, %c0_126], %205 {strides = array<i32>} : memref<2x4x128xf32, #tpu.memory_space<vmem>>, vector<1x4x128xf32>,
    %206 = arith.truncf %199 : vector<4x128xf32> to vector<4x128xbf16>
    %cst_127 = arith.constant dense<0.000000e+00> : vector<4x128xf32>
    %207 = tpu.matmul %206, %169, %cst_127 {dimension_numbers = #tpu.dot_dimension_numbers<[1], [0], [0], [1], [0, 0, 1, 1], [], []>} : vector<4x128xbf16>, vector<128x128xbf16>, vector<4x128xf32> -> vector<4x128xf32>
    %208 = vector.broadcast %176 : vector<1x128xf32> to vector<4x128xf32>
    %209 = arith.addf %207, %208 : vector<4x128xf32>
    %210 = vector.extract_strided_slice %186 {offsets = [0, 0], sizes = [8, 128], strides = [1, 1]} : vector<32x128xf32> to vector<8x128xf32>
    %211 = vector.extract_strided_slice %186 {offsets = [16, 0], sizes = [8, 128], strides = [1, 1]} : vector<32x128xf32> to vector<8x128xf32>
    %212 = tpu.concatenate %210, %211 in 0 : vector<8x128xf32>, vector<8x128xf32> -> vector<16x128xf32>
    %213 = vector.extract_strided_slice %189 {offsets = [0, 0], sizes = [8, 128], strides = [1, 1]} : vector<32x128xf32> to vector<8x128xf32>
    %214 = vector.extract_strided_slice %189 {offsets = [16, 0], sizes = [8, 128], strides = [1, 1]} : vector<32x128xf32> to vector<8x128xf32>
    %215 = tpu.concatenate %213, %214 in 0 : vector<8x128xf32>, vector<8x128xf32> -> vector<16x128xf32>
    %216 = arith.truncf %209 : vector<4x128xf32> to vector<4x128xbf16>
    %217 = arith.truncf %212 : vector<16x128xf32> to vector<16x128xbf16>
    %cst_128 = arith.constant dense<0.000000e+00> : vector<4x16xf32>
    %218 = tpu.matmul %216, %217, %cst_128 {dimension_numbers = #tpu.dot_dimension_numbers<[1], [1], [0], [0], [0, 0, 1, 0], [], []>} : vector<4x128xbf16>, vector<16x128xbf16>, vector<4x16xf32> -> vector<4x16xf32>
    %cst_129 = arith.constant 0.0883883461 : f32
    %219 = vector.broadcast %cst_129 : f32 to vector<4x16xf32>
    %220 = arith.mulf %218, %219 : vector<4x16xf32>
    %cst_130 = arith.constant dense<0xFF800000> : vector<4xf32>
    %221 = vector.multi_reduction <maximumf>, %220, %cst_130 [1] : vector<4x16xf32> to vector<4xf32>
    %222 = vector.shape_cast %221 : vector<4xf32> to vector<4x1xf32>
    %223 = vector.broadcast %222 : vector<4x1xf32> to vector<4x16xf32>
    %224 = arith.subf %220, %223 : vector<4x16xf32>
    %225 = math.exp %224 : vector<4x16xf32>
    %cst_131 = arith.constant dense<0.000000e+00> : vector<4xf32>
    %226 = vector.multi_reduction <add>, %225, %cst_131 [1] : vector<4x16xf32> to vector<4xf32>
    %227 = vector.shape_cast %226 : vector<4xf32> to vector<4x1xf32>
    %228 = tpu.reciprocal %227 {approx = true} : vector<4x1xf32> -> vector<4x1xf32>
    %229 = vector.broadcast %228 : vector<4x1xf32> to vector<4x16xf32>
    %230 = arith.mulf %225, %229 : vector<4x16xf32>
    %231 = arith.truncf %230 : vector<4x16xf32> to vector<4x16xbf16>
    %232 = arith.truncf %215 : vector<16x128xf32> to vector<16x128xbf16>
    %cst_132 = arith.constant dense<0.000000e+00> : vector<4x128xf32>
    %233 = tpu.matmul %231, %232, %cst_132 {dimension_numbers = #tpu.dot_dimension_numbers<[1], [0], [0], [1], [0, 0, 1, 1], [], []>} : vector<4x16xbf16>, vector<16x128xbf16>, vector<4x128xf32> -> vector<4x128xf32>
    %234 = arith.truncf %233 : vector<4x128xf32> to vector<4x128xbf16>
    %cst_133 = arith.constant dense<0.000000e+00> : vector<4x128xf32>
    %235 = tpu.matmul %234, %175, %cst_133 {dimension_numbers = #tpu.dot_dimension_numbers<[1], [0], [0], [1], [0, 0, 1, 1], [], []>} : vector<4x128xbf16>, vector<128x128xbf16>, vector<4x128xf32> -> vector<4x128xf32>
    %236 = vector.broadcast %179 : vector<1x128xf32> to vector<4x128xf32>
    %237 = arith.addf %235, %236 : vector<4x128xf32>
    %238 = arith.addf %199, %237 : vector<4x128xf32>
    %239 = arith.truncf %238 : vector<4x128xf32> to vector<4x128xbf16>
    %cst_134 = arith.constant dense<0.000000e+00> : vector<4x128xf32>
    %240 = tpu.matmul %239, %180, %cst_134 {dimension_numbers = #tpu.dot_dimension_numbers<[1], [0], [0], [1], [0, 0, 1, 1], [], []>} : vector<4x128xbf16>, vector<128x128xbf16>, vector<4x128xf32> -> vector<4x128xf32>
    %241 = vector.broadcast %181 : vector<1x128xf32> to vector<4x128xf32>
    %242 = arith.addf %240, %241 : vector<4x128xf32>
    %243 = arith.mulf %242, %242 : vector<4x128xf32>
    %cst_135 = arith.constant dense<0.000000e+00> : vector<4xf32>
    %244 = vector.multi_reduction <add>, %243, %cst_135 [1] : vector<4x128xf32> to vector<4xf32>
    %245 = vector.shape_cast %244 : vector<4xf32> to vector<4x1xf32>
    %cst_136 = arith.constant 1.000000e-24 : f32
    %246 = vector.broadcast %cst_136 : f32 to vector<4x1xf32>
    %247 = arith.maximumf %245, %246 : vector<4x1xf32>
    %248 = math.rsqrt %247 : vector<4x1xf32>
    %249 = vector.broadcast %248 : vector<4x1xf32> to vector<4x128xf32>
    %250 = arith.mulf %242, %249 : vector<4x128xf32>
    %c0_137 = arith.constant 0 : index
    %c0_138 = arith.constant 0 : index
    %c0_139 = arith.constant 0 : index
    %251 = vector.load %arg20[%c0_137, %c0_138, %c0_139] : memref<2x4x128xf32, #tpu.memory_space<vmem>>, vector<1x4x128xf32>
    %252 = vector.shape_cast %251 : vector<1x4x128xf32> to vector<4x128xf32>
    %253 = vector.shape_cast %250 : vector<4x128xf32> to vector<1x4x128xf32>
    tpu.vector_store %arg20[%c0_137, %c0_138, %c0_139], %253 {strides = array<i32>} : memref<2x4x128xf32, #tpu.memory_space<vmem>>, vector<1x4x128xf32>,
    %254 = vector.extract_strided_slice %23 {offsets = [1, 0], sizes = [1, 128], strides = [1, 1]} : vector<2x128xf32> to vector<1x128xf32>
    %255 = vector.extract_strided_slice %51 {offsets = [1, 0], sizes = [1, 128], strides = [1, 1]} : vector<2x128xf32> to vector<1x128xf32>
    %256 = vector.extract_strided_slice %79 {offsets = [1, 0], sizes = [1, 128], strides = [1, 1]} : vector<2x128xf32> to vector<1x128xf32>
    %257 = vector.extract_strided_slice %107 {offsets = [1, 0], sizes = [1, 128], strides = [1, 1]} : vector<2x128xf32> to vector<1x128xf32>
    %258 = tpu.concatenate %254, %255, %256, %257 in 0 : vector<1x128xf32>, vector<1x128xf32>, vector<1x128xf32>, vector<1x128xf32> -> vector<4x128xf32>
    %259 = vector.extract_strided_slice %31 {offsets = [1, 0], sizes = [1, 128], strides = [1, 1]} : vector<2x128xf32> to vector<1x128xf32>
    %260 = vector.extract_strided_slice %59 {offsets = [1, 0], sizes = [1, 128], strides = [1, 1]} : vector<2x128xf32> to vector<1x128xf32>
    %261 = vector.extract_strided_slice %87 {offsets = [1, 0], sizes = [1, 128], strides = [1, 1]} : vector<2x128xf32> to vector<1x128xf32>
    %262 = vector.extract_strided_slice %115 {offsets = [1, 0], sizes = [1, 128], strides = [1, 1]} : vector<2x128xf32> to vector<1x128xf32>
    %263 = tpu.concatenate %259, %260, %261, %262 in 0 : vector<1x128xf32>, vector<1x128xf32>, vector<1x128xf32>, vector<1x128xf32> -> vector<4x128xf32>
    %c1_140 = arith.constant 1 : index
    %c0_141 = arith.constant 0 : index
    %c0_142 = arith.constant 0 : index
    %264 = vector.load %arg21[%c1_140, %c0_141, %c0_142] : memref<2x4x128xf32, #tpu.memory_space<vmem>>, vector<1x4x128xf32>
    %265 = vector.shape_cast %264 : vector<1x4x128xf32> to vector<4x128xf32>
    %266 = vector.shape_cast %258 : vector<4x128xf32> to vector<1x4x128xf32>
    tpu.vector_store %arg21[%c1_140, %c0_141, %c0_142], %266 {strides = array<i32>} : memref<2x4x128xf32, #tpu.memory_space<vmem>>, vector<1x4x128xf32>,
    %c1_143 = arith.constant 1 : index
    %c0_144 = arith.constant 0 : index
    %c0_145 = arith.constant 0 : index
    %267 = vector.load %arg22[%c1_143, %c0_144, %c0_145] : memref<2x4x128xf32, #tpu.memory_space<vmem>>, vector<1x4x128xf32>
    %268 = vector.shape_cast %267 : vector<1x4x128xf32> to vector<4x128xf32>
    %269 = vector.shape_cast %263 : vector<4x128xf32> to vector<1x4x128xf32>
    tpu.vector_store %arg22[%c1_143, %c0_144, %c0_145], %269 {strides = array<i32>} : memref<2x4x128xf32, #tpu.memory_space<vmem>>, vector<1x4x128xf32>,
    %270 = arith.truncf %263 : vector<4x128xf32> to vector<4x128xbf16>
    %cst_146 = arith.constant dense<0.000000e+00> : vector<4x128xf32>
    %271 = tpu.matmul %270, %169, %cst_146 {dimension_numbers = #tpu.dot_dimension_numbers<[1], [0], [0], [1], [0, 0, 1, 1], [], []>} : vector<4x128xbf16>, vector<128x128xbf16>, vector<4x128xf32> -> vector<4x128xf32>
    %272 = vector.broadcast %176 : vector<1x128xf32> to vector<4x128xf32>
    %273 = arith.addf %271, %272 : vector<4x128xf32>
    %274 = vector.extract_strided_slice %186 {offsets = [8, 0], sizes = [8, 128], strides = [1, 1]} : vector<32x128xf32> to vector<8x128xf32>
    %275 = vector.extract_strided_slice %186 {offsets = [24, 0], sizes = [8, 128], strides = [1, 1]} : vector<32x128xf32> to vector<8x128xf32>
    %276 = tpu.concatenate %274, %275 in 0 : vector<8x128xf32>, vector<8x128xf32> -> vector<16x128xf32>
    %277 = vector.extract_strided_slice %189 {offsets = [8, 0], sizes = [8, 128], strides = [1, 1]} : vector<32x128xf32> to vector<8x128xf32>
    %278 = vector.extract_strided_slice %189 {offsets = [24, 0], sizes = [8, 128], strides = [1, 1]} : vector<32x128xf32> to vector<8x128xf32>
    %279 = tpu.concatenate %277, %278 in 0 : vector<8x128xf32>, vector<8x128xf32> -> vector<16x128xf32>
    %280 = arith.truncf %273 : vector<4x128xf32> to vector<4x128xbf16>
    %281 = arith.truncf %276 : vector<16x128xf32> to vector<16x128xbf16>
    %cst_147 = arith.constant dense<0.000000e+00> : vector<4x16xf32>
    %282 = tpu.matmul %280, %281, %cst_147 {dimension_numbers = #tpu.dot_dimension_numbers<[1], [1], [0], [0], [0, 0, 1, 0], [], []>} : vector<4x128xbf16>, vector<16x128xbf16>, vector<4x16xf32> -> vector<4x16xf32>
    %cst_148 = arith.constant 0.0883883461 : f32
    %283 = vector.broadcast %cst_148 : f32 to vector<4x16xf32>
    %284 = arith.mulf %282, %283 : vector<4x16xf32>
    %cst_149 = arith.constant dense<0xFF800000> : vector<4xf32>
    %285 = vector.multi_reduction <maximumf>, %284, %cst_149 [1] : vector<4x16xf32> to vector<4xf32>
    %286 = vector.shape_cast %285 : vector<4xf32> to vector<4x1xf32>
    %287 = vector.broadcast %286 : vector<4x1xf32> to vector<4x16xf32>
    %288 = arith.subf %284, %287 : vector<4x16xf32>
    %289 = math.exp %288 : vector<4x16xf32>
    %cst_150 = arith.constant dense<0.000000e+00> : vector<4xf32>
    %290 = vector.multi_reduction <add>, %289, %cst_150 [1] : vector<4x16xf32> to vector<4xf32>
    %291 = vector.shape_cast %290 : vector<4xf32> to vector<4x1xf32>
    %292 = tpu.reciprocal %291 {approx = true} : vector<4x1xf32> -> vector<4x1xf32>
    %293 = vector.broadcast %292 : vector<4x1xf32> to vector<4x16xf32>
    %294 = arith.mulf %289, %293 : vector<4x16xf32>
    %295 = arith.truncf %294 : vector<4x16xf32> to vector<4x16xbf16>
    %296 = arith.truncf %279 : vector<16x128xf32> to vector<16x128xbf16>
    %cst_151 = arith.constant dense<0.000000e+00> : vector<4x128xf32>
    %297 = tpu.matmul %295, %296, %cst_151 {dimension_numbers = #tpu.dot_dimension_numbers<[1], [0], [0], [1], [0, 0, 1, 1], [], []>} : vector<4x16xbf16>, vector<16x128xbf16>, vector<4x128xf32> -> vector<4x128xf32>
    %298 = arith.truncf %297 : vector<4x128xf32> to vector<4x128xbf16>
    %cst_152 = arith.constant dense<0.000000e+00> : vector<4x128xf32>
    %299 = tpu.matmul %298, %175, %cst_152 {dimension_numbers = #tpu.dot_dimension_numbers<[1], [0], [0], [1], [0, 0, 1, 1], [], []>} : vector<4x128xbf16>, vector<128x128xbf16>, vector<4x128xf32> -> vector<4x128xf32>
    %300 = vector.broadcast %179 : vector<1x128xf32> to vector<4x128xf32>
    %301 = arith.addf %299, %300 : vector<4x128xf32>
    %302 = arith.addf %263, %301 : vector<4x128xf32>
    %303 = arith.truncf %302 : vector<4x128xf32> to vector<4x128xbf16>
    %cst_153 = arith.constant dense<0.000000e+00> : vector<4x128xf32>
    %304 = tpu.matmul %303, %180, %cst_153 {dimension_numbers = #tpu.dot_dimension_numbers<[1], [0], [0], [1], [0, 0, 1, 1], [], []>} : vector<4x128xbf16>, vector<128x128xbf16>, vector<4x128xf32> -> vector<4x128xf32>
    %305 = vector.broadcast %181 : vector<1x128xf32> to vector<4x128xf32>
    %306 = arith.addf %304, %305 : vector<4x128xf32>
    %307 = arith.mulf %306, %306 : vector<4x128xf32>
    %cst_154 = arith.constant dense<0.000000e+00> : vector<4xf32>
    %308 = vector.multi_reduction <add>, %307, %cst_154 [1] : vector<4x128xf32> to vector<4xf32>
    %309 = vector.shape_cast %308 : vector<4xf32> to vector<4x1xf32>
    %cst_155 = arith.constant 1.000000e-24 : f32
    %310 = vector.broadcast %cst_155 : f32 to vector<4x1xf32>
    %311 = arith.maximumf %309, %310 : vector<4x1xf32>
    %312 = math.rsqrt %311 : vector<4x1xf32>
    %313 = vector.broadcast %312 : vector<4x1xf32> to vector<4x128xf32>
    %314 = arith.mulf %306, %313 : vector<4x128xf32>
    %c1_156 = arith.constant 1 : index
    %c0_157 = arith.constant 0 : index
    %c0_158 = arith.constant 0 : index
    %315 = vector.load %arg20[%c1_156, %c0_157, %c0_158] : memref<2x4x128xf32, #tpu.memory_space<vmem>>, vector<1x4x128xf32>
    %316 = vector.shape_cast %315 : vector<1x4x128xf32> to vector<4x128xf32>
    %317 = vector.shape_cast %314 : vector<4x128xf32> to vector<1x4x128xf32>
    tpu.vector_store %arg20[%c1_156, %c0_157, %c0_158], %317 {strides = array<i32>} : memref<2x4x128xf32, #tpu.memory_space<vmem>>, vector<1x4x128xf32>,
    return
  }
}

</mosaic_0001>

<llo_original>
// kernel: ip_retrieval_forward.3
$region0: #{ip_retrieval_forward.3}
  #allocation0 [shape = 'u32[]', space=smem, size = 0x4, offset = 0x4, fixed_abs, tag = 'smem constant byte address 0x4 - core index']
  #allocation1 [shape = 'u32[72,128]{1,0:T(1,128)}', space=vmem, size = 0x9000, scoped, tag = 'internal scratch']
  %s0 = inlined_call_operand.vmem [shape: f32[2,4,256], index: 0, kind: input, shape index: {}]
  %s1 = inlined_call_operand.vmem [shape: f32[2,1,128], index: 1, kind: input, shape index: {}]
  %s2 = inlined_call_operand.hbm [shape: f32[2,8,128], index: 2, kind: input, shape index: {}]
  %s3 = inlined_call_operand.vmem [shape: f32[2,4,128], index: 3, kind: input, shape index: {}]
  %s4 = inlined_call_operand.vmem [shape: f32[2,4,128], index: 4, kind: input, shape index: {}]
  %s5 = inlined_call_operand.vmem [shape: bf16[128,4], index: 5, kind: input, shape index: {}]
  %s6 = inlined_call_operand.vmem [shape: f32[128,1], index: 6, kind: input, shape index: {}]
  %s7 = inlined_call_operand.hbm [shape: bf16[128,128], index: 7, kind: input, shape index: {}]
  %s8 = inlined_call_operand.vmem [shape: f32[128,1], index: 8, kind: input, shape index: {}]
  %s9 = inlined_call_operand.hbm [shape: bf16[128,128], index: 9, kind: input, shape index: {}]
  %s10 = inlined_call_operand.hbm [shape: f32[1,128], index: 10, kind: input, shape index: {}]
  %s11 = inlined_call_operand.hbm [shape: bf16[128,128], index: 11, kind: input, shape index: {}]
  %s12 = inlined_call_operand.hbm [shape: f32[1,128], index: 12, kind: input, shape index: {}]
  %s13 = inlined_call_operand.hbm [shape: bf16[4,128], index: 13, kind: input, shape index: {}]
  %s14 = inlined_call_operand.vmem [shape: f32[4,1], index: 14, kind: input, shape index: {}]
  %s15 = inlined_call_operand.vmem [shape: f32[2,4,256], index: 15, kind: output, shape index: {}]
  %s16 = sld [smem:[#allocation0]]
  $region121: #{ip_retrieval_forward.3} parent=0
    _
  %s18 = ssub.s32 1, %s16
  %s19 = scalar_select 0, %s18, %s16
  $region1: #{ip_retrieval_forward.3} parent=0
    #allocation2 [shape = 'u8[8192]{0}', space=vmem, size = 0x2000, scoped, tag = 'input window, operand 2']
    #allocation3 [shape = 's32[2]{0}', space=sflag, size = 0x8, scoped, tag = 'scoped memory for ip_retrieval_forward.3']
    #allocation4 [shape = 'u8[32768]{0}', space=vmem, size = 0x8000, scoped, tag = 'input window, operand 7, single buffered']
    #allocation5 [shape = 's32[1]{0}', space=sflag, size = 0x4, scoped, tag = 'scoped memory for ip_retrieval_forward.3']
    #allocation6 [shape = 'u8[32768]{0}', space=vmem, size = 0x8000, scoped, tag = 'input window, operand 9, single buffered']
    #allocation7 [shape = 'u8[512]{0}', space=vmem, size = 0x400, scoped, tag = 'input window, operand 10, single buffered']
    #allocation8 [shape = 's32[1]{0}', space=sflag, size = 0x4, scoped, tag = 'scoped memory for ip_retrieval_forward.3']
    #allocation9 [shape = 'u8[32768]{0}', space=vmem, size = 0x8000, scoped, tag = 'input window, operand 11, single buffered']
    #allocation10 [shape = 'u8[512]{0}', space=vmem, size = 0x400, scoped, tag = 'input window, operand 12, single buffered']
    #allocation11 [shape = 's32[1]{0}', space=sflag, size = 0x4, scoped, tag = 'scoped memory for ip_retrieval_forward.3']
    #allocation12 [shape = 'u8[1024]{0}', space=vmem, size = 0x400, scoped, tag = 'input window, operand 13, single buffered']
    %20 = vsyncpa [#allocation3], 0
    %s21 = scalar_lea.sflag [#allocation3], 1
    %22 = vsyncpa %s21, 0
    %23 = vsyncpa [#allocation5], 0
    %24 = vsyncpa [#allocation8], 0
    %25 = vsyncpa [#allocation11], 0
    loop: start=0, step=1, limit=4
    $region2: #{ip_retrieval_forward.3} parent=1 // loop_pre_header
      _
    $region3: #{ip_retrieval_forward.3} parent=1 // loop_header
      %s27 = sphi 0, %s31
      %p28 = scmp.ge.s32.totalorder %s27, 4
      %s37 = sphi 0, %s39
      %s40 = sphi 0, %s37
      %s41 = sphi 0, %s40
      %s57 = sphi 0, %s41
      %s63 = sphi 0, %s65
      %s66 = sphi 0, %s63
      %s67 = sphi 0, %s66
      %s83 = sphi 0, %s67
      %s89 = sphi 0, %s91
      %s92 = sphi 0, %s89
      %s93 = sphi 0, %s92
      %s109 = sphi 0, %s93
      %s115 = sphi 0, %s117
      %s118 = sphi 0, %s115
      %s119 = sphi 0, %s118
      %s135 = sphi 0, %s119
      %s141 = sphi 0, %s143
      %s144 = sphi 0, %s141
      %s145 = sphi 0, %s144
      %s161 = sphi 0, %s145
      %s165 = sphi 0, %s165
      %s167 = sphi 0, %s165
      %s168 = sphi 0, %s167
      %s182 = sphi 0, %s168
      %s186 = sphi 0, %s186
      %s188 = sphi 0, %s186
      %s189 = sphi 0, %s188
      %s203 = sphi 0, %s189
      %s207 = sphi 0, %s207
      %s209 = sphi 0, %s207
      %s210 = sphi 0, %s209
      %s224 = sphi 0, %s210
      %s228 = sphi 0, %s228
      %s230 = sphi 0, %s228
      %s231 = sphi 0, %s230
      %s245 = sphi 0, %s231
      %s249 = sphi 0, %s249
      %s251 = sphi 0, %s249
      %s252 = sphi 0, %s251
      %s266 = sphi 0, %s252
      %s270 = sphi 0, %s270
      %s272 = sphi 0, %s270
      %s273 = sphi 0, %s272
      %s287 = sphi 0, %s273
      %s291 = sphi 0, %s291
      %s293 = sphi 0, %s291
      %s294 = sphi 0, %s293
      %s308 = sphi 0, %s294
      %s312 = sphi 0, %s312
      %s314 = sphi 0, %s312
      %s315 = sphi 0, %s314
      %s329 = sphi 0, %s315
      %s333 = sphi 0, %s333
      %s335 = sphi 0, %s333
      %s336 = sphi 0, %s335
      %s350 = sphi 0, %s336
      %s354 = sphi 0, %s354
      %s356 = sphi 0, %s354
      %s357 = sphi 0, %s356
      %s371 = sphi 0, %s357
      %s377 = sphi 0, %s379
      %s380 = sphi 0, %s377
      %s381 = sphi 0, %s380
      %s397 = sphi 0, %s381
    $region4: #{ip_retrieval_forward.3} parent=1 // loop_header_branch
      %30 = sbr.rel (%p28) target = $region8
    $region5: #{ip_retrieval_forward.3} parent=1 // loop_body
      %s32 = ssub.s32 %s27, 1
      %s33 = ssub.s32 %s27, 2
      %s34 = sadd.s32 %s27, 1
      %s35 = ssub.s32 %s27, %s34
      %p36 = scmp.eq.s32.totalorder %s35, 0
      %s38 = sadd.s32 %s37, 1
      %s39 = scalar_select %p36, %s37, %s38
      %p42 = pneg %p36
      %p43 = scmp.eq.s32.totalorder %s27, 1
      %p44 = por %p42, %p43
      %p45 = scmp.ne.s32.totalorder %s37, %s40
      %p46 = scmp.eq.s32.totalorder %s27, 0
      %p47 = por %p45, %p46
      %p48 = scmp.ne.s32.totalorder %s37, %s40
      %p49 = scmp.eq.s32.totalorder %s32, 1
      %p50 = por %p48, %p49
      %p51 = scmp.ne.s32.totalorder %s40, %s41
      %p52 = scmp.eq.s32.totalorder %s32, 0
      %p53 = por %p51, %p52
      %p54 = scmp.ne.s32.totalorder %s40, %s41
      %p55 = scmp.eq.s32.totalorder %s33, 1
      %p56 = por %p54, %p55
      %p58 = scmp.ne.s32.totalorder %s41, %s57
      %p59 = scmp.eq.s32.totalorder %s33, 0
      %p60 = por %p58, %p59
      %s61 = ssub.s32 %s27, %s34
      %p62 = scmp.eq.s32.totalorder %s61, 0
      %s64 = sadd.s32 %s63, 1
      %s65 = scalar_select %p62, %s63, %s64
      %p68 = pneg %p62
      %p69 = scmp.eq.s32.totalorder %s27, 1
      %p70 = por %p68, %p69
      %p71 = scmp.ne.s32.totalorder %s63, %s66
      %p72 = scmp.eq.s32.totalorder %s27, 0
      %p73 = por %p71, %p72
      %p74 = scmp.ne.s32.totalorder %s63, %s66
      %p75 = scmp.eq.s32.totalorder %s32, 1
      %p76 = por %p74, %p75
      %p77 = scmp.ne.s32.totalorder %s66, %s67
      %p78 = scmp.eq.s32.totalorder %s32, 0
      %p79 = por %p77, %p78
      %p80 = scmp.ne.s32.totalorder %s66, %s67
      %p81 = scmp.eq.s32.totalorder %s33, 1
      %p82 = por %p80, %p81
      %p84 = scmp.ne.s32.totalorder %s67, %s83
      %p85 = scmp.eq.s32.totalorder %s33, 0
      %p86 = por %p84, %p85
      %s87 = ssub.s32 %s27, %s34
      %p88 = scmp.eq.s32.totalorder %s87, 0
      %s90 = sadd.s32 %s89, 1
      %s91 = scalar_select %p88, %s89, %s90
      %p94 = pneg %p88
      %p95 = scmp.eq.s32.totalorder %s27, 1
      %p96 = por %p94, %p95
      %p97 = scmp.ne.s32.totalorder %s89, %s92
      %p98 = scmp.eq.s32.totalorder %s27, 0
      %p99 = por %p97, %p98
      %p100 = scmp.ne.s32.totalorder %s89, %s92
      %p101 = scmp.eq.s32.totalorder %s32, 1
      %p102 = por %p100, %p101
      %p103 = scmp.ne.s32.totalorder %s92, %s93
      %p104 = scmp.eq.s32.totalorder %s32, 0
      %p105 = por %p103, %p104
      %p106 = scmp.ne.s32.totalorder %s92, %s93
      %p107 = scmp.eq.s32.totalorder %s33, 1
      %p108 = por %p106, %p107
      %p110 = scmp.ne.s32.totalorder %s93, %s109
      %p111 = scmp.eq.s32.totalorder %s33, 0
      %p112 = por %p110, %p111
      %s113 = ssub.s32 %s27, %s34
      %p114 = scmp.eq.s32.totalorder %s113, 0
      %s116 = sadd.s32 %s115, 1
      %s117 = scalar_select %p114, %s115, %s116
      %p120 = pneg %p114
      %p121 = scmp.eq.s32.totalorder %s27, 1
      %p122 = por %p120, %p121
      %p123 = scmp.ne.s32.totalorder %s115, %s118
      %p124 = scmp.eq.s32.totalorder %s27, 0
      %p125 = por %p123, %p124
      %p126 = scmp.ne.s32.totalorder %s115, %s118
      %p127 = scmp.eq.s32.totalorder %s32, 1
      %p128 = por %p126, %p127
      %p129 = scmp.ne.s32.totalorder %s118, %s119
      %p130 = scmp.eq.s32.totalorder %s32, 0
      %p131 = por %p129, %p130
      %p132 = scmp.ne.s32.totalorder %s118, %s119
      %p133 = scmp.eq.s32.totalorder %s33, 1
      %p134 = por %p132, %p133
      %p136 = scmp.ne.s32.totalorder %s119, %s135
      %p137 = scmp.eq.s32.totalorder %s33, 0
      %p138 = por %p136, %p137
      %s139 = ssub.s32 %s27, %s34
      %p140 = scmp.eq.s32.totalorder %s139, 0
      %s142 = sadd.s32 %s141, 1
      %s143 = scalar_select %p140, %s141, %s142
      %p146 = pneg %p140
      %p147 = scmp.eq.s32.totalorder %s27, 1
      %p148 = por %p146, %p147
      %p149 = scmp.ne.s32.totalorder %s141, %s144
      %p150 = scmp.eq.s32.totalorder %s27, 0
      %p151 = por %p149, %p150
      %p152 = scmp.ne.s32.totalorder %s141, %s144
      %p153 = scmp.eq.s32.totalorder %s32, 1
      %p154 = por %p152, %p153
      %p155 = scmp.ne.s32.totalorder %s144, %s145
      %p156 = scmp.eq.s32.totalorder %s32, 0
      %p157 = por %p155, %p156
      %p158 = scmp.ne.s32.totalorder %s144, %s145
      %p159 = scmp.eq.s32.totalorder %s33, 1
      %p160 = por %p158, %p159
      %p162 = scmp.ne.s32.totalorder %s145, %s161
      %p163 = scmp.eq.s32.totalorder %s33, 0
      %p164 = por %p162, %p163
      %s166 = sadd.s32 %s165, 1
      %p169 = scmp.eq.s32.totalorder %s27, 1
      %p170 = scmp.ne.s32.totalorder %s165, %s167
      %p171 = scmp.eq.s32.totalorder %s27, 0
      %p172 = por %p170, %p171
      %p173 = scmp.ne.s32.totalorder %s165, %s167
      %p174 = scmp.eq.s32.totalorder %s32, 1
      %p175 = por %p173, %p174
      %p176 = scmp.ne.s32.totalorder %s167, %s168
      %p177 = scmp.eq.s32.totalorder %s32, 0
      %p178 = por %p176, %p177
      %p179 = scmp.ne.s32.totalorder %s167, %s168
      %p180 = scmp.eq.s32.totalorder %s33, 1
      %p181 = por %p179, %p180
      %p183 = scmp.ne.s32.totalorder %s168, %s182
      %p184 = scmp.eq.s32.totalorder %s33, 0
      %p185 = por %p183, %p184
      %s187 = sadd.s32 %s186, 1
      %p190 = scmp.eq.s32.totalorder %s27, 1
      %p191 = scmp.ne.s32.totalorder %s186, %s188
      %p192 = scmp.eq.s32.totalorder %s27, 0
      %p193 = por %p191, %p192
      %p194 = scmp.ne.s32.totalorder %s186, %s188
      %p195 = scmp.eq.s32.totalorder %s32, 1
      %p196 = por %p194, %p195
      %p197 = scmp.ne.s32.totalorder %s188, %s189
      %p198 = scmp.eq.s32.totalorder %s32, 0
      %p199 = por %p197, %p198
      %p200 = scmp.ne.s32.totalorder %s188, %s189
      %p201 = scmp.eq.s32.totalorder %s33, 1
      %p202 = por %p200, %p201
      %p204 = scmp.ne.s32.totalorder %s189, %s203
      %p205 = scmp.eq.s32.totalorder %s33, 0
      %p206 = por %p204, %p205
      %s208 = sadd.s32 %s207, 1
      %p211 = scmp.eq.s32.totalorder %s27, 1
      %p212 = scmp.ne.s32.totalorder %s207, %s209
      %p213 = scmp.eq.s32.totalorder %s27, 0
      %p214 = por %p212, %p213
      %p215 = scmp.ne.s32.totalorder %s207, %s209
      %p216 = scmp.eq.s32.totalorder %s32, 1
      %p217 = por %p215, %p216
      %p218 = scmp.ne.s32.totalorder %s209, %s210
      %p219 = scmp.eq.s32.totalorder %s32, 0
      %p220 = por %p218, %p219
      %p221 = scmp.ne.s32.totalorder %s209, %s210
      %p222 = scmp.eq.s32.totalorder %s33, 1
      %p223 = por %p221, %p222
      %p225 = scmp.ne.s32.totalorder %s210, %s224
      %p226 = scmp.eq.s32.totalorder %s33, 0
      %p227 = por %p225, %p226
      %s229 = sadd.s32 %s228, 1
      %p232 = scmp.eq.s32.totalorder %s27, 1
      %p233 = scmp.ne.s32.totalorder %s228, %s230
      %p234 = scmp.eq.s32.totalorder %s27, 0
      %p235 = por %p233, %p234
      %p236 = scmp.ne.s32.totalorder %s228, %s230
      %p237 = scmp.eq.s32.totalorder %s32, 1
      %p238 = por %p236, %p237
      %p239 = scmp.ne.s32.totalorder %s230, %s231
      %p240 = scmp.eq.s32.totalorder %s32, 0
      %p241 = por %p239, %p240
      %p242 = scmp.ne.s32.totalorder %s230, %s231
      %p243 = scmp.eq.s32.totalorder %s33, 1
      %p244 = por %p242, %p243
      %p246 = scmp.ne.s32.totalorder %s231, %s245
      %p247 = scmp.eq.s32.totalorder %s33, 0
      %p248 = por %p246, %p247
      %s250 = sadd.s32 %s249, 1
      %p253 = scmp.eq.s32.totalorder %s27, 1
      %p254 = scmp.ne.s32.totalorder %s249, %s251
      %p255 = scmp.eq.s32.totalorder %s27, 0
      %p256 = por %p254, %p255
      %p257 = scmp.ne.s32.totalorder %s249, %s251
      %p258 = scmp.eq.s32.totalorder %s32, 1
      %p259 = por %p257, %p258
      %p260 = scmp.ne.s32.totalorder %s251, %s252
      %p261 = scmp.eq.s32.totalorder %s32, 0
      %p262 = por %p260, %p261
      %p263 = scmp.ne.s32.totalorder %s251, %s252
      %p264 = scmp.eq.s32.totalorder %s33, 1
      %p265 = por %p263, %p264
      %p267 = scmp.ne.s32.totalorder %s252, %s266
      %p268 = scmp.eq.s32.totalorder %s33, 0
      %p269 = por %p267, %p268
      %s271 = sadd.s32 %s270, 1
      %p274 = scmp.eq.s32.totalorder %s27, 1
      %p275 = scmp.ne.s32.totalorder %s270, %s272
      %p276 = scmp.eq.s32.totalorder %s27, 0
      %p277 = por %p275, %p276
      %p278 = scmp.ne.s32.totalorder %s270, %s272
      %p279 = scmp.eq.s32.totalorder %s32, 1
      %p280 = por %p278, %p279
      %p281 = scmp.ne.s32.totalorder %s272, %s273
      %p282 = scmp.eq.s32.totalorder %s32, 0
      %p283 = por %p281, %p282
      %p284 = scmp.ne.s32.totalorder %s272, %s273
      %p285 = scmp.eq.s32.totalorder %s33, 1
      %p286 = por %p284, %p285
      %p288 = scmp.ne.s32.totalorder %s273, %s287
      %p289 = scmp.eq.s32.totalorder %s33, 0
      %p290 = por %p288, %p289
      %s292 = sadd.s32 %s291, 1
      %p295 = scmp.eq.s32.totalorder %s27, 1
      %p296 = scmp.ne.s32.totalorder %s291, %s293
      %p297 = scmp.eq.s32.totalorder %s27, 0
      %p298 = por %p296, %p297
      %p299 = scmp.ne.s32.totalorder %s291, %s293
      %p300 = scmp.eq.s32.totalorder %s32, 1
      %p301 = por %p299, %p300
      %p302 = scmp.ne.s32.totalorder %s293, %s294
      %p303 = scmp.eq.s32.totalorder %s32, 0
      %p304 = por %p302, %p303
      %p305 = scmp.ne.s32.totalorder %s293, %s294
      %p306 = scmp.eq.s32.totalorder %s33, 1
      %p307 = por %p305, %p306
      %p309 = scmp.ne.s32.totalorder %s294, %s308
      %p310 = scmp.eq.s32.totalorder %s33, 0
      %p311 = por %p309, %p310
      %s313 = sadd.s32 %s312, 1
      %p316 = scmp.eq.s32.totalorder %s27, 1
      %p317 = scmp.ne.s32.totalorder %s312, %s314
      %p318 = scmp.eq.s32.totalorder %s27, 0
      %p319 = por %p317, %p318
      %p320 = scmp.ne.s32.totalorder %s312, %s314
      %p321 = scmp.eq.s32.totalorder %s32, 1
      %p322 = por %p320, %p321
      %p323 = scmp.ne.s32.totalorder %s314, %s315
      %p324 = scmp.eq.s32.totalorder %s32, 0
      %p325 = por %p323, %p324
      %p326 = scmp.ne.s32.totalorder %s314, %s315
      %p327 = scmp.eq.s32.totalorder %s33, 1
      %p328 = por %p326, %p327
      %p330 = scmp.ne.s32.totalorder %s315, %s329
      %p331 = scmp.eq.s32.totalorder %s33, 0
      %p332 = por %p330, %p331
      %s334 = sadd.s32 %s333, 1
      %p337 = scmp.eq.s32.totalorder %s27, 1
      %p338 = scmp.ne.s32.totalorder %s333, %s335
      %p339 = scmp.eq.s32.totalorder %s27, 0
      %p340 = por %p338, %p339
      %p341 = scmp.ne.s32.totalorder %s333, %s335
      %p342 = scmp.eq.s32.totalorder %s32, 1
      %p343 = por %p341, %p342
      %p344 = scmp.ne.s32.totalorder %s335, %s336
      %p345 = scmp.eq.s32.totalorder %s32, 0
      %p346 = por %p344, %p345
      %p347 = scmp.ne.s32.totalorder %s335, %s336
      %p348 = scmp.eq.s32.totalorder %s33, 1
      %p349 = por %p347, %p348
      %p351 = scmp.ne.s32.totalorder %s336, %s350
      %p352 = scmp.eq.s32.totalorder %s33, 0
      %p353 = por %p351, %p352
      %s355 = sadd.s32 %s354, 1
      %p358 = scmp.eq.s32.totalorder %s27, 1
      %p359 = scmp.ne.s32.totalorder %s354, %s356
      %p360 = scmp.eq.s32.totalorder %s27, 0
      %p361 = por %p359, %p360
      %p362 = scmp.ne.s32.totalorder %s354, %s356
      %p363 = scmp.eq.s32.totalorder %s32, 1
      %p364 = por %p362, %p363
      %p365 = scmp.ne.s32.totalorder %s356, %s357
      %p366 = scmp.eq.s32.totalorder %s32, 0
      %p367 = por %p365, %p366
      %p368 = scmp.ne.s32.totalorder %s356, %s357
      %p369 = scmp.eq.s32.totalorder %s33, 1
      %p370 = por %p368, %p369
      %p372 = scmp.ne.s32.totalorder %s357, %s371
      %p373 = scmp.eq.s32.totalorder %s33, 0
      %p374 = por %p372, %p373
      %s375 = ssub.s32 %s27, %s34
      %p376 = scmp.eq.s32.totalorder %s375, 0
      %s378 = sadd.s32 %s377, 1
      %s379 = scalar_select %p376, %s377, %s378
      %p382 = pneg %p376
      %p383 = scmp.eq.s32.totalorder %s27, 1
      %p384 = por %p382, %p383
      %p385 = scmp.ne.s32.totalorder %s377, %s380
      %p386 = scmp.eq.s32.totalorder %s27, 0
      %p387 = por %p385, %p386
      %p388 = scmp.ne.s32.totalorder %s377, %s380
      %p389 = scmp.eq.s32.totalorder %s32, 1
      %p390 = por %p388, %p389
      %p391 = scmp.ne.s32.totalorder %s380, %s381
      %p392 = scmp.eq.s32.totalorder %s32, 0
      %p393 = por %p391, %p392
      %p394 = scmp.ne.s32.totalorder %s380, %s381
      %p395 = scmp.eq.s32.totalorder %s33, 1
      %p396 = por %p394, %p395
      %p398 = scmp.ne.s32.totalorder %s381, %s397
      %p399 = scmp.eq.s32.totalorder %s33, 0
      %p400 = por %p398, %p399
      %p401 = scmp.le.s32.totalorder 1, %s27
      %p402 = scmp.lt.s32.totalorder %s27, 3
      %p403 = pnand %p401, %p402
      %p404 = pneg %p403
      // Predicated region
      $region9: #{ip_retrieval_forward.3} parent=5 // pred_check
        _
      $region10: #{ip_retrieval_forward.3} parent=5 // pred_check_branch
        %406 = sbr.rel (%p403) target = $region12
      $region11: #{ip_retrieval_forward.3} parent=5 // pred_region
        %s407 = ssub.s32 %s27, 1
        // Predicated region
        $region13: #{ip_retrieval_forward.3} parent=11 // pred_check
          %p408 = pneg %p178
        $region14: #{ip_retrieval_forward.3} parent=11 // pred_check_branch
          %410 = sbr.rel (%p408) target = $region16
        $region15: #{ip_retrieval_forward.3} parent=11 // pred_region
          _
        $region16: #{ip_retrieval_forward.3} parent=11 // pred_fallthru
          _
        // Predicated region
        $region17: #{ip_retrieval_forward.3} parent=11 // pred_check
          %p411 = pneg %p199
        $region18: #{ip_retrieval_forward.3} parent=11 // pred_check_branch
          %413 = sbr.rel (%p411) target = $region20
        $region19: #{ip_retrieval_forward.3} parent=11 // pred_region
          _
        $region20: #{ip_retrieval_forward.3} parent=11 // pred_fallthru
          _
        // Predicated region
        $region21: #{ip_retrieval_forward.3} parent=11 // pred_check
          %p414 = pneg %p220
        $region22: #{ip_retrieval_forward.3} parent=11 // pred_check_branch
          %416 = sbr.rel (%p414) target = $region24
        $region23: #{ip_retrieval_forward.3} parent=11 // pred_region
          %418 = vsyncadd [#allocation5], 0
          %s419 = sshll.u32 %s7, 4
          %s420 = int_to_ptr.hbm [resolvable:$true] %s419
          %s421 = sshll.u32 [#allocation4], 4
          %s422 = int_to_ptr.vmem [resolvable:$true] %s421
          %427 = dma.hbm_to_vmem [thread:$0]  %s420, 1024, %s422, [#allocation5], 64, 64, 4
        $region24: #{ip_retrieval_forward.3} parent=11 // pred_fallthru
          _
        // Predicated region
        $region25: #{ip_retrieval_forward.3} parent=11 // pred_check
          %p428 = pneg %p241
        $region26: #{ip_retrieval_forward.3} parent=11 // pred_check_branch
          %430 = sbr.rel (%p428) target = $region28
        $region27: #{ip_retrieval_forward.3} parent=11 // pred_region
          _
        $region28: #{ip_retrieval_forward.3} parent=11 // pred_fallthru
          _
        // Predicated region
        $region29: #{ip_retrieval_forward.3} parent=11 // pred_check
          %p431 = pneg %p262
        $region30: #{ip_retrieval_forward.3} parent=11 // pred_check_branch
          %433 = sbr.rel (%p431) target = $region32
        $region31: #{ip_retrieval_forward.3} parent=11 // pred_region
          %435 = vsyncadd [#allocation5], 0
          %s436 = sshll.u32 %s9, 4
          %s437 = int_to_ptr.hbm [resolvable:$true] %s436
          %s438 = sshll.u32 [#allocation6], 4
          %s439 = int_to_ptr.vmem [resolvable:$true] %s438
          %444 = dma.hbm_to_vmem [thread:$0]  %s437, 1024, %s439, [#allocation5], 64, 64, 4
        $region32: #{ip_retrieval_forward.3} parent=11 // pred_fallthru
          _
        // Predicated region
        $region33: #{ip_retrieval_forward.3} parent=11 // pred_check
          %p445 = pneg %p283
        $region34: #{ip_retrieval_forward.3} parent=11 // pred_check_branch
          %447 = sbr.rel (%p445) target = $region36
        $region35: #{ip_retrieval_forward.3} parent=11 // pred_region
          %449 = vsyncadd [#allocation8], 0
          %s451 = sshll.u32 %s10, 4
          %s452 = int_to_ptr.hbm [resolvable:$true] %s451
          %s453 = sshll.u32 [#allocation7], 4
          %s454 = int_to_ptr.vmem [resolvable:$true] %s453
          %456 = dma.hbm_to_vmem [thread:$0]  %s452, 16, %s454, [#allocation8]
        $region36: #{ip_retrieval_forward.3} parent=11 // pred_fallthru
          _
        // Predicated region
        $region37: #{ip_retrieval_forward.3} parent=11 // pred_check
          %p457 = pneg %p304
        $region38: #{ip_retrieval_forward.3} parent=11 // pred_check_branch
          %459 = sbr.rel (%p457) target = $region40
        $region39: #{ip_retrieval_forward.3} parent=11 // pred_region
          %461 = vsyncadd [#allocation8], 0
          %s462 = sshll.u32 %s11, 4
          %s463 = int_to_ptr.hbm [resolvable:$true] %s462
          %s464 = sshll.u32 [#allocation9], 4
          %s465 = int_to_ptr.vmem [resolvable:$true] %s464
          %470 = dma.hbm_to_vmem [thread:$0]  %s463, 1024, %s465, [#allocation8], 64, 64, 4
        $region40: #{ip_retrieval_forward.3} parent=11 // pred_fallthru
          _
        // Predicated region
        $region41: #{ip_retrieval_forward.3} parent=11 // pred_check
          %p471 = pneg %p325
        $region42: #{ip_retrieval_forward.3} parent=11 // pred_check_branch
          %473 = sbr.rel (%p471) target = $region44
        $region43: #{ip_retrieval_forward.3} parent=11 // pred_region
          %475 = vsyncadd [#allocation11], 0
          %s477 = sshll.u32 %s12, 4
          %s478 = int_to_ptr.hbm [resolvable:$true] %s477
          %s479 = sshll.u32 [#allocation10], 4
          %s480 = int_to_ptr.vmem [resolvable:$true] %s479
          %482 = dma.hbm_to_vmem [thread:$0]  %s478, 16, %s480, [#allocation11]
        $region44: #{ip_retrieval_forward.3} parent=11 // pred_fallthru
          _
        // Predicated region
        $region45: #{ip_retrieval_forward.3} parent=11 // pred_check
          %p483 = pneg %p346
        $region46: #{ip_retrieval_forward.3} parent=11 // pred_check_branch
          %485 = sbr.rel (%p483) target = $region48
        $region47: #{ip_retrieval_forward.3} parent=11 // pred_region
          %487 = vsyncadd [#allocation11], 0
          %s489 = sshll.u32 %s13, 4
          %s490 = int_to_ptr.hbm [resolvable:$true] %s489
          %s491 = sshll.u32 [#allocation12], 4
          %s492 = int_to_ptr.vmem [resolvable:$true] %s491
          %494 = dma.hbm_to_vmem [thread:$0]  %s490, 32, %s492, [#allocation11]
        $region48: #{ip_retrieval_forward.3} parent=11 // pred_fallthru
          _
        // Predicated region
        $region49: #{ip_retrieval_forward.3} parent=11 // pred_check
          %p495 = pneg %p367
        $region50: #{ip_retrieval_forward.3} parent=11 // pred_check_branch
          %497 = sbr.rel (%p495) target = $region52
        $region51: #{ip_retrieval_forward.3} parent=11 // pred_region
          _
        $region52: #{ip_retrieval_forward.3} parent=11 // pred_fallthru
          _
      $region12: #{ip_retrieval_forward.3} parent=5 // pred_fallthru
        _
      %p498 = scmp.lt.s32.totalorder %s27, 2
      // Predicated region
      $region53: #{ip_retrieval_forward.3} parent=5 // pred_check
        %p499 = pneg %p498
      $region54: #{ip_retrieval_forward.3} parent=5 // pred_check_branch
        %501 = sbr.rel (%p499) target = $region56
      $region55: #{ip_retrieval_forward.3} parent=5 // pred_region
        // Predicated region
        $region57: #{ip_retrieval_forward.3} parent=55 // pred_check
          %p502 = pneg %p47
        $region58: #{ip_retrieval_forward.3} parent=55 // pred_check_branch
          %504 = sbr.rel (%p502) target = $region60
        $region59: #{ip_retrieval_forward.3} parent=55 // pred_region
          %p505 = scmp.lt.s32.totalorder %s27, 1
          %s506 = scalar_select %p505, %s27, 1
          %s507 = smul.addr %s506, 2
          %s508 = smul.addr %s507, 4
          %s509 = scalar_lea.vmem %s0, %s508
        $region60: #{ip_retrieval_forward.3} parent=55 // pred_fallthru
          _
        // Predicated region
        $region61: #{ip_retrieval_forward.3} parent=55 // pred_check
          %p510 = pneg %p73
        $region62: #{ip_retrieval_forward.3} parent=55 // pred_check_branch
          %512 = sbr.rel (%p510) target = $region64
        $region63: #{ip_retrieval_forward.3} parent=55 // pred_region
          %p513 = scmp.lt.s32.totalorder %s27, 1
          %s514 = scalar_select %p513, %s27, 1
          %s515 = scalar_lea.vmem %s1, %s514
        $region64: #{ip_retrieval_forward.3} parent=55 // pred_fallthru
          _
        // Predicated region
        $region65: #{ip_retrieval_forward.3} parent=55 // pred_check
          %p516 = pneg %p99
        $region66: #{ip_retrieval_forward.3} parent=55 // pred_check_branch
          %518 = sbr.rel (%p516) target = $region68
        $region67: #{ip_retrieval_forward.3} parent=55 // pred_region
          %s519 = sand.u32 %s89, 1
          %s520 = scalar_lea.sflag [#allocation3], %s519
          %s521 = sand.u32 %s89, 1
          %s522 = smul.addr %s521, 8
          %s523 = scalar_lea.vmem [#allocation2], %s522
          %525 = vsyncadd %s520, 0
          %s526 = smul.addr %s27, 8
          %s527 = scalar_lea.hbm %s2, %s526
          %s529 = sshll.u32 %s527, 4
          %s530 = int_to_ptr.hbm [resolvable:$true] %s529
          %s531 = sshll.u32 %s523, 4
          %s532 = int_to_ptr.vmem [resolvable:$true] %s531
          %534 = dma.hbm_to_vmem [thread:$0]  %s530, 128, %s532, %s520
        $region68: #{ip_retrieval_forward.3} parent=55 // pred_fallthru
          _
        // Predicated region
        $region69: #{ip_retrieval_forward.3} parent=55 // pred_check
          %p535 = pneg %p125
        $region70: #{ip_retrieval_forward.3} parent=55 // pred_check_branch
          %537 = sbr.rel (%p535) target = $region72
        $region71: #{ip_retrieval_forward.3} parent=55 // pred_region
          %p538 = scmp.lt.s32.totalorder %s27, 1
          %s539 = scalar_select %p538, %s27, 1
          %s540 = smul.addr %s539, 4
          %s541 = scalar_lea.vmem %s3, %s540
        $region72: #{ip_retrieval_forward.3} parent=55 // pred_fallthru
          _
        // Predicated region
        $region73: #{ip_retrieval_forward.3} parent=55 // pred_check
          %p542 = pneg %p151
        $region74: #{ip_retrieval_forward.3} parent=55 // pred_check_branch
          %544 = sbr.rel (%p542) target = $region76
        $region75: #{ip_retrieval_forward.3} parent=55 // pred_region
          %p545 = scmp.lt.s32.totalorder %s27, 1
          %s546 = scalar_select %p545, %s27, 1
          %s547 = smul.addr %s546, 4
          %s548 = scalar_lea.vmem %s4, %s547
        $region76: #{ip_retrieval_forward.3} parent=55 // pred_fallthru
          _
      $region56: #{ip_retrieval_forward.3} parent=5 // pred_fallthru
        _
      %p549 = scmp.le.s32.totalorder 1, %s27
      %p550 = scmp.lt.s32.totalorder %s27, 3
      %p551 = pnand %p549, %p550
      %p552 = pneg %p551
      // Predicated region
      $region77: #{ip_retrieval_forward.3} parent=5 // pred_check
        _
      $region78: #{ip_retrieval_forward.3} parent=5 // pred_check_branch
        %554 = sbr.rel (%p551) target = $region80
      $region79: #{ip_retrieval_forward.3} parent=5 // pred_region
        %s555 = ssub.s32 %s27, 1
        %s556 = sand.u32 %s92, 1
        %s557 = scalar_lea.sflag [#allocation3], %s556
        %s558 = sand.u32 %s92, 1
        %s559 = smul.addr %s558, 8
        %s560 = scalar_lea.vmem [#allocation2], %s559
        // Predicated region
        $region81: #{ip_retrieval_forward.3} parent=79 // pred_check
          %p561 = pneg %p105
        $region82: #{ip_retrieval_forward.3} parent=79 // pred_check_branch
          %563 = sbr.rel (%p561) target = $region84
        $region83: #{ip_retrieval_forward.3} parent=79 // pred_region
          %565 = dma.done %s557, 128
        $region84: #{ip_retrieval_forward.3} parent=79 // pred_fallthru
          _
        // Predicated region
        $region85: #{ip_retrieval_forward.3} parent=79 // pred_check
          %p566 = pneg %p220
        $region86: #{ip_retrieval_forward.3} parent=79 // pred_check_branch
          %568 = sbr.rel (%p566) target = $region88
        $region87: #{ip_retrieval_forward.3} parent=79 // pred_region
          %570 = dma.done [#allocation5], 1024
        $region88: #{ip_retrieval_forward.3} parent=79 // pred_fallthru
          _
        // Predicated region
        $region89: #{ip_retrieval_forward.3} parent=79 // pred_check
          %p571 = pneg %p262
        $region90: #{ip_retrieval_forward.3} parent=79 // pred_check_branch
          %573 = sbr.rel (%p571) target = $region92
        $region91: #{ip_retrieval_forward.3} parent=79 // pred_region
          %575 = dma.done [#allocation5], 1024
        $region92: #{ip_retrieval_forward.3} parent=79 // pred_fallthru
          _
        // Predicated region
        $region93: #{ip_retrieval_forward.3} parent=79 // pred_check
          %p576 = pneg %p283
        $region94: #{ip_retrieval_forward.3} parent=79 // pred_check_branch
          %578 = sbr.rel (%p576) target = $region96
        $region95: #{ip_retrieval_forward.3} parent=79 // pred_region
          %580 = dma.done [#allocation8], 16
        $region96: #{ip_retrieval_forward.3} parent=79 // pred_fallthru
          _
        // Predicated region
        $region97: #{ip_retrieval_forward.3} parent=79 // pred_check
          %p581 = pneg %p304
        $region98: #{ip_retrieval_forward.3} parent=79 // pred_check_branch
          %583 = sbr.rel (%p581) target = $region100
        $region99: #{ip_retrieval_forward.3} parent=79 // pred_region
          %585 = dma.done [#allocation8], 1024
        $region100: #{ip_retrieval_forward.3} parent=79 // pred_fallthru
          _
        // Predicated region
        $region101: #{ip_retrieval_forward.3} parent=79 // pred_check
          %p586 = pneg %p325
        $region102: #{ip_retrieval_forward.3} parent=79 // pred_check_branch
          %588 = sbr.rel (%p586) target = $region104
        $region103: #{ip_retrieval_forward.3} parent=79 // pred_region
          %590 = dma.done [#allocation11], 16
        $region104: #{ip_retrieval_forward.3} parent=79 // pred_fallthru
          _
        // Predicated region
        $region105: #{ip_retrieval_forward.3} parent=79 // pred_check
          %p591 = pneg %p346
        $region106: #{ip_retrieval_forward.3} parent=79 // pred_check_branch
          %593 = sbr.rel (%p591) target = $region108
        $region107: #{ip_retrieval_forward.3} parent=79 // pred_region
          %595 = dma.done [#allocation11], 32
        $region108: #{ip_retrieval_forward.3} parent=79 // pred_fallthru
          _
        %p596 = scmp.lt.s32.totalorder %s32, 1
        %s597 = scalar_select %p596, %s32, 1
        %s598 = smul.addr %s597, 2
        %s599 = smul.addr %s598, 4
        %s600 = scalar_lea.vmem %s0, %s599
        %p601 = pneg %p53
        %p602 = pneg %p50
        %p603 = scmp.lt.s32.totalorder %s32, 1
        %s604 = scalar_select %p603, %s32, 1
        %s605 = scalar_lea.vmem %s1, %s604
        %p606 = pneg %p79
        %p607 = pneg %p76
        %s608 = sand.u32 %s92, 1
        %s609 = scalar_lea.sflag [#allocation3], %s608
        %s610 = sand.u32 %s92, 1
        %s611 = smul.addr %s610, 8
        %s612 = scalar_lea.vmem [#allocation2], %s611
        %p613 = pneg %p105
        %p614 = pneg %p102
        %p615 = scmp.lt.s32.totalorder %s32, 1
        %s616 = scalar_select %p615, %s32, 1
        %s617 = smul.addr %s616, 4
        %s618 = scalar_lea.vmem %s3, %s617
        %p619 = pneg %p131
        %p620 = pneg %p128
        %p621 = scmp.lt.s32.totalorder %s32, 1
        %s622 = scalar_select %p621, %s32, 1
        %s623 = smul.addr %s622, 4
        %s624 = scalar_lea.vmem %s4, %s623
        %p625 = pneg %p157
        %p626 = pneg %p154
        %p627 = pneg %p178
        %p628 = pneg %p175
        %p629 = pneg %p199
        %p630 = pneg %p196
        %p631 = pneg %p220
        %p632 = pneg %p217
        %p633 = pneg %p241
        %p634 = pneg %p238
        %p635 = pneg %p262
        %p636 = pneg %p259
        %p637 = pneg %p283
        %p638 = pneg %p280
        %p639 = pneg %p304
        %p640 = pneg %p301
        %p641 = pneg %p325
        %p642 = pneg %p322
        %p643 = pneg %p346
        %p644 = pneg %p343
        %p645 = pneg %p367
        %p646 = pneg %p364
        %p647 = pneg %p393
        %p648 = pneg %p390
        %p649 = scmp.lt.s32.totalorder %s32, 1
        %s650 = scalar_select %p649, %s32, 1
        %s651 = smul.addr %s650, 2
        %s652 = smul.addr %s651, 4
        %s653 = scalar_lea.vmem %s15, %s652
        %p654 = scmp.lt.s32.totalorder %s32, 1
        %s655 = scalar_select %p654, %s32, 1
        %s656 = smul.addr %s655, 2
        %s657 = smul.addr %s656, 4
        %s658 = scalar_lea.vmem %s0, %s657
        %p659 = scmp.lt.s32.totalorder %s32, 1
        %s660 = scalar_select %p659, %s32, 1
        %s661 = scalar_lea.vmem %s1, %s660
        %p662 = scmp.lt.s32.totalorder %s32, 1
        %s663 = scalar_select %p662, %s32, 1
        %s664 = smul.addr %s663, 4
        %s665 = scalar_lea.vmem %s3, %s664
        %p666 = scmp.lt.s32.totalorder %s32, 1
        %s667 = scalar_select %p666, %s32, 1
        %s668 = smul.addr %s667, 4
        %s669 = scalar_lea.vmem %s4, %s668
        %p670 = scmp.lt.s32.totalorder %s32, 1
        %s671 = scalar_select %p670, %s32, 1
        %s672 = smul.addr %s671, 2
        %s673 = smul.addr %s672, 4
        %s674 = scalar_lea.vmem %s15, %s673
        %v676 = vld [vmem:[%s658] sm:$0xff]
        %v677 = vld [vmem:[%s5] sm:$0xf]
        %v678 = vld [vmem:[%s5 + $0x4] sm:$0xf]
        %v679 = vld [vmem:[%s5 + $0x8] sm:$0xf]
        %v680 = vld [vmem:[%s5 + $0xc] sm:$0xf]
        %v681 = vld [vmem:[%s5 + $0x10] sm:$0xf]
        %v682 = vld [vmem:[%s5 + $0x14] sm:$0xf]
        %v683 = vld [vmem:[%s5 + $0x18] sm:$0xf]
        %v684 = vld [vmem:[%s5 + $0x1c] sm:$0xf]
        %v685 = vld [vmem:[%s5 + $0x20] sm:$0xf]
        %v686 = vld [vmem:[%s5 + $0x24] sm:$0xf]
        %v687 = vld [vmem:[%s5 + $0x28] sm:$0xf]
        %v688 = vld [vmem:[%s5 + $0x2c] sm:$0xf]
        %v689 = vld [vmem:[%s5 + $0x30] sm:$0xf]
        %v690 = vld [vmem:[%s5 + $0x34] sm:$0xf]
        %v691 = vld [vmem:[%s5 + $0x38] sm:$0xf]
        %v692 = vld [vmem:[%s5 + $0x3c] sm:$0xf]
        %694 = vst [vmem:[#allocation1] ss:$2 sm:$0xff] %v676
        %v695 = vld.sshfl [vmem:[#allocation1] sm:$0xff pattern:$0x75316420]
        %v696 = vld.sshfl [vmem:[#allocation1 + $0x8] sm:$0xff pattern:$0x75316420]
        %v699 = vpack.c.bf16 %v695, %v695
        %v700 = vpack.c.bf16 %v696, %v696
        %v701 = vld [vmem:[%s6] sm:$0xff]
        %v702 = vld [vmem:[%s6 + $0x8] sm:$0xff]
        %v703 = vld [vmem:[%s6 + $0x10] sm:$0xff]
        %v704 = vld [vmem:[%s6 + $0x18] sm:$0xff]
        %v705 = vld [vmem:[%s6 + $0x20] sm:$0xff]
        %v706 = vld [vmem:[%s6 + $0x28] sm:$0xff]
        %v707 = vld [vmem:[%s6 + $0x30] sm:$0xff]
        %v708 = vld [vmem:[%s6 + $0x38] sm:$0xff]
        %v709 = vld [vmem:[%s6 + $0x40] sm:$0xff]
        %v710 = vld [vmem:[%s6 + $0x48] sm:$0xff]
        %v711 = vld [vmem:[%s6 + $0x50] sm:$0xff]
        %v712 = vld [vmem:[%s6 + $0x58] sm:$0xff]
        %v713 = vld [vmem:[%s6 + $0x60] sm:$0xff]
        %v714 = vld [vmem:[%s6 + $0x68] sm:$0xff]
        %v715 = vld [vmem:[%s6 + $0x70] sm:$0xff]
        %v716 = vld [vmem:[%s6 + $0x78] sm:$0xff]
        %718 = vset.pattern.permute.xlu0 0
        %719 = vperm.xlu0 %718, %v701
        %v720 = vpop.permute.xlu0 %719
        %723 = vset.pattern.permute.xlu0 0
        %724 = vperm.xlu0 %723, %v702
        %v725 = vpop.permute.xlu0 %724
        %728 = vset.pattern.permute.xlu0 0
        %729 = vperm.xlu0 %728, %v703
        %v730 = vpop.permute.xlu0 %729
        %733 = vset.pattern.permute.xlu0 0
        %734 = vperm.xlu0 %733, %v704
        %v735 = vpop.permute.xlu0 %734
        %738 = vset.pattern.permute.xlu0 0
        %739 = vperm.xlu0 %738, %v705
        %v740 = vpop.permute.xlu0 %739
        %743 = vset.pattern.permute.xlu0 0
        %744 = vperm.xlu0 %743, %v706
        %v745 = vpop.permute.xlu0 %744
        %748 = vset.pattern.permute.xlu0 0
        %749 = vperm.xlu0 %748, %v707
        %v750 = vpop.permute.xlu0 %749
        %753 = vset.pattern.permute.xlu0 0
        %754 = vperm.xlu0 %753, %v708
        %v755 = vpop.permute.xlu0 %754
        %758 = vset.pattern.permute.xlu0 0
        %759 = vperm.xlu0 %758, %v709
        %v760 = vpop.permute.xlu0 %759
        %763 = vset.pattern.permute.xlu0 0
        %764 = vperm.xlu0 %763, %v710
        %v765 = vpop.permute.xlu0 %764
        %768 = vset.pattern.permute.xlu0 0
        %769 = vperm.xlu0 %768, %v711
        %v770 = vpop.permute.xlu0 %769
        %773 = vset.pattern.permute.xlu0 0
        %774 = vperm.xlu0 %773, %v712
        %v775 = vpop.permute.xlu0 %774
        %778 = vset.pattern.permute.xlu0 0
        %779 = vperm.xlu0 %778, %v713
        %v780 = vpop.permute.xlu0 %779
        %783 = vset.pattern.permute.xlu0 0
        %784 = vperm.xlu0 %783, %v714
        %v785 = vpop.permute.xlu0 %784
        %788 = vset.pattern.permute.xlu0 0
        %789 = vperm.xlu0 %788, %v715
        %v790 = vpop.permute.xlu0 %789
        %793 = vset.pattern.permute.xlu0 0
        %794 = vperm.xlu0 %793, %v716
        %v795 = vpop.permute.xlu0 %794
        %v813 = vunpack.c.l.b16 %v677
        %v814 = vunpack.c.l.b16 %v678
        %v815 = vunpack.c.l.b16 %v679
        %v816 = vunpack.c.l.b16 %v680
        %v817 = vunpack.c.l.b16 %v681
        %v818 = vunpack.c.l.b16 %v682
        %v819 = vunpack.c.l.b16 %v683
        %v820 = vunpack.c.l.b16 %v684
        %v821 = vunpack.c.l.b16 %v685
        %v822 = vunpack.c.l.b16 %v686
        %v823 = vunpack.c.l.b16 %v687
        %v824 = vunpack.c.l.b16 %v688
        %v825 = vunpack.c.l.b16 %v689
        %v826 = vunpack.c.l.b16 %v690
        %v827 = vunpack.c.l.b16 %v691
        %v828 = vunpack.c.l.b16 %v692
        %v829 = vpack.c.b16 %v814, %v813
        %v830 = vpack.c.b16 %v816, %v815
        %v831 = vpack.c.b16 %v818, %v817
        %v832 = vpack.c.b16 %v820, %v819
        %v833 = vpack.c.b16 %v822, %v821
        %v834 = vpack.c.b16 %v824, %v823
        %v835 = vpack.c.b16 %v826, %v825
        %v836 = vpack.c.b16 %v828, %v827
        %vm837 = vcmask 31744
        %v839 = vsel %vm837, %v829, 0
        %v842 = vsel %vm837, %v830, 0
        %v845 = vsel %vm837, %v831, 0
        %v848 = vsel %vm837, %v832, 0
        %v851 = vsel %vm837, %v833, 0
        %v854 = vsel %vm837, %v834, 0
        %v857 = vsel %vm837, %v835, 0
        %v860 = vsel %vm837, %v836, 0
        %vm862 = vcmask 1041408
        %v864 = vsel %vm862, %v699, 0
        %v867 = vsel %vm862, %v700, 0
        %869 = vmatpush.bf16.msra.mxu0 0
        %870 = vmatpush.bf16.msra.mxu0 0
        %871 = vmatpush.bf16.msra.mxu0 0
        %872 = vmatpush.bf16.msra.mxu0 0
        %873 = vmatpush.bf16.msra.mxu0 0
        %874 = vmatpush.bf16.msra.mxu0 0
        %875 = vmatpush.bf16.msra.mxu0 0
        %876 = vmatpush.bf16.msra.mxu0 %v864
        %877 = vmatmul.bf16.gmra.mxu0 %v839
        %v878 = vpop.f32.mrf.mxu0
        %v879 = vadd.f32 %v720, %v878
        %v880 = vpop.f32.mrf.mxu0
        %v881 = vadd.f32 %v725, %v880
        %882 = vmatmul.bf16.gmra.mxu0 %v842
        %v883 = vpop.f32.mrf.mxu0
        %v884 = vadd.f32 %v730, %v883
        %v885 = vpop.f32.mrf.mxu0
        %v886 = vadd.f32 %v735, %v885
        %887 = vmatmul.bf16.gmra.mxu0 %v845
        %v888 = vpop.f32.mrf.mxu0
        %v889 = vadd.f32 %v740, %v888
        %v890 = vpop.f32.mrf.mxu0
        %v891 = vadd.f32 %v745, %v890
        %892 = vmatmul.bf16.gmra.mxu0 %v848
        %v893 = vpop.f32.mrf.mxu0
        %v894 = vadd.f32 %v750, %v893
        %v895 = vpop.f32.mrf.mxu0
        %v896 = vadd.f32 %v755, %v895
        %897 = vmatmul.bf16.gmra.mxu0 %v851
        %v898 = vpop.f32.mrf.mxu0
        %v899 = vadd.f32 %v760, %v898
        %v900 = vpop.f32.mrf.mxu0
        %v901 = vadd.f32 %v765, %v900
        %902 = vmatmul.bf16.gmra.mxu0 %v854
        %v903 = vpop.f32.mrf.mxu0
        %v904 = vadd.f32 %v770, %v903
        %v905 = vpop.f32.mrf.mxu0
        %v906 = vadd.f32 %v775, %v905
        %907 = vmatmul.bf16.gmra.mxu0 %v857
        %v908 = vpop.f32.mrf.mxu0
        %v909 = vadd.f32 %v780, %v908
        %v910 = vpop.f32.mrf.mxu0
        %v911 = vadd.f32 %v785, %v910
        %912 = vmatmul.bf16.gmra.mxu0 %v860
        %v913 = vpop.f32.mrf.mxu0
        %v914 = vadd.f32 %v790, %v913
        %v915 = vpop.f32.mrf.mxu0
        %v916 = vadd.f32 %v795, %v915
        %917 = vdwg.mxu0
        %918 = vmatpush.bf16.msra.mxu0 0
        %919 = vmatpush.bf16.msra.mxu0 0
        %920 = vmatpush.bf16.msra.mxu0 0
        %921 = vmatpush.bf16.msra.mxu0 0
        %922 = vmatpush.bf16.msra.mxu0 0
        %923 = vmatpush.bf16.msra.mxu0 0
        %924 = vmatpush.bf16.msra.mxu0 0
        %925 = vmatpush.bf16.msra.mxu0 %v867
        %926 = vmatmul.bf16.gmra.mxu0 %v839
        %v927 = vpop.f32.mrf.mxu0
        %v928 = vadd.f32 %v720, %v927
        %v929 = vpop.f32.mrf.mxu0
        %v930 = vadd.f32 %v725, %v929
        %931 = vmatmul.bf16.gmra.mxu0 %v842
        %v932 = vpop.f32.mrf.mxu0
        %v933 = vadd.f32 %v730, %v932
        %v934 = vpop.f32.mrf.mxu0
        %v935 = vadd.f32 %v735, %v934
        %936 = vmatmul.bf16.gmra.mxu0 %v845
        %v937 = vpop.f32.mrf.mxu0
        %v938 = vadd.f32 %v740, %v937
        %v939 = vpop.f32.mrf.mxu0
        %v940 = vadd.f32 %v745, %v939
        %941 = vmatmul.bf16.gmra.mxu0 %v848
        %v942 = vpop.f32.mrf.mxu0
        %v943 = vadd.f32 %v750, %v942
        %v944 = vpop.f32.mrf.mxu0
        %v945 = vadd.f32 %v755, %v944
        %946 = vmatmul.bf16.gmra.mxu0 %v851
        %v947 = vpop.f32.mrf.mxu0
        %v948 = vadd.f32 %v760, %v947
        %v949 = vpop.f32.mrf.mxu0
        %v950 = vadd.f32 %v765, %v949
        %951 = vmatmul.bf16.gmra.mxu0 %v854
        %v952 = vpop.f32.mrf.mxu0
        %v953 = vadd.f32 %v770, %v952
        %v954 = vpop.f32.mrf.mxu0
        %v955 = vadd.f32 %v775, %v954
        %956 = vmatmul.bf16.gmra.mxu0 %v857
        %v957 = vpop.f32.mrf.mxu0
        %v958 = vadd.f32 %v780, %v957
        %v959 = vpop.f32.mrf.mxu0
        %v960 = vadd.f32 %v785, %v959
        %961 = vmatmul.bf16.gmra.mxu0 %v860
        %v962 = vpop.f32.mrf.mxu0
        %v963 = vadd.f32 %v790, %v962
        %v964 = vpop.f32.mrf.mxu0
        %v965 = vadd.f32 %v795, %v964
        %966 = vdwg.mxu0
        %v967 = vld [vmem:[%s661] sm:$0x1]
        %v968 = vld [vmem:[#allocation4] sm:$0xf]
        %v969 = vld [vmem:[#allocation4 + $0x4] sm:$0xf]
        %v970 = vld [vmem:[#allocation4 + $0x8] sm:$0xf]
        %v971 = vld [vmem:[#allocation4 + $0xc] sm:$0xf]
        %v972 = vld [vmem:[#allocation4 + $0x10] sm:$0xf]
        %v973 = vld [vmem:[#allocation4 + $0x14] sm:$0xf]
        %v974 = vld [vmem:[#allocation4 + $0x18] sm:$0xf]
        %v975 = vld [vmem:[#allocation4 + $0x1c] sm:$0xf]
        %v976 = vld [vmem:[#allocation4 + $0x20] sm:$0xf]
        %v977 = vld [vmem:[#allocation4 + $0x24] sm:$0xf]
        %v978 = vld [vmem:[#allocation4 + $0x28] sm:$0xf]
        %v979 = vld [vmem:[#allocation4 + $0x2c] sm:$0xf]
        %v980 = vld [vmem:[#allocation4 + $0x30] sm:$0xf]
        %v981 = vld [vmem:[#allocation4 + $0x34] sm:$0xf]
        %v982 = vld [vmem:[#allocation4 + $0x38] sm:$0xf]
        %v983 = vld [vmem:[#allocation4 + $0x3c] sm:$0xf]
        %v984 = vunpack.c.l.bf16 %v968
        %v985 = vunpack.c.l.bf16 %v969
        %v986 = vunpack.c.l.bf16 %v970
        %v987 = vunpack.c.l.bf16 %v971
        %v988 = vunpack.c.l.bf16 %v972
        %v989 = vunpack.c.l.bf16 %v973
        %v990 = vunpack.c.l.bf16 %v974
        %v991 = vunpack.c.l.bf16 %v975
        %v992 = vunpack.c.l.bf16 %v976
        %v993 = vunpack.c.l.bf16 %v977
        %v994 = vunpack.c.l.bf16 %v978
        %v995 = vunpack.c.l.bf16 %v979
        %v996 = vunpack.c.l.bf16 %v980
        %v997 = vunpack.c.l.bf16 %v981
        %v998 = vunpack.c.l.bf16 %v982
        %v999 = vunpack.c.l.bf16 %v983
        %v1001 = vperm.slane %v967, 0
        %v1003 = vmul.f32 %v984, %v1001
        %v1004 = vmul.f32 %v985, %v1001
        %v1005 = vmul.f32 %v986, %v1001
        %v1006 = vmul.f32 %v987, %v1001
        %v1007 = vmul.f32 %v988, %v1001
        %v1008 = vmul.f32 %v989, %v1001
        %v1009 = vmul.f32 %v990, %v1001
        %v1010 = vmul.f32 %v991, %v1001
        %v1011 = vmul.f32 %v992, %v1001
        %v1012 = vmul.f32 %v993, %v1001
        %v1013 = vmul.f32 %v994, %v1001
        %v1014 = vmul.f32 %v995, %v1001
        %v1015 = vmul.f32 %v996, %v1001
        %v1016 = vmul.f32 %v997, %v1001
        %v1017 = vmul.f32 %v998, %v1001
        %v1018 = vmul.f32 %v999, %v1001
        %1019 = vadd.xlane.f32.xlu0 %v1003
        %v1020 = vpop.xlane.xlu0 %1019
        %1021 = vadd.xlane.f32.xlu0 %v1004
        %v1022 = vpop.xlane.xlu0 %1021
        %1023 = vadd.xlane.f32.xlu0 %v1005
        %v1024 = vpop.xlane.xlu0 %1023
        %1025 = vadd.xlane.f32.xlu0 %v1006
        %v1026 = vpop.xlane.xlu0 %1025
        %1027 = vadd.xlane.f32.xlu0 %v1007
        %v1028 = vpop.xlane.xlu0 %1027
        %1029 = vadd.xlane.f32.xlu0 %v1008
        %v1030 = vpop.xlane.xlu0 %1029
        %1031 = vadd.xlane.f32.xlu0 %v1009
        %v1032 = vpop.xlane.xlu0 %1031
        %1033 = vadd.xlane.f32.xlu0 %v1010
        %v1034 = vpop.xlane.xlu0 %1033
        %1035 = vadd.xlane.f32.xlu0 %v1011
        %v1036 = vpop.xlane.xlu0 %1035
        %1037 = vadd.xlane.f32.xlu0 %v1012
        %v1038 = vpop.xlane.xlu0 %1037
        %1039 = vadd.xlane.f32.xlu0 %v1013
        %v1040 = vpop.xlane.xlu0 %1039
        %1041 = vadd.xlane.f32.xlu0 %v1014
        %v1042 = vpop.xlane.xlu0 %1041
        %1043 = vadd.xlane.f32.xlu0 %v1015
        %v1044 = vpop.xlane.xlu0 %1043
        %1045 = vadd.xlane.f32.xlu0 %v1016
        %v1046 = vpop.xlane.xlu0 %1045
        %1047 = vadd.xlane.f32.xlu0 %v1017
        %v1048 = vpop.xlane.xlu0 %1047
        %1049 = vadd.xlane.f32.xlu0 %v1018
        %v1050 = vpop.xlane.xlu0 %1049
        %v1051 = vld [vmem:[%s8] sm:$0xff]
        %v1052 = vld [vmem:[%s8 + $0x8] sm:$0xff]
        %v1053 = vld [vmem:[%s8 + $0x10] sm:$0xff]
        %v1054 = vld [vmem:[%s8 + $0x18] sm:$0xff]
        %v1055 = vld [vmem:[%s8 + $0x20] sm:$0xff]
        %v1056 = vld [vmem:[%s8 + $0x28] sm:$0xff]
        %v1057 = vld [vmem:[%s8 + $0x30] sm:$0xff]
        %v1058 = vld [vmem:[%s8 + $0x38] sm:$0xff]
        %v1059 = vld [vmem:[%s8 + $0x40] sm:$0xff]
        %v1060 = vld [vmem:[%s8 + $0x48] sm:$0xff]
        %v1061 = vld [vmem:[%s8 + $0x50] sm:$0xff]
        %v1062 = vld [vmem:[%s8 + $0x58] sm:$0xff]
        %v1063 = vld [vmem:[%s8 + $0x60] sm:$0xff]
        %v1064 = vld [vmem:[%s8 + $0x68] sm:$0xff]
        %v1065 = vld [vmem:[%s8 + $0x70] sm:$0xff]
        %v1066 = vld [vmem:[%s8 + $0x78] sm:$0xff]
        %v1067 = vadd.f32 %v1020, %v1051
        %v1068 = vadd.f32 %v1022, %v1052
        %v1069 = vadd.f32 %v1024, %v1053
        %v1070 = vadd.f32 %v1026, %v1054
        %v1071 = vadd.f32 %v1028, %v1055
        %v1072 = vadd.f32 %v1030, %v1056
        %v1073 = vadd.f32 %v1032, %v1057
        %v1074 = vadd.f32 %v1034, %v1058
        %v1075 = vadd.f32 %v1036, %v1059
        %v1076 = vadd.f32 %v1038, %v1060
        %v1077 = vadd.f32 %v1040, %v1061
        %v1078 = vadd.f32 %v1042, %v1062
        %v1079 = vadd.f32 %v1044, %v1063
        %v1080 = vadd.f32 %v1046, %v1064
        %v1081 = vadd.f32 %v1048, %v1065
        %v1082 = vadd.f32 %v1050, %v1066
        %1084 = vset.pattern.permute.xlu0 0
        %1085 = vperm.xlu0 %1084, %v1067
        %v1086 = vpop.permute.xlu0 %1085
        %1089 = vset.pattern.permute.xlu0 0
        %1090 = vperm.xlu0 %1089, %v1068
        %v1091 = vpop.permute.xlu0 %1090
        %1094 = vset.pattern.permute.xlu0 0
        %1095 = vperm.xlu0 %1094, %v1069
        %v1096 = vpop.permute.xlu0 %1095
        %1099 = vset.pattern.permute.xlu0 0
        %1100 = vperm.xlu0 %1099, %v1070
        %v1101 = vpop.permute.xlu0 %1100
        %1104 = vset.pattern.permute.xlu0 0
        %1105 = vperm.xlu0 %1104, %v1071
        %v1106 = vpop.permute.xlu0 %1105
        %1109 = vset.pattern.permute.xlu0 0
        %1110 = vperm.xlu0 %1109, %v1072
        %v1111 = vpop.permute.xlu0 %1110
        %1114 = vset.pattern.permute.xlu0 0
        %1115 = vperm.xlu0 %1114, %v1073
        %v1116 = vpop.permute.xlu0 %1115
        %1119 = vset.pattern.permute.xlu0 0
        %1120 = vperm.xlu0 %1119, %v1074
        %v1121 = vpop.permute.xlu0 %1120
        %1124 = vset.pattern.permute.xlu0 0
        %1125 = vperm.xlu0 %1124, %v1075
        %v1126 = vpop.permute.xlu0 %1125
        %1129 = vset.pattern.permute.xlu0 0
        %1130 = vperm.xlu0 %1129, %v1076
        %v1131 = vpop.permute.xlu0 %1130
        %1134 = vset.pattern.permute.xlu0 0
        %1135 = vperm.xlu0 %1134, %v1077
        %v1136 = vpop.permute.xlu0 %1135
        %1139 = vset.pattern.permute.xlu0 0
        %1140 = vperm.xlu0 %1139, %v1078
        %v1141 = vpop.permute.xlu0 %1140
        %1144 = vset.pattern.permute.xlu0 0
        %1145 = vperm.xlu0 %1144, %v1079
        %v1146 = vpop.permute.xlu0 %1145
        %1149 = vset.pattern.permute.xlu0 0
        %1150 = vperm.xlu0 %1149, %v1080
        %v1151 = vpop.permute.xlu0 %1150
        %1154 = vset.pattern.permute.xlu0 0
        %1155 = vperm.xlu0 %1154, %v1081
        %v1156 = vpop.permute.xlu0 %1155
        %1159 = vset.pattern.permute.xlu0 0
        %1160 = vperm.xlu0 %1159, %v1082
        %v1161 = vpop.permute.xlu0 %1160
        %v1163 = vadd.f32 %v879, %v1086
        %v1164 = vadd.f32 %v928, %v1086
        %v1165 = vadd.f32 %v881, %v1091
        %v1166 = vadd.f32 %v930, %v1091
        %v1167 = vadd.f32 %v884, %v1096
        %v1168 = vadd.f32 %v933, %v1096
        %v1169 = vadd.f32 %v886, %v1101
        %v1170 = vadd.f32 %v935, %v1101
        %v1171 = vadd.f32 %v889, %v1106
        %v1172 = vadd.f32 %v938, %v1106
        %v1173 = vadd.f32 %v891, %v1111
        %v1174 = vadd.f32 %v940, %v1111
        %v1175 = vadd.f32 %v894, %v1116
        %v1176 = vadd.f32 %v943, %v1116
        %v1177 = vadd.f32 %v896, %v1121
        %v1178 = vadd.f32 %v945, %v1121
        %v1179 = vadd.f32 %v899, %v1126
        %v1180 = vadd.f32 %v948, %v1126
        %v1181 = vadd.f32 %v901, %v1131
        %v1182 = vadd.f32 %v950, %v1131
        %v1183 = vadd.f32 %v904, %v1136
        %v1184 = vadd.f32 %v953, %v1136
        %v1185 = vadd.f32 %v906, %v1141
        %v1186 = vadd.f32 %v955, %v1141
        %v1187 = vadd.f32 %v909, %v1146
        %v1188 = vadd.f32 %v958, %v1146
        %v1189 = vadd.f32 %v911, %v1151
        %v1190 = vadd.f32 %v960, %v1151
        %v1191 = vadd.f32 %v914, %v1156
        %v1192 = vadd.f32 %v963, %v1156
        %v1193 = vadd.f32 %v916, %v1161
        %v1194 = vadd.f32 %v965, %v1161
        %v1195 = vld [vmem:[%s560] sm:$0xff]
        %v1196 = vld [vmem:[%s665] sm:$0xf]
        %v1197 = vld [vmem:[%s669] sm:$0xf]
        %v1199 = vrot.slane %v1197, 4
        %vm1201 = vcmask 1043456
        %v1202 = vsel %vm1201, %v1196, %v1199
        %v1203 = vpack.c.bf16 %v1202, %v1195
        %v1204 = vld [vmem:[#allocation6] sm:$0xf]
        %v1205 = vld [vmem:[#allocation6 + $0x4] sm:$0xf]
        %v1206 = vld [vmem:[#allocation6 + $0x8] sm:$0xf]
        %v1207 = vld [vmem:[#allocation6 + $0xc] sm:$0xf]
        %v1208 = vld [vmem:[#allocation6 + $0x10] sm:$0xf]
        %v1209 = vld [vmem:[#allocation6 + $0x14] sm:$0xf]
        %v1210 = vld [vmem:[#allocation6 + $0x18] sm:$0xf]
        %v1211 = vld [vmem:[#allocation6 + $0x1c] sm:$0xf]
        %v1212 = vld [vmem:[#allocation6 + $0x20] sm:$0xf]
        %v1213 = vld [vmem:[#allocation6 + $0x24] sm:$0xf]
        %v1214 = vld [vmem:[#allocation6 + $0x28] sm:$0xf]
        %v1215 = vld [vmem:[#allocation6 + $0x2c] sm:$0xf]
        %v1216 = vld [vmem:[#allocation6 + $0x30] sm:$0xf]
        %v1217 = vld [vmem:[#allocation6 + $0x34] sm:$0xf]
        %v1218 = vld [vmem:[#allocation6 + $0x38] sm:$0xf]
        %v1219 = vld [vmem:[#allocation6 + $0x3c] sm:$0xf]
        %v1220 = vld [vmem:[#allocation7] sm:$0x1]
        %v1222 = vperm.slane %v1220, 0
        %v1240 = vunpack.c.l.b16 %v1204
        %v1241 = vunpack.c.l.b16 %v1205
        %v1242 = vunpack.c.l.b16 %v1206
        %v1243 = vunpack.c.l.b16 %v1207
        %v1244 = vunpack.c.l.b16 %v1208
        %v1245 = vunpack.c.l.b16 %v1209
        %v1246 = vunpack.c.l.b16 %v1210
        %v1247 = vunpack.c.l.b16 %v1211
        %v1248 = vunpack.c.l.b16 %v1212
        %v1249 = vunpack.c.l.b16 %v1213
        %v1250 = vunpack.c.l.b16 %v1214
        %v1251 = vunpack.c.l.b16 %v1215
        %v1252 = vunpack.c.l.b16 %v1216
        %v1253 = vunpack.c.l.b16 %v1217
        %v1254 = vunpack.c.l.b16 %v1218
        %v1255 = vunpack.c.l.b16 %v1219
        %v1256 = vpack.c.b16 %v1241, %v1240
        %v1257 = vpack.c.b16 %v1243, %v1242
        %v1258 = vpack.c.b16 %v1245, %v1244
        %v1259 = vpack.c.b16 %v1247, %v1246
        %v1260 = vpack.c.b16 %v1249, %v1248
        %v1261 = vpack.c.b16 %v1251, %v1250
        %v1262 = vpack.c.b16 %v1253, %v1252
        %v1263 = vpack.c.b16 %v1255, %v1254
        %1272 = vmatpush.bf16.msra.mxu0 %v1263
        %1273 = vmatpush.bf16.msra.mxu0 %v1262
        %1274 = vmatpush.bf16.msra.mxu0 %v1261
        %1275 = vmatpush.bf16.msra.mxu0 %v1260
        %1276 = vmatpush.bf16.msra.mxu0 %v1259
        %1277 = vmatpush.bf16.msra.mxu0 %v1258
        %1278 = vmatpush.bf16.msra.mxu0 %v1257
        %1279 = vmatpush.bf16.msra.mxu0 %v1256
        %1280 = vmatmul.bf16.gmra.mxu0 %v1203
        %v1281 = vpop.f32.mrf.mxu0
        %v1282 = vadd.f32 %v1222, %v1281
        %v1283 = vpop.f32.mrf.mxu0
        %v1284 = vadd.f32 %v1222, %v1283
        %1285 = vdwg.mxu0
        %v1286 = vld [vmem:[#allocation9] sm:$0xf]
        %v1287 = vld [vmem:[#allocation9 + $0x4] sm:$0xf]
        %v1288 = vld [vmem:[#allocation9 + $0x8] sm:$0xf]
        %v1289 = vld [vmem:[#allocation9 + $0xc] sm:$0xf]
        %v1290 = vld [vmem:[#allocation9 + $0x10] sm:$0xf]
        %v1291 = vld [vmem:[#allocation9 + $0x14] sm:$0xf]
        %v1292 = vld [vmem:[#allocation9 + $0x18] sm:$0xf]
        %v1293 = vld [vmem:[#allocation9 + $0x1c] sm:$0xf]
        %v1294 = vld [vmem:[#allocation9 + $0x20] sm:$0xf]
        %v1295 = vld [vmem:[#allocation9 + $0x24] sm:$0xf]
        %v1296 = vld [vmem:[#allocation9 + $0x28] sm:$0xf]
        %v1297 = vld [vmem:[#allocation9 + $0x2c] sm:$0xf]
        %v1298 = vld [vmem:[#allocation9 + $0x30] sm:$0xf]
        %v1299 = vld [vmem:[#allocation9 + $0x34] sm:$0xf]
        %v1300 = vld [vmem:[#allocation9 + $0x38] sm:$0xf]
        %v1301 = vld [vmem:[#allocation9 + $0x3c] sm:$0xf]
        %v1302 = vld [vmem:[#allocation10] sm:$0x1]
        %v1304 = vperm.slane %v1302, 0
        %v1322 = vunpack.c.l.b16 %v1286
        %v1323 = vunpack.c.l.b16 %v1287
        %v1324 = vunpack.c.l.b16 %v1288
        %v1325 = vunpack.c.l.b16 %v1289
        %v1326 = vunpack.c.l.b16 %v1290
        %v1327 = vunpack.c.l.b16 %v1291
        %v1328 = vunpack.c.l.b16 %v1292
        %v1329 = vunpack.c.l.b16 %v1293
        %v1330 = vunpack.c.l.b16 %v1294
        %v1331 = vunpack.c.l.b16 %v1295
        %v1332 = vunpack.c.l.b16 %v1296
        %v1333 = vunpack.c.l.b16 %v1297
        %v1334 = vunpack.c.l.b16 %v1298
        %v1335 = vunpack.c.l.b16 %v1299
        %v1336 = vunpack.c.l.b16 %v1300
        %v1337 = vunpack.c.l.b16 %v1301
        %v1338 = vpack.c.b16 %v1323, %v1322
        %v1339 = vpack.c.b16 %v1325, %v1324
        %v1340 = vpack.c.b16 %v1327, %v1326
        %v1341 = vpack.c.b16 %v1329, %v1328
        %v1342 = vpack.c.b16 %v1331, %v1330
        %v1343 = vpack.c.b16 %v1333, %v1332
        %v1344 = vpack.c.b16 %v1335, %v1334
        %v1345 = vpack.c.b16 %v1337, %v1336
        %1354 = vmatpush.bf16.msra.mxu0 %v1345
        %1355 = vmatpush.bf16.msra.mxu0 %v1344
        %1356 = vmatpush.bf16.msra.mxu0 %v1343
        %1357 = vmatpush.bf16.msra.mxu0 %v1342
        %1358 = vmatpush.bf16.msra.mxu0 %v1341
        %1359 = vmatpush.bf16.msra.mxu0 %v1340
        %1360 = vmatpush.bf16.msra.mxu0 %v1339
        %1361 = vmatpush.bf16.msra.mxu0 %v1338
        %1362 = vmatmul.bf16.gmra.mxu0 %v1203
        %v1363 = vpop.f32.mrf.mxu0
        %v1364 = vadd.f32 %v1304, %v1363
        %v1365 = vpop.f32.mrf.mxu0
        %v1366 = vadd.f32 %v1304, %v1365
        %1367 = vdwg.mxu0
        %v1368 = vpack.c.bf16 %v1284, %v1282
        %v1369 = vpack.c.bf16 %v1165, %v1163
        %v1370 = vpack.c.bf16 %v1166, %v1164
        %v1371 = vpack.c.bf16 %v1169, %v1167
        %v1372 = vpack.c.bf16 %v1170, %v1168
        %v1373 = vpack.c.bf16 %v1173, %v1171
        %v1374 = vpack.c.bf16 %v1174, %v1172
        %v1375 = vpack.c.bf16 %v1177, %v1175
        %v1376 = vpack.c.bf16 %v1178, %v1176
        %v1377 = vpack.c.bf16 %v1181, %v1179
        %v1378 = vpack.c.bf16 %v1182, %v1180
        %v1379 = vpack.c.bf16 %v1185, %v1183
        %v1380 = vpack.c.bf16 %v1186, %v1184
        %v1381 = vpack.c.bf16 %v1189, %v1187
        %v1382 = vpack.c.bf16 %v1190, %v1188
        %v1383 = vpack.c.bf16 %v1193, %v1191
        %v1384 = vpack.c.bf16 %v1194, %v1192
        %1385 = vmatpush.bf16.msra.mxu0 %v1383
        %1386 = vmatpush.bf16.msra.mxu0 %v1381
        %1387 = vmatpush.bf16.msra.mxu0 %v1379
        %1388 = vmatpush.bf16.msra.mxu0 %v1377
        %1389 = vmatpush.bf16.msra.mxu0 %v1375
        %1390 = vmatpush.bf16.msra.mxu0 %v1373
        %1391 = vmatpush.bf16.msra.mxu0 %v1371
        %1392 = vmatpush.bf16.msra.mxu0 %v1369
        %1393 = vmatmul.bf16.gmra.mxu0 %v1368
        %v1394 = vpop.f32.mrf.mxu0
        %v1395 = vadd.f32 0.0, %v1394
        %v1396 = vpop.f32.mrf.mxu0
        %v1397 = vadd.f32 0.0, %v1396
        %1398 = vdwg.mxu0
        %1399 = vmatpush.bf16.msra.mxu0 %v1384
        %1400 = vmatpush.bf16.msra.mxu0 %v1382
        %1401 = vmatpush.bf16.msra.mxu0 %v1380
        %1402 = vmatpush.bf16.msra.mxu0 %v1378
        %1403 = vmatpush.bf16.msra.mxu0 %v1376
        %1404 = vmatpush.bf16.msra.mxu0 %v1374
        %1405 = vmatpush.bf16.msra.mxu0 %v1372
        %1406 = vmatpush.bf16.msra.mxu0 %v1370
        %1407 = vmatmul.bf16.gmra.mxu0 %v1368
        %v1408 = vpop.f32.mrf.mxu0
        %v1409 = vadd.f32 0.0, %v1408
        %v1410 = vpop.f32.mrf.mxu0
        %v1411 = vadd.f32 0.0, %v1410
        %1412 = vdwg.mxu0
        %v1413 = vmul.f32 %v1395, 0.088388346
        %v1414 = vmul.f32 %v1409, 0.088388346
        %v1415 = vmul.f32 %v1397, 0.088388346
        %v1416 = vmul.f32 %v1411, 0.088388346
        %v1417 = vmax.f32 %v1413, %v1415
        %v1418 = vrot.slane %v1417, 4
        %v1419 = vmax.f32 %v1417, %v1418
        %v1420 = vrot.slane %v1419, 2
        %v1421 = vmax.f32 %v1419, %v1420
        %v1422 = vrot.slane %v1421, 1
        %v1423 = vmax.f32 %v1421, %v1422
        %v1424 = vmax.f32 %v1414, %v1416
        %v1425 = vrot.slane %v1424, 4
        %v1426 = vmax.f32 %v1424, %v1425
        %v1427 = vrot.slane %v1426, 2
        %v1428 = vmax.f32 %v1426, %v1427
        %v1429 = vrot.slane %v1428, 1
        %v1430 = vmax.f32 %v1428, %v1429
        %v1431 = vsub.f32 %v1413, %v1423
        %v1432 = vsub.f32 %v1414, %v1430
        %v1433 = vsub.f32 %v1415, %v1423
        %v1434 = vsub.f32 %v1416, %v1430
        %v1435 = vmul.f32 %v1431, 1.442695
        %v1436 = vpow.pop %v1435
        %v1437 = vmul.f32 %v1432, 1.442695
        %v1438 = vpow.pop %v1437
        %v1439 = vmul.f32 %v1433, 1.442695
        %v1440 = vpow.pop %v1439
        %v1441 = vmul.f32 %v1434, 1.442695
        %v1442 = vpow.pop %v1441
        %v1443 = vadd.f32 %v1436, %v1440
        %v1444 = vrot.slane %v1443, 4
        %v1445 = vadd.f32 %v1443, %v1444
        %v1446 = vrot.slane %v1445, 2
        %v1447 = vadd.f32 %v1445, %v1446
        %v1448 = vrot.slane %v1447, 1
        %v1449 = vadd.f32 %v1447, %v1448
        %v1450 = vadd.f32 %v1438, %v1442
        %v1451 = vrot.slane %v1450, 4
        %v1452 = vadd.f32 %v1450, %v1451
        %v1453 = vrot.slane %v1452, 2
        %v1454 = vadd.f32 %v1452, %v1453
        %v1455 = vrot.slane %v1454, 1
        %v1456 = vadd.f32 %v1454, %v1455
        %v1457 = vrcp.pop %v1449
        %v1458 = vrcp.pop %v1456
        %v1459 = vmul.f32 %v1436, %v1457
        %v1460 = vmul.f32 %v1438, %v1458
        %v1461 = vmul.f32 %v1440, %v1457
        %v1462 = vmul.f32 %v1442, %v1458
        %v1463 = vpack.c.bf16 %v1366, %v1364
        %v1464 = vpack.c.bf16 %v1461, %v1459
        %v1465 = vpack.c.bf16 %v1462, %v1460
        %1466 = vxpose.xlu0.c.b16.start [1/8] %v1463, 128
        %1467 = vxpose.xlu0.c.b16.cont [2/8] 0, 128
        %1468 = vxpose.xlu0.c.b16.cont [3/8] 0, 128
        %1469 = vxpose.xlu0.c.b16.cont [4/8] 0, 128
        %1470 = vxpose.xlu0.c.b16.cont [5/8] 0, 128
        %1471 = vxpose.xlu0.c.b16.cont [6/8] 0, 128
        %1472 = vxpose.xlu0.c.b16.cont [7/8] 0, 128
        %1473 = vxpose.xlu0.c.b16.end [8/8] 0, 128
        %v1474 = vpop.trf.xlu0
        %v1475 = vpop.trf.xlu0
        %v1476 = vpop.trf.xlu0
        %v1477 = vpop.trf.xlu0
        %v1478 = vpop.trf.xlu0
        %v1479 = vpop.trf.xlu0
        %v1480 = vpop.trf.xlu0
        %v1481 = vpop.trf.xlu0
        %vm1482 = vcmask 130048
        %v1484 = vsel %vm1482, %v1474, 0
        %v1487 = vsel %vm1482, %v1475, 0
        %v1490 = vsel %vm1482, %v1476, 0
        %v1493 = vsel %vm1482, %v1477, 0
        %v1496 = vsel %vm1482, %v1478, 0
        %v1499 = vsel %vm1482, %v1479, 0
        %v1502 = vsel %vm1482, %v1480, 0
        %v1505 = vsel %vm1482, %v1481, 0
        %1507 = vmatpush.bf16.msra.mxu0 0
        %1508 = vmatpush.bf16.msra.mxu0 0
        %1509 = vmatpush.bf16.msra.mxu0 0
        %1510 = vmatpush.bf16.msra.mxu0 0
        %1511 = vmatpush.bf16.msra.mxu0 0
        %1512 = vmatpush.bf16.msra.mxu0 0
        %1513 = vmatpush.bf16.msra.mxu0 0
        %1514 = vmatpush.bf16.msra.mxu0 %v1464
        %1515 = vmatmul.bf16.gmra.mxu0 %v1484
        %v1516 = vpop.f32.mrf.mxu0
        %v1517 = vadd.f32 0.0, %v1516
        %v1518 = vpop.f32.mrf.mxu0
        %v1519 = vadd.f32 0.0, %v1518
        %1520 = vmatmul.bf16.gmra.mxu0 %v1487
        %v1521 = vpop.f32.mrf.mxu0
        %v1522 = vadd.f32 0.0, %v1521
        %v1523 = vpop.f32.mrf.mxu0
        %v1524 = vadd.f32 0.0, %v1523
        %1525 = vmatmul.bf16.gmra.mxu0 %v1490
        %v1526 = vpop.f32.mrf.mxu0
        %v1527 = vadd.f32 0.0, %v1526
        %v1528 = vpop.f32.mrf.mxu0
        %v1529 = vadd.f32 0.0, %v1528
        %1530 = vmatmul.bf16.gmra.mxu0 %v1493
        %v1531 = vpop.f32.mrf.mxu0
        %v1532 = vadd.f32 0.0, %v1531
        %v1533 = vpop.f32.mrf.mxu0
        %v1534 = vadd.f32 0.0, %v1533
        %1535 = vmatmul.bf16.gmra.mxu0 %v1496
        %v1536 = vpop.f32.mrf.mxu0
        %v1537 = vadd.f32 0.0, %v1536
        %v1538 = vpop.f32.mrf.mxu0
        %v1539 = vadd.f32 0.0, %v1538
        %1540 = vmatmul.bf16.gmra.mxu0 %v1499
        %v1541 = vpop.f32.mrf.mxu0
        %v1542 = vadd.f32 0.0, %v1541
        %v1543 = vpop.f32.mrf.mxu0
        %v1544 = vadd.f32 0.0, %v1543
        %1545 = vmatmul.bf16.gmra.mxu0 %v1502
        %v1546 = vpop.f32.mrf.mxu0
        %v1547 = vadd.f32 0.0, %v1546
        %v1548 = vpop.f32.mrf.mxu0
        %v1549 = vadd.f32 0.0, %v1548
        %1550 = vmatmul.bf16.gmra.mxu0 %v1505
        %v1551 = vpop.f32.mrf.mxu0
        %v1552 = vadd.f32 0.0, %v1551
        %v1553 = vpop.f32.mrf.mxu0
        %v1554 = vadd.f32 0.0, %v1553
        %1555 = vdwg.mxu0
        %1556 = vmatpush.bf16.msra.mxu0 0
        %1557 = vmatpush.bf16.msra.mxu0 0
        %1558 = vmatpush.bf16.msra.mxu0 0
        %1559 = vmatpush.bf16.msra.mxu0 0
        %1560 = vmatpush.bf16.msra.mxu0 0
        %1561 = vmatpush.bf16.msra.mxu0 0
        %1562 = vmatpush.bf16.msra.mxu0 0
        %1563 = vmatpush.bf16.msra.mxu0 %v1465
        %1564 = vmatmul.bf16.gmra.mxu0 %v1484
        %v1565 = vpop.f32.mrf.mxu0
        %v1566 = vadd.f32 0.0, %v1565
        %v1567 = vpop.f32.mrf.mxu0
        %v1568 = vadd.f32 0.0, %v1567
        %1569 = vmatmul.bf16.gmra.mxu0 %v1487
        %v1570 = vpop.f32.mrf.mxu0
        %v1571 = vadd.f32 0.0, %v1570
        %v1572 = vpop.f32.mrf.mxu0
        %v1573 = vadd.f32 0.0, %v1572
        %1574 = vmatmul.bf16.gmra.mxu0 %v1490
        %v1575 = vpop.f32.mrf.mxu0
        %v1576 = vadd.f32 0.0, %v1575
        %v1577 = vpop.f32.mrf.mxu0
        %v1578 = vadd.f32 0.0, %v1577
        %1579 = vmatmul.bf16.gmra.mxu0 %v1493
        %v1580 = vpop.f32.mrf.mxu0
        %v1581 = vadd.f32 0.0, %v1580
        %v1582 = vpop.f32.mrf.mxu0
        %v1583 = vadd.f32 0.0, %v1582
        %1584 = vmatmul.bf16.gmra.mxu0 %v1496
        %v1585 = vpop.f32.mrf.mxu0
        %v1586 = vadd.f32 0.0, %v1585
        %v1587 = vpop.f32.mrf.mxu0
        %v1588 = vadd.f32 0.0, %v1587
        %1589 = vmatmul.bf16.gmra.mxu0 %v1499
        %v1590 = vpop.f32.mrf.mxu0
        %v1591 = vadd.f32 0.0, %v1590
        %v1592 = vpop.f32.mrf.mxu0
        %v1593 = vadd.f32 0.0, %v1592
        %1594 = vmatmul.bf16.gmra.mxu0 %v1502
        %v1595 = vpop.f32.mrf.mxu0
        %v1596 = vadd.f32 0.0, %v1595
        %v1597 = vpop.f32.mrf.mxu0
        %v1598 = vadd.f32 0.0, %v1597
        %1599 = vmatmul.bf16.gmra.mxu0 %v1505
        %v1600 = vpop.f32.mrf.mxu0
        %v1601 = vadd.f32 0.0, %v1600
        %v1602 = vpop.f32.mrf.mxu0
        %v1603 = vadd.f32 0.0, %v1602
        %1604 = vdwg.mxu0
        %v1605 = vadd.f32 %v1163, %v1517
        %v1606 = vadd.f32 %v1164, %v1566
        %v1607 = vadd.f32 %v1165, %v1519
        %v1608 = vadd.f32 %v1166, %v1568
        %v1609 = vadd.f32 %v1167, %v1522
        %v1610 = vadd.f32 %v1168, %v1571
        %v1611 = vadd.f32 %v1169, %v1524
        %v1612 = vadd.f32 %v1170, %v1573
        %v1613 = vadd.f32 %v1171, %v1527
        %v1614 = vadd.f32 %v1172, %v1576
        %v1615 = vadd.f32 %v1173, %v1529
        %v1616 = vadd.f32 %v1174, %v1578
        %v1617 = vadd.f32 %v1175, %v1532
        %v1618 = vadd.f32 %v1176, %v1581
        %v1619 = vadd.f32 %v1177, %v1534
        %v1620 = vadd.f32 %v1178, %v1583
        %v1621 = vadd.f32 %v1179, %v1537
        %v1622 = vadd.f32 %v1180, %v1586
        %v1623 = vadd.f32 %v1181, %v1539
        %v1624 = vadd.f32 %v1182, %v1588
        %v1625 = vadd.f32 %v1183, %v1542
        %v1626 = vadd.f32 %v1184, %v1591
        %v1627 = vadd.f32 %v1185, %v1544
        %v1628 = vadd.f32 %v1186, %v1593
        %v1629 = vadd.f32 %v1187, %v1547
        %v1630 = vadd.f32 %v1188, %v1596
        %v1631 = vadd.f32 %v1189, %v1549
        %v1632 = vadd.f32 %v1190, %v1598
        %v1633 = vadd.f32 %v1191, %v1552
        %v1634 = vadd.f32 %v1192, %v1601
        %v1635 = vadd.f32 %v1193, %v1554
        %v1636 = vadd.f32 %v1194, %v1603
        %v1637 = vld [vmem:[#allocation12] sm:$0x3]
        %v1638 = vpack.c.bf16 %v1607, %v1605
        %v1639 = vpack.c.bf16 %v1608, %v1606
        %v1640 = vpack.c.bf16 %v1611, %v1609
        %v1641 = vpack.c.bf16 %v1612, %v1610
        %v1642 = vpack.c.bf16 %v1615, %v1613
        %v1643 = vpack.c.bf16 %v1616, %v1614
        %v1644 = vpack.c.bf16 %v1619, %v1617
        %v1645 = vpack.c.bf16 %v1620, %v1618
        %v1646 = vpack.c.bf16 %v1623, %v1621
        %v1647 = vpack.c.bf16 %v1624, %v1622
        %v1648 = vpack.c.bf16 %v1627, %v1625
        %v1649 = vpack.c.bf16 %v1628, %v1626
        %v1650 = vpack.c.bf16 %v1631, %v1629
        %v1651 = vpack.c.bf16 %v1632, %v1630
        %v1652 = vpack.c.bf16 %v1635, %v1633
        %v1653 = vpack.c.bf16 %v1636, %v1634
        %v1654 = vld [vmem:[%s14] sm:$0xf]
        %1656 = vset.pattern.permute.xlu0 0
        %1657 = vperm.xlu0 %1656, %v1654
        %v1658 = vpop.permute.xlu0 %1657
        %1660 = vmatpush.bf16.msra.mxu0 %v1652
        %1661 = vmatpush.bf16.msra.mxu0 %v1650
        %1662 = vmatpush.bf16.msra.mxu0 %v1648
        %1663 = vmatpush.bf16.msra.mxu0 %v1646
        %1664 = vmatpush.bf16.msra.mxu0 %v1644
        %1665 = vmatpush.bf16.msra.mxu0 %v1642
        %1666 = vmatpush.bf16.msra.mxu0 %v1640
        %1667 = vmatpush.bf16.msra.mxu0 %v1638
        %1668 = vmatmul.bf16.gmra.mxu0 %v1637
        %v1669 = vpop.f32.mrf.mxu0
        %v1670 = vadd.f32 %v1658, %v1669
        %v1671 = vpop.f32.mrf.mxu0
        %1672 = vdwg.mxu0
        %1673 = vmatpush.bf16.msra.mxu0 %v1653
        %1674 = vmatpush.bf16.msra.mxu0 %v1651
        %1675 = vmatpush.bf16.msra.mxu0 %v1649
        %1676 = vmatpush.bf16.msra.mxu0 %v1647
        %1677 = vmatpush.bf16.msra.mxu0 %v1645
        %1678 = vmatpush.bf16.msra.mxu0 %v1643
        %1679 = vmatpush.bf16.msra.mxu0 %v1641
        %1680 = vmatpush.bf16.msra.mxu0 %v1639
        %1681 = vmatmul.bf16.gmra.mxu0 %v1637
        %v1682 = vpop.f32.mrf.mxu0
        %v1683 = vadd.f32 %v1658, %v1682
        %v1684 = vpop.f32.mrf.mxu0
        %1685 = vdwg.mxu0
        %v1688 = vrot.slane %v1683, 4
        %v1689 = vsel %vm1201, %v1670, %v1688
        %v1691 = vadd.f32 %v676, %v1689
        %1692 = vst [vmem:[%s674] sm:$0xff] %v1691
        %p1693 = scmp.lt.s32.totalorder %s32, 1
        %s1694 = scalar_select %p1693, %s32, 1
        %s1695 = smul.addr %s1694, 2
        %s1696 = smul.addr %s1695, 4
        %s1697 = scalar_lea.vmem %s15, %s1696
        // Predicated region
        $region109: #{ip_retrieval_forward.3} parent=79 // pred_check
          %p1698 = pneg %p390
        $region110: #{ip_retrieval_forward.3} parent=79 // pred_check_branch
          %1700 = sbr.rel (%p1698) target = $region112
        $region111: #{ip_retrieval_forward.3} parent=79 // pred_region
          _
        $region112: #{ip_retrieval_forward.3} parent=79 // pred_fallthru
          _
      $region80: #{ip_retrieval_forward.3} parent=5 // pred_fallthru
        _
      %p1701 = scmp.le.s32.totalorder 2, %s27
      // Predicated region
      $region113: #{ip_retrieval_forward.3} parent=5 // pred_check
        %p1702 = pneg %p1701
      $region114: #{ip_retrieval_forward.3} parent=5 // pred_check_branch
        %1704 = sbr.rel (%p1702) target = $region116
      $region115: #{ip_retrieval_forward.3} parent=5 // pred_region
        %s1705 = ssub.s32 %s27, 2
        // Predicated region
        $region117: #{ip_retrieval_forward.3} parent=115 // pred_check
          %p1706 = pneg %p396
        $region118: #{ip_retrieval_forward.3} parent=115 // pred_check_branch
          %1708 = sbr.rel (%p1706) target = $region120
        $region119: #{ip_retrieval_forward.3} parent=115 // pred_region
          %p1709 = scmp.lt.s32.totalorder %s33, 1
          %s1710 = scalar_select %p1709, %s33, 1
          %s1711 = smul.addr %s1710, 2
          %s1712 = smul.addr %s1711, 4
          %s1713 = scalar_lea.vmem %s15, %s1712
        $region120: #{ip_retrieval_forward.3} parent=115 // pred_fallthru
          _
      $region116: #{ip_retrieval_forward.3} parent=5 // pred_fallthru
        _
    $region6: #{ip_retrieval_forward.3} parent=1 // loop_footer
      %s31 = sadd.s32 1, %s27
    $region7: #{ip_retrieval_forward.3} parent=1 // loop_footer_branch
      %26 = sbr.rel target = $region3
    $region8: #{ip_retrieval_forward.3} parent=1 // loop_exit
      _
    %1714 = vsyncpa [#allocation3], 1
    %s1715 = scalar_lea.sflag [#allocation3], 1
    %1716 = vsyncpa %s1715, 1
    %1717 = vsyncpa [#allocation5], 1
    %1718 = vsyncpa [#allocation8], 1
    %1719 = vsyncpa [#allocation11], 1

// kernel: ip_retrieval_forward.2
$region0: #{ip_retrieval_forward.2}
  #allocation0 [shape = 'u32[]', space=smem, size = 0x4, offset = 0x4, fixed_abs, tag = 'smem constant byte address 0x4 - core index']
  #allocation1 [shape = 'u32[72,128]{1,0:T(1,128)}', space=vmem, size = 0x9000, scoped, tag = 'internal scratch']
  %s0 = inlined_call_operand.hbm [shape: f32[2,512], index: 0, kind: input, shape index: {}]
  %s1 = inlined_call_operand.hbm [shape: f32[2,512], index: 1, kind: input, shape index: {}]
  %s2 = inlined_call_operand.hbm [shape: f32[16,768], index: 2, kind: input, shape index: {}]
  %s3 = inlined_call_operand.hbm [shape: f32[16,512], index: 3, kind: input, shape index: {}]
  %s4 = inlined_call_operand.hbm [shape: bf16[4,512,128], index: 4, kind: input, shape index: {}]
  %s5 = inlined_call_operand.hbm [shape: f32[4,128], index: 5, kind: input, shape index: {}]
  %s6 = inlined_call_operand.hbm [shape: bf16[4,512,128], index: 6, kind: input, shape index: {}]
  %s7 = inlined_call_operand.hbm [shape: f32[4,128], index: 7, kind: input, shape index: {}]
  %s8 = inlined_call_operand.hbm [shape: bf16[768,1024], index: 8, kind: input, shape index: {}]
  %s9 = inlined_call_operand.hbm [shape: f32[1,1024], index: 9, kind: input, shape index: {}]
  %s10 = inlined_call_operand.hbm [shape: bf16[1024,128], index: 10, kind: input, shape index: {}]
  %s11 = inlined_call_operand.hbm [shape: f32[1,128], index: 11, kind: input, shape index: {}]
  %s12 = inlined_call_operand.hbm [shape: bf16[512,1024], index: 12, kind: input, shape index: {}]
  %s13 = inlined_call_operand.hbm [shape: f32[1,1024], index: 13, kind: input, shape index: {}]
  %s14 = inlined_call_operand.hbm [shape: bf16[1024,128], index: 14, kind: input, shape index: {}]
  %s15 = inlined_call_operand.hbm [shape: f32[1,128], index: 15, kind: input, shape index: {}]
  %s16 = inlined_call_operand.hbm [shape: bf16[4,128,128], index: 16, kind: input, shape index: {}]
  %s17 = inlined_call_operand.hbm [shape: f32[4,128], index: 17, kind: input, shape index: {}]
  %s18 = inlined_call_operand.hbm [shape: bf16[128,128], index: 18, kind: input, shape index: {}]
  %s19 = inlined_call_operand.hbm [shape: f32[1,128], index: 19, kind: input, shape index: {}]
  %s20 = inlined_call_operand.vmem [shape: f32[2,4,128], index: 20, kind: output, shape index: {0}]
  %s21 = inlined_call_operand.hbm [shape: f32[2,4,128], index: 21, kind: output, shape index: {1}]
  %s22 = inlined_call_operand.vmem [shape: f32[2,4,128], index: 22, kind: output, shape index: {2}]
  %23 = xla_tuple %s20, %s21, %s22
  %s24 = sld [smem:[#allocation0]]
  $region186: #{ip_retrieval_forward.2} parent=0
    _
  %s26 = ssub.s32 1, %s24
  %s27 = scalar_select 0, %s26, %s24
  $region1: #{ip_retrieval_forward.2} parent=0
    #allocation2 [shape = 'u8[4096]{0}', space=vmem, size = 0x1000, scoped, tag = 'input window, operand 0, single buffered']
    #allocation3 [shape = 's32[1]{0}', space=sflag, size = 0x4, scoped, tag = 'scoped memory for ip_retrieval_forward.2']
    #allocation4 [shape = 's32[1]{0}', space=sflag, size = 0x4, scoped, tag = 'scoped memory for ip_retrieval_forward.2']
    #allocation5 [shape = 'u8[4096]{0}', space=vmem, size = 0x1000, scoped, tag = 'input window, operand 1, single buffered']
    #allocation6 [shape = 's32[1]{0}', space=sflag, size = 0x4, scoped, tag = 'scoped memory for ip_retrieval_forward.2']
    #allocation7 [shape = 'u8[49152]{0}', space=vmem, size = 0xc000, scoped, tag = 'input window, operand 2, single buffered']
    #allocation8 [shape = 'u8[32768]{0}', space=vmem, size = 0x8000, scoped, tag = 'input window, operand 3, single buffered']
    #allocation9 [shape = 's32[1]{0}', space=sflag, size = 0x4, scoped, tag = 'scoped memory for ip_retrieval_forward.2']
    #allocation10 [shape = 'u8[524288]{0}', space=vmem, size = 0x80000, scoped, tag = 'input window, operand 4, single buffered']
    #allocation11 [shape = 'u8[2048]{0}', space=vmem, size = 0x800, scoped, tag = 'input window, operand 5, single buffered']
    #allocation12 [shape = 's32[1]{0}', space=sflag, size = 0x4, scoped, tag = 'scoped memory for ip_retrieval_forward.2']
    #allocation13 [shape = 'u8[524288]{0}', space=vmem, size = 0x80000, scoped, tag = 'input window, operand 6, single buffered']
    #allocation14 [shape = 'u8[2048]{0}', space=vmem, size = 0x800, scoped, tag = 'input window, operand 7, single buffered']
    #allocation15 [shape = 's32[1]{0}', space=sflag, size = 0x4, scoped, tag = 'scoped memory for ip_retrieval_forward.2']
    #allocation16 [shape = 'u8[1572864]{0}', space=vmem, size = 0x180000, scoped, tag = 'input window, operand 8, single buffered']
    #allocation17 [shape = 'u8[4096]{0}', space=vmem, size = 0x1000, scoped, tag = 'input window, operand 9, single buffered']
    #allocation18 [shape = 's32[1]{0}', space=sflag, size = 0x4, scoped, tag = 'scoped memory for ip_retrieval_forward.2']
    #allocation19 [shape = 'u8[262144]{0}', space=vmem, size = 0x40000, scoped, tag = 'input window, operand 10, single buffered']
    #allocation20 [shape = 'u8[512]{0}', space=vmem, size = 0x400, scoped, tag = 'input window, operand 11, single buffered']
    #allocation21 [shape = 's32[1]{0}', space=sflag, size = 0x4, scoped, tag = 'scoped memory for ip_retrieval_forward.2']
    #allocation22 [shape = 'u8[1048576]{0}', space=vmem, size = 0x100000, scoped, tag = 'input window, operand 12, single buffered']
    #allocation23 [shape = 'u8[4096]{0}', space=vmem, size = 0x1000, scoped, tag = 'input window, operand 13, single buffered']
    #allocation24 [shape = 's32[1]{0}', space=sflag, size = 0x4, scoped, tag = 'scoped memory for ip_retrieval_forward.2']
    #allocation25 [shape = 'u8[262144]{0}', space=vmem, size = 0x40000, scoped, tag = 'input window, operand 14, single buffered']
    #allocation26 [shape = 'u8[512]{0}', space=vmem, size = 0x400, scoped, tag = 'input window, operand 15, single buffered']
    #allocation27 [shape = 's32[1]{0}', space=sflag, size = 0x4, scoped, tag = 'scoped memory for ip_retrieval_forward.2']
    #allocation28 [shape = 'u8[131072]{0}', space=vmem, size = 0x20000, scoped, tag = 'input window, operand 16, single buffered']
    #allocation29 [shape = 'u8[2048]{0}', space=vmem, size = 0x800, scoped, tag = 'input window, operand 17, single buffered']
    #allocation30 [shape = 's32[1]{0}', space=sflag, size = 0x4, scoped, tag = 'scoped memory for ip_retrieval_forward.2']
    #allocation31 [shape = 'u8[32768]{0}', space=vmem, size = 0x8000, scoped, tag = 'input window, operand 18, single buffered']
    #allocation32 [shape = 'u8[512]{0}', space=vmem, size = 0x400, scoped, tag = 'input window, operand 19, single buffered']
    #allocation33 [shape = 's32[1]{0}', space=sflag, size = 0x4, scoped, tag = 'scoped memory for ip_retrieval_forward.2']
    #allocation34 [shape = 'u8[4096]{0}', space=vmem, size = 0x1000, scoped, tag = 'output window, operand 1, single buffered']
    %28 = vsyncpa [#allocation3], 0
    %29 = vsyncpa [#allocation6], 0
    %30 = vsyncpa [#allocation9], 0
    %31 = vsyncpa [#allocation12], 0
    %32 = vsyncpa [#allocation15], 0
    %33 = vsyncpa [#allocation18], 0
    %34 = vsyncpa [#allocation21], 0
    %35 = vsyncpa [#allocation24], 0
    %36 = vsyncpa [#allocation27], 0
    %37 = vsyncpa [#allocation30], 0
    %38 = vsyncpa [#allocation33], 0
    %39 = vsyncpa [#allocation4], 0
    // Predicated region
    $region2: #{ip_retrieval_forward.2} parent=1 // pred_check
      _
    $region3: #{ip_retrieval_forward.2} parent=1 // pred_check_branch
      %41 = sbr.rel (0) target = $region5
    $region4: #{ip_retrieval_forward.2} parent=1 // pred_region
      %43 = vsyncadd [#allocation3], 0
      %s45 = sshll.u32 %s0, 4
      %s46 = int_to_ptr.hbm [resolvable:$true] %s45
      %s47 = sshll.u32 [#allocation2], 4
      %s48 = int_to_ptr.vmem [resolvable:$true] %s47
      %50 = dma.hbm_to_vmem [thread:$0]  %s46, 128, %s48, [#allocation3]
    $region5: #{ip_retrieval_forward.2} parent=1 // pred_fallthru
      _
    // Predicated region
    $region6: #{ip_retrieval_forward.2} parent=1 // pred_check
      _
    $region7: #{ip_retrieval_forward.2} parent=1 // pred_check_branch
      %52 = sbr.rel (0) target = $region9
    $region8: #{ip_retrieval_forward.2} parent=1 // pred_region
      %54 = vsyncadd [#allocation6], 0
      %s56 = sshll.u32 %s1, 4
      %s57 = int_to_ptr.hbm [resolvable:$true] %s56
      %s58 = sshll.u32 [#allocation5], 4
      %s59 = int_to_ptr.vmem [resolvable:$true] %s58
      %61 = dma.hbm_to_vmem [thread:$0]  %s57, 128, %s59, [#allocation6]
    $region9: #{ip_retrieval_forward.2} parent=1 // pred_fallthru
      _
    // Predicated region
    $region10: #{ip_retrieval_forward.2} parent=1 // pred_check
      _
    $region11: #{ip_retrieval_forward.2} parent=1 // pred_check_branch
      %63 = sbr.rel (0) target = $region13
    $region12: #{ip_retrieval_forward.2} parent=1 // pred_region
      %65 = vsyncadd [#allocation6], 0
      %s66 = sshll.u32 %s2, 4
      %s67 = int_to_ptr.hbm [resolvable:$true] %s66
      %s68 = sshll.u32 [#allocation7], 4
      %s69 = int_to_ptr.vmem [resolvable:$true] %s68
      %74 = dma.hbm_to_vmem [thread:$0]  %s67, 1536, %s69, [#allocation6], 768, 768, 48
    $region13: #{ip_retrieval_forward.2} parent=1 // pred_fallthru
      _
    // Predicated region
    $region14: #{ip_retrieval_forward.2} parent=1 // pred_check
      _
    $region15: #{ip_retrieval_forward.2} parent=1 // pred_check_branch
      %76 = sbr.rel (0) target = $region17
    $region16: #{ip_retrieval_forward.2} parent=1 // pred_region
      %78 = vsyncadd [#allocation9], 0
      %s79 = sshll.u32 %s3, 4
      %s80 = int_to_ptr.hbm [resolvable:$true] %s79
      %s81 = sshll.u32 [#allocation8], 4
      %s82 = int_to_ptr.vmem [resolvable:$true] %s81
      %87 = dma.hbm_to_vmem [thread:$0]  %s80, 1024, %s82, [#allocation9], 512, 512, 32
    $region17: #{ip_retrieval_forward.2} parent=1 // pred_fallthru
      _
    // Predicated region
    $region18: #{ip_retrieval_forward.2} parent=1 // pred_check
      _
    $region19: #{ip_retrieval_forward.2} parent=1 // pred_check_branch
      %89 = sbr.rel (0) target = $region21
    $region20: #{ip_retrieval_forward.2} parent=1 // pred_region
      %91 = vsyncadd [#allocation9], 0
      %s92 = sshll.u32 %s4, 4
      %s93 = int_to_ptr.hbm [resolvable:$true] %s92
      %s94 = sshll.u32 [#allocation10], 4
      %s95 = int_to_ptr.vmem [resolvable:$true] %s94
      %100 = dma.hbm_to_vmem [thread:$0]  %s93, 16384, %s95, [#allocation9], 64, 64, 4
    $region21: #{ip_retrieval_forward.2} parent=1 // pred_fallthru
      _
    // Predicated region
    $region22: #{ip_retrieval_forward.2} parent=1 // pred_check
      _
    $region23: #{ip_retrieval_forward.2} parent=1 // pred_check_branch
      %102 = sbr.rel (0) target = $region25
    $region24: #{ip_retrieval_forward.2} parent=1 // pred_region
      %104 = vsyncadd [#allocation12], 0
      %s106 = sshll.u32 %s5, 4
      %s107 = int_to_ptr.hbm [resolvable:$true] %s106
      %s108 = sshll.u32 [#allocation11], 4
      %s109 = int_to_ptr.vmem [resolvable:$true] %s108
      %111 = dma.hbm_to_vmem [thread:$0]  %s107, 64, %s109, [#allocation12]
    $region25: #{ip_retrieval_forward.2} parent=1 // pred_fallthru
      _
    // Predicated region
    $region26: #{ip_retrieval_forward.2} parent=1 // pred_check
      _
    $region27: #{ip_retrieval_forward.2} parent=1 // pred_check_branch
      %113 = sbr.rel (0) target = $region29
    $region28: #{ip_retrieval_forward.2} parent=1 // pred_region
      %115 = vsyncadd [#allocation12], 0
      %s116 = sshll.u32 %s6, 4
      %s117 = int_to_ptr.hbm [resolvable:$true] %s116
      %s118 = sshll.u32 [#allocation13], 4
      %s119 = int_to_ptr.vmem [resolvable:$true] %s118
      %124 = dma.hbm_to_vmem [thread:$0]  %s117, 16384, %s119, [#allocation12], 64, 64, 4
    $region29: #{ip_retrieval_forward.2} parent=1 // pred_fallthru
      _
    // Predicated region
    $region30: #{ip_retrieval_forward.2} parent=1 // pred_check
      _
    $region31: #{ip_retrieval_forward.2} parent=1 // pred_check_branch
      %126 = sbr.rel (0) target = $region33
    $region32: #{ip_retrieval_forward.2} parent=1 // pred_region
      %128 = vsyncadd [#allocation15], 0
      %s130 = sshll.u32 %s7, 4
      %s131 = int_to_ptr.hbm [resolvable:$true] %s130
      %s132 = sshll.u32 [#allocation14], 4
      %s133 = int_to_ptr.vmem [resolvable:$true] %s132
      %135 = dma.hbm_to_vmem [thread:$0]  %s131, 64, %s133, [#allocation15]
    $region33: #{ip_retrieval_forward.2} parent=1 // pred_fallthru
      _
    // Predicated region
    $region34: #{ip_retrieval_forward.2} parent=1 // pred_check
      _
    $region35: #{ip_retrieval_forward.2} parent=1 // pred_check_branch
      %137 = sbr.rel (0) target = $region37
    $region36: #{ip_retrieval_forward.2} parent=1 // pred_region
      %139 = vsyncadd [#allocation15], 0
      %s140 = sshll.u32 %s8, 4
      %s141 = int_to_ptr.hbm [resolvable:$true] %s140
      %s142 = sshll.u32 [#allocation16], 4
      %s143 = int_to_ptr.vmem [resolvable:$true] %s142
      %148 = dma.hbm_to_vmem [thread:$0]  %s141, 49152, %s143, [#allocation15], 512, 512, 32
    $region37: #{ip_retrieval_forward.2} parent=1 // pred_fallthru
      _
    // Predicated region
    $region38: #{ip_retrieval_forward.2} parent=1 // pred_check
      _
    $region39: #{ip_retrieval_forward.2} parent=1 // pred_check_branch
      %150 = sbr.rel (0) target = $region41
    $region40: #{ip_retrieval_forward.2} parent=1 // pred_region
      %152 = vsyncadd [#allocation18], 0
      %s154 = sshll.u32 %s9, 4
      %s155 = int_to_ptr.hbm [resolvable:$true] %s154
      %s156 = sshll.u32 [#allocation17], 4
      %s157 = int_to_ptr.vmem [resolvable:$true] %s156
      %159 = dma.hbm_to_vmem [thread:$0]  %s155, 128, %s157, [#allocation18]
    $region41: #{ip_retrieval_forward.2} parent=1 // pred_fallthru
      _
    // Predicated region
    $region42: #{ip_retrieval_forward.2} parent=1 // pred_check
      _
    $region43: #{ip_retrieval_forward.2} parent=1 // pred_check_branch
      %161 = sbr.rel (0) target = $region45
    $region44: #{ip_retrieval_forward.2} parent=1 // pred_region
      %163 = vsyncadd [#allocation18], 0
      %s164 = sshll.u32 %s10, 4
      %s165 = int_to_ptr.hbm [resolvable:$true] %s164
      %s166 = sshll.u32 [#allocation19], 4
      %s167 = int_to_ptr.vmem [resolvable:$true] %s166
      %172 = dma.hbm_to_vmem [thread:$0]  %s165, 8192, %s167, [#allocation18], 64, 64, 4
    $region45: #{ip_retrieval_forward.2} parent=1 // pred_fallthru
      _
    // Predicated region
    $region46: #{ip_retrieval_forward.2} parent=1 // pred_check
      _
    $region47: #{ip_retrieval_forward.2} parent=1 // pred_check_branch
      %174 = sbr.rel (0) target = $region49
    $region48: #{ip_retrieval_forward.2} parent=1 // pred_region
      %176 = vsyncadd [#allocation21], 0
      %s178 = sshll.u32 %s11, 4
      %s179 = int_to_ptr.hbm [resolvable:$true] %s178
      %s180 = sshll.u32 [#allocation20], 4
      %s181 = int_to_ptr.vmem [resolvable:$true] %s180
      %183 = dma.hbm_to_vmem [thread:$0]  %s179, 16, %s181, [#allocation21]
    $region49: #{ip_retrieval_forward.2} parent=1 // pred_fallthru
      _
    // Predicated region
    $region50: #{ip_retrieval_forward.2} parent=1 // pred_check
      _
    $region51: #{ip_retrieval_forward.2} parent=1 // pred_check_branch
      %185 = sbr.rel (0) target = $region53
    $region52: #{ip_retrieval_forward.2} parent=1 // pred_region
      %187 = vsyncadd [#allocation21], 0
      %s188 = sshll.u32 %s12, 4
      %s189 = int_to_ptr.hbm [resolvable:$true] %s188
      %s190 = sshll.u32 [#allocation22], 4
      %s191 = int_to_ptr.vmem [resolvable:$true] %s190
      %196 = dma.hbm_to_vmem [thread:$0]  %s189, 32768, %s191, [#allocation21], 512, 512, 32
    $region53: #{ip_retrieval_forward.2} parent=1 // pred_fallthru
      _
    // Predicated region
    $region54: #{ip_retrieval_forward.2} parent=1 // pred_check
      _
    $region55: #{ip_retrieval_forward.2} parent=1 // pred_check_branch
      %198 = sbr.rel (0) target = $region57
    $region56: #{ip_retrieval_forward.2} parent=1 // pred_region
      %200 = vsyncadd [#allocation24], 0
      %s202 = sshll.u32 %s13, 4
      %s203 = int_to_ptr.hbm [resolvable:$true] %s202
      %s204 = sshll.u32 [#allocation23], 4
      %s205 = int_to_ptr.vmem [resolvable:$true] %s204
      %207 = dma.hbm_to_vmem [thread:$0]  %s203, 128, %s205, [#allocation24]
    $region57: #{ip_retrieval_forward.2} parent=1 // pred_fallthru
      _
    // Predicated region
    $region58: #{ip_retrieval_forward.2} parent=1 // pred_check
      _
    $region59: #{ip_retrieval_forward.2} parent=1 // pred_check_branch
      %209 = sbr.rel (0) target = $region61
    $region60: #{ip_retrieval_forward.2} parent=1 // pred_region
      %211 = vsyncadd [#allocation24], 0
      %s212 = sshll.u32 %s14, 4
      %s213 = int_to_ptr.hbm [resolvable:$true] %s212
      %s214 = sshll.u32 [#allocation25], 4
      %s215 = int_to_ptr.vmem [resolvable:$true] %s214
      %220 = dma.hbm_to_vmem [thread:$0]  %s213, 8192, %s215, [#allocation24], 64, 64, 4
    $region61: #{ip_retrieval_forward.2} parent=1 // pred_fallthru
      _
    // Predicated region
    $region62: #{ip_retrieval_forward.2} parent=1 // pred_check
      _
    $region63: #{ip_retrieval_forward.2} parent=1 // pred_check_branch
      %222 = sbr.rel (0) target = $region65
    $region64: #{ip_retrieval_forward.2} parent=1 // pred_region
      %224 = vsyncadd [#allocation27], 0
      %s226 = sshll.u32 %s15, 4
      %s227 = int_to_ptr.hbm [resolvable:$true] %s226
      %s228 = sshll.u32 [#allocation26], 4
      %s229 = int_to_ptr.vmem [resolvable:$true] %s228
      %231 = dma.hbm_to_vmem [thread:$0]  %s227, 16, %s229, [#allocation27]
    $region65: #{ip_retrieval_forward.2} parent=1 // pred_fallthru
      _
    // Predicated region
    $region66: #{ip_retrieval_forward.2} parent=1 // pred_check
      _
    $region67: #{ip_retrieval_forward.2} parent=1 // pred_check_branch
      %233 = sbr.rel (0) target = $region69
    $region68: #{ip_retrieval_forward.2} parent=1 // pred_region
      %235 = vsyncadd [#allocation27], 0
      %s236 = sshll.u32 %s16, 4
      %s237 = int_to_ptr.hbm [resolvable:$true] %s236
      %s238 = sshll.u32 [#allocation28], 4
      %s239 = int_to_ptr.vmem [resolvable:$true] %s238
      %244 = dma.hbm_to_vmem [thread:$0]  %s237, 4096, %s239, [#allocation27], 64, 64, 4
    $region69: #{ip_retrieval_forward.2} parent=1 // pred_fallthru
      _
    // Predicated region
    $region70: #{ip_retrieval_forward.2} parent=1 // pred_check
      _
    $region71: #{ip_retrieval_forward.2} parent=1 // pred_check_branch
      %246 = sbr.rel (0) target = $region73
    $region72: #{ip_retrieval_forward.2} parent=1 // pred_region
      %248 = vsyncadd [#allocation30], 0
      %s250 = sshll.u32 %s17, 4
      %s251 = int_to_ptr.hbm [resolvable:$true] %s250
      %s252 = sshll.u32 [#allocation29], 4
      %s253 = int_to_ptr.vmem [resolvable:$true] %s252
      %255 = dma.hbm_to_vmem [thread:$0]  %s251, 64, %s253, [#allocation30]
    $region73: #{ip_retrieval_forward.2} parent=1 // pred_fallthru
      _
    // Predicated region
    $region74: #{ip_retrieval_forward.2} parent=1 // pred_check
      _
    $region75: #{ip_retrieval_forward.2} parent=1 // pred_check_branch
      %257 = sbr.rel (0) target = $region77
    $region76: #{ip_retrieval_forward.2} parent=1 // pred_region
      %259 = vsyncadd [#allocation30], 0
      %s260 = sshll.u32 %s18, 4
      %s261 = int_to_ptr.hbm [resolvable:$true] %s260
      %s262 = sshll.u32 [#allocation31], 4
      %s263 = int_to_ptr.vmem [resolvable:$true] %s262
      %268 = dma.hbm_to_vmem [thread:$0]  %s261, 1024, %s263, [#allocation30], 64, 64, 4
    $region77: #{ip_retrieval_forward.2} parent=1 // pred_fallthru
      _
    // Predicated region
    $region78: #{ip_retrieval_forward.2} parent=1 // pred_check
      _
    $region79: #{ip_retrieval_forward.2} parent=1 // pred_check_branch
      %270 = sbr.rel (0) target = $region81
    $region80: #{ip_retrieval_forward.2} parent=1 // pred_region
      %272 = vsyncadd [#allocation33], 0
      %s274 = sshll.u32 %s19, 4
      %s275 = int_to_ptr.hbm [resolvable:$true] %s274
      %s276 = sshll.u32 [#allocation32], 4
      %s277 = int_to_ptr.vmem [resolvable:$true] %s276
      %279 = dma.hbm_to_vmem [thread:$0]  %s275, 16, %s277, [#allocation33]
    $region81: #{ip_retrieval_forward.2} parent=1 // pred_fallthru
      _
    // Predicated region
    $region82: #{ip_retrieval_forward.2} parent=1 // pred_check
      _
    $region83: #{ip_retrieval_forward.2} parent=1 // pred_check_branch
      %281 = sbr.rel (0) target = $region85
    $region84: #{ip_retrieval_forward.2} parent=1 // pred_region
      %283 = dma.done [#allocation3], 128
    $region85: #{ip_retrieval_forward.2} parent=1 // pred_fallthru
      _
    // Predicated region
    $region86: #{ip_retrieval_forward.2} parent=1 // pred_check
      _
    $region87: #{ip_retrieval_forward.2} parent=1 // pred_check_branch
      %285 = sbr.rel (0) target = $region89
    $region88: #{ip_retrieval_forward.2} parent=1 // pred_region
      %287 = dma.done [#allocation6], 128
    $region89: #{ip_retrieval_forward.2} parent=1 // pred_fallthru
      _
    // Predicated region
    $region90: #{ip_retrieval_forward.2} parent=1 // pred_check
      _
    $region91: #{ip_retrieval_forward.2} parent=1 // pred_check_branch
      %289 = sbr.rel (0) target = $region93
    $region92: #{ip_retrieval_forward.2} parent=1 // pred_region
      %291 = dma.done [#allocation6], 1536
    $region93: #{ip_retrieval_forward.2} parent=1 // pred_fallthru
      _
    // Predicated region
    $region94: #{ip_retrieval_forward.2} parent=1 // pred_check
      _
    $region95: #{ip_retrieval_forward.2} parent=1 // pred_check_branch
      %293 = sbr.rel (0) target = $region97
    $region96: #{ip_retrieval_forward.2} parent=1 // pred_region
      %295 = dma.done [#allocation9], 1024
    $region97: #{ip_retrieval_forward.2} parent=1 // pred_fallthru
      _
    // Predicated region
    $region98: #{ip_retrieval_forward.2} parent=1 // pred_check
      _
    $region99: #{ip_retrieval_forward.2} parent=1 // pred_check_branch
      %297 = sbr.rel (0) target = $region101
    $region100: #{ip_retrieval_forward.2} parent=1 // pred_region
      %299 = dma.done [#allocation9], 16384
    $region101: #{ip_retrieval_forward.2} parent=1 // pred_fallthru
      _
    // Predicated region
    $region102: #{ip_retrieval_forward.2} parent=1 // pred_check
      _
    $region103: #{ip_retrieval_forward.2} parent=1 // pred_check_branch
      %301 = sbr.rel (0) target = $region105
    $region104: #{ip_retrieval_forward.2} parent=1 // pred_region
      %303 = dma.done [#allocation12], 64
    $region105: #{ip_retrieval_forward.2} parent=1 // pred_fallthru
      _
    // Predicated region
    $region106: #{ip_retrieval_forward.2} parent=1 // pred_check
      _
    $region107: #{ip_retrieval_forward.2} parent=1 // pred_check_branch
      %305 = sbr.rel (0) target = $region109
    $region108: #{ip_retrieval_forward.2} parent=1 // pred_region
      %307 = dma.done [#allocation12], 16384
    $region109: #{ip_retrieval_forward.2} parent=1 // pred_fallthru
      _
    // Predicated region
    $region110: #{ip_retrieval_forward.2} parent=1 // pred_check
      _
    $region111: #{ip_retrieval_forward.2} parent=1 // pred_check_branch
      %309 = sbr.rel (0) target = $region113
    $region112: #{ip_retrieval_forward.2} parent=1 // pred_region
      %311 = dma.done [#allocation15], 64
    $region113: #{ip_retrieval_forward.2} parent=1 // pred_fallthru
      _
    // Predicated region
    $region114: #{ip_retrieval_forward.2} parent=1 // pred_check
      _
    $region115: #{ip_retrieval_forward.2} parent=1 // pred_check_branch
      %313 = sbr.rel (0) target = $region117
    $region116: #{ip_retrieval_forward.2} parent=1 // pred_region
      %315 = dma.done [#allocation15], 49152
    $region117: #{ip_retrieval_forward.2} parent=1 // pred_fallthru
      _
    // Predicated region
    $region118: #{ip_retrieval_forward.2} parent=1 // pred_check
      _
    $region119: #{ip_retrieval_forward.2} parent=1 // pred_check_branch
      %317 = sbr.rel (0) target = $region121
    $region120: #{ip_retrieval_forward.2} parent=1 // pred_region
      %319 = dma.done [#allocation18], 128
    $region121: #{ip_retrieval_forward.2} parent=1 // pred_fallthru
      _
    // Predicated region
    $region122: #{ip_retrieval_forward.2} parent=1 // pred_check
      _
    $region123: #{ip_retrieval_forward.2} parent=1 // pred_check_branch
      %321 = sbr.rel (0) target = $region125
    $region124: #{ip_retrieval_forward.2} parent=1 // pred_region
      %323 = dma.done [#allocation18], 8192
    $region125: #{ip_retrieval_forward.2} parent=1 // pred_fallthru
      _
    // Predicated region
    $region126: #{ip_retrieval_forward.2} parent=1 // pred_check
      _
    $region127: #{ip_retrieval_forward.2} parent=1 // pred_check_branch
      %325 = sbr.rel (0) target = $region129
    $region128: #{ip_retrieval_forward.2} parent=1 // pred_region
      %327 = dma.done [#allocation21], 16
    $region129: #{ip_retrieval_forward.2} parent=1 // pred_fallthru
      _
    // Predicated region
    $region130: #{ip_retrieval_forward.2} parent=1 // pred_check
      _
    $region131: #{ip_retrieval_forward.2} parent=1 // pred_check_branch
      %329 = sbr.rel (0) target = $region133
    $region132: #{ip_retrieval_forward.2} parent=1 // pred_region
      %331 = dma.done [#allocation21], 32768
    $region133: #{ip_retrieval_forward.2} parent=1 // pred_fallthru
      _
    // Predicated region
    $region134: #{ip_retrieval_forward.2} parent=1 // pred_check
      _
    $region135: #{ip_retrieval_forward.2} parent=1 // pred_check_branch
      %333 = sbr.rel (0) target = $region137
    $region136: #{ip_retrieval_forward.2} parent=1 // pred_region
      %335 = dma.done [#allocation24], 128
    $region137: #{ip_retrieval_forward.2} parent=1 // pred_fallthru
      _
    // Predicated region
    $region138: #{ip_retrieval_forward.2} parent=1 // pred_check
      _
    $region139: #{ip_retrieval_forward.2} parent=1 // pred_check_branch
      %337 = sbr.rel (0) target = $region141
    $region140: #{ip_retrieval_forward.2} parent=1 // pred_region
      %339 = dma.done [#allocation24], 8192
    $region141: #{ip_retrieval_forward.2} parent=1 // pred_fallthru
      _
    // Predicated region
    $region142: #{ip_retrieval_forward.2} parent=1 // pred_check
      _
    $region143: #{ip_retrieval_forward.2} parent=1 // pred_check_branch
      %341 = sbr.rel (0) target = $region145
    $region144: #{ip_retrieval_forward.2} parent=1 // pred_region
      %343 = dma.done [#allocation27], 16
    $region145: #{ip_retrieval_forward.2} parent=1 // pred_fallthru
      _
    // Predicated region
    $region146: #{ip_retrieval_forward.2} parent=1 // pred_check
      _
    $region147: #{ip_retrieval_forward.2} parent=1 // pred_check_branch
      %345 = sbr.rel (0) target = $region149
    $region148: #{ip_retrieval_forward.2} parent=1 // pred_region
      %347 = dma.done [#allocation27], 4096
    $region149: #{ip_retrieval_forward.2} parent=1 // pred_fallthru
      _
    // Predicated region
    $region150: #{ip_retrieval_forward.2} parent=1 // pred_check
      _
    $region151: #{ip_retrieval_forward.2} parent=1 // pred_check_branch
      %349 = sbr.rel (0) target = $region153
    $region152: #{ip_retrieval_forward.2} parent=1 // pred_region
      %351 = dma.done [#allocation30], 64
    $region153: #{ip_retrieval_forward.2} parent=1 // pred_fallthru
      _
    // Predicated region
    $region154: #{ip_retrieval_forward.2} parent=1 // pred_check
      _
    $region155: #{ip_retrieval_forward.2} parent=1 // pred_check_branch
      %353 = sbr.rel (0) target = $region157
    $region156: #{ip_retrieval_forward.2} parent=1 // pred_region
      %355 = dma.done [#allocation30], 1024
    $region157: #{ip_retrieval_forward.2} parent=1 // pred_fallthru
      _
    // Predicated region
    $region158: #{ip_retrieval_forward.2} parent=1 // pred_check
      _
    $region159: #{ip_retrieval_forward.2} parent=1 // pred_check_branch
      %357 = sbr.rel (0) target = $region161
    $region160: #{ip_retrieval_forward.2} parent=1 // pred_region
      %359 = dma.done [#allocation33], 16
    $region161: #{ip_retrieval_forward.2} parent=1 // pred_fallthru
      _
    %v361 = vld [vmem:[#allocation2] sm:$0xff]
    %363 = vst [vmem:[#allocation1] ss:$4 sm:$0xff] %v361
    %v364 = vld.sshfl [vmem:[#allocation1] sm:$0xff pattern:$0x73625140]
    %v365 = vld.sshfl [vmem:[#allocation1 + $0x8] sm:$0xff pattern:$0x73625140]
    %v366 = vld.sshfl [vmem:[#allocation1 + $0x10] sm:$0xff pattern:$0x73625140]
    %v367 = vld.sshfl [vmem:[#allocation1 + $0x18] sm:$0xff pattern:$0x73625140]
    %v372 = vpack.c.bf16 %v364, %v364
    %v373 = vpack.c.bf16 %v365, %v365
    %v374 = vpack.c.bf16 %v366, %v366
    %v375 = vpack.c.bf16 %v367, %v367
    %v376 = vld [vmem:[#allocation5] sm:$0xff]
    %378 = vst [vmem:[#allocation1] ss:$4 sm:$0xff] %v376
    %v379 = vld.sshfl [vmem:[#allocation1] sm:$0xff pattern:$0x73625140]
    %v380 = vld.sshfl [vmem:[#allocation1 + $0x8] sm:$0xff pattern:$0x73625140]
    %v381 = vld.sshfl [vmem:[#allocation1 + $0x10] sm:$0xff pattern:$0x73625140]
    %v382 = vld.sshfl [vmem:[#allocation1 + $0x18] sm:$0xff pattern:$0x73625140]
    %v387 = vpack.c.bf16 %v379, %v379
    %v388 = vpack.c.bf16 %v380, %v380
    %v389 = vpack.c.bf16 %v381, %v381
    %v390 = vpack.c.bf16 %v382, %v382
    %v391 = vld [vmem:[#allocation10] sm:$0xf]
    %v392 = vld [vmem:[#allocation10 + $0x4] sm:$0xf]
    %v393 = vld [vmem:[#allocation10 + $0x8] sm:$0xf]
    %v394 = vld [vmem:[#allocation10 + $0xc] sm:$0xf]
    %v395 = vld [vmem:[#allocation10 + $0x10] sm:$0xf]
    %v396 = vld [vmem:[#allocation10 + $0x14] sm:$0xf]
    %v397 = vld [vmem:[#allocation10 + $0x18] sm:$0xf]
    %v398 = vld [vmem:[#allocation10 + $0x1c] sm:$0xf]
    %v399 = vld [vmem:[#allocation10 + $0x20] sm:$0xf]
    %v400 = vld [vmem:[#allocation10 + $0x24] sm:$0xf]
    %v401 = vld [vmem:[#allocation10 + $0x28] sm:$0xf]
    %v402 = vld [vmem:[#allocation10 + $0x2c] sm:$0xf]
    %v403 = vld [vmem:[#allocation10 + $0x30] sm:$0xf]
    %v404 = vld [vmem:[#allocation10 + $0x34] sm:$0xf]
    %v405 = vld [vmem:[#allocation10 + $0x38] sm:$0xf]
    %v406 = vld [vmem:[#allocation10 + $0x3c] sm:$0xf]
    %v407 = vld [vmem:[#allocation10 + $0x40] sm:$0xf]
    %v408 = vld [vmem:[#allocation10 + $0x44] sm:$0xf]
    %v409 = vld [vmem:[#allocation10 + $0x48] sm:$0xf]
    %v410 = vld [vmem:[#allocation10 + $0x4c] sm:$0xf]
    %v411 = vld [vmem:[#allocation10 + $0x50] sm:$0xf]
    %v412 = vld [vmem:[#allocation10 + $0x54] sm:$0xf]
    %v413 = vld [vmem:[#allocation10 + $0x58] sm:$0xf]
    %v414 = vld [vmem:[#allocation10 + $0x5c] sm:$0xf]
    %v415 = vld [vmem:[#allocation10 + $0x60] sm:$0xf]
    %v416 = vld [vmem:[#allocation10 + $0x64] sm:$0xf]
    %v417 = vld [vmem:[#allocation10 + $0x68] sm:$0xf]
    %v418 = vld [vmem:[#allocation10 + $0x6c] sm:$0xf]
    %v419 = vld [vmem:[#allocation10 + $0x70] sm:$0xf]
    %v420 = vld [vmem:[#allocation10 + $0x74] sm:$0xf]
    %v421 = vld [vmem:[#allocation10 + $0x78] sm:$0xf]
    %v422 = vld [vmem:[#allocation10 + $0x7c] sm:$0xf]
    %v423 = vld [vmem:[#allocation10 + $0x80] sm:$0xf]
    %v424 = vld [vmem:[#allocation10 + $0x84] sm:$0xf]
    %v425 = vld [vmem:[#allocation10 + $0x88] sm:$0xf]
    %v426 = vld [vmem:[#allocation10 + $0x8c] sm:$0xf]
    %v427 = vld [vmem:[#allocation10 + $0x90] sm:$0xf]
    %v428 = vld [vmem:[#allocation10 + $0x94] sm:$0xf]
    %v429 = vld [vmem:[#allocation10 + $0x98] sm:$0xf]
    %v430 = vld [vmem:[#allocation10 + $0x9c] sm:$0xf]
    %v431 = vld [vmem:[#allocation10 + $0xa0] sm:$0xf]
    %v432 = vld [vmem:[#allocation10 + $0xa4] sm:$0xf]
    %v433 = vld [vmem:[#allocation10 + $0xa8] sm:$0xf]
    %v434 = vld [vmem:[#allocation10 + $0xac] sm:$0xf]
    %v435 = vld [vmem:[#allocation10 + $0xb0] sm:$0xf]
    %v436 = vld [vmem:[#allocation10 + $0xb4] sm:$0xf]
    %v437 = vld [vmem:[#allocation10 + $0xb8] sm:$0xf]
    %v438 = vld [vmem:[#allocation10 + $0xbc] sm:$0xf]
    %v439 = vld [vmem:[#allocation10 + $0xc0] sm:$0xf]
    %v440 = vld [vmem:[#allocation10 + $0xc4] sm:$0xf]
    %v441 = vld [vmem:[#allocation10 + $0xc8] sm:$0xf]
    %v442 = vld [vmem:[#allocation10 + $0xcc] sm:$0xf]
    %v443 = vld [vmem:[#allocation10 + $0xd0] sm:$0xf]
    %v444 = vld [vmem:[#allocation10 + $0xd4] sm:$0xf]
    %v445 = vld [vmem:[#allocation10 + $0xd8] sm:$0xf]
    %v446 = vld [vmem:[#allocation10 + $0xdc] sm:$0xf]
    %v447 = vld [vmem:[#allocation10 + $0xe0] sm:$0xf]
    %v448 = vld [vmem:[#allocation10 + $0xe4] sm:$0xf]
    %v449 = vld [vmem:[#allocation10 + $0xe8] sm:$0xf]
    %v450 = vld [vmem:[#allocation10 + $0xec] sm:$0xf]
    %v451 = vld [vmem:[#allocation10 + $0xf0] sm:$0xf]
    %v452 = vld [vmem:[#allocation10 + $0xf4] sm:$0xf]
    %v453 = vld [vmem:[#allocation10 + $0xf8] sm:$0xf]
    %v454 = vld [vmem:[#allocation10 + $0xfc] sm:$0xf]
    %v455 = vld [vmem:[#allocation11] sm:$0x1]
    %v456 = vperm.slane %v455, 0
    %v521 = vunpack.c.l.b16 %v391
    %v522 = vunpack.c.l.b16 %v392
    %v523 = vunpack.c.l.b16 %v393
    %v524 = vunpack.c.l.b16 %v394
    %v525 = vunpack.c.l.b16 %v395
    %v526 = vunpack.c.l.b16 %v396
    %v527 = vunpack.c.l.b16 %v397
    %v528 = vunpack.c.l.b16 %v398
    %v529 = vunpack.c.l.b16 %v399
    %v530 = vunpack.c.l.b16 %v400
    %v531 = vunpack.c.l.b16 %v401
    %v532 = vunpack.c.l.b16 %v402
    %v533 = vunpack.c.l.b16 %v403
    %v534 = vunpack.c.l.b16 %v404
    %v535 = vunpack.c.l.b16 %v405
    %v536 = vunpack.c.l.b16 %v406
    %v537 = vunpack.c.l.b16 %v407
    %v538 = vunpack.c.l.b16 %v408
    %v539 = vunpack.c.l.b16 %v409
    %v540 = vunpack.c.l.b16 %v410
    %v541 = vunpack.c.l.b16 %v411
    %v542 = vunpack.c.l.b16 %v412
    %v543 = vunpack.c.l.b16 %v413
    %v544 = vunpack.c.l.b16 %v414
    %v545 = vunpack.c.l.b16 %v415
    %v546 = vunpack.c.l.b16 %v416
    %v547 = vunpack.c.l.b16 %v417
    %v548 = vunpack.c.l.b16 %v418
    %v549 = vunpack.c.l.b16 %v419
    %v550 = vunpack.c.l.b16 %v420
    %v551 = vunpack.c.l.b16 %v421
    %v552 = vunpack.c.l.b16 %v422
    %v553 = vunpack.c.l.b16 %v423
    %v554 = vunpack.c.l.b16 %v424
    %v555 = vunpack.c.l.b16 %v425
    %v556 = vunpack.c.l.b16 %v426
    %v557 = vunpack.c.l.b16 %v427
    %v558 = vunpack.c.l.b16 %v428
    %v559 = vunpack.c.l.b16 %v429
    %v560 = vunpack.c.l.b16 %v430
    %v561 = vunpack.c.l.b16 %v431
    %v562 = vunpack.c.l.b16 %v432
    %v563 = vunpack.c.l.b16 %v433
    %v564 = vunpack.c.l.b16 %v434
    %v565 = vunpack.c.l.b16 %v435
    %v566 = vunpack.c.l.b16 %v436
    %v567 = vunpack.c.l.b16 %v437
    %v568 = vunpack.c.l.b16 %v438
    %v569 = vunpack.c.l.b16 %v439
    %v570 = vunpack.c.l.b16 %v440
    %v571 = vunpack.c.l.b16 %v441
    %v572 = vunpack.c.l.b16 %v442
    %v573 = vunpack.c.l.b16 %v443
    %v574 = vunpack.c.l.b16 %v444
    %v575 = vunpack.c.l.b16 %v445
    %v576 = vunpack.c.l.b16 %v446
    %v577 = vunpack.c.l.b16 %v447
    %v578 = vunpack.c.l.b16 %v448
    %v579 = vunpack.c.l.b16 %v449
    %v580 = vunpack.c.l.b16 %v450
    %v581 = vunpack.c.l.b16 %v451
    %v582 = vunpack.c.l.b16 %v452
    %v583 = vunpack.c.l.b16 %v453
    %v584 = vunpack.c.l.b16 %v454
    %v585 = vpack.c.b16 %v522, %v521
    %v586 = vpack.c.b16 %v524, %v523
    %v587 = vpack.c.b16 %v526, %v525
    %v588 = vpack.c.b16 %v528, %v527
    %v589 = vpack.c.b16 %v530, %v529
    %v590 = vpack.c.b16 %v532, %v531
    %v591 = vpack.c.b16 %v534, %v533
    %v592 = vpack.c.b16 %v536, %v535
    %v593 = vpack.c.b16 %v538, %v537
    %v594 = vpack.c.b16 %v540, %v539
    %v595 = vpack.c.b16 %v542, %v541
    %v596 = vpack.c.b16 %v544, %v543
    %v597 = vpack.c.b16 %v546, %v545
    %v598 = vpack.c.b16 %v548, %v547
    %v599 = vpack.c.b16 %v550, %v549
    %v600 = vpack.c.b16 %v552, %v551
    %v601 = vpack.c.b16 %v554, %v553
    %v602 = vpack.c.b16 %v556, %v555
    %v603 = vpack.c.b16 %v558, %v557
    %v604 = vpack.c.b16 %v560, %v559
    %v605 = vpack.c.b16 %v562, %v561
    %v606 = vpack.c.b16 %v564, %v563
    %v607 = vpack.c.b16 %v566, %v565
    %v608 = vpack.c.b16 %v568, %v567
    %v609 = vpack.c.b16 %v570, %v569
    %v610 = vpack.c.b16 %v572, %v571
    %v611 = vpack.c.b16 %v574, %v573
    %v612 = vpack.c.b16 %v576, %v575
    %v613 = vpack.c.b16 %v578, %v577
    %v614 = vpack.c.b16 %v580, %v579
    %v615 = vpack.c.b16 %v582, %v581
    %v616 = vpack.c.b16 %v584, %v583
    %649 = vmatpush.bf16.msra.mxu0 %v592
    %650 = vmatpush.bf16.msra.mxu0 %v591
    %651 = vmatpush.bf16.msra.mxu0 %v590
    %652 = vmatpush.bf16.msra.mxu0 %v589
    %653 = vmatpush.bf16.msra.mxu0 %v588
    %654 = vmatpush.bf16.msra.mxu0 %v587
    %655 = vmatpush.bf16.msra.mxu0 %v586
    %656 = vmatpush.bf16.msra.mxu0 %v585
    %657 = vmatmul.bf16.gmra.mxu0 %v372
    %v658 = vpop.f32.mrf.mxu0
    %v659 = vadd.f32 %v456, %v658
    %v660 = vpop.f32.mrf.mxu0
    %661 = vdwg.mxu0
    %662 = vmatpush.bf16.msra.mxu0 %v600
    %663 = vmatpush.bf16.msra.mxu0 %v599
    %664 = vmatpush.bf16.msra.mxu0 %v598
    %665 = vmatpush.bf16.msra.mxu0 %v597
    %666 = vmatpush.bf16.msra.mxu0 %v596
    %667 = vmatpush.bf16.msra.mxu0 %v595
    %668 = vmatpush.bf16.msra.mxu0 %v594
    %669 = vmatpush.bf16.msra.mxu0 %v593
    %670 = vmatmul.bf16.gmra.mxu0 %v373
    %v671 = vpop.f32.mrf.mxu0
    %v672 = vadd.f32 %v659, %v671
    %v673 = vpop.f32.mrf.mxu0
    %674 = vdwg.mxu0
    %675 = vmatpush.bf16.msra.mxu0 %v608
    %676 = vmatpush.bf16.msra.mxu0 %v607
    %677 = vmatpush.bf16.msra.mxu0 %v606
    %678 = vmatpush.bf16.msra.mxu0 %v605
    %679 = vmatpush.bf16.msra.mxu0 %v604
    %680 = vmatpush.bf16.msra.mxu0 %v603
    %681 = vmatpush.bf16.msra.mxu0 %v602
    %682 = vmatpush.bf16.msra.mxu0 %v601
    %683 = vmatmul.bf16.gmra.mxu0 %v374
    %v684 = vpop.f32.mrf.mxu0
    %v685 = vadd.f32 %v672, %v684
    %v686 = vpop.f32.mrf.mxu0
    %687 = vdwg.mxu0
    %688 = vmatpush.bf16.msra.mxu0 %v616
    %689 = vmatpush.bf16.msra.mxu0 %v615
    %690 = vmatpush.bf16.msra.mxu0 %v614
    %691 = vmatpush.bf16.msra.mxu0 %v613
    %692 = vmatpush.bf16.msra.mxu0 %v612
    %693 = vmatpush.bf16.msra.mxu0 %v611
    %694 = vmatpush.bf16.msra.mxu0 %v610
    %695 = vmatpush.bf16.msra.mxu0 %v609
    %696 = vmatmul.bf16.gmra.mxu0 %v375
    %v697 = vpop.f32.mrf.mxu0
    %v698 = vadd.f32 %v685, %v697
    %v699 = vpop.f32.mrf.mxu0
    %700 = vdwg.mxu0
    %v701 = vld [vmem:[#allocation13] sm:$0xf]
    %v702 = vld [vmem:[#allocation13 + $0x4] sm:$0xf]
    %v703 = vld [vmem:[#allocation13 + $0x8] sm:$0xf]
    %v704 = vld [vmem:[#allocation13 + $0xc] sm:$0xf]
    %v705 = vld [vmem:[#allocation13 + $0x10] sm:$0xf]
    %v706 = vld [vmem:[#allocation13 + $0x14] sm:$0xf]
    %v707 = vld [vmem:[#allocation13 + $0x18] sm:$0xf]
    %v708 = vld [vmem:[#allocation13 + $0x1c] sm:$0xf]
    %v709 = vld [vmem:[#allocation13 + $0x20] sm:$0xf]
    %v710 = vld [vmem:[#allocation13 + $0x24] sm:$0xf]
    %v711 = vld [vmem:[#allocation13 + $0x28] sm:$0xf]
    %v712 = vld [vmem:[#allocation13 + $0x2c] sm:$0xf]
    %v713 = vld [vmem:[#allocation13 + $0x30] sm:$0xf]
    %v714 = vld [vmem:[#allocation13 + $0x34] sm:$0xf]
    %v715 = vld [vmem:[#allocation13 + $0x38] sm:$0xf]
    %v716 = vld [vmem:[#allocation13 + $0x3c] sm:$0xf]
    %v717 = vld [vmem:[#allocation13 + $0x40] sm:$0xf]
    %v718 = vld [vmem:[#allocation13 + $0x44] sm:$0xf]
    %v719 = vld [vmem:[#allocation13 + $0x48] sm:$0xf]
    %v720 = vld [vmem:[#allocation13 + $0x4c] sm:$0xf]
    %v721 = vld [vmem:[#allocation13 + $0x50] sm:$0xf]
    %v722 = vld [vmem:[#allocation13 + $0x54] sm:$0xf]
    %v723 = vld [vmem:[#allocation13 + $0x58] sm:$0xf]
    %v724 = vld [vmem:[#allocation13 + $0x5c] sm:$0xf]
    %v725 = vld [vmem:[#allocation13 + $0x60] sm:$0xf]
    %v726 = vld [vmem:[#allocation13 + $0x64] sm:$0xf]
    %v727 = vld [vmem:[#allocation13 + $0x68] sm:$0xf]
    %v728 = vld [vmem:[#allocation13 + $0x6c] sm:$0xf]
    %v729 = vld [vmem:[#allocation13 + $0x70] sm:$0xf]
    %v730 = vld [vmem:[#allocation13 + $0x74] sm:$0xf]
    %v731 = vld [vmem:[#allocation13 + $0x78] sm:$0xf]
    %v732 = vld [vmem:[#allocation13 + $0x7c] sm:$0xf]
    %v733 = vld [vmem:[#allocation13 + $0x80] sm:$0xf]
    %v734 = vld [vmem:[#allocation13 + $0x84] sm:$0xf]
    %v735 = vld [vmem:[#allocation13 + $0x88] sm:$0xf]
    %v736 = vld [vmem:[#allocation13 + $0x8c] sm:$0xf]
    %v737 = vld [vmem:[#allocation13 + $0x90] sm:$0xf]
    %v738 = vld [vmem:[#allocation13 + $0x94] sm:$0xf]
    %v739 = vld [vmem:[#allocation13 + $0x98] sm:$0xf]
    %v740 = vld [vmem:[#allocation13 + $0x9c] sm:$0xf]
    %v741 = vld [vmem:[#allocation13 + $0xa0] sm:$0xf]
    %v742 = vld [vmem:[#allocation13 + $0xa4] sm:$0xf]
    %v743 = vld [vmem:[#allocation13 + $0xa8] sm:$0xf]
    %v744 = vld [vmem:[#allocation13 + $0xac] sm:$0xf]
    %v745 = vld [vmem:[#allocation13 + $0xb0] sm:$0xf]
    %v746 = vld [vmem:[#allocation13 + $0xb4] sm:$0xf]
    %v747 = vld [vmem:[#allocation13 + $0xb8] sm:$0xf]
    %v748 = vld [vmem:[#allocation13 + $0xbc] sm:$0xf]
    %v749 = vld [vmem:[#allocation13 + $0xc0] sm:$0xf]
    %v750 = vld [vmem:[#allocation13 + $0xc4] sm:$0xf]
    %v751 = vld [vmem:[#allocation13 + $0xc8] sm:$0xf]
    %v752 = vld [vmem:[#allocation13 + $0xcc] sm:$0xf]
    %v753 = vld [vmem:[#allocation13 + $0xd0] sm:$0xf]
    %v754 = vld [vmem:[#allocation13 + $0xd4] sm:$0xf]
    %v755 = vld [vmem:[#allocation13 + $0xd8] sm:$0xf]
    %v756 = vld [vmem:[#allocation13 + $0xdc] sm:$0xf]
    %v757 = vld [vmem:[#allocation13 + $0xe0] sm:$0xf]
    %v758 = vld [vmem:[#allocation13 + $0xe4] sm:$0xf]
    %v759 = vld [vmem:[#allocation13 + $0xe8] sm:$0xf]
    %v760 = vld [vmem:[#allocation13 + $0xec] sm:$0xf]
    %v761 = vld [vmem:[#allocation13 + $0xf0] sm:$0xf]
    %v762 = vld [vmem:[#allocation13 + $0xf4] sm:$0xf]
    %v763 = vld [vmem:[#allocation13 + $0xf8] sm:$0xf]
    %v764 = vld [vmem:[#allocation13 + $0xfc] sm:$0xf]
    %v765 = vld [vmem:[#allocation14] sm:$0x1]
    %v766 = vperm.slane %v765, 0
    %v831 = vunpack.c.l.b16 %v701
    %v832 = vunpack.c.l.b16 %v702
    %v833 = vunpack.c.l.b16 %v703
    %v834 = vunpack.c.l.b16 %v704
    %v835 = vunpack.c.l.b16 %v705
    %v836 = vunpack.c.l.b16 %v706
    %v837 = vunpack.c.l.b16 %v707
    %v838 = vunpack.c.l.b16 %v708
    %v839 = vunpack.c.l.b16 %v709
    %v840 = vunpack.c.l.b16 %v710
    %v841 = vunpack.c.l.b16 %v711
    %v842 = vunpack.c.l.b16 %v712
    %v843 = vunpack.c.l.b16 %v713
    %v844 = vunpack.c.l.b16 %v714
    %v845 = vunpack.c.l.b16 %v715
    %v846 = vunpack.c.l.b16 %v716
    %v847 = vunpack.c.l.b16 %v717
    %v848 = vunpack.c.l.b16 %v718
    %v849 = vunpack.c.l.b16 %v719
    %v850 = vunpack.c.l.b16 %v720
    %v851 = vunpack.c.l.b16 %v721
    %v852 = vunpack.c.l.b16 %v722
    %v853 = vunpack.c.l.b16 %v723
    %v854 = vunpack.c.l.b16 %v724
    %v855 = vunpack.c.l.b16 %v725
    %v856 = vunpack.c.l.b16 %v726
    %v857 = vunpack.c.l.b16 %v727
    %v858 = vunpack.c.l.b16 %v728
    %v859 = vunpack.c.l.b16 %v729
    %v860 = vunpack.c.l.b16 %v730
    %v861 = vunpack.c.l.b16 %v731
    %v862 = vunpack.c.l.b16 %v732
    %v863 = vunpack.c.l.b16 %v733
    %v864 = vunpack.c.l.b16 %v734
    %v865 = vunpack.c.l.b16 %v735
    %v866 = vunpack.c.l.b16 %v736
    %v867 = vunpack.c.l.b16 %v737
    %v868 = vunpack.c.l.b16 %v738
    %v869 = vunpack.c.l.b16 %v739
    %v870 = vunpack.c.l.b16 %v740
    %v871 = vunpack.c.l.b16 %v741
    %v872 = vunpack.c.l.b16 %v742
    %v873 = vunpack.c.l.b16 %v743
    %v874 = vunpack.c.l.b16 %v744
    %v875 = vunpack.c.l.b16 %v745
    %v876 = vunpack.c.l.b16 %v746
    %v877 = vunpack.c.l.b16 %v747
    %v878 = vunpack.c.l.b16 %v748
    %v879 = vunpack.c.l.b16 %v749
    %v880 = vunpack.c.l.b16 %v750
    %v881 = vunpack.c.l.b16 %v751
    %v882 = vunpack.c.l.b16 %v752
    %v883 = vunpack.c.l.b16 %v753
    %v884 = vunpack.c.l.b16 %v754
    %v885 = vunpack.c.l.b16 %v755
    %v886 = vunpack.c.l.b16 %v756
    %v887 = vunpack.c.l.b16 %v757
    %v888 = vunpack.c.l.b16 %v758
    %v889 = vunpack.c.l.b16 %v759
    %v890 = vunpack.c.l.b16 %v760
    %v891 = vunpack.c.l.b16 %v761
    %v892 = vunpack.c.l.b16 %v762
    %v893 = vunpack.c.l.b16 %v763
    %v894 = vunpack.c.l.b16 %v764
    %v895 = vpack.c.b16 %v832, %v831
    %v896 = vpack.c.b16 %v834, %v833
    %v897 = vpack.c.b16 %v836, %v835
    %v898 = vpack.c.b16 %v838, %v837
    %v899 = vpack.c.b16 %v840, %v839
    %v900 = vpack.c.b16 %v842, %v841
    %v901 = vpack.c.b16 %v844, %v843
    %v902 = vpack.c.b16 %v846, %v845
    %v903 = vpack.c.b16 %v848, %v847
    %v904 = vpack.c.b16 %v850, %v849
    %v905 = vpack.c.b16 %v852, %v851
    %v906 = vpack.c.b16 %v854, %v853
    %v907 = vpack.c.b16 %v856, %v855
    %v908 = vpack.c.b16 %v858, %v857
    %v909 = vpack.c.b16 %v860, %v859
    %v910 = vpack.c.b16 %v862, %v861
    %v911 = vpack.c.b16 %v864, %v863
    %v912 = vpack.c.b16 %v866, %v865
    %v913 = vpack.c.b16 %v868, %v867
    %v914 = vpack.c.b16 %v870, %v869
    %v915 = vpack.c.b16 %v872, %v871
    %v916 = vpack.c.b16 %v874, %v873
    %v917 = vpack.c.b16 %v876, %v875
    %v918 = vpack.c.b16 %v878, %v877
    %v919 = vpack.c.b16 %v880, %v879
    %v920 = vpack.c.b16 %v882, %v881
    %v921 = vpack.c.b16 %v884, %v883
    %v922 = vpack.c.b16 %v886, %v885
    %v923 = vpack.c.b16 %v888, %v887
    %v924 = vpack.c.b16 %v890, %v889
    %v925 = vpack.c.b16 %v892, %v891
    %v926 = vpack.c.b16 %v894, %v893
    %959 = vmatpush.bf16.msra.mxu0 %v902
    %960 = vmatpush.bf16.msra.mxu0 %v901
    %961 = vmatpush.bf16.msra.mxu0 %v900
    %962 = vmatpush.bf16.msra.mxu0 %v899
    %963 = vmatpush.bf16.msra.mxu0 %v898
    %964 = vmatpush.bf16.msra.mxu0 %v897
    %965 = vmatpush.bf16.msra.mxu0 %v896
    %966 = vmatpush.bf16.msra.mxu0 %v895
    %967 = vmatmul.bf16.gmra.mxu0 %v387
    %v968 = vpop.f32.mrf.mxu0
    %v969 = vadd.f32 %v766, %v968
    %v970 = vpop.f32.mrf.mxu0
    %971 = vdwg.mxu0
    %972 = vmatpush.bf16.msra.mxu0 %v910
    %973 = vmatpush.bf16.msra.mxu0 %v909
    %974 = vmatpush.bf16.msra.mxu0 %v908
    %975 = vmatpush.bf16.msra.mxu0 %v907
    %976 = vmatpush.bf16.msra.mxu0 %v906
    %977 = vmatpush.bf16.msra.mxu0 %v905
    %978 = vmatpush.bf16.msra.mxu0 %v904
    %979 = vmatpush.bf16.msra.mxu0 %v903
    %980 = vmatmul.bf16.gmra.mxu0 %v388
    %v981 = vpop.f32.mrf.mxu0
    %v982 = vadd.f32 %v969, %v981
    %v983 = vpop.f32.mrf.mxu0
    %984 = vdwg.mxu0
    %985 = vmatpush.bf16.msra.mxu0 %v918
    %986 = vmatpush.bf16.msra.mxu0 %v917
    %987 = vmatpush.bf16.msra.mxu0 %v916
    %988 = vmatpush.bf16.msra.mxu0 %v915
    %989 = vmatpush.bf16.msra.mxu0 %v914
    %990 = vmatpush.bf16.msra.mxu0 %v913
    %991 = vmatpush.bf16.msra.mxu0 %v912
    %992 = vmatpush.bf16.msra.mxu0 %v911
    %993 = vmatmul.bf16.gmra.mxu0 %v389
    %v994 = vpop.f32.mrf.mxu0
    %v995 = vadd.f32 %v982, %v994
    %v996 = vpop.f32.mrf.mxu0
    %997 = vdwg.mxu0
    %998 = vmatpush.bf16.msra.mxu0 %v926
    %999 = vmatpush.bf16.msra.mxu0 %v925
    %1000 = vmatpush.bf16.msra.mxu0 %v924
    %1001 = vmatpush.bf16.msra.mxu0 %v923
    %1002 = vmatpush.bf16.msra.mxu0 %v922
    %1003 = vmatpush.bf16.msra.mxu0 %v921
    %1004 = vmatpush.bf16.msra.mxu0 %v920
    %1005 = vmatpush.bf16.msra.mxu0 %v919
    %1006 = vmatmul.bf16.gmra.mxu0 %v390
    %v1007 = vpop.f32.mrf.mxu0
    %v1008 = vadd.f32 %v995, %v1007
    %v1009 = vpop.f32.mrf.mxu0
    %1010 = vdwg.mxu0
    %v1011 = vmul.f32 %v698, %v698
    %vm1012 = vcmask 1041408
    %v1013 = vsel %vm1012, %v1011, 0.0
    %1014 = vadd.xlane.f32.xlu0 %v1013
    %v1015 = vpop.xlane.xlu0 %1014
    %v1016 = vmax.f32 %v1015, 1e-24
    %v1017 = vrsqrt.pop %v1016
    %v1018 = vmul.f32 %v1017, %v1016
    %v1019 = vmul.f32 %v1018, %v1017
    %v1020 = vmul.f32 0.5, %v1019
    %v1021 = vsub.f32 1.5, %v1020
    %v1022 = vmul.f32 %v1017, %v1021
    %vm1023 = vweird.f32 %v1016
    %vm1024 = vweird.f32 %v1017
    %vm1025 = vmor %vm1023, %vm1024
    %v1026 = vsel %vm1025, %v1017, %v1022
    %v1027 = vmul.f32 %v698, %v1026
    %v1028 = vmul.f32 %v1008, %v1008
    %v1029 = vsel %vm1012, %v1028, 0.0
    %1030 = vadd.xlane.f32.xlu0 %v1029
    %v1031 = vpop.xlane.xlu0 %1030
    %v1032 = vmax.f32 %v1031, 1e-24
    %v1033 = vrsqrt.pop %v1032
    %v1034 = vmul.f32 %v1033, %v1032
    %v1035 = vmul.f32 %v1034, %v1033
    %v1036 = vmul.f32 0.5, %v1035
    %v1037 = vsub.f32 1.5, %v1036
    %v1038 = vmul.f32 %v1033, %v1037
    %vm1039 = vweird.f32 %v1032
    %vm1040 = vweird.f32 %v1033
    %vm1041 = vmor %vm1039, %vm1040
    %v1042 = vsel %vm1041, %v1033, %v1038
    %v1043 = vmul.f32 %v1008, %v1042
    %s1044 = scalar_lea.vmem [#allocation10], 256
    %v1045 = vld [vmem:[%s1044] sm:$0xf]
    %v1046 = vld [vmem:[%s1044 + $0x4] sm:$0xf]
    %v1047 = vld [vmem:[%s1044 + $0x8] sm:$0xf]
    %v1048 = vld [vmem:[%s1044 + $0xc] sm:$0xf]
    %v1049 = vld [vmem:[%s1044 + $0x10] sm:$0xf]
    %v1050 = vld [vmem:[%s1044 + $0x14] sm:$0xf]
    %v1051 = vld [vmem:[%s1044 + $0x18] sm:$0xf]
    %v1052 = vld [vmem:[%s1044 + $0x1c] sm:$0xf]
    %v1053 = vld [vmem:[%s1044 + $0x20] sm:$0xf]
    %v1054 = vld [vmem:[%s1044 + $0x24] sm:$0xf]
    %v1055 = vld [vmem:[%s1044 + $0x28] sm:$0xf]
    %v1056 = vld [vmem:[%s1044 + $0x2c] sm:$0xf]
    %v1057 = vld [vmem:[%s1044 + $0x30] sm:$0xf]
    %v1058 = vld [vmem:[%s1044 + $0x34] sm:$0xf]
    %v1059 = vld [vmem:[%s1044 + $0x38] sm:$0xf]
    %v1060 = vld [vmem:[%s1044 + $0x3c] sm:$0xf]
    %v1061 = vld [vmem:[%s1044 + $0x40] sm:$0xf]
    %v1062 = vld [vmem:[%s1044 + $0x44] sm:$0xf]
    %v1063 = vld [vmem:[%s1044 + $0x48] sm:$0xf]
    %v1064 = vld [vmem:[%s1044 + $0x4c] sm:$0xf]
    %v1065 = vld [vmem:[%s1044 + $0x50] sm:$0xf]
    %v1066 = vld [vmem:[%s1044 + $0x54] sm:$0xf]
    %v1067 = vld [vmem:[%s1044 + $0x58] sm:$0xf]
    %v1068 = vld [vmem:[%s1044 + $0x5c] sm:$0xf]
    %v1069 = vld [vmem:[%s1044 + $0x60] sm:$0xf]
    %v1070 = vld [vmem:[%s1044 + $0x64] sm:$0xf]
    %v1071 = vld [vmem:[%s1044 + $0x68] sm:$0xf]
    %v1072 = vld [vmem:[%s1044 + $0x6c] sm:$0xf]
    %v1073 = vld [vmem:[%s1044 + $0x70] sm:$0xf]
    %v1074 = vld [vmem:[%s1044 + $0x74] sm:$0xf]
    %v1075 = vld [vmem:[%s1044 + $0x78] sm:$0xf]
    %v1076 = vld [vmem:[%s1044 + $0x7c] sm:$0xf]
    %v1077 = vld [vmem:[%s1044 + $0x80] sm:$0xf]
    %v1078 = vld [vmem:[%s1044 + $0x84] sm:$0xf]
    %v1079 = vld [vmem:[%s1044 + $0x88] sm:$0xf]
    %v1080 = vld [vmem:[%s1044 + $0x8c] sm:$0xf]
    %v1081 = vld [vmem:[%s1044 + $0x90] sm:$0xf]
    %v1082 = vld [vmem:[%s1044 + $0x94] sm:$0xf]
    %v1083 = vld [vmem:[%s1044 + $0x98] sm:$0xf]
    %v1084 = vld [vmem:[%s1044 + $0x9c] sm:$0xf]
    %v1085 = vld [vmem:[%s1044 + $0xa0] sm:$0xf]
    %v1086 = vld [vmem:[%s1044 + $0xa4] sm:$0xf]
    %v1087 = vld [vmem:[%s1044 + $0xa8] sm:$0xf]
    %v1088 = vld [vmem:[%s1044 + $0xac] sm:$0xf]
    %v1089 = vld [vmem:[%s1044 + $0xb0] sm:$0xf]
    %v1090 = vld [vmem:[%s1044 + $0xb4] sm:$0xf]
    %v1091 = vld [vmem:[%s1044 + $0xb8] sm:$0xf]
    %v1092 = vld [vmem:[%s1044 + $0xbc] sm:$0xf]
    %v1093 = vld [vmem:[%s1044 + $0xc0] sm:$0xf]
    %v1094 = vld [vmem:[%s1044 + $0xc4] sm:$0xf]
    %v1095 = vld [vmem:[%s1044 + $0xc8] sm:$0xf]
    %v1096 = vld [vmem:[%s1044 + $0xcc] sm:$0xf]
    %v1097 = vld [vmem:[%s1044 + $0xd0] sm:$0xf]
    %v1098 = vld [vmem:[%s1044 + $0xd4] sm:$0xf]
    %v1099 = vld [vmem:[%s1044 + $0xd8] sm:$0xf]
    %v1100 = vld [vmem:[%s1044 + $0xdc] sm:$0xf]
    %v1101 = vld [vmem:[%s1044 + $0xe0] sm:$0xf]
    %v1102 = vld [vmem:[%s1044 + $0xe4] sm:$0xf]
    %v1103 = vld [vmem:[%s1044 + $0xe8] sm:$0xf]
    %v1104 = vld [vmem:[%s1044 + $0xec] sm:$0xf]
    %v1105 = vld [vmem:[%s1044 + $0xf0] sm:$0xf]
    %v1106 = vld [vmem:[%s1044 + $0xf4] sm:$0xf]
    %v1107 = vld [vmem:[%s1044 + $0xf8] sm:$0xf]
    %v1108 = vld [vmem:[%s1044 + $0xfc] sm:$0xf]
    %v1109 = vld [vmem:[#allocation11 + $0x1] sm:$0x1]
    %v1110 = vperm.slane %v1109, 0
    %v1175 = vunpack.c.l.b16 %v1045
    %v1176 = vunpack.c.l.b16 %v1046
    %v1177 = vunpack.c.l.b16 %v1047
    %v1178 = vunpack.c.l.b16 %v1048
    %v1179 = vunpack.c.l.b16 %v1049
    %v1180 = vunpack.c.l.b16 %v1050
    %v1181 = vunpack.c.l.b16 %v1051
    %v1182 = vunpack.c.l.b16 %v1052
    %v1183 = vunpack.c.l.b16 %v1053
    %v1184 = vunpack.c.l.b16 %v1054
    %v1185 = vunpack.c.l.b16 %v1055
    %v1186 = vunpack.c.l.b16 %v1056
    %v1187 = vunpack.c.l.b16 %v1057
    %v1188 = vunpack.c.l.b16 %v1058
    %v1189 = vunpack.c.l.b16 %v1059
    %v1190 = vunpack.c.l.b16 %v1060
    %v1191 = vunpack.c.l.b16 %v1061
    %v1192 = vunpack.c.l.b16 %v1062
    %v1193 = vunpack.c.l.b16 %v1063
    %v1194 = vunpack.c.l.b16 %v1064
    %v1195 = vunpack.c.l.b16 %v1065
    %v1196 = vunpack.c.l.b16 %v1066
    %v1197 = vunpack.c.l.b16 %v1067
    %v1198 = vunpack.c.l.b16 %v1068
    %v1199 = vunpack.c.l.b16 %v1069
    %v1200 = vunpack.c.l.b16 %v1070
    %v1201 = vunpack.c.l.b16 %v1071
    %v1202 = vunpack.c.l.b16 %v1072
    %v1203 = vunpack.c.l.b16 %v1073
    %v1204 = vunpack.c.l.b16 %v1074
    %v1205 = vunpack.c.l.b16 %v1075
    %v1206 = vunpack.c.l.b16 %v1076
    %v1207 = vunpack.c.l.b16 %v1077
    %v1208 = vunpack.c.l.b16 %v1078
    %v1209 = vunpack.c.l.b16 %v1079
    %v1210 = vunpack.c.l.b16 %v1080
    %v1211 = vunpack.c.l.b16 %v1081
    %v1212 = vunpack.c.l.b16 %v1082
    %v1213 = vunpack.c.l.b16 %v1083
    %v1214 = vunpack.c.l.b16 %v1084
    %v1215 = vunpack.c.l.b16 %v1085
    %v1216 = vunpack.c.l.b16 %v1086
    %v1217 = vunpack.c.l.b16 %v1087
    %v1218 = vunpack.c.l.b16 %v1088
    %v1219 = vunpack.c.l.b16 %v1089
    %v1220 = vunpack.c.l.b16 %v1090
    %v1221 = vunpack.c.l.b16 %v1091
    %v1222 = vunpack.c.l.b16 %v1092
    %v1223 = vunpack.c.l.b16 %v1093
    %v1224 = vunpack.c.l.b16 %v1094
    %v1225 = vunpack.c.l.b16 %v1095
    %v1226 = vunpack.c.l.b16 %v1096
    %v1227 = vunpack.c.l.b16 %v1097
    %v1228 = vunpack.c.l.b16 %v1098
    %v1229 = vunpack.c.l.b16 %v1099
    %v1230 = vunpack.c.l.b16 %v1100
    %v1231 = vunpack.c.l.b16 %v1101
    %v1232 = vunpack.c.l.b16 %v1102
    %v1233 = vunpack.c.l.b16 %v1103
    %v1234 = vunpack.c.l.b16 %v1104
    %v1235 = vunpack.c.l.b16 %v1105
    %v1236 = vunpack.c.l.b16 %v1106
    %v1237 = vunpack.c.l.b16 %v1107
    %v1238 = vunpack.c.l.b16 %v1108
    %v1239 = vpack.c.b16 %v1176, %v1175
    %v1240 = vpack.c.b16 %v1178, %v1177
    %v1241 = vpack.c.b16 %v1180, %v1179
    %v1242 = vpack.c.b16 %v1182, %v1181
    %v1243 = vpack.c.b16 %v1184, %v1183
    %v1244 = vpack.c.b16 %v1186, %v1185
    %v1245 = vpack.c.b16 %v1188, %v1187
    %v1246 = vpack.c.b16 %v1190, %v1189
    %v1247 = vpack.c.b16 %v1192, %v1191
    %v1248 = vpack.c.b16 %v1194, %v1193
    %v1249 = vpack.c.b16 %v1196, %v1195
    %v1250 = vpack.c.b16 %v1198, %v1197
    %v1251 = vpack.c.b16 %v1200, %v1199
    %v1252 = vpack.c.b16 %v1202, %v1201
    %v1253 = vpack.c.b16 %v1204, %v1203
    %v1254 = vpack.c.b16 %v1206, %v1205
    %v1255 = vpack.c.b16 %v1208, %v1207
    %v1256 = vpack.c.b16 %v1210, %v1209
    %v1257 = vpack.c.b16 %v1212, %v1211
    %v1258 = vpack.c.b16 %v1214, %v1213
    %v1259 = vpack.c.b16 %v1216, %v1215
    %v1260 = vpack.c.b16 %v1218, %v1217
    %v1261 = vpack.c.b16 %v1220, %v1219
    %v1262 = vpack.c.b16 %v1222, %v1221
    %v1263 = vpack.c.b16 %v1224, %v1223
    %v1264 = vpack.c.b16 %v1226, %v1225
    %v1265 = vpack.c.b16 %v1228, %v1227
    %v1266 = vpack.c.b16 %v1230, %v1229
    %v1267 = vpack.c.b16 %v1232, %v1231
    %v1268 = vpack.c.b16 %v1234, %v1233
    %v1269 = vpack.c.b16 %v1236, %v1235
    %v1270 = vpack.c.b16 %v1238, %v1237
    %1303 = vmatpush.bf16.msra.mxu0 %v1246
    %1304 = vmatpush.bf16.msra.mxu0 %v1245
    %1305 = vmatpush.bf16.msra.mxu0 %v1244
    %1306 = vmatpush.bf16.msra.mxu0 %v1243
    %1307 = vmatpush.bf16.msra.mxu0 %v1242
    %1308 = vmatpush.bf16.msra.mxu0 %v1241
    %1309 = vmatpush.bf16.msra.mxu0 %v1240
    %1310 = vmatpush.bf16.msra.mxu0 %v1239
    %1311 = vmatmul.bf16.gmra.mxu0 %v372
    %v1312 = vpop.f32.mrf.mxu0
    %v1313 = vadd.f32 %v1110, %v1312
    %v1314 = vpop.f32.mrf.mxu0
    %1315 = vdwg.mxu0
    %1316 = vmatpush.bf16.msra.mxu0 %v1254
    %1317 = vmatpush.bf16.msra.mxu0 %v1253
    %1318 = vmatpush.bf16.msra.mxu0 %v1252
    %1319 = vmatpush.bf16.msra.mxu0 %v1251
    %1320 = vmatpush.bf16.msra.mxu0 %v1250
    %1321 = vmatpush.bf16.msra.mxu0 %v1249
    %1322 = vmatpush.bf16.msra.mxu0 %v1248
    %1323 = vmatpush.bf16.msra.mxu0 %v1247
    %1324 = vmatmul.bf16.gmra.mxu0 %v373
    %v1325 = vpop.f32.mrf.mxu0
    %v1326 = vadd.f32 %v1313, %v1325
    %v1327 = vpop.f32.mrf.mxu0
    %1328 = vdwg.mxu0
    %1329 = vmatpush.bf16.msra.mxu0 %v1262
    %1330 = vmatpush.bf16.msra.mxu0 %v1261
    %1331 = vmatpush.bf16.msra.mxu0 %v1260
    %1332 = vmatpush.bf16.msra.mxu0 %v1259
    %1333 = vmatpush.bf16.msra.mxu0 %v1258
    %1334 = vmatpush.bf16.msra.mxu0 %v1257
    %1335 = vmatpush.bf16.msra.mxu0 %v1256
    %1336 = vmatpush.bf16.msra.mxu0 %v1255
    %1337 = vmatmul.bf16.gmra.mxu0 %v374
    %v1338 = vpop.f32.mrf.mxu0
    %v1339 = vadd.f32 %v1326, %v1338
    %v1340 = vpop.f32.mrf.mxu0
    %1341 = vdwg.mxu0
    %1342 = vmatpush.bf16.msra.mxu0 %v1270
    %1343 = vmatpush.bf16.msra.mxu0 %v1269
    %1344 = vmatpush.bf16.msra.mxu0 %v1268
    %1345 = vmatpush.bf16.msra.mxu0 %v1267
    %1346 = vmatpush.bf16.msra.mxu0 %v1266
    %1347 = vmatpush.bf16.msra.mxu0 %v1265
    %1348 = vmatpush.bf16.msra.mxu0 %v1264
    %1349 = vmatpush.bf16.msra.mxu0 %v1263
    %1350 = vmatmul.bf16.gmra.mxu0 %v375
    %v1351 = vpop.f32.mrf.mxu0
    %v1352 = vadd.f32 %v1339, %v1351
    %v1353 = vpop.f32.mrf.mxu0
    %1354 = vdwg.mxu0
    %s1355 = scalar_lea.vmem [#allocation13], 256
    %v1356 = vld [vmem:[%s1355] sm:$0xf]
    %v1357 = vld [vmem:[%s1355 + $0x4] sm:$0xf]
    %v1358 = vld [vmem:[%s1355 + $0x8] sm:$0xf]
    %v1359 = vld [vmem:[%s1355 + $0xc] sm:$0xf]
    %v1360 = vld [vmem:[%s1355 + $0x10] sm:$0xf]
    %v1361 = vld [vmem:[%s1355 + $0x14] sm:$0xf]
    %v1362 = vld [vmem:[%s1355 + $0x18] sm:$0xf]
    %v1363 = vld [vmem:[%s1355 + $0x1c] sm:$0xf]
    %v1364 = vld [vmem:[%s1355 + $0x20] sm:$0xf]
    %v1365 = vld [vmem:[%s1355 + $0x24] sm:$0xf]
    %v1366 = vld [vmem:[%s1355 + $0x28] sm:$0xf]
    %v1367 = vld [vmem:[%s1355 + $0x2c] sm:$0xf]
    %v1368 = vld [vmem:[%s1355 + $0x30] sm:$0xf]
    %v1369 = vld [vmem:[%s1355 + $0x34] sm:$0xf]
    %v1370 = vld [vmem:[%s1355 + $0x38] sm:$0xf]
    %v1371 = vld [vmem:[%s1355 + $0x3c] sm:$0xf]
    %v1372 = vld [vmem:[%s1355 + $0x40] sm:$0xf]
    %v1373 = vld [vmem:[%s1355 + $0x44] sm:$0xf]
    %v1374 = vld [vmem:[%s1355 + $0x48] sm:$0xf]
    %v1375 = vld [vmem:[%s1355 + $0x4c] sm:$0xf]
    %v1376 = vld [vmem:[%s1355 + $0x50] sm:$0xf]
    %v1377 = vld [vmem:[%s1355 + $0x54] sm:$0xf]
    %v1378 = vld [vmem:[%s1355 + $0x58] sm:$0xf]
    %v1379 = vld [vmem:[%s1355 + $0x5c] sm:$0xf]
    %v1380 = vld [vmem:[%s1355 + $0x60] sm:$0xf]
    %v1381 = vld [vmem:[%s1355 + $0x64] sm:$0xf]
    %v1382 = vld [vmem:[%s1355 + $0x68] sm:$0xf]
    %v1383 = vld [vmem:[%s1355 + $0x6c] sm:$0xf]
    %v1384 = vld [vmem:[%s1355 + $0x70] sm:$0xf]
    %v1385 = vld [vmem:[%s1355 + $0x74] sm:$0xf]
    %v1386 = vld [vmem:[%s1355 + $0x78] sm:$0xf]
    %v1387 = vld [vmem:[%s1355 + $0x7c] sm:$0xf]
    %v1388 = vld [vmem:[%s1355 + $0x80] sm:$0xf]
    %v1389 = vld [vmem:[%s1355 + $0x84] sm:$0xf]
    %v1390 = vld [vmem:[%s1355 + $0x88] sm:$0xf]
    %v1391 = vld [vmem:[%s1355 + $0x8c] sm:$0xf]
    %v1392 = vld [vmem:[%s1355 + $0x90] sm:$0xf]
    %v1393 = vld [vmem:[%s1355 + $0x94] sm:$0xf]
    %v1394 = vld [vmem:[%s1355 + $0x98] sm:$0xf]
    %v1395 = vld [vmem:[%s1355 + $0x9c] sm:$0xf]
    %v1396 = vld [vmem:[%s1355 + $0xa0] sm:$0xf]
    %v1397 = vld [vmem:[%s1355 + $0xa4] sm:$0xf]
    %v1398 = vld [vmem:[%s1355 + $0xa8] sm:$0xf]
    %v1399 = vld [vmem:[%s1355 + $0xac] sm:$0xf]
    %v1400 = vld [vmem:[%s1355 + $0xb0] sm:$0xf]
    %v1401 = vld [vmem:[%s1355 + $0xb4] sm:$0xf]
    %v1402 = vld [vmem:[%s1355 + $0xb8] sm:$0xf]
    %v1403 = vld [vmem:[%s1355 + $0xbc] sm:$0xf]
    %v1404 = vld [vmem:[%s1355 + $0xc0] sm:$0xf]
    %v1405 = vld [vmem:[%s1355 + $0xc4] sm:$0xf]
    %v1406 = vld [vmem:[%s1355 + $0xc8] sm:$0xf]
    %v1407 = vld [vmem:[%s1355 + $0xcc] sm:$0xf]
    %v1408 = vld [vmem:[%s1355 + $0xd0] sm:$0xf]
    %v1409 = vld [vmem:[%s1355 + $0xd4] sm:$0xf]
    %v1410 = vld [vmem:[%s1355 + $0xd8] sm:$0xf]
    %v1411 = vld [vmem:[%s1355 + $0xdc] sm:$0xf]
    %v1412 = vld [vmem:[%s1355 + $0xe0] sm:$0xf]
    %v1413 = vld [vmem:[%s1355 + $0xe4] sm:$0xf]
    %v1414 = vld [vmem:[%s1355 + $0xe8] sm:$0xf]
    %v1415 = vld [vmem:[%s1355 + $0xec] sm:$0xf]
    %v1416 = vld [vmem:[%s1355 + $0xf0] sm:$0xf]
    %v1417 = vld [vmem:[%s1355 + $0xf4] sm:$0xf]
    %v1418 = vld [vmem:[%s1355 + $0xf8] sm:$0xf]
    %v1419 = vld [vmem:[%s1355 + $0xfc] sm:$0xf]
    %v1420 = vld [vmem:[#allocation14 + $0x1] sm:$0x1]
    %v1421 = vperm.slane %v1420, 0
    %v1486 = vunpack.c.l.b16 %v1356
    %v1487 = vunpack.c.l.b16 %v1357
    %v1488 = vunpack.c.l.b16 %v1358
    %v1489 = vunpack.c.l.b16 %v1359
    %v1490 = vunpack.c.l.b16 %v1360
    %v1491 = vunpack.c.l.b16 %v1361
    %v1492 = vunpack.c.l.b16 %v1362
    %v1493 = vunpack.c.l.b16 %v1363
    %v1494 = vunpack.c.l.b16 %v1364
    %v1495 = vunpack.c.l.b16 %v1365
    %v1496 = vunpack.c.l.b16 %v1366
    %v1497 = vunpack.c.l.b16 %v1367
    %v1498 = vunpack.c.l.b16 %v1368
    %v1499 = vunpack.c.l.b16 %v1369
    %v1500 = vunpack.c.l.b16 %v1370
    %v1501 = vunpack.c.l.b16 %v1371
    %v1502 = vunpack.c.l.b16 %v1372
    %v1503 = vunpack.c.l.b16 %v1373
    %v1504 = vunpack.c.l.b16 %v1374
    %v1505 = vunpack.c.l.b16 %v1375
    %v1506 = vunpack.c.l.b16 %v1376
    %v1507 = vunpack.c.l.b16 %v1377
    %v1508 = vunpack.c.l.b16 %v1378
    %v1509 = vunpack.c.l.b16 %v1379
    %v1510 = vunpack.c.l.b16 %v1380
    %v1511 = vunpack.c.l.b16 %v1381
    %v1512 = vunpack.c.l.b16 %v1382
    %v1513 = vunpack.c.l.b16 %v1383
    %v1514 = vunpack.c.l.b16 %v1384
    %v1515 = vunpack.c.l.b16 %v1385
    %v1516 = vunpack.c.l.b16 %v1386
    %v1517 = vunpack.c.l.b16 %v1387
    %v1518 = vunpack.c.l.b16 %v1388
    %v1519 = vunpack.c.l.b16 %v1389
    %v1520 = vunpack.c.l.b16 %v1390
    %v1521 = vunpack.c.l.b16 %v1391
    %v1522 = vunpack.c.l.b16 %v1392
    %v1523 = vunpack.c.l.b16 %v1393
    %v1524 = vunpack.c.l.b16 %v1394
    %v1525 = vunpack.c.l.b16 %v1395
    %v1526 = vunpack.c.l.b16 %v1396
    %v1527 = vunpack.c.l.b16 %v1397
    %v1528 = vunpack.c.l.b16 %v1398
    %v1529 = vunpack.c.l.b16 %v1399
    %v1530 = vunpack.c.l.b16 %v1400
    %v1531 = vunpack.c.l.b16 %v1401
    %v1532 = vunpack.c.l.b16 %v1402
    %v1533 = vunpack.c.l.b16 %v1403
    %v1534 = vunpack.c.l.b16 %v1404
    %v1535 = vunpack.c.l.b16 %v1405
    %v1536 = vunpack.c.l.b16 %v1406
    %v1537 = vunpack.c.l.b16 %v1407
    %v1538 = vunpack.c.l.b16 %v1408
    %v1539 = vunpack.c.l.b16 %v1409
    %v1540 = vunpack.c.l.b16 %v1410
    %v1541 = vunpack.c.l.b16 %v1411
    %v1542 = vunpack.c.l.b16 %v1412
    %v1543 = vunpack.c.l.b16 %v1413
    %v1544 = vunpack.c.l.b16 %v1414
    %v1545 = vunpack.c.l.b16 %v1415
    %v1546 = vunpack.c.l.b16 %v1416
    %v1547 = vunpack.c.l.b16 %v1417
    %v1548 = vunpack.c.l.b16 %v1418
    %v1549 = vunpack.c.l.b16 %v1419
    %v1550 = vpack.c.b16 %v1487, %v1486
    %v1551 = vpack.c.b16 %v1489, %v1488
    %v1552 = vpack.c.b16 %v1491, %v1490
    %v1553 = vpack.c.b16 %v1493, %v1492
    %v1554 = vpack.c.b16 %v1495, %v1494
    %v1555 = vpack.c.b16 %v1497, %v1496
    %v1556 = vpack.c.b16 %v1499, %v1498
    %v1557 = vpack.c.b16 %v1501, %v1500
    %v1558 = vpack.c.b16 %v1503, %v1502
    %v1559 = vpack.c.b16 %v1505, %v1504
    %v1560 = vpack.c.b16 %v1507, %v1506
    %v1561 = vpack.c.b16 %v1509, %v1508
    %v1562 = vpack.c.b16 %v1511, %v1510
    %v1563 = vpack.c.b16 %v1513, %v1512
    %v1564 = vpack.c.b16 %v1515, %v1514
    %v1565 = vpack.c.b16 %v1517, %v1516
    %v1566 = vpack.c.b16 %v1519, %v1518
    %v1567 = vpack.c.b16 %v1521, %v1520
    %v1568 = vpack.c.b16 %v1523, %v1522
    %v1569 = vpack.c.b16 %v1525, %v1524
    %v1570 = vpack.c.b16 %v1527, %v1526
    %v1571 = vpack.c.b16 %v1529, %v1528
    %v1572 = vpack.c.b16 %v1531, %v1530
    %v1573 = vpack.c.b16 %v1533, %v1532
    %v1574 = vpack.c.b16 %v1535, %v1534
    %v1575 = vpack.c.b16 %v1537, %v1536
    %v1576 = vpack.c.b16 %v1539, %v1538
    %v1577 = vpack.c.b16 %v1541, %v1540
    %v1578 = vpack.c.b16 %v1543, %v1542
    %v1579 = vpack.c.b16 %v1545, %v1544
    %v1580 = vpack.c.b16 %v1547, %v1546
    %v1581 = vpack.c.b16 %v1549, %v1548
    %1614 = vmatpush.bf16.msra.mxu0 %v1557
    %1615 = vmatpush.bf16.msra.mxu0 %v1556
    %1616 = vmatpush.bf16.msra.mxu0 %v1555
    %1617 = vmatpush.bf16.msra.mxu0 %v1554
    %1618 = vmatpush.bf16.msra.mxu0 %v1553
    %1619 = vmatpush.bf16.msra.mxu0 %v1552
    %1620 = vmatpush.bf16.msra.mxu0 %v1551
    %1621 = vmatpush.bf16.msra.mxu0 %v1550
    %1622 = vmatmul.bf16.gmra.mxu0 %v387
    %v1623 = vpop.f32.mrf.mxu0
    %v1624 = vadd.f32 %v1421, %v1623
    %v1625 = vpop.f32.mrf.mxu0
    %1626 = vdwg.mxu0
    %1627 = vmatpush.bf16.msra.mxu0 %v1565
    %1628 = vmatpush.bf16.msra.mxu0 %v1564
    %1629 = vmatpush.bf16.msra.mxu0 %v1563
    %1630 = vmatpush.bf16.msra.mxu0 %v1562
    %1631 = vmatpush.bf16.msra.mxu0 %v1561
    %1632 = vmatpush.bf16.msra.mxu0 %v1560
    %1633 = vmatpush.bf16.msra.mxu0 %v1559
    %1634 = vmatpush.bf16.msra.mxu0 %v1558
    %1635 = vmatmul.bf16.gmra.mxu0 %v388
    %v1636 = vpop.f32.mrf.mxu0
    %v1637 = vadd.f32 %v1624, %v1636
    %v1638 = vpop.f32.mrf.mxu0
    %1639 = vdwg.mxu0
    %1640 = vmatpush.bf16.msra.mxu0 %v1573
    %1641 = vmatpush.bf16.msra.mxu0 %v1572
    %1642 = vmatpush.bf16.msra.mxu0 %v1571
    %1643 = vmatpush.bf16.msra.mxu0 %v1570
    %1644 = vmatpush.bf16.msra.mxu0 %v1569
    %1645 = vmatpush.bf16.msra.mxu0 %v1568
    %1646 = vmatpush.bf16.msra.mxu0 %v1567
    %1647 = vmatpush.bf16.msra.mxu0 %v1566
    %1648 = vmatmul.bf16.gmra.mxu0 %v389
    %v1649 = vpop.f32.mrf.mxu0
    %v1650 = vadd.f32 %v1637, %v1649
    %v1651 = vpop.f32.mrf.mxu0
    %1652 = vdwg.mxu0
    %1653 = vmatpush.bf16.msra.mxu0 %v1581
    %1654 = vmatpush.bf16.msra.mxu0 %v1580
    %1655 = vmatpush.bf16.msra.mxu0 %v1579
    %1656 = vmatpush.bf16.msra.mxu0 %v1578
    %1657 = vmatpush.bf16.msra.mxu0 %v1577
    %1658 = vmatpush.bf16.msra.mxu0 %v1576
    %1659 = vmatpush.bf16.msra.mxu0 %v1575
    %1660 = vmatpush.bf16.msra.mxu0 %v1574
    %1661 = vmatmul.bf16.gmra.mxu0 %v390
    %v1662 = vpop.f32.mrf.mxu0
    %v1663 = vadd.f32 %v1650, %v1662
    %v1664 = vpop.f32.mrf.mxu0
    %1665 = vdwg.mxu0
    %v1666 = vmul.f32 %v1352, %v1352
    %v1667 = vsel %vm1012, %v1666, 0.0
    %1668 = vadd.xlane.f32.xlu0 %v1667
    %v1669 = vpop.xlane.xlu0 %1668
    %v1670 = vmax.f32 %v1669, 1e-24
    %v1671 = vrsqrt.pop %v1670
    %v1672 = vmul.f32 %v1671, %v1670
    %v1673 = vmul.f32 %v1672, %v1671
    %v1674 = vmul.f32 0.5, %v1673
    %v1675 = vsub.f32 1.5, %v1674
    %v1676 = vmul.f32 %v1671, %v1675
    %vm1677 = vweird.f32 %v1670
    %vm1678 = vweird.f32 %v1671
    %vm1679 = vmor %vm1677, %vm1678
    %v1680 = vsel %vm1679, %v1671, %v1676
    %v1681 = vmul.f32 %v1352, %v1680
    %v1682 = vmul.f32 %v1663, %v1663
    %v1683 = vsel %vm1012, %v1682, 0.0
    %1684 = vadd.xlane.f32.xlu0 %v1683
    %v1685 = vpop.xlane.xlu0 %1684
    %v1686 = vmax.f32 %v1685, 1e-24
    %v1687 = vrsqrt.pop %v1686
    %v1688 = vmul.f32 %v1687, %v1686
    %v1689 = vmul.f32 %v1688, %v1687
    %v1690 = vmul.f32 0.5, %v1689
    %v1691 = vsub.f32 1.5, %v1690
    %v1692 = vmul.f32 %v1687, %v1691
    %vm1693 = vweird.f32 %v1686
    %vm1694 = vweird.f32 %v1687
    %vm1695 = vmor %vm1693, %vm1694
    %v1696 = vsel %vm1695, %v1687, %v1692
    %v1697 = vmul.f32 %v1663, %v1696
    %s1698 = scalar_lea.vmem [#allocation10], 512
    %v1699 = vld [vmem:[%s1698] sm:$0xf]
    %v1700 = vld [vmem:[%s1698 + $0x4] sm:$0xf]
    %v1701 = vld [vmem:[%s1698 + $0x8] sm:$0xf]
    %v1702 = vld [vmem:[%s1698 + $0xc] sm:$0xf]
    %v1703 = vld [vmem:[%s1698 + $0x10] sm:$0xf]
    %v1704 = vld [vmem:[%s1698 + $0x14] sm:$0xf]
    %v1705 = vld [vmem:[%s1698 + $0x18] sm:$0xf]
    %v1706 = vld [vmem:[%s1698 + $0x1c] sm:$0xf]
    %v1707 = vld [vmem:[%s1698 + $0x20] sm:$0xf]
    %v1708 = vld [vmem:[%s1698 + $0x24] sm:$0xf]
    %v1709 = vld [vmem:[%s1698 + $0x28] sm:$0xf]
    %v1710 = vld [vmem:[%s1698 + $0x2c] sm:$0xf]
    %v1711 = vld [vmem:[%s1698 + $0x30] sm:$0xf]
    %v1712 = vld [vmem:[%s1698 + $0x34] sm:$0xf]
    %v1713 = vld [vmem:[%s1698 + $0x38] sm:$0xf]
    %v1714 = vld [vmem:[%s1698 + $0x3c] sm:$0xf]
    %v1715 = vld [vmem:[%s1698 + $0x40] sm:$0xf]
    %v1716 = vld [vmem:[%s1698 + $0x44] sm:$0xf]
    %v1717 = vld [vmem:[%s1698 + $0x48] sm:$0xf]
    %v1718 = vld [vmem:[%s1698 + $0x4c] sm:$0xf]
    %v1719 = vld [vmem:[%s1698 + $0x50] sm:$0xf]
    %v1720 = vld [vmem:[%s1698 + $0x54] sm:$0xf]
    %v1721 = vld [vmem:[%s1698 + $0x58] sm:$0xf]
    %v1722 = vld [vmem:[%s1698 + $0x5c] sm:$0xf]
    %v1723 = vld [vmem:[%s1698 + $0x60] sm:$0xf]
    %v1724 = vld [vmem:[%s1698 + $0x64] sm:$0xf]
    %v1725 = vld [vmem:[%s1698 + $0x68] sm:$0xf]
    %v1726 = vld [vmem:[%s1698 + $0x6c] sm:$0xf]
    %v1727 = vld [vmem:[%s1698 + $0x70] sm:$0xf]
    %v1728 = vld [vmem:[%s1698 + $0x74] sm:$0xf]
    %v1729 = vld [vmem:[%s1698 + $0x78] sm:$0xf]
    %v1730 = vld [vmem:[%s1698 + $0x7c] sm:$0xf]
    %v1731 = vld [vmem:[%s1698 + $0x80] sm:$0xf]
    %v1732 = vld [vmem:[%s1698 + $0x84] sm:$0xf]
    %v1733 = vld [vmem:[%s1698 + $0x88] sm:$0xf]
    %v1734 = vld [vmem:[%s1698 + $0x8c] sm:$0xf]
    %v1735 = vld [vmem:[%s1698 + $0x90] sm:$0xf]
    %v1736 = vld [vmem:[%s1698 + $0x94] sm:$0xf]
    %v1737 = vld [vmem:[%s1698 + $0x98] sm:$0xf]
    %v1738 = vld [vmem:[%s1698 + $0x9c] sm:$0xf]
    %v1739 = vld [vmem:[%s1698 + $0xa0] sm:$0xf]
    %v1740 = vld [vmem:[%s1698 + $0xa4] sm:$0xf]
    %v1741 = vld [vmem:[%s1698 + $0xa8] sm:$0xf]
    %v1742 = vld [vmem:[%s1698 + $0xac] sm:$0xf]
    %v1743 = vld [vmem:[%s1698 + $0xb0] sm:$0xf]
    %v1744 = vld [vmem:[%s1698 + $0xb4] sm:$0xf]
    %v1745 = vld [vmem:[%s1698 + $0xb8] sm:$0xf]
    %v1746 = vld [vmem:[%s1698 + $0xbc] sm:$0xf]
    %v1747 = vld [vmem:[%s1698 + $0xc0] sm:$0xf]
    %v1748 = vld [vmem:[%s1698 + $0xc4] sm:$0xf]
    %v1749 = vld [vmem:[%s1698 + $0xc8] sm:$0xf]
    %v1750 = vld [vmem:[%s1698 + $0xcc] sm:$0xf]
    %v1751 = vld [vmem:[%s1698 + $0xd0] sm:$0xf]
    %v1752 = vld [vmem:[%s1698 + $0xd4] sm:$0xf]
    %v1753 = vld [vmem:[%s1698 + $0xd8] sm:$0xf]
    %v1754 = vld [vmem:[%s1698 + $0xdc] sm:$0xf]
    %v1755 = vld [vmem:[%s1698 + $0xe0] sm:$0xf]
    %v1756 = vld [vmem:[%s1698 + $0xe4] sm:$0xf]
    %v1757 = vld [vmem:[%s1698 + $0xe8] sm:$0xf]
    %v1758 = vld [vmem:[%s1698 + $0xec] sm:$0xf]
    %v1759 = vld [vmem:[%s1698 + $0xf0] sm:$0xf]
    %v1760 = vld [vmem:[%s1698 + $0xf4] sm:$0xf]
    %v1761 = vld [vmem:[%s1698 + $0xf8] sm:$0xf]
    %v1762 = vld [vmem:[%s1698 + $0xfc] sm:$0xf]
    %v1763 = vld [vmem:[#allocation11 + $0x2] sm:$0x1]
    %v1764 = vperm.slane %v1763, 0
    %v1829 = vunpack.c.l.b16 %v1699
    %v1830 = vunpack.c.l.b16 %v1700
    %v1831 = vunpack.c.l.b16 %v1701
    %v1832 = vunpack.c.l.b16 %v1702
    %v1833 = vunpack.c.l.b16 %v1703
    %v1834 = vunpack.c.l.b16 %v1704
    %v1835 = vunpack.c.l.b16 %v1705
    %v1836 = vunpack.c.l.b16 %v1706
    %v1837 = vunpack.c.l.b16 %v1707
    %v1838 = vunpack.c.l.b16 %v1708
    %v1839 = vunpack.c.l.b16 %v1709
    %v1840 = vunpack.c.l.b16 %v1710
    %v1841 = vunpack.c.l.b16 %v1711
    %v1842 = vunpack.c.l.b16 %v1712
    %v1843 = vunpack.c.l.b16 %v1713
    %v1844 = vunpack.c.l.b16 %v1714
    %v1845 = vunpack.c.l.b16 %v1715
    %v1846 = vunpack.c.l.b16 %v1716
    %v1847 = vunpack.c.l.b16 %v1717
    %v1848 = vunpack.c.l.b16 %v1718
    %v1849 = vunpack.c.l.b16 %v1719
    %v1850 = vunpack.c.l.b16 %v1720
    %v1851 = vunpack.c.l.b16 %v1721
    %v1852 = vunpack.c.l.b16 %v1722
    %v1853 = vunpack.c.l.b16 %v1723
    %v1854 = vunpack.c.l.b16 %v1724
    %v1855 = vunpack.c.l.b16 %v1725
    %v1856 = vunpack.c.l.b16 %v1726
    %v1857 = vunpack.c.l.b16 %v1727
    %v1858 = vunpack.c.l.b16 %v1728
    %v1859 = vunpack.c.l.b16 %v1729
    %v1860 = vunpack.c.l.b16 %v1730
    %v1861 = vunpack.c.l.b16 %v1731
    %v1862 = vunpack.c.l.b16 %v1732
    %v1863 = vunpack.c.l.b16 %v1733
    %v1864 = vunpack.c.l.b16 %v1734
    %v1865 = vunpack.c.l.b16 %v1735
    %v1866 = vunpack.c.l.b16 %v1736
    %v1867 = vunpack.c.l.b16 %v1737
    %v1868 = vunpack.c.l.b16 %v1738
    %v1869 = vunpack.c.l.b16 %v1739
    %v1870 = vunpack.c.l.b16 %v1740
    %v1871 = vunpack.c.l.b16 %v1741
    %v1872 = vunpack.c.l.b16 %v1742
    %v1873 = vunpack.c.l.b16 %v1743
    %v1874 = vunpack.c.l.b16 %v1744
    %v1875 = vunpack.c.l.b16 %v1745
    %v1876 = vunpack.c.l.b16 %v1746
    %v1877 = vunpack.c.l.b16 %v1747
    %v1878 = vunpack.c.l.b16 %v1748
    %v1879 = vunpack.c.l.b16 %v1749
    %v1880 = vunpack.c.l.b16 %v1750
    %v1881 = vunpack.c.l.b16 %v1751
    %v1882 = vunpack.c.l.b16 %v1752
    %v1883 = vunpack.c.l.b16 %v1753
    %v1884 = vunpack.c.l.b16 %v1754
    %v1885 = vunpack.c.l.b16 %v1755
    %v1886 = vunpack.c.l.b16 %v1756
    %v1887 = vunpack.c.l.b16 %v1757
    %v1888 = vunpack.c.l.b16 %v1758
    %v1889 = vunpack.c.l.b16 %v1759
    %v1890 = vunpack.c.l.b16 %v1760
    %v1891 = vunpack.c.l.b16 %v1761
    %v1892 = vunpack.c.l.b16 %v1762
    %v1893 = vpack.c.b16 %v1830, %v1829
    %v1894 = vpack.c.b16 %v1832, %v1831
    %v1895 = vpack.c.b16 %v1834, %v1833
    %v1896 = vpack.c.b16 %v1836, %v1835
    %v1897 = vpack.c.b16 %v1838, %v1837
    %v1898 = vpack.c.b16 %v1840, %v1839
    %v1899 = vpack.c.b16 %v1842, %v1841
    %v1900 = vpack.c.b16 %v1844, %v1843
    %v1901 = vpack.c.b16 %v1846, %v1845
    %v1902 = vpack.c.b16 %v1848, %v1847
    %v1903 = vpack.c.b16 %v1850, %v1849
    %v1904 = vpack.c.b16 %v1852, %v1851
    %v1905 = vpack.c.b16 %v1854, %v1853
    %v1906 = vpack.c.b16 %v1856, %v1855
    %v1907 = vpack.c.b16 %v1858, %v1857
    %v1908 = vpack.c.b16 %v1860, %v1859
    %v1909 = vpack.c.b16 %v1862, %v1861
    %v1910 = vpack.c.b16 %v1864, %v1863
    %v1911 = vpack.c.b16 %v1866, %v1865
    %v1912 = vpack.c.b16 %v1868, %v1867
    %v1913 = vpack.c.b16 %v1870, %v1869
    %v1914 = vpack.c.b16 %v1872, %v1871
    %v1915 = vpack.c.b16 %v1874, %v1873
    %v1916 = vpack.c.b16 %v1876, %v1875
    %v1917 = vpack.c.b16 %v1878, %v1877
    %v1918 = vpack.c.b16 %v1880, %v1879
    %v1919 = vpack.c.b16 %v1882, %v1881
    %v1920 = vpack.c.b16 %v1884, %v1883
    %v1921 = vpack.c.b16 %v1886, %v1885
    %v1922 = vpack.c.b16 %v1888, %v1887
    %v1923 = vpack.c.b16 %v1890, %v1889
    %v1924 = vpack.c.b16 %v1892, %v1891
    %1957 = vmatpush.bf16.msra.mxu0 %v1900
    %1958 = vmatpush.bf16.msra.mxu0 %v1899
    %1959 = vmatpush.bf16.msra.mxu0 %v1898
    %1960 = vmatpush.bf16.msra.mxu0 %v1897
    %1961 = vmatpush.bf16.msra.mxu0 %v1896
    %1962 = vmatpush.bf16.msra.mxu0 %v1895
    %1963 = vmatpush.bf16.msra.mxu0 %v1894
    %1964 = vmatpush.bf16.msra.mxu0 %v1893
    %1965 = vmatmul.bf16.gmra.mxu0 %v372
    %v1966 = vpop.f32.mrf.mxu0
    %v1967 = vadd.f32 %v1764, %v1966
    %v1968 = vpop.f32.mrf.mxu0
    %1969 = vdwg.mxu0
    %1970 = vmatpush.bf16.msra.mxu0 %v1908
    %1971 = vmatpush.bf16.msra.mxu0 %v1907
    %1972 = vmatpush.bf16.msra.mxu0 %v1906
    %1973 = vmatpush.bf16.msra.mxu0 %v1905
    %1974 = vmatpush.bf16.msra.mxu0 %v1904
    %1975 = vmatpush.bf16.msra.mxu0 %v1903
    %1976 = vmatpush.bf16.msra.mxu0 %v1902
    %1977 = vmatpush.bf16.msra.mxu0 %v1901
    %1978 = vmatmul.bf16.gmra.mxu0 %v373
    %v1979 = vpop.f32.mrf.mxu0
    %v1980 = vadd.f32 %v1967, %v1979
    %v1981 = vpop.f32.mrf.mxu0
    %1982 = vdwg.mxu0
    %1983 = vmatpush.bf16.msra.mxu0 %v1916
    %1984 = vmatpush.bf16.msra.mxu0 %v1915
    %1985 = vmatpush.bf16.msra.mxu0 %v1914
    %1986 = vmatpush.bf16.msra.mxu0 %v1913
    %1987 = vmatpush.bf16.msra.mxu0 %v1912
    %1988 = vmatpush.bf16.msra.mxu0 %v1911
    %1989 = vmatpush.bf16.msra.mxu0 %v1910
    %1990 = vmatpush.bf16.msra.mxu0 %v1909
    %1991 = vmatmul.bf16.gmra.mxu0 %v374
    %v1992 = vpop.f32.mrf.mxu0
    %v1993 = vadd.f32 %v1980, %v1992
    %v1994 = vpop.f32.mrf.mxu0
    %1995 = vdwg.mxu0
    %1996 = vmatpush.bf16.msra.mxu0 %v1924
    %1997 = vmatpush.bf16.msra.mxu0 %v1923
    %1998 = vmatpush.bf16.msra.mxu0 %v1922
    %1999 = vmatpush.bf16.msra.mxu0 %v1921
    %2000 = vmatpush.bf16.msra.mxu0 %v1920
    %2001 = vmatpush.bf16.msra.mxu0 %v1919
    %2002 = vmatpush.bf16.msra.mxu0 %v1918
    %2003 = vmatpush.bf16.msra.mxu0 %v1917
    %2004 = vmatmul.bf16.gmra.mxu0 %v375
    %v2005 = vpop.f32.mrf.mxu0
    %v2006 = vadd.f32 %v1993, %v2005
    %v2007 = vpop.f32.mrf.mxu0
    %2008 = vdwg.mxu0
    %s2009 = scalar_lea.vmem [#allocation13], 512
    %v2010 = vld [vmem:[%s2009] sm:$0xf]
    %v2011 = vld [vmem:[%s2009 + $0x4] sm:$0xf]
    %v2012 = vld [vmem:[%s2009 + $0x8] sm:$0xf]
    %v2013 = vld [vmem:[%s2009 + $0xc] sm:$0xf]
    %v2014 = vld [vmem:[%s2009 + $0x10] sm:$0xf]
    %v2015 = vld [vmem:[%s2009 + $0x14] sm:$0xf]
    %v2016 = vld [vmem:[%s2009 + $0x18] sm:$0xf]
    %v2017 = vld [vmem:[%s2009 + $0x1c] sm:$0xf]
    %v2018 = vld [vmem:[%s2009 + $0x20] sm:$0xf]
    %v2019 = vld [vmem:[%s2009 + $0x24] sm:$0xf]
    %v2020 = vld [vmem:[%s2009 + $0x28] sm:$0xf]
    %v2021 = vld [vmem:[%s2009 + $0x2c] sm:$0xf]
    %v2022 = vld [vmem:[%s2009 + $0x30] sm:$0xf]
    %v2023 = vld [vmem:[%s2009 + $0x34] sm:$0xf]
    %v2024 = vld [vmem:[%s2009 + $0x38] sm:$0xf]
    %v2025 = vld [vmem:[%s2009 + $0x3c] sm:$0xf]
    %v2026 = vld [vmem:[%s2009 + $0x40] sm:$0xf]
    %v2027 = vld [vmem:[%s2009 + $0x44] sm:$0xf]
    %v2028 = vld [vmem:[%s2009 + $0x48] sm:$0xf]
    %v2029 = vld [vmem:[%s2009 + $0x4c] sm:$0xf]
    %v2030 = vld [vmem:[%s2009 + $0x50] sm:$0xf]
    %v2031 = vld [vmem:[%s2009 + $0x54] sm:$0xf]
    %v2032 = vld [vmem:[%s2009 + $0x58] sm:$0xf]
    %v2033 = vld [vmem:[%s2009 + $0x5c] sm:$0xf]
    %v2034 = vld [vmem:[%s2009 + $0x60] sm:$0xf]
    %v2035 = vld [vmem:[%s2009 + $0x64] sm:$0xf]
    %v2036 = vld [vmem:[%s2009 + $0x68] sm:$0xf]
    %v2037 = vld [vmem:[%s2009 + $0x6c] sm:$0xf]
    %v2038 = vld [vmem:[%s2009 + $0x70] sm:$0xf]
    %v2039 = vld [vmem:[%s2009 + $0x74] sm:$0xf]
    %v2040 = vld [vmem:[%s2009 + $0x78] sm:$0xf]
    %v2041 = vld [vmem:[%s2009 + $0x7c] sm:$0xf]
    %v2042 = vld [vmem:[%s2009 + $0x80] sm:$0xf]
    %v2043 = vld [vmem:[%s2009 + $0x84] sm:$0xf]
    %v2044 = vld [vmem:[%s2009 + $0x88] sm:$0xf]
    %v2045 = vld [vmem:[%s2009 + $0x8c] sm:$0xf]
    %v2046 = vld [vmem:[%s2009 + $0x90] sm:$0xf]
    %v2047 = vld [vmem:[%s2009 + $0x94] sm:$0xf]
    %v2048 = vld [vmem:[%s2009 + $0x98] sm:$0xf]
    %v2049 = vld [vmem:[%s2009 + $0x9c] sm:$0xf]
    %v2050 = vld [vmem:[%s2009 + $0xa0] sm:$0xf]
    %v2051 = vld [vmem:[%s2009 + $0xa4] sm:$0xf]
    %v2052 = vld [vmem:[%s2009 + $0xa8] sm:$0xf]
    %v2053 = vld [vmem:[%s2009 + $0xac] sm:$0xf]
    %v2054 = vld [vmem:[%s2009 + $0xb0] sm:$0xf]
    %v2055 = vld [vmem:[%s2009 + $0xb4] sm:$0xf]
    %v2056 = vld [vmem:[%s2009 + $0xb8] sm:$0xf]
    %v2057 = vld [vmem:[%s2009 + $0xbc] sm:$0xf]
    %v2058 = vld [vmem:[%s2009 + $0xc0] sm:$0xf]
    %v2059 = vld [vmem:[%s2009 + $0xc4] sm:$0xf]
    %v2060 = vld [vmem:[%s2009 + $0xc8] sm:$0xf]
    %v2061 = vld [vmem:[%s2009 + $0xcc] sm:$0xf]
    %v2062 = vld [vmem:[%s2009 + $0xd0] sm:$0xf]
    %v2063 = vld [vmem:[%s2009 + $0xd4] sm:$0xf]
    %v2064 = vld [vmem:[%s2009 + $0xd8] sm:$0xf]
    %v2065 = vld [vmem:[%s2009 + $0xdc] sm:$0xf]
    %v2066 = vld [vmem:[%s2009 + $0xe0] sm:$0xf]
    %v2067 = vld [vmem:[%s2009 + $0xe4] sm:$0xf]
    %v2068 = vld [vmem:[%s2009 + $0xe8] sm:$0xf]
    %v2069 = vld [vmem:[%s2009 + $0xec] sm:$0xf]
    %v2070 = vld [vmem:[%s2009 + $0xf0] sm:$0xf]
    %v2071 = vld [vmem:[%s2009 + $0xf4] sm:$0xf]
    %v2072 = vld [vmem:[%s2009 + $0xf8] sm:$0xf]
    %v2073 = vld [vmem:[%s2009 + $0xfc] sm:$0xf]
    %v2074 = vld [vmem:[#allocation14 + $0x2] sm:$0x1]
    %v2075 = vperm.slane %v2074, 0
    %v2140 = vunpack.c.l.b16 %v2010
    %v2141 = vunpack.c.l.b16 %v2011
    %v2142 = vunpack.c.l.b16 %v2012
    %v2143 = vunpack.c.l.b16 %v2013
    %v2144 = vunpack.c.l.b16 %v2014
    %v2145 = vunpack.c.l.b16 %v2015
    %v2146 = vunpack.c.l.b16 %v2016
    %v2147 = vunpack.c.l.b16 %v2017
    %v2148 = vunpack.c.l.b16 %v2018
    %v2149 = vunpack.c.l.b16 %v2019
    %v2150 = vunpack.c.l.b16 %v2020
    %v2151 = vunpack.c.l.b16 %v2021
    %v2152 = vunpack.c.l.b16 %v2022
    %v2153 = vunpack.c.l.b16 %v2023
    %v2154 = vunpack.c.l.b16 %v2024
    %v2155 = vunpack.c.l.b16 %v2025
    %v2156 = vunpack.c.l.b16 %v2026
    %v2157 = vunpack.c.l.b16 %v2027
    %v2158 = vunpack.c.l.b16 %v2028
    %v2159 = vunpack.c.l.b16 %v2029
    %v2160 = vunpack.c.l.b16 %v2030
    %v2161 = vunpack.c.l.b16 %v2031
    %v2162 = vunpack.c.l.b16 %v2032
    %v2163 = vunpack.c.l.b16 %v2033
    %v2164 = vunpack.c.l.b16 %v2034
    %v2165 = vunpack.c.l.b16 %v2035
    %v2166 = vunpack.c.l.b16 %v2036
    %v2167 = vunpack.c.l.b16 %v2037
    %v2168 = vunpack.c.l.b16 %v2038
    %v2169 = vunpack.c.l.b16 %v2039
    %v2170 = vunpack.c.l.b16 %v2040
    %v2171 = vunpack.c.l.b16 %v2041
    %v2172 = vunpack.c.l.b16 %v2042
    %v2173 = vunpack.c.l.b16 %v2043
    %v2174 = vunpack.c.l.b16 %v2044
    %v2175 = vunpack.c.l.b16 %v2045
    %v2176 = vunpack.c.l.b16 %v2046
    %v2177 = vunpack.c.l.b16 %v2047
    %v2178 = vunpack.c.l.b16 %v2048
    %v2179 = vunpack.c.l.b16 %v2049
    %v2180 = vunpack.c.l.b16 %v2050
    %v2181 = vunpack.c.l.b16 %v2051
    %v2182 = vunpack.c.l.b16 %v2052
    %v2183 = vunpack.c.l.b16 %v2053
    %v2184 = vunpack.c.l.b16 %v2054
    %v2185 = vunpack.c.l.b16 %v2055
    %v2186 = vunpack.c.l.b16 %v2056
    %v2187 = vunpack.c.l.b16 %v2057
    %v2188 = vunpack.c.l.b16 %v2058
    %v2189 = vunpack.c.l.b16 %v2059
    %v2190 = vunpack.c.l.b16 %v2060
    %v2191 = vunpack.c.l.b16 %v2061
    %v2192 = vunpack.c.l.b16 %v2062
    %v2193 = vunpack.c.l.b16 %v2063
    %v2194 = vunpack.c.l.b16 %v2064
    %v2195 = vunpack.c.l.b16 %v2065
    %v2196 = vunpack.c.l.b16 %v2066
    %v2197 = vunpack.c.l.b16 %v2067
    %v2198 = vunpack.c.l.b16 %v2068
    %v2199 = vunpack.c.l.b16 %v2069
    %v2200 = vunpack.c.l.b16 %v2070
    %v2201 = vunpack.c.l.b16 %v2071
    %v2202 = vunpack.c.l.b16 %v2072
    %v2203 = vunpack.c.l.b16 %v2073
    %v2204 = vpack.c.b16 %v2141, %v2140
    %v2205 = vpack.c.b16 %v2143, %v2142
    %v2206 = vpack.c.b16 %v2145, %v2144
    %v2207 = vpack.c.b16 %v2147, %v2146
    %v2208 = vpack.c.b16 %v2149, %v2148
    %v2209 = vpack.c.b16 %v2151, %v2150
    %v2210 = vpack.c.b16 %v2153, %v2152
    %v2211 = vpack.c.b16 %v2155, %v2154
    %v2212 = vpack.c.b16 %v2157, %v2156
    %v2213 = vpack.c.b16 %v2159, %v2158
    %v2214 = vpack.c.b16 %v2161, %v2160
    %v2215 = vpack.c.b16 %v2163, %v2162
    %v2216 = vpack.c.b16 %v2165, %v2164
    %v2217 = vpack.c.b16 %v2167, %v2166
    %v2218 = vpack.c.b16 %v2169, %v2168
    %v2219 = vpack.c.b16 %v2171, %v2170
    %v2220 = vpack.c.b16 %v2173, %v2172
    %v2221 = vpack.c.b16 %v2175, %v2174
    %v2222 = vpack.c.b16 %v2177, %v2176
    %v2223 = vpack.c.b16 %v2179, %v2178
    %v2224 = vpack.c.b16 %v2181, %v2180
    %v2225 = vpack.c.b16 %v2183, %v2182
    %v2226 = vpack.c.b16 %v2185, %v2184
    %v2227 = vpack.c.b16 %v2187, %v2186
    %v2228 = vpack.c.b16 %v2189, %v2188
    %v2229 = vpack.c.b16 %v2191, %v2190
    %v2230 = vpack.c.b16 %v2193, %v2192
    %v2231 = vpack.c.b16 %v2195, %v2194
    %v2232 = vpack.c.b16 %v2197, %v2196
    %v2233 = vpack.c.b16 %v2199, %v2198
    %v2234 = vpack.c.b16 %v2201, %v2200
    %v2235 = vpack.c.b16 %v2203, %v2202
    %2268 = vmatpush.bf16.msra.mxu0 %v2211
    %2269 = vmatpush.bf16.msra.mxu0 %v2210
    %2270 = vmatpush.bf16.msra.mxu0 %v2209
    %2271 = vmatpush.bf16.msra.mxu0 %v2208
    %2272 = vmatpush.bf16.msra.mxu0 %v2207
    %2273 = vmatpush.bf16.msra.mxu0 %v2206
    %2274 = vmatpush.bf16.msra.mxu0 %v2205
    %2275 = vmatpush.bf16.msra.mxu0 %v2204
    %2276 = vmatmul.bf16.gmra.mxu0 %v387
    %v2277 = vpop.f32.mrf.mxu0
    %v2278 = vadd.f32 %v2075, %v2277
    %v2279 = vpop.f32.mrf.mxu0
    %2280 = vdwg.mxu0
    %2281 = vmatpush.bf16.msra.mxu0 %v2219
    %2282 = vmatpush.bf16.msra.mxu0 %v2218
    %2283 = vmatpush.bf16.msra.mxu0 %v2217
    %2284 = vmatpush.bf16.msra.mxu0 %v2216
    %2285 = vmatpush.bf16.msra.mxu0 %v2215
    %2286 = vmatpush.bf16.msra.mxu0 %v2214
    %2287 = vmatpush.bf16.msra.mxu0 %v2213
    %2288 = vmatpush.bf16.msra.mxu0 %v2212
    %2289 = vmatmul.bf16.gmra.mxu0 %v388
    %v2290 = vpop.f32.mrf.mxu0
    %v2291 = vadd.f32 %v2278, %v2290
    %v2292 = vpop.f32.mrf.mxu0
    %2293 = vdwg.mxu0
    %2294 = vmatpush.bf16.msra.mxu0 %v2227
    %2295 = vmatpush.bf16.msra.mxu0 %v2226
    %2296 = vmatpush.bf16.msra.mxu0 %v2225
    %2297 = vmatpush.bf16.msra.mxu0 %v2224
    %2298 = vmatpush.bf16.msra.mxu0 %v2223
    %2299 = vmatpush.bf16.msra.mxu0 %v2222
    %2300 = vmatpush.bf16.msra.mxu0 %v2221
    %2301 = vmatpush.bf16.msra.mxu0 %v2220
    %2302 = vmatmul.bf16.gmra.mxu0 %v389
    %v2303 = vpop.f32.mrf.mxu0
    %v2304 = vadd.f32 %v2291, %v2303
    %v2305 = vpop.f32.mrf.mxu0
    %2306 = vdwg.mxu0
    %2307 = vmatpush.bf16.msra.mxu0 %v2235
    %2308 = vmatpush.bf16.msra.mxu0 %v2234
    %2309 = vmatpush.bf16.msra.mxu0 %v2233
    %2310 = vmatpush.bf16.msra.mxu0 %v2232
    %2311 = vmatpush.bf16.msra.mxu0 %v2231
    %2312 = vmatpush.bf16.msra.mxu0 %v2230
    %2313 = vmatpush.bf16.msra.mxu0 %v2229
    %2314 = vmatpush.bf16.msra.mxu0 %v2228
    %2315 = vmatmul.bf16.gmra.mxu0 %v390
    %v2316 = vpop.f32.mrf.mxu0
    %v2317 = vadd.f32 %v2304, %v2316
    %v2318 = vpop.f32.mrf.mxu0
    %2319 = vdwg.mxu0
    %v2320 = vmul.f32 %v2006, %v2006
    %v2321 = vsel %vm1012, %v2320, 0.0
    %2322 = vadd.xlane.f32.xlu0 %v2321
    %v2323 = vpop.xlane.xlu0 %2322
    %v2324 = vmax.f32 %v2323, 1e-24
    %v2325 = vrsqrt.pop %v2324
    %v2326 = vmul.f32 %v2325, %v2324
    %v2327 = vmul.f32 %v2326, %v2325
    %v2328 = vmul.f32 0.5, %v2327
    %v2329 = vsub.f32 1.5, %v2328
    %v2330 = vmul.f32 %v2325, %v2329
    %vm2331 = vweird.f32 %v2324
    %vm2332 = vweird.f32 %v2325
    %vm2333 = vmor %vm2331, %vm2332
    %v2334 = vsel %vm2333, %v2325, %v2330
    %v2335 = vmul.f32 %v2006, %v2334
    %v2336 = vmul.f32 %v2317, %v2317
    %v2337 = vsel %vm1012, %v2336, 0.0
    %2338 = vadd.xlane.f32.xlu0 %v2337
    %v2339 = vpop.xlane.xlu0 %2338
    %v2340 = vmax.f32 %v2339, 1e-24
    %v2341 = vrsqrt.pop %v2340
    %v2342 = vmul.f32 %v2341, %v2340
    %v2343 = vmul.f32 %v2342, %v2341
    %v2344 = vmul.f32 0.5, %v2343
    %v2345 = vsub.f32 1.5, %v2344
    %v2346 = vmul.f32 %v2341, %v2345
    %vm2347 = vweird.f32 %v2340
    %vm2348 = vweird.f32 %v2341
    %vm2349 = vmor %vm2347, %vm2348
    %v2350 = vsel %vm2349, %v2341, %v2346
    %v2351 = vmul.f32 %v2317, %v2350
    %s2352 = scalar_lea.vmem [#allocation10], 768
    %v2353 = vld [vmem:[%s2352] sm:$0xf]
    %v2354 = vld [vmem:[%s2352 + $0x4] sm:$0xf]
    %v2355 = vld [vmem:[%s2352 + $0x8] sm:$0xf]
    %v2356 = vld [vmem:[%s2352 + $0xc] sm:$0xf]
    %v2357 = vld [vmem:[%s2352 + $0x10] sm:$0xf]
    %v2358 = vld [vmem:[%s2352 + $0x14] sm:$0xf]
    %v2359 = vld [vmem:[%s2352 + $0x18] sm:$0xf]
    %v2360 = vld [vmem:[%s2352 + $0x1c] sm:$0xf]
    %v2361 = vld [vmem:[%s2352 + $0x20] sm:$0xf]
    %v2362 = vld [vmem:[%s2352 + $0x24] sm:$0xf]
    %v2363 = vld [vmem:[%s2352 + $0x28] sm:$0xf]
    %v2364 = vld [vmem:[%s2352 + $0x2c] sm:$0xf]
    %v2365 = vld [vmem:[%s2352 + $0x30] sm:$0xf]
    %v2366 = vld [vmem:[%s2352 + $0x34] sm:$0xf]
    %v2367 = vld [vmem:[%s2352 + $0x38] sm:$0xf]
    %v2368 = vld [vmem:[%s2352 + $0x3c] sm:$0xf]
    %v2369 = vld [vmem:[%s2352 + $0x40] sm:$0xf]
    %v2370 = vld [vmem:[%s2352 + $0x44] sm:$0xf]
    %v2371 = vld [vmem:[%s2352 + $0x48] sm:$0xf]
    %v2372 = vld [vmem:[%s2352 + $0x4c] sm:$0xf]
    %v2373 = vld [vmem:[%s2352 + $0x50] sm:$0xf]
    %v2374 = vld [vmem:[%s2352 + $0x54] sm:$0xf]
    %v2375 = vld [vmem:[%s2352 + $0x58] sm:$0xf]
    %v2376 = vld [vmem:[%s2352 + $0x5c] sm:$0xf]
    %v2377 = vld [vmem:[%s2352 + $0x60] sm:$0xf]
    %v2378 = vld [vmem:[%s2352 + $0x64] sm:$0xf]
    %v2379 = vld [vmem:[%s2352 + $0x68] sm:$0xf]
    %v2380 = vld [vmem:[%s2352 + $0x6c] sm:$0xf]
    %v2381 = vld [vmem:[%s2352 + $0x70] sm:$0xf]
    %v2382 = vld [vmem:[%s2352 + $0x74] sm:$0xf]
    %v2383 = vld [vmem:[%s2352 + $0x78] sm:$0xf]
    %v2384 = vld [vmem:[%s2352 + $0x7c] sm:$0xf]
    %v2385 = vld [vmem:[%s2352 + $0x80] sm:$0xf]
    %v2386 = vld [vmem:[%s2352 + $0x84] sm:$0xf]
    %v2387 = vld [vmem:[%s2352 + $0x88] sm:$0xf]
    %v2388 = vld [vmem:[%s2352 + $0x8c] sm:$0xf]
    %v2389 = vld [vmem:[%s2352 + $0x90] sm:$0xf]
    %v2390 = vld [vmem:[%s2352 + $0x94] sm:$0xf]
    %v2391 = vld [vmem:[%s2352 + $0x98] sm:$0xf]
    %v2392 = vld [vmem:[%s2352 + $0x9c] sm:$0xf]
    %v2393 = vld [vmem:[%s2352 + $0xa0] sm:$0xf]
    %v2394 = vld [vmem:[%s2352 + $0xa4] sm:$0xf]
    %v2395 = vld [vmem:[%s2352 + $0xa8] sm:$0xf]
    %v2396 = vld [vmem:[%s2352 + $0xac] sm:$0xf]
    %v2397 = vld [vmem:[%s2352 + $0xb0] sm:$0xf]
    %v2398 = vld [vmem:[%s2352 + $0xb4] sm:$0xf]
    %v2399 = vld [vmem:[%s2352 + $0xb8] sm:$0xf]
    %v2400 = vld [vmem:[%s2352 + $0xbc] sm:$0xf]
    %v2401 = vld [vmem:[%s2352 + $0xc0] sm:$0xf]
    %v2402 = vld [vmem:[%s2352 + $0xc4] sm:$0xf]
    %v2403 = vld [vmem:[%s2352 + $0xc8] sm:$0xf]
    %v2404 = vld [vmem:[%s2352 + $0xcc] sm:$0xf]
    %v2405 = vld [vmem:[%s2352 + $0xd0] sm:$0xf]
    %v2406 = vld [vmem:[%s2352 + $0xd4] sm:$0xf]
    %v2407 = vld [vmem:[%s2352 + $0xd8] sm:$0xf]
    %v2408 = vld [vmem:[%s2352 + $0xdc] sm:$0xf]
    %v2409 = vld [vmem:[%s2352 + $0xe0] sm:$0xf]
    %v2410 = vld [vmem:[%s2352 + $0xe4] sm:$0xf]
    %v2411 = vld [vmem:[%s2352 + $0xe8] sm:$0xf]
    %v2412 = vld [vmem:[%s2352 + $0xec] sm:$0xf]
    %v2413 = vld [vmem:[%s2352 + $0xf0] sm:$0xf]
    %v2414 = vld [vmem:[%s2352 + $0xf4] sm:$0xf]
    %v2415 = vld [vmem:[%s2352 + $0xf8] sm:$0xf]
    %v2416 = vld [vmem:[%s2352 + $0xfc] sm:$0xf]
    %v2417 = vld [vmem:[#allocation11 + $0x3] sm:$0x1]
    %v2418 = vperm.slane %v2417, 0
    %v2483 = vunpack.c.l.b16 %v2353
    %v2484 = vunpack.c.l.b16 %v2354
    %v2485 = vunpack.c.l.b16 %v2355
    %v2486 = vunpack.c.l.b16 %v2356
    %v2487 = vunpack.c.l.b16 %v2357
    %v2488 = vunpack.c.l.b16 %v2358
    %v2489 = vunpack.c.l.b16 %v2359
    %v2490 = vunpack.c.l.b16 %v2360
    %v2491 = vunpack.c.l.b16 %v2361
    %v2492 = vunpack.c.l.b16 %v2362
    %v2493 = vunpack.c.l.b16 %v2363
    %v2494 = vunpack.c.l.b16 %v2364
    %v2495 = vunpack.c.l.b16 %v2365
    %v2496 = vunpack.c.l.b16 %v2366
    %v2497 = vunpack.c.l.b16 %v2367
    %v2498 = vunpack.c.l.b16 %v2368
    %v2499 = vunpack.c.l.b16 %v2369
    %v2500 = vunpack.c.l.b16 %v2370
    %v2501 = vunpack.c.l.b16 %v2371
    %v2502 = vunpack.c.l.b16 %v2372
    %v2503 = vunpack.c.l.b16 %v2373
    %v2504 = vunpack.c.l.b16 %v2374
    %v2505 = vunpack.c.l.b16 %v2375
    %v2506 = vunpack.c.l.b16 %v2376
    %v2507 = vunpack.c.l.b16 %v2377
    %v2508 = vunpack.c.l.b16 %v2378
    %v2509 = vunpack.c.l.b16 %v2379
    %v2510 = vunpack.c.l.b16 %v2380
    %v2511 = vunpack.c.l.b16 %v2381
    %v2512 = vunpack.c.l.b16 %v2382
    %v2513 = vunpack.c.l.b16 %v2383
    %v2514 = vunpack.c.l.b16 %v2384
    %v2515 = vunpack.c.l.b16 %v2385
    %v2516 = vunpack.c.l.b16 %v2386
    %v2517 = vunpack.c.l.b16 %v2387
    %v2518 = vunpack.c.l.b16 %v2388
    %v2519 = vunpack.c.l.b16 %v2389
    %v2520 = vunpack.c.l.b16 %v2390
    %v2521 = vunpack.c.l.b16 %v2391
    %v2522 = vunpack.c.l.b16 %v2392
    %v2523 = vunpack.c.l.b16 %v2393
    %v2524 = vunpack.c.l.b16 %v2394
    %v2525 = vunpack.c.l.b16 %v2395
    %v2526 = vunpack.c.l.b16 %v2396
    %v2527 = vunpack.c.l.b16 %v2397
    %v2528 = vunpack.c.l.b16 %v2398
    %v2529 = vunpack.c.l.b16 %v2399
    %v2530 = vunpack.c.l.b16 %v2400
    %v2531 = vunpack.c.l.b16 %v2401
    %v2532 = vunpack.c.l.b16 %v2402
    %v2533 = vunpack.c.l.b16 %v2403
    %v2534 = vunpack.c.l.b16 %v2404
    %v2535 = vunpack.c.l.b16 %v2405
    %v2536 = vunpack.c.l.b16 %v2406
    %v2537 = vunpack.c.l.b16 %v2407
    %v2538 = vunpack.c.l.b16 %v2408
    %v2539 = vunpack.c.l.b16 %v2409
    %v2540 = vunpack.c.l.b16 %v2410
    %v2541 = vunpack.c.l.b16 %v2411
    %v2542 = vunpack.c.l.b16 %v2412
    %v2543 = vunpack.c.l.b16 %v2413
    %v2544 = vunpack.c.l.b16 %v2414
    %v2545 = vunpack.c.l.b16 %v2415
    %v2546 = vunpack.c.l.b16 %v2416
    %v2547 = vpack.c.b16 %v2484, %v2483
    %v2548 = vpack.c.b16 %v2486, %v2485
    %v2549 = vpack.c.b16 %v2488, %v2487
    %v2550 = vpack.c.b16 %v2490, %v2489
    %v2551 = vpack.c.b16 %v2492, %v2491
    %v2552 = vpack.c.b16 %v2494, %v2493
    %v2553 = vpack.c.b16 %v2496, %v2495
    %v2554 = vpack.c.b16 %v2498, %v2497
    %v2555 = vpack.c.b16 %v2500, %v2499
    %v2556 = vpack.c.b16 %v2502, %v2501
    %v2557 = vpack.c.b16 %v2504, %v2503
    %v2558 = vpack.c.b16 %v2506, %v2505
    %v2559 = vpack.c.b16 %v2508, %v2507
    %v2560 = vpack.c.b16 %v2510, %v2509
    %v2561 = vpack.c.b16 %v2512, %v2511
    %v2562 = vpack.c.b16 %v2514, %v2513
    %v2563 = vpack.c.b16 %v2516, %v2515
    %v2564 = vpack.c.b16 %v2518, %v2517
    %v2565 = vpack.c.b16 %v2520, %v2519
    %v2566 = vpack.c.b16 %v2522, %v2521
    %v2567 = vpack.c.b16 %v2524, %v2523
    %v2568 = vpack.c.b16 %v2526, %v2525
    %v2569 = vpack.c.b16 %v2528, %v2527
    %v2570 = vpack.c.b16 %v2530, %v2529
    %v2571 = vpack.c.b16 %v2532, %v2531
    %v2572 = vpack.c.b16 %v2534, %v2533
    %v2573 = vpack.c.b16 %v2536, %v2535
    %v2574 = vpack.c.b16 %v2538, %v2537
    %v2575 = vpack.c.b16 %v2540, %v2539
    %v2576 = vpack.c.b16 %v2542, %v2541
    %v2577 = vpack.c.b16 %v2544, %v2543
    %v2578 = vpack.c.b16 %v2546, %v2545
    %2611 = vmatpush.bf16.msra.mxu0 %v2554
    %2612 = vmatpush.bf16.msra.mxu0 %v2553
    %2613 = vmatpush.bf16.msra.mxu0 %v2552
    %2614 = vmatpush.bf16.msra.mxu0 %v2551
    %2615 = vmatpush.bf16.msra.mxu0 %v2550
    %2616 = vmatpush.bf16.msra.mxu0 %v2549
    %2617 = vmatpush.bf16.msra.mxu0 %v2548
    %2618 = vmatpush.bf16.msra.mxu0 %v2547
    %2619 = vmatmul.bf16.gmra.mxu0 %v372
    %v2620 = vpop.f32.mrf.mxu0
    %v2621 = vadd.f32 %v2418, %v2620
    %v2622 = vpop.f32.mrf.mxu0
    %2623 = vdwg.mxu0
    %2624 = vmatpush.bf16.msra.mxu0 %v2562
    %2625 = vmatpush.bf16.msra.mxu0 %v2561
    %2626 = vmatpush.bf16.msra.mxu0 %v2560
    %2627 = vmatpush.bf16.msra.mxu0 %v2559
    %2628 = vmatpush.bf16.msra.mxu0 %v2558
    %2629 = vmatpush.bf16.msra.mxu0 %v2557
    %2630 = vmatpush.bf16.msra.mxu0 %v2556
    %2631 = vmatpush.bf16.msra.mxu0 %v2555
    %2632 = vmatmul.bf16.gmra.mxu0 %v373
    %v2633 = vpop.f32.mrf.mxu0
    %v2634 = vadd.f32 %v2621, %v2633
    %v2635 = vpop.f32.mrf.mxu0
    %2636 = vdwg.mxu0
    %2637 = vmatpush.bf16.msra.mxu0 %v2570
    %2638 = vmatpush.bf16.msra.mxu0 %v2569
    %2639 = vmatpush.bf16.msra.mxu0 %v2568
    %2640 = vmatpush.bf16.msra.mxu0 %v2567
    %2641 = vmatpush.bf16.msra.mxu0 %v2566
    %2642 = vmatpush.bf16.msra.mxu0 %v2565
    %2643 = vmatpush.bf16.msra.mxu0 %v2564
    %2644 = vmatpush.bf16.msra.mxu0 %v2563
    %2645 = vmatmul.bf16.gmra.mxu0 %v374
    %v2646 = vpop.f32.mrf.mxu0
    %v2647 = vadd.f32 %v2634, %v2646
    %v2648 = vpop.f32.mrf.mxu0
    %2649 = vdwg.mxu0
    %2650 = vmatpush.bf16.msra.mxu0 %v2578
    %2651 = vmatpush.bf16.msra.mxu0 %v2577
    %2652 = vmatpush.bf16.msra.mxu0 %v2576
    %2653 = vmatpush.bf16.msra.mxu0 %v2575
    %2654 = vmatpush.bf16.msra.mxu0 %v2574
    %2655 = vmatpush.bf16.msra.mxu0 %v2573
    %2656 = vmatpush.bf16.msra.mxu0 %v2572
    %2657 = vmatpush.bf16.msra.mxu0 %v2571
    %2658 = vmatmul.bf16.gmra.mxu0 %v375
    %v2659 = vpop.f32.mrf.mxu0
    %v2660 = vadd.f32 %v2647, %v2659
    %v2661 = vpop.f32.mrf.mxu0
    %2662 = vdwg.mxu0
    %s2663 = scalar_lea.vmem [#allocation13], 768
    %v2664 = vld [vmem:[%s2663] sm:$0xf]
    %v2665 = vld [vmem:[%s2663 + $0x4] sm:$0xf]
    %v2666 = vld [vmem:[%s2663 + $0x8] sm:$0xf]
    %v2667 = vld [vmem:[%s2663 + $0xc] sm:$0xf]
    %v2668 = vld [vmem:[%s2663 + $0x10] sm:$0xf]
    %v2669 = vld [vmem:[%s2663 + $0x14] sm:$0xf]
    %v2670 = vld [vmem:[%s2663 + $0x18] sm:$0xf]
    %v2671 = vld [vmem:[%s2663 + $0x1c] sm:$0xf]
    %v2672 = vld [vmem:[%s2663 + $0x20] sm:$0xf]
    %v2673 = vld [vmem:[%s2663 + $0x24] sm:$0xf]
    %v2674 = vld [vmem:[%s2663 + $0x28] sm:$0xf]
    %v2675 = vld [vmem:[%s2663 + $0x2c] sm:$0xf]
    %v2676 = vld [vmem:[%s2663 + $0x30] sm:$0xf]
    %v2677 = vld [vmem:[%s2663 + $0x34] sm:$0xf]
    %v2678 = vld [vmem:[%s2663 + $0x38] sm:$0xf]
    %v2679 = vld [vmem:[%s2663 + $0x3c] sm:$0xf]
    %v2680 = vld [vmem:[%s2663 + $0x40] sm:$0xf]
    %v2681 = vld [vmem:[%s2663 + $0x44] sm:$0xf]
    %v2682 = vld [vmem:[%s2663 + $0x48] sm:$0xf]
    %v2683 = vld [vmem:[%s2663 + $0x4c] sm:$0xf]
    %v2684 = vld [vmem:[%s2663 + $0x50] sm:$0xf]
    %v2685 = vld [vmem:[%s2663 + $0x54] sm:$0xf]
    %v2686 = vld [vmem:[%s2663 + $0x58] sm:$0xf]
    %v2687 = vld [vmem:[%s2663 + $0x5c] sm:$0xf]
    %v2688 = vld [vmem:[%s2663 + $0x60] sm:$0xf]
    %v2689 = vld [vmem:[%s2663 + $0x64] sm:$0xf]
    %v2690 = vld [vmem:[%s2663 + $0x68] sm:$0xf]
    %v2691 = vld [vmem:[%s2663 + $0x6c] sm:$0xf]
    %v2692 = vld [vmem:[%s2663 + $0x70] sm:$0xf]
    %v2693 = vld [vmem:[%s2663 + $0x74] sm:$0xf]
    %v2694 = vld [vmem:[%s2663 + $0x78] sm:$0xf]
    %v2695 = vld [vmem:[%s2663 + $0x7c] sm:$0xf]
    %v2696 = vld [vmem:[%s2663 + $0x80] sm:$0xf]
    %v2697 = vld [vmem:[%s2663 + $0x84] sm:$0xf]
    %v2698 = vld [vmem:[%s2663 + $0x88] sm:$0xf]
    %v2699 = vld [vmem:[%s2663 + $0x8c] sm:$0xf]
    %v2700 = vld [vmem:[%s2663 + $0x90] sm:$0xf]
    %v2701 = vld [vmem:[%s2663 + $0x94] sm:$0xf]
    %v2702 = vld [vmem:[%s2663 + $0x98] sm:$0xf]
    %v2703 = vld [vmem:[%s2663 + $0x9c] sm:$0xf]
    %v2704 = vld [vmem:[%s2663 + $0xa0] sm:$0xf]
    %v2705 = vld [vmem:[%s2663 + $0xa4] sm:$0xf]
    %v2706 = vld [vmem:[%s2663 + $0xa8] sm:$0xf]
    %v2707 = vld [vmem:[%s2663 + $0xac] sm:$0xf]
    %v2708 = vld [vmem:[%s2663 + $0xb0] sm:$0xf]
    %v2709 = vld [vmem:[%s2663 + $0xb4] sm:$0xf]
    %v2710 = vld [vmem:[%s2663 + $0xb8] sm:$0xf]
    %v2711 = vld [vmem:[%s2663 + $0xbc] sm:$0xf]
    %v2712 = vld [vmem:[%s2663 + $0xc0] sm:$0xf]
    %v2713 = vld [vmem:[%s2663 + $0xc4] sm:$0xf]
    %v2714 = vld [vmem:[%s2663 + $0xc8] sm:$0xf]
    %v2715 = vld [vmem:[%s2663 + $0xcc] sm:$0xf]
    %v2716 = vld [vmem:[%s2663 + $0xd0] sm:$0xf]
    %v2717 = vld [vmem:[%s2663 + $0xd4] sm:$0xf]
    %v2718 = vld [vmem:[%s2663 + $0xd8] sm:$0xf]
    %v2719 = vld [vmem:[%s2663 + $0xdc] sm:$0xf]
    %v2720 = vld [vmem:[%s2663 + $0xe0] sm:$0xf]
    %v2721 = vld [vmem:[%s2663 + $0xe4] sm:$0xf]
    %v2722 = vld [vmem:[%s2663 + $0xe8] sm:$0xf]
    %v2723 = vld [vmem:[%s2663 + $0xec] sm:$0xf]
    %v2724 = vld [vmem:[%s2663 + $0xf0] sm:$0xf]
    %v2725 = vld [vmem:[%s2663 + $0xf4] sm:$0xf]
    %v2726 = vld [vmem:[%s2663 + $0xf8] sm:$0xf]
    %v2727 = vld [vmem:[%s2663 + $0xfc] sm:$0xf]
    %v2728 = vld [vmem:[#allocation14 + $0x3] sm:$0x1]
    %v2729 = vperm.slane %v2728, 0
    %v2794 = vunpack.c.l.b16 %v2664
    %v2795 = vunpack.c.l.b16 %v2665
    %v2796 = vunpack.c.l.b16 %v2666
    %v2797 = vunpack.c.l.b16 %v2667
    %v2798 = vunpack.c.l.b16 %v2668
    %v2799 = vunpack.c.l.b16 %v2669
    %v2800 = vunpack.c.l.b16 %v2670
    %v2801 = vunpack.c.l.b16 %v2671
    %v2802 = vunpack.c.l.b16 %v2672
    %v2803 = vunpack.c.l.b16 %v2673
    %v2804 = vunpack.c.l.b16 %v2674
    %v2805 = vunpack.c.l.b16 %v2675
    %v2806 = vunpack.c.l.b16 %v2676
    %v2807 = vunpack.c.l.b16 %v2677
    %v2808 = vunpack.c.l.b16 %v2678
    %v2809 = vunpack.c.l.b16 %v2679
    %v2810 = vunpack.c.l.b16 %v2680
    %v2811 = vunpack.c.l.b16 %v2681
    %v2812 = vunpack.c.l.b16 %v2682
    %v2813 = vunpack.c.l.b16 %v2683
    %v2814 = vunpack.c.l.b16 %v2684
    %v2815 = vunpack.c.l.b16 %v2685
    %v2816 = vunpack.c.l.b16 %v2686
    %v2817 = vunpack.c.l.b16 %v2687
    %v2818 = vunpack.c.l.b16 %v2688
    %v2819 = vunpack.c.l.b16 %v2689
    %v2820 = vunpack.c.l.b16 %v2690
    %v2821 = vunpack.c.l.b16 %v2691
    %v2822 = vunpack.c.l.b16 %v2692
    %v2823 = vunpack.c.l.b16 %v2693
    %v2824 = vunpack.c.l.b16 %v2694
    %v2825 = vunpack.c.l.b16 %v2695
    %v2826 = vunpack.c.l.b16 %v2696
    %v2827 = vunpack.c.l.b16 %v2697
    %v2828 = vunpack.c.l.b16 %v2698
    %v2829 = vunpack.c.l.b16 %v2699
    %v2830 = vunpack.c.l.b16 %v2700
    %v2831 = vunpack.c.l.b16 %v2701
    %v2832 = vunpack.c.l.b16 %v2702
    %v2833 = vunpack.c.l.b16 %v2703
    %v2834 = vunpack.c.l.b16 %v2704
    %v2835 = vunpack.c.l.b16 %v2705
    %v2836 = vunpack.c.l.b16 %v2706
    %v2837 = vunpack.c.l.b16 %v2707
    %v2838 = vunpack.c.l.b16 %v2708
    %v2839 = vunpack.c.l.b16 %v2709
    %v2840 = vunpack.c.l.b16 %v2710
    %v2841 = vunpack.c.l.b16 %v2711
    %v2842 = vunpack.c.l.b16 %v2712
    %v2843 = vunpack.c.l.b16 %v2713
    %v2844 = vunpack.c.l.b16 %v2714
    %v2845 = vunpack.c.l.b16 %v2715
    %v2846 = vunpack.c.l.b16 %v2716
    %v2847 = vunpack.c.l.b16 %v2717
    %v2848 = vunpack.c.l.b16 %v2718
    %v2849 = vunpack.c.l.b16 %v2719
    %v2850 = vunpack.c.l.b16 %v2720
    %v2851 = vunpack.c.l.b16 %v2721
    %v2852 = vunpack.c.l.b16 %v2722
    %v2853 = vunpack.c.l.b16 %v2723
    %v2854 = vunpack.c.l.b16 %v2724
    %v2855 = vunpack.c.l.b16 %v2725
    %v2856 = vunpack.c.l.b16 %v2726
    %v2857 = vunpack.c.l.b16 %v2727
    %v2858 = vpack.c.b16 %v2795, %v2794
    %v2859 = vpack.c.b16 %v2797, %v2796
    %v2860 = vpack.c.b16 %v2799, %v2798
    %v2861 = vpack.c.b16 %v2801, %v2800
    %v2862 = vpack.c.b16 %v2803, %v2802
    %v2863 = vpack.c.b16 %v2805, %v2804
    %v2864 = vpack.c.b16 %v2807, %v2806
    %v2865 = vpack.c.b16 %v2809, %v2808
    %v2866 = vpack.c.b16 %v2811, %v2810
    %v2867 = vpack.c.b16 %v2813, %v2812
    %v2868 = vpack.c.b16 %v2815, %v2814
    %v2869 = vpack.c.b16 %v2817, %v2816
    %v2870 = vpack.c.b16 %v2819, %v2818
    %v2871 = vpack.c.b16 %v2821, %v2820
    %v2872 = vpack.c.b16 %v2823, %v2822
    %v2873 = vpack.c.b16 %v2825, %v2824
    %v2874 = vpack.c.b16 %v2827, %v2826
    %v2875 = vpack.c.b16 %v2829, %v2828
    %v2876 = vpack.c.b16 %v2831, %v2830
    %v2877 = vpack.c.b16 %v2833, %v2832
    %v2878 = vpack.c.b16 %v2835, %v2834
    %v2879 = vpack.c.b16 %v2837, %v2836
    %v2880 = vpack.c.b16 %v2839, %v2838
    %v2881 = vpack.c.b16 %v2841, %v2840
    %v2882 = vpack.c.b16 %v2843, %v2842
    %v2883 = vpack.c.b16 %v2845, %v2844
    %v2884 = vpack.c.b16 %v2847, %v2846
    %v2885 = vpack.c.b16 %v2849, %v2848
    %v2886 = vpack.c.b16 %v2851, %v2850
    %v2887 = vpack.c.b16 %v2853, %v2852
    %v2888 = vpack.c.b16 %v2855, %v2854
    %v2889 = vpack.c.b16 %v2857, %v2856
    %2922 = vmatpush.bf16.msra.mxu0 %v2865
    %2923 = vmatpush.bf16.msra.mxu0 %v2864
    %2924 = vmatpush.bf16.msra.mxu0 %v2863
    %2925 = vmatpush.bf16.msra.mxu0 %v2862
    %2926 = vmatpush.bf16.msra.mxu0 %v2861
    %2927 = vmatpush.bf16.msra.mxu0 %v2860
    %2928 = vmatpush.bf16.msra.mxu0 %v2859
    %2929 = vmatpush.bf16.msra.mxu0 %v2858
    %2930 = vmatmul.bf16.gmra.mxu0 %v387
    %v2931 = vpop.f32.mrf.mxu0
    %v2932 = vadd.f32 %v2729, %v2931
    %v2933 = vpop.f32.mrf.mxu0
    %2934 = vdwg.mxu0
    %2935 = vmatpush.bf16.msra.mxu0 %v2873
    %2936 = vmatpush.bf16.msra.mxu0 %v2872
    %2937 = vmatpush.bf16.msra.mxu0 %v2871
    %2938 = vmatpush.bf16.msra.mxu0 %v2870
    %2939 = vmatpush.bf16.msra.mxu0 %v2869
    %2940 = vmatpush.bf16.msra.mxu0 %v2868
    %2941 = vmatpush.bf16.msra.mxu0 %v2867
    %2942 = vmatpush.bf16.msra.mxu0 %v2866
    %2943 = vmatmul.bf16.gmra.mxu0 %v388
    %v2944 = vpop.f32.mrf.mxu0
    %v2945 = vadd.f32 %v2932, %v2944
    %v2946 = vpop.f32.mrf.mxu0
    %2947 = vdwg.mxu0
    %2948 = vmatpush.bf16.msra.mxu0 %v2881
    %2949 = vmatpush.bf16.msra.mxu0 %v2880
    %2950 = vmatpush.bf16.msra.mxu0 %v2879
    %2951 = vmatpush.bf16.msra.mxu0 %v2878
    %2952 = vmatpush.bf16.msra.mxu0 %v2877
    %2953 = vmatpush.bf16.msra.mxu0 %v2876
    %2954 = vmatpush.bf16.msra.mxu0 %v2875
    %2955 = vmatpush.bf16.msra.mxu0 %v2874
    %2956 = vmatmul.bf16.gmra.mxu0 %v389
    %v2957 = vpop.f32.mrf.mxu0
    %v2958 = vadd.f32 %v2945, %v2957
    %v2959 = vpop.f32.mrf.mxu0
    %2960 = vdwg.mxu0
    %2961 = vmatpush.bf16.msra.mxu0 %v2889
    %2962 = vmatpush.bf16.msra.mxu0 %v2888
    %2963 = vmatpush.bf16.msra.mxu0 %v2887
    %2964 = vmatpush.bf16.msra.mxu0 %v2886
    %2965 = vmatpush.bf16.msra.mxu0 %v2885
    %2966 = vmatpush.bf16.msra.mxu0 %v2884
    %2967 = vmatpush.bf16.msra.mxu0 %v2883
    %2968 = vmatpush.bf16.msra.mxu0 %v2882
    %2969 = vmatmul.bf16.gmra.mxu0 %v390
    %v2970 = vpop.f32.mrf.mxu0
    %v2971 = vadd.f32 %v2958, %v2970
    %v2972 = vpop.f32.mrf.mxu0
    %2973 = vdwg.mxu0
    %v2974 = vmul.f32 %v2660, %v2660
    %v2975 = vsel %vm1012, %v2974, 0.0
    %2976 = vadd.xlane.f32.xlu0 %v2975
    %v2977 = vpop.xlane.xlu0 %2976
    %v2978 = vmax.f32 %v2977, 1e-24
    %v2979 = vrsqrt.pop %v2978
    %v2980 = vmul.f32 %v2979, %v2978
    %v2981 = vmul.f32 %v2980, %v2979
    %v2982 = vmul.f32 0.5, %v2981
    %v2983 = vsub.f32 1.5, %v2982
    %v2984 = vmul.f32 %v2979, %v2983
    %vm2985 = vweird.f32 %v2978
    %vm2986 = vweird.f32 %v2979
    %vm2987 = vmor %vm2985, %vm2986
    %v2988 = vsel %vm2987, %v2979, %v2984
    %v2989 = vmul.f32 %v2660, %v2988
    %v2990 = vmul.f32 %v2971, %v2971
    %v2991 = vsel %vm1012, %v2990, 0.0
    %2992 = vadd.xlane.f32.xlu0 %v2991
    %v2993 = vpop.xlane.xlu0 %2992
    %v2994 = vmax.f32 %v2993, 1e-24
    %v2995 = vrsqrt.pop %v2994
    %v2996 = vmul.f32 %v2995, %v2994
    %v2997 = vmul.f32 %v2996, %v2995
    %v2998 = vmul.f32 0.5, %v2997
    %v2999 = vsub.f32 1.5, %v2998
    %v3000 = vmul.f32 %v2995, %v2999
    %vm3001 = vweird.f32 %v2994
    %vm3002 = vweird.f32 %v2995
    %vm3003 = vmor %vm3001, %vm3002
    %v3004 = vsel %vm3003, %v2995, %v3000
    %v3005 = vmul.f32 %v2971, %v3004
    %v3006 = vld [vmem:[#allocation7] sm:$0xff]
    %v3007 = vld [vmem:[#allocation7 + $0x8] sm:$0xff]
    %v3008 = vld [vmem:[#allocation7 + $0x10] sm:$0xff]
    %v3009 = vld [vmem:[#allocation7 + $0x18] sm:$0xff]
    %v3010 = vld [vmem:[#allocation7 + $0x20] sm:$0xff]
    %v3011 = vld [vmem:[#allocation7 + $0x28] sm:$0xff]
    %v3012 = vld [vmem:[#allocation7 + $0x30] sm:$0xff]
    %v3013 = vld [vmem:[#allocation7 + $0x38] sm:$0xff]
    %v3014 = vld [vmem:[#allocation7 + $0x40] sm:$0xff]
    %v3015 = vld [vmem:[#allocation7 + $0x48] sm:$0xff]
    %v3016 = vld [vmem:[#allocation7 + $0x50] sm:$0xff]
    %v3017 = vld [vmem:[#allocation7 + $0x58] sm:$0xff]
    %v3018 = vpack.c.bf16 %v3012, %v3006
    %v3019 = vpack.c.bf16 %v3013, %v3007
    %v3020 = vpack.c.bf16 %v3014, %v3008
    %v3021 = vpack.c.bf16 %v3015, %v3009
    %v3022 = vpack.c.bf16 %v3016, %v3010
    %v3023 = vpack.c.bf16 %v3017, %v3011
    %v3024 = vld [vmem:[#allocation8] sm:$0xff]
    %v3025 = vld [vmem:[#allocation8 + $0x8] sm:$0xff]
    %v3026 = vld [vmem:[#allocation8 + $0x10] sm:$0xff]
    %v3027 = vld [vmem:[#allocation8 + $0x18] sm:$0xff]
    %v3028 = vld [vmem:[#allocation8 + $0x20] sm:$0xff]
    %v3029 = vld [vmem:[#allocation8 + $0x28] sm:$0xff]
    %v3030 = vld [vmem:[#allocation8 + $0x30] sm:$0xff]
    %v3031 = vld [vmem:[#allocation8 + $0x38] sm:$0xff]
    %v3032 = vpack.c.bf16 %v3028, %v3024
    %v3033 = vpack.c.bf16 %v3029, %v3025
    %v3034 = vpack.c.bf16 %v3030, %v3026
    %v3035 = vpack.c.bf16 %v3031, %v3027
    %v3036 = vld [vmem:[#allocation16] sm:$0xff]
    %v3037 = vld [vmem:[#allocation16 + $0x8] sm:$0xff]
    %v3038 = vld [vmem:[#allocation16 + $0x10] sm:$0xff]
    %v3039 = vld [vmem:[#allocation16 + $0x18] sm:$0xff]
    %v3040 = vld [vmem:[#allocation16 + $0x20] sm:$0xff]
    %v3041 = vld [vmem:[#allocation16 + $0x28] sm:$0xff]
    %v3042 = vld [vmem:[#allocation16 + $0x30] sm:$0xff]
    %v3043 = vld [vmem:[#allocation16 + $0x38] sm:$0xff]
    %v3044 = vld [vmem:[#allocation16 + $0x40] sm:$0xff]
    %v3045 = vld [vmem:[#allocation16 + $0x48] sm:$0xff]
    %v3046 = vld [vmem:[#allocation16 + $0x50] sm:$0xff]
    %v3047 = vld [vmem:[#allocation16 + $0x58] sm:$0xff]
    %v3048 = vld [vmem:[#allocation16 + $0x60] sm:$0xff]
    %v3049 = vld [vmem:[#allocation16 + $0x68] sm:$0xff]
    %v3050 = vld [vmem:[#allocation16 + $0x70] sm:$0xff]
    %v3051 = vld [vmem:[#allocation16 + $0x78] sm:$0xff]
    %v3052 = vld [vmem:[#allocation16 + $0x80] sm:$0xff]
    %v3053 = vld [vmem:[#allocation16 + $0x88] sm:$0xff]
    %v3054 = vld [vmem:[#allocation16 + $0x90] sm:$0xff]
    %v3055 = vld [vmem:[#allocation16 + $0x98] sm:$0xff]
    %v3056 = vld [vmem:[#allocation16 + $0xa0] sm:$0xff]
    %v3057 = vld [vmem:[#allocation16 + $0xa8] sm:$0xff]
    %v3058 = vld [vmem:[#allocation16 + $0xb0] sm:$0xff]
    %v3059 = vld [vmem:[#allocation16 + $0xb8] sm:$0xff]
    %v3060 = vld [vmem:[#allocation16 + $0xc0] sm:$0xff]
    %v3061 = vld [vmem:[#allocation16 + $0xc8] sm:$0xff]
    %v3062 = vld [vmem:[#allocation16 + $0xd0] sm:$0xff]
    %v3063 = vld [vmem:[#allocation16 + $0xd8] sm:$0xff]
    %v3064 = vld [vmem:[#allocation16 + $0xe0] sm:$0xff]
    %v3065 = vld [vmem:[#allocation16 + $0xe8] sm:$0xff]
    %v3066 = vld [vmem:[#allocation16 + $0xf0] sm:$0xff]
    %v3067 = vld [vmem:[#allocation16 + $0xf8] sm:$0xff]
    %v3068 = vld [vmem:[#allocation16 + $0x100] sm:$0xff]
    %v3069 = vld [vmem:[#allocation16 + $0x108] sm:$0xff]
    %v3070 = vld [vmem:[#allocation16 + $0x110] sm:$0xff]
    %v3071 = vld [vmem:[#allocation16 + $0x118] sm:$0xff]
    %v3072 = vld [vmem:[#allocation16 + $0x120] sm:$0xff]
    %v3073 = vld [vmem:[#allocation16 + $0x128] sm:$0xff]
    %v3074 = vld [vmem:[#allocation16 + $0x130] sm:$0xff]
    %v3075 = vld [vmem:[#allocation16 + $0x138] sm:$0xff]
    %v3076 = vld [vmem:[#allocation16 + $0x140] sm:$0xff]
    %v3077 = vld [vmem:[#allocation16 + $0x148] sm:$0xff]
    %v3078 = vld [vmem:[#allocation16 + $0x150] sm:$0xff]
    %v3079 = vld [vmem:[#allocation16 + $0x158] sm:$0xff]
    %v3080 = vld [vmem:[#allocation16 + $0x160] sm:$0xff]
    %v3081 = vld [vmem:[#allocation16 + $0x168] sm:$0xff]
    %v3082 = vld [vmem:[#allocation16 + $0x170] sm:$0xff]
    %v3083 = vld [vmem:[#allocation16 + $0x178] sm:$0xff]
    %v3084 = vld [vmem:[#allocation16 + $0x180] sm:$0xff]
    %v3085 = vld [vmem:[#allocation16 + $0x188] sm:$0xff]
    %v3086 = vld [vmem:[#allocation16 + $0x190] sm:$0xff]
    %v3087 = vld [vmem:[#allocation16 + $0x198] sm:$0xff]
    %v3088 = vld [vmem:[#allocation16 + $0x1a0] sm:$0xff]
    %v3089 = vld [vmem:[#allocation16 + $0x1a8] sm:$0xff]
    %v3090 = vld [vmem:[#allocation16 + $0x1b0] sm:$0xff]
    %v3091 = vld [vmem:[#allocation16 + $0x1b8] sm:$0xff]
    %v3092 = vld [vmem:[#allocation16 + $0x1c0] sm:$0xff]
    %v3093 = vld [vmem:[#allocation16 + $0x1c8] sm:$0xff]
    %v3094 = vld [vmem:[#allocation16 + $0x1d0] sm:$0xff]
    %v3095 = vld [vmem:[#allocation16 + $0x1d8] sm:$0xff]
    %v3096 = vld [vmem:[#allocation16 + $0x1e0] sm:$0xff]
    %v3097 = vld [vmem:[#allocation16 + $0x1e8] sm:$0xff]
    %v3098 = vld [vmem:[#allocation16 + $0x1f0] sm:$0xff]
    %v3099 = vld [vmem:[#allocation16 + $0x1f8] sm:$0xff]
    %v3100 = vld [vmem:[#allocation16 + $0x200] sm:$0xff]
    %v3101 = vld [vmem:[#allocation16 + $0x208] sm:$0xff]
    %v3102 = vld [vmem:[#allocation16 + $0x210] sm:$0xff]
    %v3103 = vld [vmem:[#allocation16 + $0x218] sm:$0xff]
    %v3104 = vld [vmem:[#allocation16 + $0x220] sm:$0xff]
    %v3105 = vld [vmem:[#allocation16 + $0x228] sm:$0xff]
    %v3106 = vld [vmem:[#allocation16 + $0x230] sm:$0xff]
    %v3107 = vld [vmem:[#allocation16 + $0x238] sm:$0xff]
    %v3108 = vld [vmem:[#allocation16 + $0x240] sm:$0xff]
    %v3109 = vld [vmem:[#allocation16 + $0x248] sm:$0xff]
    %v3110 = vld [vmem:[#allocation16 + $0x250] sm:$0xff]
    %v3111 = vld [vmem:[#allocation16 + $0x258] sm:$0xff]
    %v3112 = vld [vmem:[#allocation16 + $0x260] sm:$0xff]
    %v3113 = vld [vmem:[#allocation16 + $0x268] sm:$0xff]
    %v3114 = vld [vmem:[#allocation16 + $0x270] sm:$0xff]
    %v3115 = vld [vmem:[#allocation16 + $0x278] sm:$0xff]
    %v3116 = vld [vmem:[#allocation16 + $0x280] sm:$0xff]
    %v3117 = vld [vmem:[#allocation16 + $0x288] sm:$0xff]
    %v3118 = vld [vmem:[#allocation16 + $0x290] sm:$0xff]
    %v3119 = vld [vmem:[#allocation16 + $0x298] sm:$0xff]
    %v3120 = vld [vmem:[#allocation16 + $0x2a0] sm:$0xff]
    %v3121 = vld [vmem:[#allocation16 + $0x2a8] sm:$0xff]
    %v3122 = vld [vmem:[#allocation16 + $0x2b0] sm:$0xff]
    %v3123 = vld [vmem:[#allocation16 + $0x2b8] sm:$0xff]
    %v3124 = vld [vmem:[#allocation16 + $0x2c0] sm:$0xff]
    %v3125 = vld [vmem:[#allocation16 + $0x2c8] sm:$0xff]
    %v3126 = vld [vmem:[#allocation16 + $0x2d0] sm:$0xff]
    %v3127 = vld [vmem:[#allocation16 + $0x2d8] sm:$0xff]
    %v3128 = vld [vmem:[#allocation16 + $0x2e0] sm:$0xff]
    %v3129 = vld [vmem:[#allocation16 + $0x2e8] sm:$0xff]
    %v3130 = vld [vmem:[#allocation16 + $0x2f0] sm:$0xff]
    %v3131 = vld [vmem:[#allocation16 + $0x2f8] sm:$0xff]
    %v3132 = vld [vmem:[#allocation16 + $0x300] sm:$0xff]
    %v3133 = vld [vmem:[#allocation16 + $0x308] sm:$0xff]
    %v3134 = vld [vmem:[#allocation16 + $0x310] sm:$0xff]
    %v3135 = vld [vmem:[#allocation16 + $0x318] sm:$0xff]
    %v3136 = vld [vmem:[#allocation16 + $0x320] sm:$0xff]
    %v3137 = vld [vmem:[#allocation16 + $0x328] sm:$0xff]
    %v3138 = vld [vmem:[#allocation16 + $0x330] sm:$0xff]
    %v3139 = vld [vmem:[#allocation16 + $0x338] sm:$0xff]
    %v3140 = vld [vmem:[#allocation16 + $0x340] sm:$0xff]
    %v3141 = vld [vmem:[#allocation16 + $0x348] sm:$0xff]
    %v3142 = vld [vmem:[#allocation16 + $0x350] sm:$0xff]
    %v3143 = vld [vmem:[#allocation16 + $0x358] sm:$0xff]
    %v3144 = vld [vmem:[#allocation16 + $0x360] sm:$0xff]
    %v3145 = vld [vmem:[#allocation16 + $0x368] sm:$0xff]
    %v3146 = vld [vmem:[#allocation16 + $0x370] sm:$0xff]
    %v3147 = vld [vmem:[#allocation16 + $0x378] sm:$0xff]
    %v3148 = vld [vmem:[#allocation16 + $0x380] sm:$0xff]
    %v3149 = vld [vmem:[#allocation16 + $0x388] sm:$0xff]
    %v3150 = vld [vmem:[#allocation16 + $0x390] sm:$0xff]
    %v3151 = vld [vmem:[#allocation16 + $0x398] sm:$0xff]
    %v3152 = vld [vmem:[#allocation16 + $0x3a0] sm:$0xff]
    %v3153 = vld [vmem:[#allocation16 + $0x3a8] sm:$0xff]
    %v3154 = vld [vmem:[#allocation16 + $0x3b0] sm:$0xff]
    %v3155 = vld [vmem:[#allocation16 + $0x3b8] sm:$0xff]
    %v3156 = vld [vmem:[#allocation16 + $0x3c0] sm:$0xff]
    %v3157 = vld [vmem:[#allocation16 + $0x3c8] sm:$0xff]
    %v3158 = vld [vmem:[#allocation16 + $0x3d0] sm:$0xff]
    %v3159 = vld [vmem:[#allocation16 + $0x3d8] sm:$0xff]
    %v3160 = vld [vmem:[#allocation16 + $0x3e0] sm:$0xff]
    %v3161 = vld [vmem:[#allocation16 + $0x3e8] sm:$0xff]
    %v3162 = vld [vmem:[#allocation16 + $0x3f0] sm:$0xff]
    %v3163 = vld [vmem:[#allocation16 + $0x3f8] sm:$0xff]
    %v3164 = vld [vmem:[#allocation16 + $0x400] sm:$0xff]
    %v3165 = vld [vmem:[#allocation16 + $0x408] sm:$0xff]
    %v3166 = vld [vmem:[#allocation16 + $0x410] sm:$0xff]
    %v3167 = vld [vmem:[#allocation16 + $0x418] sm:$0xff]
    %v3168 = vld [vmem:[#allocation16 + $0x420] sm:$0xff]
    %v3169 = vld [vmem:[#allocation16 + $0x428] sm:$0xff]
    %v3170 = vld [vmem:[#allocation16 + $0x430] sm:$0xff]
    %v3171 = vld [vmem:[#allocation16 + $0x438] sm:$0xff]
    %v3172 = vld [vmem:[#allocation16 + $0x440] sm:$0xff]
    %v3173 = vld [vmem:[#allocation16 + $0x448] sm:$0xff]
    %v3174 = vld [vmem:[#allocation16 + $0x450] sm:$0xff]
    %v3175 = vld [vmem:[#allocation16 + $0x458] sm:$0xff]
    %v3176 = vld [vmem:[#allocation16 + $0x460] sm:$0xff]
    %v3177 = vld [vmem:[#allocation16 + $0x468] sm:$0xff]
    %v3178 = vld [vmem:[#allocation16 + $0x470] sm:$0xff]
    %v3179 = vld [vmem:[#allocation16 + $0x478] sm:$0xff]
    %v3180 = vld [vmem:[#allocation16 + $0x480] sm:$0xff]
    %v3181 = vld [vmem:[#allocation16 + $0x488] sm:$0xff]
    %v3182 = vld [vmem:[#allocation16 + $0x490] sm:$0xff]
    %v3183 = vld [vmem:[#allocation16 + $0x498] sm:$0xff]
    %v3184 = vld [vmem:[#allocation16 + $0x4a0] sm:$0xff]
    %v3185 = vld [vmem:[#allocation16 + $0x4a8] sm:$0xff]
    %v3186 = vld [vmem:[#allocation16 + $0x4b0] sm:$0xff]
    %v3187 = vld [vmem:[#allocation16 + $0x4b8] sm:$0xff]
    %v3188 = vld [vmem:[#allocation16 + $0x4c0] sm:$0xff]
    %v3189 = vld [vmem:[#allocation16 + $0x4c8] sm:$0xff]
    %v3190 = vld [vmem:[#allocation16 + $0x4d0] sm:$0xff]
    %v3191 = vld [vmem:[#allocation16 + $0x4d8] sm:$0xff]
    %v3192 = vld [vmem:[#allocation16 + $0x4e0] sm:$0xff]
    %v3193 = vld [vmem:[#allocation16 + $0x4e8] sm:$0xff]
    %v3194 = vld [vmem:[#allocation16 + $0x4f0] sm:$0xff]
    %v3195 = vld [vmem:[#allocation16 + $0x4f8] sm:$0xff]
    %v3196 = vld [vmem:[#allocation16 + $0x500] sm:$0xff]
    %v3197 = vld [vmem:[#allocation16 + $0x508] sm:$0xff]
    %v3198 = vld [vmem:[#allocation16 + $0x510] sm:$0xff]
    %v3199 = vld [vmem:[#allocation16 + $0x518] sm:$0xff]
    %v3200 = vld [vmem:[#allocation16 + $0x520] sm:$0xff]
    %v3201 = vld [vmem:[#allocation16 + $0x528] sm:$0xff]
    %v3202 = vld [vmem:[#allocation16 + $0x530] sm:$0xff]
    %v3203 = vld [vmem:[#allocation16 + $0x538] sm:$0xff]
    %v3204 = vld [vmem:[#allocation16 + $0x540] sm:$0xff]
    %v3205 = vld [vmem:[#allocation16 + $0x548] sm:$0xff]
    %v3206 = vld [vmem:[#allocation16 + $0x550] sm:$0xff]
    %v3207 = vld [vmem:[#allocation16 + $0x558] sm:$0xff]
    %v3208 = vld [vmem:[#allocation16 + $0x560] sm:$0xff]
    %v3209 = vld [vmem:[#allocation16 + $0x568] sm:$0xff]
    %v3210 = vld [vmem:[#allocation16 + $0x570] sm:$0xff]
    %v3211 = vld [vmem:[#allocation16 + $0x578] sm:$0xff]
    %v3212 = vld [vmem:[#allocation16 + $0x580] sm:$0xff]
    %v3213 = vld [vmem:[#allocation16 + $0x588] sm:$0xff]
    %v3214 = vld [vmem:[#allocation16 + $0x590] sm:$0xff]
    %v3215 = vld [vmem:[#allocation16 + $0x598] sm:$0xff]
    %v3216 = vld [vmem:[#allocation16 + $0x5a0] sm:$0xff]
    %v3217 = vld [vmem:[#allocation16 + $0x5a8] sm:$0xff]
    %v3218 = vld [vmem:[#allocation16 + $0x5b0] sm:$0xff]
    %v3219 = vld [vmem:[#allocation16 + $0x5b8] sm:$0xff]
    %v3220 = vld [vmem:[#allocation16 + $0x5c0] sm:$0xff]
    %v3221 = vld [vmem:[#allocation16 + $0x5c8] sm:$0xff]
    %v3222 = vld [vmem:[#allocation16 + $0x5d0] sm:$0xff]
    %v3223 = vld [vmem:[#allocation16 + $0x5d8] sm:$0xff]
    %v3224 = vld [vmem:[#allocation16 + $0x5e0] sm:$0xff]
    %v3225 = vld [vmem:[#allocation16 + $0x5e8] sm:$0xff]
    %v3226 = vld [vmem:[#allocation16 + $0x5f0] sm:$0xff]
    %v3227 = vld [vmem:[#allocation16 + $0x5f8] sm:$0xff]
    %v3228 = vld [vmem:[#allocation16 + $0x600] sm:$0xff]
    %v3229 = vld [vmem:[#allocation16 + $0x608] sm:$0xff]
    %v3230 = vld [vmem:[#allocation16 + $0x610] sm:$0xff]
    %v3231 = vld [vmem:[#allocation16 + $0x618] sm:$0xff]
    %v3232 = vld [vmem:[#allocation16 + $0x620] sm:$0xff]
    %v3233 = vld [vmem:[#allocation16 + $0x628] sm:$0xff]
    %v3234 = vld [vmem:[#allocation16 + $0x630] sm:$0xff]
    %v3235 = vld [vmem:[#allocation16 + $0x638] sm:$0xff]
    %v3236 = vld [vmem:[#allocation16 + $0x640] sm:$0xff]
    %v3237 = vld [vmem:[#allocation16 + $0x648] sm:$0xff]
    %v3238 = vld [vmem:[#allocation16 + $0x650] sm:$0xff]
    %v3239 = vld [vmem:[#allocation16 + $0x658] sm:$0xff]
    %v3240 = vld [vmem:[#allocation16 + $0x660] sm:$0xff]
    %v3241 = vld [vmem:[#allocation16 + $0x668] sm:$0xff]
    %v3242 = vld [vmem:[#allocation16 + $0x670] sm:$0xff]
    %v3243 = vld [vmem:[#allocation16 + $0x678] sm:$0xff]
    %v3244 = vld [vmem:[#allocation16 + $0x680] sm:$0xff]
    %v3245 = vld [vmem:[#allocation16 + $0x688] sm:$0xff]
    %v3246 = vld [vmem:[#allocation16 + $0x690] sm:$0xff]
    %v3247 = vld [vmem:[#allocation16 + $0x698] sm:$0xff]
    %v3248 = vld [vmem:[#allocation16 + $0x6a0] sm:$0xff]
    %v3249 = vld [vmem:[#allocation16 + $0x6a8] sm:$0xff]
    %v3250 = vld [vmem:[#allocation16 + $0x6b0] sm:$0xff]
    %v3251 = vld [vmem:[#allocation16 + $0x6b8] sm:$0xff]
    %v3252 = vld [vmem:[#allocation16 + $0x6c0] sm:$0xff]
    %v3253 = vld [vmem:[#allocation16 + $0x6c8] sm:$0xff]
    %v3254 = vld [vmem:[#allocation16 + $0x6d0] sm:$0xff]
    %v3255 = vld [vmem:[#allocation16 + $0x6d8] sm:$0xff]
    %v3256 = vld [vmem:[#allocation16 + $0x6e0] sm:$0xff]
    %v3257 = vld [vmem:[#allocation16 + $0x6e8] sm:$0xff]
    %v3258 = vld [vmem:[#allocation16 + $0x6f0] sm:$0xff]
    %v3259 = vld [vmem:[#allocation16 + $0x6f8] sm:$0xff]
    %v3260 = vld [vmem:[#allocation16 + $0x700] sm:$0xff]
    %v3261 = vld [vmem:[#allocation16 + $0x708] sm:$0xff]
    %v3262 = vld [vmem:[#allocation16 + $0x710] sm:$0xff]
    %v3263 = vld [vmem:[#allocation16 + $0x718] sm:$0xff]
    %v3264 = vld [vmem:[#allocation16 + $0x720] sm:$0xff]
    %v3265 = vld [vmem:[#allocation16 + $0x728] sm:$0xff]
    %v3266 = vld [vmem:[#allocation16 + $0x730] sm:$0xff]
    %v3267 = vld [vmem:[#allocation16 + $0x738] sm:$0xff]
    %v3268 = vld [vmem:[#allocation16 + $0x740] sm:$0xff]
    %v3269 = vld [vmem:[#allocation16 + $0x748] sm:$0xff]
    %v3270 = vld [vmem:[#allocation16 + $0x750] sm:$0xff]
    %v3271 = vld [vmem:[#allocation16 + $0x758] sm:$0xff]
    %v3272 = vld [vmem:[#allocation16 + $0x760] sm:$0xff]
    %v3273 = vld [vmem:[#allocation16 + $0x768] sm:$0xff]
    %v3274 = vld [vmem:[#allocation16 + $0x770] sm:$0xff]
    %v3275 = vld [vmem:[#allocation16 + $0x778] sm:$0xff]
    %v3276 = vld [vmem:[#allocation16 + $0x780] sm:$0xff]
    %v3277 = vld [vmem:[#allocation16 + $0x788] sm:$0xff]
    %v3278 = vld [vmem:[#allocation16 + $0x790] sm:$0xff]
    %v3279 = vld [vmem:[#allocation16 + $0x798] sm:$0xff]
    %v3280 = vld [vmem:[#allocation16 + $0x7a0] sm:$0xff]
    %v3281 = vld [vmem:[#allocation16 + $0x7a8] sm:$0xff]
    %v3282 = vld [vmem:[#allocation16 + $0x7b0] sm:$0xff]
    %v3283 = vld [vmem:[#allocation16 + $0x7b8] sm:$0xff]
    %v3284 = vld [vmem:[#allocation16 + $0x7c0] sm:$0xff]
    %v3285 = vld [vmem:[#allocation16 + $0x7c8] sm:$0xff]
    %v3286 = vld [vmem:[#allocation16 + $0x7d0] sm:$0xff]
    %v3287 = vld [vmem:[#allocation16 + $0x7d8] sm:$0xff]
    %v3288 = vld [vmem:[#allocation16 + $0x7e0] sm:$0xff]
    %v3289 = vld [vmem:[#allocation16 + $0x7e8] sm:$0xff]
    %v3290 = vld [vmem:[#allocation16 + $0x7f0] sm:$0xff]
    %v3291 = vld [vmem:[#allocation16 + $0x7f8] sm:$0xff]
    %v3292 = vld [vmem:[#allocation16 + $0x800] sm:$0xff]
    %v3293 = vld [vmem:[#allocation16 + $0x808] sm:$0xff]
    %v3294 = vld [vmem:[#allocation16 + $0x810] sm:$0xff]
    %v3295 = vld [vmem:[#allocation16 + $0x818] sm:$0xff]
    %v3296 = vld [vmem:[#allocation16 + $0x820] sm:$0xff]
    %v3297 = vld [vmem:[#allocation16 + $0x828] sm:$0xff]
    %v3298 = vld [vmem:[#allocation16 + $0x830] sm:$0xff]
    %v3299 = vld [vmem:[#allocation16 + $0x838] sm:$0xff]
    %v3300 = vld [vmem:[#allocation16 + $0x840] sm:$0xff]
    %v3301 = vld [vmem:[#allocation16 + $0x848] sm:$0xff]
    %v3302 = vld [vmem:[#allocation16 + $0x850] sm:$0xff]
    %v3303 = vld [vmem:[#allocation16 + $0x858] sm:$0xff]
    %v3304 = vld [vmem:[#allocation16 + $0x860] sm:$0xff]
    %v3305 = vld [vmem:[#allocation16 + $0x868] sm:$0xff]
    %v3306 = vld [vmem:[#allocation16 + $0x870] sm:$0xff]
    %v3307 = vld [vmem:[#allocation16 + $0x878] sm:$0xff]
    %v3308 = vld [vmem:[#allocation16 + $0x880] sm:$0xff]
    %v3309 = vld [vmem:[#allocation16 + $0x888] sm:$0xff]
    %v3310 = vld [vmem:[#allocation16 + $0x890] sm:$0xff]
    %v3311 = vld [vmem:[#allocation16 + $0x898] sm:$0xff]
    %v3312 = vld [vmem:[#allocation16 + $0x8a0] sm:$0xff]
    %v3313 = vld [vmem:[#allocation16 + $0x8a8] sm:$0xff]
    %v3314 = vld [vmem:[#allocation16 + $0x8b0] sm:$0xff]
    %v3315 = vld [vmem:[#allocation16 + $0x8b8] sm:$0xff]
    %v3316 = vld [vmem:[#allocation16 + $0x8c0] sm:$0xff]
    %v3317 = vld [vmem:[#allocation16 + $0x8c8] sm:$0xff]
    %v3318 = vld [vmem:[#allocation16 + $0x8d0] sm:$0xff]
    %v3319 = vld [vmem:[#allocation16 + $0x8d8] sm:$0xff]
    %v3320 = vld [vmem:[#allocation16 + $0x8e0] sm:$0xff]
    %v3321 = vld [vmem:[#allocation16 + $0x8e8] sm:$0xff]
    %v3322 = vld [vmem:[#allocation16 + $0x8f0] sm:$0xff]
    %v3323 = vld [vmem:[#allocation16 + $0x8f8] sm:$0xff]
    %v3324 = vld [vmem:[#allocation16 + $0x900] sm:$0xff]
    %v3325 = vld [vmem:[#allocation16 + $0x908] sm:$0xff]
    %v3326 = vld [vmem:[#allocation16 + $0x910] sm:$0xff]
    %v3327 = vld [vmem:[#allocation16 + $0x918] sm:$0xff]
    %v3328 = vld [vmem:[#allocation16 + $0x920] sm:$0xff]
    %v3329 = vld [vmem:[#allocation16 + $0x928] sm:$0xff]
    %v3330 = vld [vmem:[#allocation16 + $0x930] sm:$0xff]
    %v3331 = vld [vmem:[#allocation16 + $0x938] sm:$0xff]
    %v3332 = vld [vmem:[#allocation16 + $0x940] sm:$0xff]
    %v3333 = vld [vmem:[#allocation16 + $0x948] sm:$0xff]
    %v3334 = vld [vmem:[#allocation16 + $0x950] sm:$0xff]
    %v3335 = vld [vmem:[#allocation16 + $0x958] sm:$0xff]
    %v3336 = vld [vmem:[#allocation16 + $0x960] sm:$0xff]
    %v3337 = vld [vmem:[#allocation16 + $0x968] sm:$0xff]
    %v3338 = vld [vmem:[#allocation16 + $0x970] sm:$0xff]
    %v3339 = vld [vmem:[#allocation16 + $0x978] sm:$0xff]
    %v3340 = vld [vmem:[#allocation16 + $0x980] sm:$0xff]
    %v3341 = vld [vmem:[#allocation16 + $0x988] sm:$0xff]
    %v3342 = vld [vmem:[#allocation16 + $0x990] sm:$0xff]
    %v3343 = vld [vmem:[#allocation16 + $0x998] sm:$0xff]
    %v3344 = vld [vmem:[#allocation16 + $0x9a0] sm:$0xff]
    %v3345 = vld [vmem:[#allocation16 + $0x9a8] sm:$0xff]
    %v3346 = vld [vmem:[#allocation16 + $0x9b0] sm:$0xff]
    %v3347 = vld [vmem:[#allocation16 + $0x9b8] sm:$0xff]
    %v3348 = vld [vmem:[#allocation16 + $0x9c0] sm:$0xff]
    %v3349 = vld [vmem:[#allocation16 + $0x9c8] sm:$0xff]
    %v3350 = vld [vmem:[#allocation16 + $0x9d0] sm:$0xff]
    %v3351 = vld [vmem:[#allocation16 + $0x9d8] sm:$0xff]
    %v3352 = vld [vmem:[#allocation16 + $0x9e0] sm:$0xff]
    %v3353 = vld [vmem:[#allocation16 + $0x9e8] sm:$0xff]
    %v3354 = vld [vmem:[#allocation16 + $0x9f0] sm:$0xff]
    %v3355 = vld [vmem:[#allocation16 + $0x9f8] sm:$0xff]
    %v3356 = vld [vmem:[#allocation16 + $0xa00] sm:$0xff]
    %v3357 = vld [vmem:[#allocation16 + $0xa08] sm:$0xff]
    %v3358 = vld [vmem:[#allocation16 + $0xa10] sm:$0xff]
    %v3359 = vld [vmem:[#allocation16 + $0xa18] sm:$0xff]
    %v3360 = vld [vmem:[#allocation16 + $0xa20] sm:$0xff]
    %v3361 = vld [vmem:[#allocation16 + $0xa28] sm:$0xff]
    %v3362 = vld [vmem:[#allocation16 + $0xa30] sm:$0xff]
    %v3363 = vld [vmem:[#allocation16 + $0xa38] sm:$0xff]
    %v3364 = vld [vmem:[#allocation16 + $0xa40] sm:$0xff]
    %v3365 = vld [vmem:[#allocation16 + $0xa48] sm:$0xff]
    %v3366 = vld [vmem:[#allocation16 + $0xa50] sm:$0xff]
    %v3367 = vld [vmem:[#allocation16 + $0xa58] sm:$0xff]
    %v3368 = vld [vmem:[#allocation16 + $0xa60] sm:$0xff]
    %v3369 = vld [vmem:[#allocation16 + $0xa68] sm:$0xff]
    %v3370 = vld [vmem:[#allocation16 + $0xa70] sm:$0xff]
    %v3371 = vld [vmem:[#allocation16 + $0xa78] sm:$0xff]
    %v3372 = vld [vmem:[#allocation16 + $0xa80] sm:$0xff]
    %v3373 = vld [vmem:[#allocation16 + $0xa88] sm:$0xff]
    %v3374 = vld [vmem:[#allocation16 + $0xa90] sm:$0xff]
    %v3375 = vld [vmem:[#allocation16 + $0xa98] sm:$0xff]
    %v3376 = vld [vmem:[#allocation16 + $0xaa0] sm:$0xff]
    %v3377 = vld [vmem:[#allocation16 + $0xaa8] sm:$0xff]
    %v3378 = vld [vmem:[#allocation16 + $0xab0] sm:$0xff]
    %v3379 = vld [vmem:[#allocation16 + $0xab8] sm:$0xff]
    %v3380 = vld [vmem:[#allocation16 + $0xac0] sm:$0xff]
    %v3381 = vld [vmem:[#allocation16 + $0xac8] sm:$0xff]
    %v3382 = vld [vmem:[#allocation16 + $0xad0] sm:$0xff]
    %v3383 = vld [vmem:[#allocation16 + $0xad8] sm:$0xff]
    %v3384 = vld [vmem:[#allocation16 + $0xae0] sm:$0xff]
    %v3385 = vld [vmem:[#allocation16 + $0xae8] sm:$0xff]
    %v3386 = vld [vmem:[#allocation16 + $0xaf0] sm:$0xff]
    %v3387 = vld [vmem:[#allocation16 + $0xaf8] sm:$0xff]
    %v3388 = vld [vmem:[#allocation16 + $0xb00] sm:$0xff]
    %v3389 = vld [vmem:[#allocation16 + $0xb08] sm:$0xff]
    %v3390 = vld [vmem:[#allocation16 + $0xb10] sm:$0xff]
    %v3391 = vld [vmem:[#allocation16 + $0xb18] sm:$0xff]
    %v3392 = vld [vmem:[#allocation16 + $0xb20] sm:$0xff]
    %v3393 = vld [vmem:[#allocation16 + $0xb28] sm:$0xff]
    %v3394 = vld [vmem:[#allocation16 + $0xb30] sm:$0xff]
    %v3395 = vld [vmem:[#allocation16 + $0xb38] sm:$0xff]
    %v3396 = vld [vmem:[#allocation16 + $0xb40] sm:$0xff]
    %v3397 = vld [vmem:[#allocation16 + $0xb48] sm:$0xff]
    %v3398 = vld [vmem:[#allocation16 + $0xb50] sm:$0xff]
    %v3399 = vld [vmem:[#allocation16 + $0xb58] sm:$0xff]
    %v3400 = vld [vmem:[#allocation16 + $0xb60] sm:$0xff]
    %v3401 = vld [vmem:[#allocation16 + $0xb68] sm:$0xff]
    %v3402 = vld [vmem:[#allocation16 + $0xb70] sm:$0xff]
    %v3403 = vld [vmem:[#allocation16 + $0xb78] sm:$0xff]
    %v3404 = vld [vmem:[#allocation16 + $0xb80] sm:$0xff]
    %v3405 = vld [vmem:[#allocation16 + $0xb88] sm:$0xff]
    %v3406 = vld [vmem:[#allocation16 + $0xb90] sm:$0xff]
    %v3407 = vld [vmem:[#allocation16 + $0xb98] sm:$0xff]
    %v3408 = vld [vmem:[#allocation16 + $0xba0] sm:$0xff]
    %v3409 = vld [vmem:[#allocation16 + $0xba8] sm:$0xff]
    %v3410 = vld [vmem:[#allocation16 + $0xbb0] sm:$0xff]
    %v3411 = vld [vmem:[#allocation16 + $0xbb8] sm:$0xff]
    %v3412 = vld [vmem:[#allocation16 + $0xbc0] sm:$0xff]
    %v3413 = vld [vmem:[#allocation16 + $0xbc8] sm:$0xff]
    %v3414 = vld [vmem:[#allocation16 + $0xbd0] sm:$0xff]
    %v3415 = vld [vmem:[#allocation16 + $0xbd8] sm:$0xff]
    %v3416 = vld [vmem:[#allocation16 + $0xbe0] sm:$0xff]
    %v3417 = vld [vmem:[#allocation16 + $0xbe8] sm:$0xff]
    %v3418 = vld [vmem:[#allocation16 + $0xbf0] sm:$0xff]
    %v3419 = vld [vmem:[#allocation16 + $0xbf8] sm:$0xff]
    %v3420 = vld [vmem:[#allocation17] sm:$0xff]
    %v3422 = vperm.slane %v3420, 0
    %v3423 = vperm.slane %v3420, 1
    %v3424 = vperm.slane %v3420, 2
    %v3425 = vperm.slane %v3420, 3
    %v3426 = vperm.slane %v3420, 4
    %v3427 = vperm.slane %v3420, 5
    %v3428 = vperm.slane %v3420, 6
    %v3429 = vperm.slane %v3420, 7
    %v3822 = vunpack.c.l.b16 %v3036
    %v3823 = vunpack.c.h.b16 %v3036
    %v3824 = vunpack.c.l.b16 %v3037
    %v3825 = vunpack.c.h.b16 %v3037
    %v3826 = vunpack.c.l.b16 %v3038
    %v3827 = vunpack.c.h.b16 %v3038
    %v3828 = vunpack.c.l.b16 %v3039
    %v3829 = vunpack.c.h.b16 %v3039
    %v3830 = vunpack.c.l.b16 %v3040
    %v3831 = vunpack.c.h.b16 %v3040
    %v3832 = vunpack.c.l.b16 %v3041
    %v3833 = vunpack.c.h.b16 %v3041
    %v3834 = vunpack.c.l.b16 %v3042
    %v3835 = vunpack.c.h.b16 %v3042
    %v3836 = vunpack.c.l.b16 %v3043
    %v3837 = vunpack.c.h.b16 %v3043
    %v3838 = vunpack.c.l.b16 %v3044
    %v3839 = vunpack.c.h.b16 %v3044
    %v3840 = vunpack.c.l.b16 %v3045
    %v3841 = vunpack.c.h.b16 %v3045
    %v3842 = vunpack.c.l.b16 %v3046
    %v3843 = vunpack.c.h.b16 %v3046
    %v3844 = vunpack.c.l.b16 %v3047
    %v3845 = vunpack.c.h.b16 %v3047
    %v3846 = vunpack.c.l.b16 %v3048
    %v3847 = vunpack.c.h.b16 %v3048
    %v3848 = vunpack.c.l.b16 %v3049
    %v3849 = vunpack.c.h.b16 %v3049
    %v3850 = vunpack.c.l.b16 %v3050
    %v3851 = vunpack.c.h.b16 %v3050
    %v3852 = vunpack.c.l.b16 %v3051
    %v3853 = vunpack.c.h.b16 %v3051
    %v3854 = vunpack.c.l.b16 %v3052
    %v3855 = vunpack.c.h.b16 %v3052
    %v3856 = vunpack.c.l.b16 %v3053
    %v3857 = vunpack.c.h.b16 %v3053
    %v3858 = vunpack.c.l.b16 %v3054
    %v3859 = vunpack.c.h.b16 %v3054
    %v3860 = vunpack.c.l.b16 %v3055
    %v3861 = vunpack.c.h.b16 %v3055
    %v3862 = vunpack.c.l.b16 %v3056
    %v3863 = vunpack.c.h.b16 %v3056
    %v3864 = vunpack.c.l.b16 %v3057
    %v3865 = vunpack.c.h.b16 %v3057
    %v3866 = vunpack.c.l.b16 %v3058
    %v3867 = vunpack.c.h.b16 %v3058
    %v3868 = vunpack.c.l.b16 %v3059
    %v3869 = vunpack.c.h.b16 %v3059
    %v3870 = vunpack.c.l.b16 %v3060
    %v3871 = vunpack.c.h.b16 %v3060
    %v3872 = vunpack.c.l.b16 %v3061
    %v3873 = vunpack.c.h.b16 %v3061
    %v3874 = vunpack.c.l.b16 %v3062
    %v3875 = vunpack.c.h.b16 %v3062
    %v3876 = vunpack.c.l.b16 %v3063
    %v3877 = vunpack.c.h.b16 %v3063
    %v3878 = vunpack.c.l.b16 %v3064
    %v3879 = vunpack.c.h.b16 %v3064
    %v3880 = vunpack.c.l.b16 %v3065
    %v3881 = vunpack.c.h.b16 %v3065
    %v3882 = vunpack.c.l.b16 %v3066
    %v3883 = vunpack.c.h.b16 %v3066
    %v3884 = vunpack.c.l.b16 %v3067
    %v3885 = vunpack.c.h.b16 %v3067
    %v3886 = vunpack.c.l.b16 %v3068
    %v3887 = vunpack.c.h.b16 %v3068
    %v3888 = vunpack.c.l.b16 %v3069
    %v3889 = vunpack.c.h.b16 %v3069
    %v3890 = vunpack.c.l.b16 %v3070
    %v3891 = vunpack.c.h.b16 %v3070
    %v3892 = vunpack.c.l.b16 %v3071
    %v3893 = vunpack.c.h.b16 %v3071
    %v3894 = vunpack.c.l.b16 %v3072
    %v3895 = vunpack.c.h.b16 %v3072
    %v3896 = vunpack.c.l.b16 %v3073
    %v3897 = vunpack.c.h.b16 %v3073
    %v3898 = vunpack.c.l.b16 %v3074
    %v3899 = vunpack.c.h.b16 %v3074
    %v3900 = vunpack.c.l.b16 %v3075
    %v3901 = vunpack.c.h.b16 %v3075
    %v3902 = vunpack.c.l.b16 %v3076
    %v3903 = vunpack.c.h.b16 %v3076
    %v3904 = vunpack.c.l.b16 %v3077
    %v3905 = vunpack.c.h.b16 %v3077
    %v3906 = vunpack.c.l.b16 %v3078
    %v3907 = vunpack.c.h.b16 %v3078
    %v3908 = vunpack.c.l.b16 %v3079
    %v3909 = vunpack.c.h.b16 %v3079
    %v3910 = vunpack.c.l.b16 %v3080
    %v3911 = vunpack.c.h.b16 %v3080
    %v3912 = vunpack.c.l.b16 %v3081
    %v3913 = vunpack.c.h.b16 %v3081
    %v3914 = vunpack.c.l.b16 %v3082
    %v3915 = vunpack.c.h.b16 %v3082
    %v3916 = vunpack.c.l.b16 %v3083
    %v3917 = vunpack.c.h.b16 %v3083
    %v3918 = vunpack.c.l.b16 %v3084
    %v3919 = vunpack.c.h.b16 %v3084
    %v3920 = vunpack.c.l.b16 %v3085
    %v3921 = vunpack.c.h.b16 %v3085
    %v3922 = vunpack.c.l.b16 %v3086
    %v3923 = vunpack.c.h.b16 %v3086
    %v3924 = vunpack.c.l.b16 %v3087
    %v3925 = vunpack.c.h.b16 %v3087
    %v3926 = vunpack.c.l.b16 %v3088
    %v3927 = vunpack.c.h.b16 %v3088
    %v3928 = vunpack.c.l.b16 %v3089
    %v3929 = vunpack.c.h.b16 %v3089
    %v3930 = vunpack.c.l.b16 %v3090
    %v3931 = vunpack.c.h.b16 %v3090
    %v3932 = vunpack.c.l.b16 %v3091
    %v3933 = vunpack.c.h.b16 %v3091
    %v3934 = vunpack.c.l.b16 %v3092
    %v3935 = vunpack.c.h.b16 %v3092
    %v3936 = vunpack.c.l.b16 %v3093
    %v3937 = vunpack.c.h.b16 %v3093
    %v3938 = vunpack.c.l.b16 %v3094
    %v3939 = vunpack.c.h.b16 %v3094
    %v3940 = vunpack.c.l.b16 %v3095
    %v3941 = vunpack.c.h.b16 %v3095
    %v3942 = vunpack.c.l.b16 %v3096
    %v3943 = vunpack.c.h.b16 %v3096
    %v3944 = vunpack.c.l.b16 %v3097
    %v3945 = vunpack.c.h.b16 %v3097
    %v3946 = vunpack.c.l.b16 %v3098
    %v3947 = vunpack.c.h.b16 %v3098
    %v3948 = vunpack.c.l.b16 %v3099
    %v3949 = vunpack.c.h.b16 %v3099
    %v3950 = vunpack.c.l.b16 %v3100
    %v3951 = vunpack.c.h.b16 %v3100
    %v3952 = vunpack.c.l.b16 %v3101
    %v3953 = vunpack.c.h.b16 %v3101
    %v3954 = vunpack.c.l.b16 %v3102
    %v3955 = vunpack.c.h.b16 %v3102
    %v3956 = vunpack.c.l.b16 %v3103
    %v3957 = vunpack.c.h.b16 %v3103
    %v3958 = vunpack.c.l.b16 %v3104
    %v3959 = vunpack.c.h.b16 %v3104
    %v3960 = vunpack.c.l.b16 %v3105
    %v3961 = vunpack.c.h.b16 %v3105
    %v3962 = vunpack.c.l.b16 %v3106
    %v3963 = vunpack.c.h.b16 %v3106
    %v3964 = vunpack.c.l.b16 %v3107
    %v3965 = vunpack.c.h.b16 %v3107
    %v3966 = vunpack.c.l.b16 %v3108
    %v3967 = vunpack.c.h.b16 %v3108
    %v3968 = vunpack.c.l.b16 %v3109
    %v3969 = vunpack.c.h.b16 %v3109
    %v3970 = vunpack.c.l.b16 %v3110
    %v3971 = vunpack.c.h.b16 %v3110
    %v3972 = vunpack.c.l.b16 %v3111
    %v3973 = vunpack.c.h.b16 %v3111
    %v3974 = vunpack.c.l.b16 %v3112
    %v3975 = vunpack.c.h.b16 %v3112
    %v3976 = vunpack.c.l.b16 %v3113
    %v3977 = vunpack.c.h.b16 %v3113
    %v3978 = vunpack.c.l.b16 %v3114
    %v3979 = vunpack.c.h.b16 %v3114
    %v3980 = vunpack.c.l.b16 %v3115
    %v3981 = vunpack.c.h.b16 %v3115
    %v3982 = vunpack.c.l.b16 %v3116
    %v3983 = vunpack.c.h.b16 %v3116
    %v3984 = vunpack.c.l.b16 %v3117
    %v3985 = vunpack.c.h.b16 %v3117
    %v3986 = vunpack.c.l.b16 %v3118
    %v3987 = vunpack.c.h.b16 %v3118
    %v3988 = vunpack.c.l.b16 %v3119
    %v3989 = vunpack.c.h.b16 %v3119
    %v3990 = vunpack.c.l.b16 %v3120
    %v3991 = vunpack.c.h.b16 %v3120
    %v3992 = vunpack.c.l.b16 %v3121
    %v3993 = vunpack.c.h.b16 %v3121
    %v3994 = vunpack.c.l.b16 %v3122
    %v3995 = vunpack.c.h.b16 %v3122
    %v3996 = vunpack.c.l.b16 %v3123
    %v3997 = vunpack.c.h.b16 %v3123
    %v3998 = vunpack.c.l.b16 %v3124
    %v3999 = vunpack.c.h.b16 %v3124
    %v4000 = vunpack.c.l.b16 %v3125
    %v4001 = vunpack.c.h.b16 %v3125
    %v4002 = vunpack.c.l.b16 %v3126
    %v4003 = vunpack.c.h.b16 %v3126
    %v4004 = vunpack.c.l.b16 %v3127
    %v4005 = vunpack.c.h.b16 %v3127
    %v4006 = vunpack.c.l.b16 %v3128
    %v4007 = vunpack.c.h.b16 %v3128
    %v4008 = vunpack.c.l.b16 %v3129
    %v4009 = vunpack.c.h.b16 %v3129
    %v4010 = vunpack.c.l.b16 %v3130
    %v4011 = vunpack.c.h.b16 %v3130
    %v4012 = vunpack.c.l.b16 %v3131
    %v4013 = vunpack.c.h.b16 %v3131
    %v4014 = vunpack.c.l.b16 %v3132
    %v4015 = vunpack.c.h.b16 %v3132
    %v4016 = vunpack.c.l.b16 %v3133
    %v4017 = vunpack.c.h.b16 %v3133
    %v4018 = vunpack.c.l.b16 %v3134
    %v4019 = vunpack.c.h.b16 %v3134
    %v4020 = vunpack.c.l.b16 %v3135
    %v4021 = vunpack.c.h.b16 %v3135
    %v4022 = vunpack.c.l.b16 %v3136
    %v4023 = vunpack.c.h.b16 %v3136
    %v4024 = vunpack.c.l.b16 %v3137
    %v4025 = vunpack.c.h.b16 %v3137
    %v4026 = vunpack.c.l.b16 %v3138
    %v4027 = vunpack.c.h.b16 %v3138
    %v4028 = vunpack.c.l.b16 %v3139
    %v4029 = vunpack.c.h.b16 %v3139
    %v4030 = vunpack.c.l.b16 %v3140
    %v4031 = vunpack.c.h.b16 %v3140
    %v4032 = vunpack.c.l.b16 %v3141
    %v4033 = vunpack.c.h.b16 %v3141
    %v4034 = vunpack.c.l.b16 %v3142
    %v4035 = vunpack.c.h.b16 %v3142
    %v4036 = vunpack.c.l.b16 %v3143
    %v4037 = vunpack.c.h.b16 %v3143
    %v4038 = vunpack.c.l.b16 %v3144
    %v4039 = vunpack.c.h.b16 %v3144
    %v4040 = vunpack.c.l.b16 %v3145
    %v4041 = vunpack.c.h.b16 %v3145
    %v4042 = vunpack.c.l.b16 %v3146
    %v4043 = vunpack.c.h.b16 %v3146
    %v4044 = vunpack.c.l.b16 %v3147
    %v4045 = vunpack.c.h.b16 %v3147
    %v4046 = vunpack.c.l.b16 %v3148
    %v4047 = vunpack.c.h.b16 %v3148
    %v4048 = vunpack.c.l.b16 %v3149
    %v4049 = vunpack.c.h.b16 %v3149
    %v4050 = vunpack.c.l.b16 %v3150
    %v4051 = vunpack.c.h.b16 %v3150
    %v4052 = vunpack.c.l.b16 %v3151
    %v4053 = vunpack.c.h.b16 %v3151
    %v4054 = vunpack.c.l.b16 %v3152
    %v4055 = vunpack.c.h.b16 %v3152
    %v4056 = vunpack.c.l.b16 %v3153
    %v4057 = vunpack.c.h.b16 %v3153
    %v4058 = vunpack.c.l.b16 %v3154
    %v4059 = vunpack.c.h.b16 %v3154
    %v4060 = vunpack.c.l.b16 %v3155
    %v4061 = vunpack.c.h.b16 %v3155
    %v4062 = vunpack.c.l.b16 %v3156
    %v4063 = vunpack.c.h.b16 %v3156
    %v4064 = vunpack.c.l.b16 %v3157
    %v4065 = vunpack.c.h.b16 %v3157
    %v4066 = vunpack.c.l.b16 %v3158
    %v4067 = vunpack.c.h.b16 %v3158
    %v4068 = vunpack.c.l.b16 %v3159
    %v4069 = vunpack.c.h.b16 %v3159
    %v4070 = vunpack.c.l.b16 %v3160
    %v4071 = vunpack.c.h.b16 %v3160
    %v4072 = vunpack.c.l.b16 %v3161
    %v4073 = vunpack.c.h.b16 %v3161
    %v4074 = vunpack.c.l.b16 %v3162
    %v4075 = vunpack.c.h.b16 %v3162
    %v4076 = vunpack.c.l.b16 %v3163
    %v4077 = vunpack.c.h.b16 %v3163
    %v4078 = vunpack.c.l.b16 %v3164
    %v4079 = vunpack.c.h.b16 %v3164
    %v4080 = vunpack.c.l.b16 %v3165
    %v4081 = vunpack.c.h.b16 %v3165
    %v4082 = vunpack.c.l.b16 %v3166
    %v4083 = vunpack.c.h.b16 %v3166
    %v4084 = vunpack.c.l.b16 %v3167
    %v4085 = vunpack.c.h.b16 %v3167
    %v4086 = vunpack.c.l.b16 %v3168
    %v4087 = vunpack.c.h.b16 %v3168
    %v4088 = vunpack.c.l.b16 %v3169
    %v4089 = vunpack.c.h.b16 %v3169
    %v4090 = vunpack.c.l.b16 %v3170
    %v4091 = vunpack.c.h.b16 %v3170
    %v4092 = vunpack.c.l.b16 %v3171
    %v4093 = vunpack.c.h.b16 %v3171
    %v4094 = vunpack.c.l.b16 %v3172
    %v4095 = vunpack.c.h.b16 %v3172
    %v4096 = vunpack.c.l.b16 %v3173
    %v4097 = vunpack.c.h.b16 %v3173
    %v4098 = vunpack.c.l.b16 %v3174
    %v4099 = vunpack.c.h.b16 %v3174
    %v4100 = vunpack.c.l.b16 %v3175
    %v4101 = vunpack.c.h.b16 %v3175
    %v4102 = vunpack.c.l.b16 %v3176
    %v4103 = vunpack.c.h.b16 %v3176
    %v4104 = vunpack.c.l.b16 %v3177
    %v4105 = vunpack.c.h.b16 %v3177
    %v4106 = vunpack.c.l.b16 %v3178
    %v4107 = vunpack.c.h.b16 %v3178
    %v4108 = vunpack.c.l.b16 %v3179
    %v4109 = vunpack.c.h.b16 %v3179
    %v4110 = vunpack.c.l.b16 %v3180
    %v4111 = vunpack.c.h.b16 %v3180
    %v4112 = vunpack.c.l.b16 %v3181
    %v4113 = vunpack.c.h.b16 %v3181
    %v4114 = vunpack.c.l.b16 %v3182
    %v4115 = vunpack.c.h.b16 %v3182
    %v4116 = vunpack.c.l.b16 %v3183
    %v4117 = vunpack.c.h.b16 %v3183
    %v4118 = vunpack.c.l.b16 %v3184
    %v4119 = vunpack.c.h.b16 %v3184
    %v4120 = vunpack.c.l.b16 %v3185
    %v4121 = vunpack.c.h.b16 %v3185
    %v4122 = vunpack.c.l.b16 %v3186
    %v4123 = vunpack.c.h.b16 %v3186
    %v4124 = vunpack.c.l.b16 %v3187
    %v4125 = vunpack.c.h.b16 %v3187
    %v4126 = vunpack.c.l.b16 %v3188
    %v4127 = vunpack.c.h.b16 %v3188
    %v4128 = vunpack.c.l.b16 %v3189
    %v4129 = vunpack.c.h.b16 %v3189
    %v4130 = vunpack.c.l.b16 %v3190
    %v4131 = vunpack.c.h.b16 %v3190
    %v4132 = vunpack.c.l.b16 %v3191
    %v4133 = vunpack.c.h.b16 %v3191
    %v4134 = vunpack.c.l.b16 %v3192
    %v4135 = vunpack.c.h.b16 %v3192
    %v4136 = vunpack.c.l.b16 %v3193
    %v4137 = vunpack.c.h.b16 %v3193
    %v4138 = vunpack.c.l.b16 %v3194
    %v4139 = vunpack.c.h.b16 %v3194
    %v4140 = vunpack.c.l.b16 %v3195
    %v4141 = vunpack.c.h.b16 %v3195
    %v4142 = vunpack.c.l.b16 %v3196
    %v4143 = vunpack.c.h.b16 %v3196
    %v4144 = vunpack.c.l.b16 %v3197
    %v4145 = vunpack.c.h.b16 %v3197
    %v4146 = vunpack.c.l.b16 %v3198
    %v4147 = vunpack.c.h.b16 %v3198
    %v4148 = vunpack.c.l.b16 %v3199
    %v4149 = vunpack.c.h.b16 %v3199
    %v4150 = vunpack.c.l.b16 %v3200
    %v4151 = vunpack.c.h.b16 %v3200
    %v4152 = vunpack.c.l.b16 %v3201
    %v4153 = vunpack.c.h.b16 %v3201
    %v4154 = vunpack.c.l.b16 %v3202
    %v4155 = vunpack.c.h.b16 %v3202
    %v4156 = vunpack.c.l.b16 %v3203
    %v4157 = vunpack.c.h.b16 %v3203
    %v4158 = vunpack.c.l.b16 %v3204
    %v4159 = vunpack.c.h.b16 %v3204
    %v4160 = vunpack.c.l.b16 %v3205
    %v4161 = vunpack.c.h.b16 %v3205
    %v4162 = vunpack.c.l.b16 %v3206
    %v4163 = vunpack.c.h.b16 %v3206
    %v4164 = vunpack.c.l.b16 %v3207
    %v4165 = vunpack.c.h.b16 %v3207
    %v4166 = vunpack.c.l.b16 %v3208
    %v4167 = vunpack.c.h.b16 %v3208
    %v4168 = vunpack.c.l.b16 %v3209
    %v4169 = vunpack.c.h.b16 %v3209
    %v4170 = vunpack.c.l.b16 %v3210
    %v4171 = vunpack.c.h.b16 %v3210
    %v4172 = vunpack.c.l.b16 %v3211
    %v4173 = vunpack.c.h.b16 %v3211
    %v4174 = vunpack.c.l.b16 %v3212
    %v4175 = vunpack.c.h.b16 %v3212
    %v4176 = vunpack.c.l.b16 %v3213
    %v4177 = vunpack.c.h.b16 %v3213
    %v4178 = vunpack.c.l.b16 %v3214
    %v4179 = vunpack.c.h.b16 %v3214
    %v4180 = vunpack.c.l.b16 %v3215
    %v4181 = vunpack.c.h.b16 %v3215
    %v4182 = vunpack.c.l.b16 %v3216
    %v4183 = vunpack.c.h.b16 %v3216
    %v4184 = vunpack.c.l.b16 %v3217
    %v4185 = vunpack.c.h.b16 %v3217
    %v4186 = vunpack.c.l.b16 %v3218
    %v4187 = vunpack.c.h.b16 %v3218
    %v4188 = vunpack.c.l.b16 %v3219
    %v4189 = vunpack.c.h.b16 %v3219
    %v4190 = vunpack.c.l.b16 %v3220
    %v4191 = vunpack.c.h.b16 %v3220
    %v4192 = vunpack.c.l.b16 %v3221
    %v4193 = vunpack.c.h.b16 %v3221
    %v4194 = vunpack.c.l.b16 %v3222
    %v4195 = vunpack.c.h.b16 %v3222
    %v4196 = vunpack.c.l.b16 %v3223
    %v4197 = vunpack.c.h.b16 %v3223
    %v4198 = vunpack.c.l.b16 %v3224
    %v4199 = vunpack.c.h.b16 %v3224
    %v4200 = vunpack.c.l.b16 %v3225
    %v4201 = vunpack.c.h.b16 %v3225
    %v4202 = vunpack.c.l.b16 %v3226
    %v4203 = vunpack.c.h.b16 %v3226
    %v4204 = vunpack.c.l.b16 %v3227
    %v4205 = vunpack.c.h.b16 %v3227
    %v4206 = vunpack.c.l.b16 %v3228
    %v4207 = vunpack.c.h.b16 %v3228
    %v4208 = vunpack.c.l.b16 %v3229
    %v4209 = vunpack.c.h.b16 %v3229
    %v4210 = vunpack.c.l.b16 %v3230
    %v4211 = vunpack.c.h.b16 %v3230
    %v4212 = vunpack.c.l.b16 %v3231
    %v4213 = vunpack.c.h.b16 %v3231
    %v4214 = vunpack.c.l.b16 %v3232
    %v4215 = vunpack.c.h.b16 %v3232
    %v4216 = vunpack.c.l.b16 %v3233
    %v4217 = vunpack.c.h.b16 %v3233
    %v4218 = vunpack.c.l.b16 %v3234
    %v4219 = vunpack.c.h.b16 %v3234
    %v4220 = vunpack.c.l.b16 %v3235
    %v4221 = vunpack.c.h.b16 %v3235
    %v4222 = vunpack.c.l.b16 %v3236
    %v4223 = vunpack.c.h.b16 %v3236
    %v4224 = vunpack.c.l.b16 %v3237
    %v4225 = vunpack.c.h.b16 %v3237
    %v4226 = vunpack.c.l.b16 %v3238
    %v4227 = vunpack.c.h.b16 %v3238
    %v4228 = vunpack.c.l.b16 %v3239
    %v4229 = vunpack.c.h.b16 %v3239
    %v4230 = vunpack.c.l.b16 %v3240
    %v4231 = vunpack.c.h.b16 %v3240
    %v4232 = vunpack.c.l.b16 %v3241
    %v4233 = vunpack.c.h.b16 %v3241
    %v4234 = vunpack.c.l.b16 %v3242
    %v4235 = vunpack.c.h.b16 %v3242
    %v4236 = vunpack.c.l.b16 %v3243
    %v4237 = vunpack.c.h.b16 %v3243
    %v4238 = vunpack.c.l.b16 %v3244
    %v4239 = vunpack.c.h.b16 %v3244
    %v4240 = vunpack.c.l.b16 %v3245
    %v4241 = vunpack.c.h.b16 %v3245
    %v4242 = vunpack.c.l.b16 %v3246
    %v4243 = vunpack.c.h.b16 %v3246
    %v4244 = vunpack.c.l.b16 %v3247
    %v4245 = vunpack.c.h.b16 %v3247
    %v4246 = vunpack.c.l.b16 %v3248
    %v4247 = vunpack.c.h.b16 %v3248
    %v4248 = vunpack.c.l.b16 %v3249
    %v4249 = vunpack.c.h.b16 %v3249
    %v4250 = vunpack.c.l.b16 %v3250
    %v4251 = vunpack.c.h.b16 %v3250
    %v4252 = vunpack.c.l.b16 %v3251
    %v4253 = vunpack.c.h.b16 %v3251
    %v4254 = vunpack.c.l.b16 %v3252
    %v4255 = vunpack.c.h.b16 %v3252
    %v4256 = vunpack.c.l.b16 %v3253
    %v4257 = vunpack.c.h.b16 %v3253
    %v4258 = vunpack.c.l.b16 %v3254
    %v4259 = vunpack.c.h.b16 %v3254
    %v4260 = vunpack.c.l.b16 %v3255
    %v4261 = vunpack.c.h.b16 %v3255
    %v4262 = vunpack.c.l.b16 %v3256
    %v4263 = vunpack.c.h.b16 %v3256
    %v4264 = vunpack.c.l.b16 %v3257
    %v4265 = vunpack.c.h.b16 %v3257
    %v4266 = vunpack.c.l.b16 %v3258
    %v4267 = vunpack.c.h.b16 %v3258
    %v4268 = vunpack.c.l.b16 %v3259
    %v4269 = vunpack.c.h.b16 %v3259
    %v4270 = vunpack.c.l.b16 %v3260
    %v4271 = vunpack.c.h.b16 %v3260
    %v4272 = vunpack.c.l.b16 %v3261
    %v4273 = vunpack.c.h.b16 %v3261
    %v4274 = vunpack.c.l.b16 %v3262
    %v4275 = vunpack.c.h.b16 %v3262
    %v4276 = vunpack.c.l.b16 %v3263
    %v4277 = vunpack.c.h.b16 %v3263
    %v4278 = vunpack.c.l.b16 %v3264
    %v4279 = vunpack.c.h.b16 %v3264
    %v4280 = vunpack.c.l.b16 %v3265
    %v4281 = vunpack.c.h.b16 %v3265
    %v4282 = vunpack.c.l.b16 %v3266
    %v4283 = vunpack.c.h.b16 %v3266
    %v4284 = vunpack.c.l.b16 %v3267
    %v4285 = vunpack.c.h.b16 %v3267
    %v4286 = vunpack.c.l.b16 %v3268
    %v4287 = vunpack.c.h.b16 %v3268
    %v4288 = vunpack.c.l.b16 %v3269
    %v4289 = vunpack.c.h.b16 %v3269
    %v4290 = vunpack.c.l.b16 %v3270
    %v4291 = vunpack.c.h.b16 %v3270
    %v4292 = vunpack.c.l.b16 %v3271
    %v4293 = vunpack.c.h.b16 %v3271
    %v4294 = vunpack.c.l.b16 %v3272
    %v4295 = vunpack.c.h.b16 %v3272
    %v4296 = vunpack.c.l.b16 %v3273
    %v4297 = vunpack.c.h.b16 %v3273
    %v4298 = vunpack.c.l.b16 %v3274
    %v4299 = vunpack.c.h.b16 %v3274
    %v4300 = vunpack.c.l.b16 %v3275
    %v4301 = vunpack.c.h.b16 %v3275
    %v4302 = vunpack.c.l.b16 %v3276
    %v4303 = vunpack.c.h.b16 %v3276
    %v4304 = vunpack.c.l.b16 %v3277
    %v4305 = vunpack.c.h.b16 %v3277
    %v4306 = vunpack.c.l.b16 %v3278
    %v4307 = vunpack.c.h.b16 %v3278
    %v4308 = vunpack.c.l.b16 %v3279
    %v4309 = vunpack.c.h.b16 %v3279
    %v4310 = vunpack.c.l.b16 %v3280
    %v4311 = vunpack.c.h.b16 %v3280
    %v4312 = vunpack.c.l.b16 %v3281
    %v4313 = vunpack.c.h.b16 %v3281
    %v4314 = vunpack.c.l.b16 %v3282
    %v4315 = vunpack.c.h.b16 %v3282
    %v4316 = vunpack.c.l.b16 %v3283
    %v4317 = vunpack.c.h.b16 %v3283
    %v4318 = vunpack.c.l.b16 %v3284
    %v4319 = vunpack.c.h.b16 %v3284
    %v4320 = vunpack.c.l.b16 %v3285
    %v4321 = vunpack.c.h.b16 %v3285
    %v4322 = vunpack.c.l.b16 %v3286
    %v4323 = vunpack.c.h.b16 %v3286
    %v4324 = vunpack.c.l.b16 %v3287
    %v4325 = vunpack.c.h.b16 %v3287
    %v4326 = vunpack.c.l.b16 %v3288
    %v4327 = vunpack.c.h.b16 %v3288
    %v4328 = vunpack.c.l.b16 %v3289
    %v4329 = vunpack.c.h.b16 %v3289
    %v4330 = vunpack.c.l.b16 %v3290
    %v4331 = vunpack.c.h.b16 %v3290
    %v4332 = vunpack.c.l.b16 %v3291
    %v4333 = vunpack.c.h.b16 %v3291
    %v4334 = vunpack.c.l.b16 %v3292
    %v4335 = vunpack.c.h.b16 %v3292
    %v4336 = vunpack.c.l.b16 %v3293
    %v4337 = vunpack.c.h.b16 %v3293
    %v4338 = vunpack.c.l.b16 %v3294
    %v4339 = vunpack.c.h.b16 %v3294
    %v4340 = vunpack.c.l.b16 %v3295
    %v4341 = vunpack.c.h.b16 %v3295
    %v4342 = vunpack.c.l.b16 %v3296
    %v4343 = vunpack.c.h.b16 %v3296
    %v4344 = vunpack.c.l.b16 %v3297
    %v4345 = vunpack.c.h.b16 %v3297
    %v4346 = vunpack.c.l.b16 %v3298
    %v4347 = vunpack.c.h.b16 %v3298
    %v4348 = vunpack.c.l.b16 %v3299
    %v4349 = vunpack.c.h.b16 %v3299
    %v4350 = vunpack.c.l.b16 %v3300
    %v4351 = vunpack.c.h.b16 %v3300
    %v4352 = vunpack.c.l.b16 %v3301
    %v4353 = vunpack.c.h.b16 %v3301
    %v4354 = vunpack.c.l.b16 %v3302
    %v4355 = vunpack.c.h.b16 %v3302
    %v4356 = vunpack.c.l.b16 %v3303
    %v4357 = vunpack.c.h.b16 %v3303
    %v4358 = vunpack.c.l.b16 %v3304
    %v4359 = vunpack.c.h.b16 %v3304
    %v4360 = vunpack.c.l.b16 %v3305
    %v4361 = vunpack.c.h.b16 %v3305
    %v4362 = vunpack.c.l.b16 %v3306
    %v4363 = vunpack.c.h.b16 %v3306
    %v4364 = vunpack.c.l.b16 %v3307
    %v4365 = vunpack.c.h.b16 %v3307
    %v4366 = vunpack.c.l.b16 %v3308
    %v4367 = vunpack.c.h.b16 %v3308
    %v4368 = vunpack.c.l.b16 %v3309
    %v4369 = vunpack.c.h.b16 %v3309
    %v4370 = vunpack.c.l.b16 %v3310
    %v4371 = vunpack.c.h.b16 %v3310
    %v4372 = vunpack.c.l.b16 %v3311
    %v4373 = vunpack.c.h.b16 %v3311
    %v4374 = vunpack.c.l.b16 %v3312
    %v4375 = vunpack.c.h.b16 %v3312
    %v4376 = vunpack.c.l.b16 %v3313
    %v4377 = vunpack.c.h.b16 %v3313
    %v4378 = vunpack.c.l.b16 %v3314
    %v4379 = vunpack.c.h.b16 %v3314
    %v4380 = vunpack.c.l.b16 %v3315
    %v4381 = vunpack.c.h.b16 %v3315
    %v4382 = vunpack.c.l.b16 %v3316
    %v4383 = vunpack.c.h.b16 %v3316
    %v4384 = vunpack.c.l.b16 %v3317
    %v4385 = vunpack.c.h.b16 %v3317
    %v4386 = vunpack.c.l.b16 %v3318
    %v4387 = vunpack.c.h.b16 %v3318
    %v4388 = vunpack.c.l.b16 %v3319
    %v4389 = vunpack.c.h.b16 %v3319
    %v4390 = vunpack.c.l.b16 %v3320
    %v4391 = vunpack.c.h.b16 %v3320
    %v4392 = vunpack.c.l.b16 %v3321
    %v4393 = vunpack.c.h.b16 %v3321
    %v4394 = vunpack.c.l.b16 %v3322
    %v4395 = vunpack.c.h.b16 %v3322
    %v4396 = vunpack.c.l.b16 %v3323
    %v4397 = vunpack.c.h.b16 %v3323
    %v4398 = vunpack.c.l.b16 %v3324
    %v4399 = vunpack.c.h.b16 %v3324
    %v4400 = vunpack.c.l.b16 %v3325
    %v4401 = vunpack.c.h.b16 %v3325
    %v4402 = vunpack.c.l.b16 %v3326
    %v4403 = vunpack.c.h.b16 %v3326
    %v4404 = vunpack.c.l.b16 %v3327
    %v4405 = vunpack.c.h.b16 %v3327
    %v4406 = vunpack.c.l.b16 %v3328
    %v4407 = vunpack.c.h.b16 %v3328
    %v4408 = vunpack.c.l.b16 %v3329
    %v4409 = vunpack.c.h.b16 %v3329
    %v4410 = vunpack.c.l.b16 %v3330
    %v4411 = vunpack.c.h.b16 %v3330
    %v4412 = vunpack.c.l.b16 %v3331
    %v4413 = vunpack.c.h.b16 %v3331
    %v4414 = vunpack.c.l.b16 %v3332
    %v4415 = vunpack.c.h.b16 %v3332
    %v4416 = vunpack.c.l.b16 %v3333
    %v4417 = vunpack.c.h.b16 %v3333
    %v4418 = vunpack.c.l.b16 %v3334
    %v4419 = vunpack.c.h.b16 %v3334
    %v4420 = vunpack.c.l.b16 %v3335
    %v4421 = vunpack.c.h.b16 %v3335
    %v4422 = vunpack.c.l.b16 %v3336
    %v4423 = vunpack.c.h.b16 %v3336
    %v4424 = vunpack.c.l.b16 %v3337
    %v4425 = vunpack.c.h.b16 %v3337
    %v4426 = vunpack.c.l.b16 %v3338
    %v4427 = vunpack.c.h.b16 %v3338
    %v4428 = vunpack.c.l.b16 %v3339
    %v4429 = vunpack.c.h.b16 %v3339
    %v4430 = vunpack.c.l.b16 %v3340
    %v4431 = vunpack.c.h.b16 %v3340
    %v4432 = vunpack.c.l.b16 %v3341
    %v4433 = vunpack.c.h.b16 %v3341
    %v4434 = vunpack.c.l.b16 %v3342
    %v4435 = vunpack.c.h.b16 %v3342
    %v4436 = vunpack.c.l.b16 %v3343
    %v4437 = vunpack.c.h.b16 %v3343
    %v4438 = vunpack.c.l.b16 %v3344
    %v4439 = vunpack.c.h.b16 %v3344
    %v4440 = vunpack.c.l.b16 %v3345
    %v4441 = vunpack.c.h.b16 %v3345
    %v4442 = vunpack.c.l.b16 %v3346
    %v4443 = vunpack.c.h.b16 %v3346
    %v4444 = vunpack.c.l.b16 %v3347
    %v4445 = vunpack.c.h.b16 %v3347
    %v4446 = vunpack.c.l.b16 %v3348
    %v4447 = vunpack.c.h.b16 %v3348
    %v4448 = vunpack.c.l.b16 %v3349
    %v4449 = vunpack.c.h.b16 %v3349
    %v4450 = vunpack.c.l.b16 %v3350
    %v4451 = vunpack.c.h.b16 %v3350
    %v4452 = vunpack.c.l.b16 %v3351
    %v4453 = vunpack.c.h.b16 %v3351
    %v4454 = vunpack.c.l.b16 %v3352
    %v4455 = vunpack.c.h.b16 %v3352
    %v4456 = vunpack.c.l.b16 %v3353
    %v4457 = vunpack.c.h.b16 %v3353
    %v4458 = vunpack.c.l.b16 %v3354
    %v4459 = vunpack.c.h.b16 %v3354
    %v4460 = vunpack.c.l.b16 %v3355
    %v4461 = vunpack.c.h.b16 %v3355
    %v4462 = vunpack.c.l.b16 %v3356
    %v4463 = vunpack.c.h.b16 %v3356
    %v4464 = vunpack.c.l.b16 %v3357
    %v4465 = vunpack.c.h.b16 %v3357
    %v4466 = vunpack.c.l.b16 %v3358
    %v4467 = vunpack.c.h.b16 %v3358
    %v4468 = vunpack.c.l.b16 %v3359
    %v4469 = vunpack.c.h.b16 %v3359
    %v4470 = vunpack.c.l.b16 %v3360
    %v4471 = vunpack.c.h.b16 %v3360
    %v4472 = vunpack.c.l.b16 %v3361
    %v4473 = vunpack.c.h.b16 %v3361
    %v4474 = vunpack.c.l.b16 %v3362
    %v4475 = vunpack.c.h.b16 %v3362
    %v4476 = vunpack.c.l.b16 %v3363
    %v4477 = vunpack.c.h.b16 %v3363
    %v4478 = vunpack.c.l.b16 %v3364
    %v4479 = vunpack.c.h.b16 %v3364
    %v4480 = vunpack.c.l.b16 %v3365
    %v4481 = vunpack.c.h.b16 %v3365
    %v4482 = vunpack.c.l.b16 %v3366
    %v4483 = vunpack.c.h.b16 %v3366
    %v4484 = vunpack.c.l.b16 %v3367
    %v4485 = vunpack.c.h.b16 %v3367
    %v4486 = vunpack.c.l.b16 %v3368
    %v4487 = vunpack.c.h.b16 %v3368
    %v4488 = vunpack.c.l.b16 %v3369
    %v4489 = vunpack.c.h.b16 %v3369
    %v4490 = vunpack.c.l.b16 %v3370
    %v4491 = vunpack.c.h.b16 %v3370
    %v4492 = vunpack.c.l.b16 %v3371
    %v4493 = vunpack.c.h.b16 %v3371
    %v4494 = vunpack.c.l.b16 %v3372
    %v4495 = vunpack.c.h.b16 %v3372
    %v4496 = vunpack.c.l.b16 %v3373
    %v4497 = vunpack.c.h.b16 %v3373
    %v4498 = vunpack.c.l.b16 %v3374
    %v4499 = vunpack.c.h.b16 %v3374
    %v4500 = vunpack.c.l.b16 %v3375
    %v4501 = vunpack.c.h.b16 %v3375
    %v4502 = vunpack.c.l.b16 %v3376
    %v4503 = vunpack.c.h.b16 %v3376
    %v4504 = vunpack.c.l.b16 %v3377
    %v4505 = vunpack.c.h.b16 %v3377
    %v4506 = vunpack.c.l.b16 %v3378
    %v4507 = vunpack.c.h.b16 %v3378
    %v4508 = vunpack.c.l.b16 %v3379
    %v4509 = vunpack.c.h.b16 %v3379
    %v4510 = vunpack.c.l.b16 %v3380
    %v4511 = vunpack.c.h.b16 %v3380
    %v4512 = vunpack.c.l.b16 %v3381
    %v4513 = vunpack.c.h.b16 %v3381
    %v4514 = vunpack.c.l.b16 %v3382
    %v4515 = vunpack.c.h.b16 %v3382
    %v4516 = vunpack.c.l.b16 %v3383
    %v4517 = vunpack.c.h.b16 %v3383
    %v4518 = vunpack.c.l.b16 %v3384
    %v4519 = vunpack.c.h.b16 %v3384
    %v4520 = vunpack.c.l.b16 %v3385
    %v4521 = vunpack.c.h.b16 %v3385
    %v4522 = vunpack.c.l.b16 %v3386
    %v4523 = vunpack.c.h.b16 %v3386
    %v4524 = vunpack.c.l.b16 %v3387
    %v4525 = vunpack.c.h.b16 %v3387
    %v4526 = vunpack.c.l.b16 %v3388
    %v4527 = vunpack.c.h.b16 %v3388
    %v4528 = vunpack.c.l.b16 %v3389
    %v4529 = vunpack.c.h.b16 %v3389
    %v4530 = vunpack.c.l.b16 %v3390
    %v4531 = vunpack.c.h.b16 %v3390
    %v4532 = vunpack.c.l.b16 %v3391
    %v4533 = vunpack.c.h.b16 %v3391
    %v4534 = vunpack.c.l.b16 %v3392
    %v4535 = vunpack.c.h.b16 %v3392
    %v4536 = vunpack.c.l.b16 %v3393
    %v4537 = vunpack.c.h.b16 %v3393
    %v4538 = vunpack.c.l.b16 %v3394
    %v4539 = vunpack.c.h.b16 %v3394
    %v4540 = vunpack.c.l.b16 %v3395
    %v4541 = vunpack.c.h.b16 %v3395
    %v4542 = vunpack.c.l.b16 %v3396
    %v4543 = vunpack.c.h.b16 %v3396
    %v4544 = vunpack.c.l.b16 %v3397
    %v4545 = vunpack.c.h.b16 %v3397
    %v4546 = vunpack.c.l.b16 %v3398
    %v4547 = vunpack.c.h.b16 %v3398
    %v4548 = vunpack.c.l.b16 %v3399
    %v4549 = vunpack.c.h.b16 %v3399
    %v4550 = vunpack.c.l.b16 %v3400
    %v4551 = vunpack.c.h.b16 %v3400
    %v4552 = vunpack.c.l.b16 %v3401
    %v4553 = vunpack.c.h.b16 %v3401
    %v4554 = vunpack.c.l.b16 %v3402
    %v4555 = vunpack.c.h.b16 %v3402
    %v4556 = vunpack.c.l.b16 %v3403
    %v4557 = vunpack.c.h.b16 %v3403
    %v4558 = vunpack.c.l.b16 %v3404
    %v4559 = vunpack.c.h.b16 %v3404
    %v4560 = vunpack.c.l.b16 %v3405
    %v4561 = vunpack.c.h.b16 %v3405
    %v4562 = vunpack.c.l.b16 %v3406
    %v4563 = vunpack.c.h.b16 %v3406
    %v4564 = vunpack.c.l.b16 %v3407
    %v4565 = vunpack.c.h.b16 %v3407
    %v4566 = vunpack.c.l.b16 %v3408
    %v4567 = vunpack.c.h.b16 %v3408
    %v4568 = vunpack.c.l.b16 %v3409
    %v4569 = vunpack.c.h.b16 %v3409
    %v4570 = vunpack.c.l.b16 %v3410
    %v4571 = vunpack.c.h.b16 %v3410
    %v4572 = vunpack.c.l.b16 %v3411
    %v4573 = vunpack.c.h.b16 %v3411
    %v4574 = vunpack.c.l.b16 %v3412
    %v4575 = vunpack.c.h.b16 %v3412
    %v4576 = vunpack.c.l.b16 %v3413
    %v4577 = vunpack.c.h.b16 %v3413
    %v4578 = vunpack.c.l.b16 %v3414
    %v4579 = vunpack.c.h.b16 %v3414
    %v4580 = vunpack.c.l.b16 %v3415
    %v4581 = vunpack.c.h.b16 %v3415
    %v4582 = vunpack.c.l.b16 %v3416
    %v4583 = vunpack.c.h.b16 %v3416
    %v4584 = vunpack.c.l.b16 %v3417
    %v4585 = vunpack.c.h.b16 %v3417
    %v4586 = vunpack.c.l.b16 %v3418
    %v4587 = vunpack.c.h.b16 %v3418
    %v4588 = vunpack.c.l.b16 %v3419
    %v4589 = vunpack.c.h.b16 %v3419
    %v4590 = vpack.c.b16 %v3830, %v3822
    %v4591 = vpack.c.b16 %v3831, %v3823
    %v4592 = vpack.c.b16 %v3832, %v3824
    %v4593 = vpack.c.b16 %v3833, %v3825
    %v4594 = vpack.c.b16 %v3834, %v3826
    %v4595 = vpack.c.b16 %v3835, %v3827
    %v4596 = vpack.c.b16 %v3836, %v3828
    %v4597 = vpack.c.b16 %v3837, %v3829
    %v4598 = vpack.c.b16 %v3846, %v3838
    %v4599 = vpack.c.b16 %v3847, %v3839
    %v4600 = vpack.c.b16 %v3848, %v3840
    %v4601 = vpack.c.b16 %v3849, %v3841
    %v4602 = vpack.c.b16 %v3850, %v3842
    %v4603 = vpack.c.b16 %v3851, %v3843
    %v4604 = vpack.c.b16 %v3852, %v3844
    %v4605 = vpack.c.b16 %v3853, %v3845
    %v4606 = vpack.c.b16 %v3862, %v3854
    %v4607 = vpack.c.b16 %v3863, %v3855
    %v4608 = vpack.c.b16 %v3864, %v3856
    %v4609 = vpack.c.b16 %v3865, %v3857
    %v4610 = vpack.c.b16 %v3866, %v3858
    %v4611 = vpack.c.b16 %v3867, %v3859
    %v4612 = vpack.c.b16 %v3868, %v3860
    %v4613 = vpack.c.b16 %v3869, %v3861
    %v4614 = vpack.c.b16 %v3878, %v3870
    %v4615 = vpack.c.b16 %v3879, %v3871
    %v4616 = vpack.c.b16 %v3880, %v3872
    %v4617 = vpack.c.b16 %v3881, %v3873
    %v4618 = vpack.c.b16 %v3882, %v3874
    %v4619 = vpack.c.b16 %v3883, %v3875
    %v4620 = vpack.c.b16 %v3884, %v3876
    %v4621 = vpack.c.b16 %v3885, %v3877
    %v4622 = vpack.c.b16 %v3894, %v3886
    %v4623 = vpack.c.b16 %v3895, %v3887
    %v4624 = vpack.c.b16 %v3896, %v3888
    %v4625 = vpack.c.b16 %v3897, %v3889
    %v4626 = vpack.c.b16 %v3898, %v3890
    %v4627 = vpack.c.b16 %v3899, %v3891
    %v4628 = vpack.c.b16 %v3900, %v3892
    %v4629 = vpack.c.b16 %v3901, %v3893
    %v4630 = vpack.c.b16 %v3910, %v3902
    %v4631 = vpack.c.b16 %v3911, %v3903
    %v4632 = vpack.c.b16 %v3912, %v3904
    %v4633 = vpack.c.b16 %v3913, %v3905
    %v4634 = vpack.c.b16 %v3914, %v3906
    %v4635 = vpack.c.b16 %v3915, %v3907
    %v4636 = vpack.c.b16 %v3916, %v3908
    %v4637 = vpack.c.b16 %v3917, %v3909
    %v4638 = vpack.c.b16 %v3926, %v3918
    %v4639 = vpack.c.b16 %v3927, %v3919
    %v4640 = vpack.c.b16 %v3928, %v3920
    %v4641 = vpack.c.b16 %v3929, %v3921
    %v4642 = vpack.c.b16 %v3930, %v3922
    %v4643 = vpack.c.b16 %v3931, %v3923
    %v4644 = vpack.c.b16 %v3932, %v3924
    %v4645 = vpack.c.b16 %v3933, %v3925
    %v4646 = vpack.c.b16 %v3942, %v3934
    %v4647 = vpack.c.b16 %v3943, %v3935
    %v4648 = vpack.c.b16 %v3944, %v3936
    %v4649 = vpack.c.b16 %v3945, %v3937
    %v4650 = vpack.c.b16 %v3946, %v3938
    %v4651 = vpack.c.b16 %v3947, %v3939
    %v4652 = vpack.c.b16 %v3948, %v3940
    %v4653 = vpack.c.b16 %v3949, %v3941
    %v4654 = vpack.c.b16 %v3958, %v3950
    %v4655 = vpack.c.b16 %v3959, %v3951
    %v4656 = vpack.c.b16 %v3960, %v3952
    %v4657 = vpack.c.b16 %v3961, %v3953
    %v4658 = vpack.c.b16 %v3962, %v3954
    %v4659 = vpack.c.b16 %v3963, %v3955
    %v4660 = vpack.c.b16 %v3964, %v3956
    %v4661 = vpack.c.b16 %v3965, %v3957
    %v4662 = vpack.c.b16 %v3974, %v3966
    %v4663 = vpack.c.b16 %v3975, %v3967
    %v4664 = vpack.c.b16 %v3976, %v3968
    %v4665 = vpack.c.b16 %v3977, %v3969
    %v4666 = vpack.c.b16 %v3978, %v3970
    %v4667 = vpack.c.b16 %v3979, %v3971
    %v4668 = vpack.c.b16 %v3980, %v3972
    %v4669 = vpack.c.b16 %v3981, %v3973
    %v4670 = vpack.c.b16 %v3990, %v3982
    %v4671 = vpack.c.b16 %v3991, %v3983
    %v4672 = vpack.c.b16 %v3992, %v3984
    %v4673 = vpack.c.b16 %v3993, %v3985
    %v4674 = vpack.c.b16 %v3994, %v3986
    %v4675 = vpack.c.b16 %v3995, %v3987
    %v4676 = vpack.c.b16 %v3996, %v3988
    %v4677 = vpack.c.b16 %v3997, %v3989
    %v4678 = vpack.c.b16 %v4006, %v3998
    %v4679 = vpack.c.b16 %v4007, %v3999
    %v4680 = vpack.c.b16 %v4008, %v4000
    %v4681 = vpack.c.b16 %v4009, %v4001
    %v4682 = vpack.c.b16 %v4010, %v4002
    %v4683 = vpack.c.b16 %v4011, %v4003
    %v4684 = vpack.c.b16 %v4012, %v4004
    %v4685 = vpack.c.b16 %v4013, %v4005
    %v4686 = vpack.c.b16 %v4022, %v4014
    %v4687 = vpack.c.b16 %v4023, %v4015
    %v4688 = vpack.c.b16 %v4024, %v4016
    %v4689 = vpack.c.b16 %v4025, %v4017
    %v4690 = vpack.c.b16 %v4026, %v4018
    %v4691 = vpack.c.b16 %v4027, %v4019
    %v4692 = vpack.c.b16 %v4028, %v4020
    %v4693 = vpack.c.b16 %v4029, %v4021
    %v4694 = vpack.c.b16 %v4038, %v4030
    %v4695 = vpack.c.b16 %v4039, %v4031
    %v4696 = vpack.c.b16 %v4040, %v4032
    %v4697 = vpack.c.b16 %v4041, %v4033
    %v4698 = vpack.c.b16 %v4042, %v4034
    %v4699 = vpack.c.b16 %v4043, %v4035
    %v4700 = vpack.c.b16 %v4044, %v4036
    %v4701 = vpack.c.b16 %v4045, %v4037
    %v4702 = vpack.c.b16 %v4054, %v4046
    %v4703 = vpack.c.b16 %v4055, %v4047
    %v4704 = vpack.c.b16 %v4056, %v4048
    %v4705 = vpack.c.b16 %v4057, %v4049
    %v4706 = vpack.c.b16 %v4058, %v4050
    %v4707 = vpack.c.b16 %v4059, %v4051
    %v4708 = vpack.c.b16 %v4060, %v4052
    %v4709 = vpack.c.b16 %v4061, %v4053
    %v4710 = vpack.c.b16 %v4070, %v4062
    %v4711 = vpack.c.b16 %v4071, %v4063
    %v4712 = vpack.c.b16 %v4072, %v4064
    %v4713 = vpack.c.b16 %v4073, %v4065
    %v4714 = vpack.c.b16 %v4074, %v4066
    %v4715 = vpack.c.b16 %v4075, %v4067
    %v4716 = vpack.c.b16 %v4076, %v4068
    %v4717 = vpack.c.b16 %v4077, %v4069
    %v4718 = vpack.c.b16 %v4086, %v4078
    %v4719 = vpack.c.b16 %v4087, %v4079
    %v4720 = vpack.c.b16 %v4088, %v4080
    %v4721 = vpack.c.b16 %v4089, %v4081
    %v4722 = vpack.c.b16 %v4090, %v4082
    %v4723 = vpack.c.b16 %v4091, %v4083
    %v4724 = vpack.c.b16 %v4092, %v4084
    %v4725 = vpack.c.b16 %v4093, %v4085
    %v4726 = vpack.c.b16 %v4102, %v4094
    %v4727 = vpack.c.b16 %v4103, %v4095
    %v4728 = vpack.c.b16 %v4104, %v4096
    %v4729 = vpack.c.b16 %v4105, %v4097
    %v4730 = vpack.c.b16 %v4106, %v4098
    %v4731 = vpack.c.b16 %v4107, %v4099
    %v4732 = vpack.c.b16 %v4108, %v4100
    %v4733 = vpack.c.b16 %v4109, %v4101
    %v4734 = vpack.c.b16 %v4118, %v4110
    %v4735 = vpack.c.b16 %v4119, %v4111
    %v4736 = vpack.c.b16 %v4120, %v4112
    %v4737 = vpack.c.b16 %v4121, %v4113
    %v4738 = vpack.c.b16 %v4122, %v4114
    %v4739 = vpack.c.b16 %v4123, %v4115
    %v4740 = vpack.c.b16 %v4124, %v4116
    %v4741 = vpack.c.b16 %v4125, %v4117
    %v4742 = vpack.c.b16 %v4134, %v4126
    %v4743 = vpack.c.b16 %v4135, %v4127
    %v4744 = vpack.c.b16 %v4136, %v4128
    %v4745 = vpack.c.b16 %v4137, %v4129
    %v4746 = vpack.c.b16 %v4138, %v4130
    %v4747 = vpack.c.b16 %v4139, %v4131
    %v4748 = vpack.c.b16 %v4140, %v4132
    %v4749 = vpack.c.b16 %v4141, %v4133
    %v4750 = vpack.c.b16 %v4150, %v4142
    %v4751 = vpack.c.b16 %v4151, %v4143
    %v4752 = vpack.c.b16 %v4152, %v4144
    %v4753 = vpack.c.b16 %v4153, %v4145
    %v4754 = vpack.c.b16 %v4154, %v4146
    %v4755 = vpack.c.b16 %v4155, %v4147
    %v4756 = vpack.c.b16 %v4156, %v4148
    %v4757 = vpack.c.b16 %v4157, %v4149
    %v4758 = vpack.c.b16 %v4166, %v4158
    %v4759 = vpack.c.b16 %v4167, %v4159
    %v4760 = vpack.c.b16 %v4168, %v4160
    %v4761 = vpack.c.b16 %v4169, %v4161
    %v4762 = vpack.c.b16 %v4170, %v4162
    %v4763 = vpack.c.b16 %v4171, %v4163
    %v4764 = vpack.c.b16 %v4172, %v4164
    %v4765 = vpack.c.b16 %v4173, %v4165
    %v4766 = vpack.c.b16 %v4182, %v4174
    %v4767 = vpack.c.b16 %v4183, %v4175
    %v4768 = vpack.c.b16 %v4184, %v4176
    %v4769 = vpack.c.b16 %v4185, %v4177
    %v4770 = vpack.c.b16 %v4186, %v4178
    %v4771 = vpack.c.b16 %v4187, %v4179
    %v4772 = vpack.c.b16 %v4188, %v4180
    %v4773 = vpack.c.b16 %v4189, %v4181
    %v4774 = vpack.c.b16 %v4198, %v4190
    %v4775 = vpack.c.b16 %v4199, %v4191
    %v4776 = vpack.c.b16 %v4200, %v4192
    %v4777 = vpack.c.b16 %v4201, %v4193
    %v4778 = vpack.c.b16 %v4202, %v4194
    %v4779 = vpack.c.b16 %v4203, %v4195
    %v4780 = vpack.c.b16 %v4204, %v4196
    %v4781 = vpack.c.b16 %v4205, %v4197
    %v4782 = vpack.c.b16 %v4214, %v4206
    %v4783 = vpack.c.b16 %v4215, %v4207
    %v4784 = vpack.c.b16 %v4216, %v4208
    %v4785 = vpack.c.b16 %v4217, %v4209
    %v4786 = vpack.c.b16 %v4218, %v4210
    %v4787 = vpack.c.b16 %v4219, %v4211
    %v4788 = vpack.c.b16 %v4220, %v4212
    %v4789 = vpack.c.b16 %v4221, %v4213
    %v4790 = vpack.c.b16 %v4230, %v4222
    %v4791 = vpack.c.b16 %v4231, %v4223
    %v4792 = vpack.c.b16 %v4232, %v4224
    %v4793 = vpack.c.b16 %v4233, %v4225
    %v4794 = vpack.c.b16 %v4234, %v4226
    %v4795 = vpack.c.b16 %v4235, %v4227
    %v4796 = vpack.c.b16 %v4236, %v4228
    %v4797 = vpack.c.b16 %v4237, %v4229
    %v4798 = vpack.c.b16 %v4246, %v4238
    %v4799 = vpack.c.b16 %v4247, %v4239
    %v4800 = vpack.c.b16 %v4248, %v4240
    %v4801 = vpack.c.b16 %v4249, %v4241
    %v4802 = vpack.c.b16 %v4250, %v4242
    %v4803 = vpack.c.b16 %v4251, %v4243
    %v4804 = vpack.c.b16 %v4252, %v4244
    %v4805 = vpack.c.b16 %v4253, %v4245
    %v4806 = vpack.c.b16 %v4262, %v4254
    %v4807 = vpack.c.b16 %v4263, %v4255
    %v4808 = vpack.c.b16 %v4264, %v4256
    %v4809 = vpack.c.b16 %v4265, %v4257
    %v4810 = vpack.c.b16 %v4266, %v4258
    %v4811 = vpack.c.b16 %v4267, %v4259
    %v4812 = vpack.c.b16 %v4268, %v4260
    %v4813 = vpack.c.b16 %v4269, %v4261
    %v4814 = vpack.c.b16 %v4278, %v4270
    %v4815 = vpack.c.b16 %v4279, %v4271
    %v4816 = vpack.c.b16 %v4280, %v4272
    %v4817 = vpack.c.b16 %v4281, %v4273
    %v4818 = vpack.c.b16 %v4282, %v4274
    %v4819 = vpack.c.b16 %v4283, %v4275
    %v4820 = vpack.c.b16 %v4284, %v4276
    %v4821 = vpack.c.b16 %v4285, %v4277
    %v4822 = vpack.c.b16 %v4294, %v4286
    %v4823 = vpack.c.b16 %v4295, %v4287
    %v4824 = vpack.c.b16 %v4296, %v4288
    %v4825 = vpack.c.b16 %v4297, %v4289
    %v4826 = vpack.c.b16 %v4298, %v4290
    %v4827 = vpack.c.b16 %v4299, %v4291
    %v4828 = vpack.c.b16 %v4300, %v4292
    %v4829 = vpack.c.b16 %v4301, %v4293
    %v4830 = vpack.c.b16 %v4310, %v4302
    %v4831 = vpack.c.b16 %v4311, %v4303
    %v4832 = vpack.c.b16 %v4312, %v4304
    %v4833 = vpack.c.b16 %v4313, %v4305
    %v4834 = vpack.c.b16 %v4314, %v4306
    %v4835 = vpack.c.b16 %v4315, %v4307
    %v4836 = vpack.c.b16 %v4316, %v4308
    %v4837 = vpack.c.b16 %v4317, %v4309
    %v4838 = vpack.c.b16 %v4326, %v4318
    %v4839 = vpack.c.b16 %v4327, %v4319
    %v4840 = vpack.c.b16 %v4328, %v4320
    %v4841 = vpack.c.b16 %v4329, %v4321
    %v4842 = vpack.c.b16 %v4330, %v4322
    %v4843 = vpack.c.b16 %v4331, %v4323
    %v4844 = vpack.c.b16 %v4332, %v4324
    %v4845 = vpack.c.b16 %v4333, %v4325
    %v4846 = vpack.c.b16 %v4342, %v4334
    %v4847 = vpack.c.b16 %v4343, %v4335
    %v4848 = vpack.c.b16 %v4344, %v4336
    %v4849 = vpack.c.b16 %v4345, %v4337
    %v4850 = vpack.c.b16 %v4346, %v4338
    %v4851 = vpack.c.b16 %v4347, %v4339
    %v4852 = vpack.c.b16 %v4348, %v4340
    %v4853 = vpack.c.b16 %v4349, %v4341
    %v4854 = vpack.c.b16 %v4358, %v4350
    %v4855 = vpack.c.b16 %v4359, %v4351
    %v4856 = vpack.c.b16 %v4360, %v4352
    %v4857 = vpack.c.b16 %v4361, %v4353
    %v4858 = vpack.c.b16 %v4362, %v4354
    %v4859 = vpack.c.b16 %v4363, %v4355
    %v4860 = vpack.c.b16 %v4364, %v4356
    %v4861 = vpack.c.b16 %v4365, %v4357
    %v4862 = vpack.c.b16 %v4374, %v4366
    %v4863 = vpack.c.b16 %v4375, %v4367
    %v4864 = vpack.c.b16 %v4376, %v4368
    %v4865 = vpack.c.b16 %v4377, %v4369
    %v4866 = vpack.c.b16 %v4378, %v4370
    %v4867 = vpack.c.b16 %v4379, %v4371
    %v4868 = vpack.c.b16 %v4380, %v4372
    %v4869 = vpack.c.b16 %v4381, %v4373
    %v4870 = vpack.c.b16 %v4390, %v4382
    %v4871 = vpack.c.b16 %v4391, %v4383
    %v4872 = vpack.c.b16 %v4392, %v4384
    %v4873 = vpack.c.b16 %v4393, %v4385
    %v4874 = vpack.c.b16 %v4394, %v4386
    %v4875 = vpack.c.b16 %v4395, %v4387
    %v4876 = vpack.c.b16 %v4396, %v4388
    %v4877 = vpack.c.b16 %v4397, %v4389
    %v4878 = vpack.c.b16 %v4406, %v4398
    %v4879 = vpack.c.b16 %v4407, %v4399
    %v4880 = vpack.c.b16 %v4408, %v4400
    %v4881 = vpack.c.b16 %v4409, %v4401
    %v4882 = vpack.c.b16 %v4410, %v4402
    %v4883 = vpack.c.b16 %v4411, %v4403
    %v4884 = vpack.c.b16 %v4412, %v4404
    %v4885 = vpack.c.b16 %v4413, %v4405
    %v4886 = vpack.c.b16 %v4422, %v4414
    %v4887 = vpack.c.b16 %v4423, %v4415
    %v4888 = vpack.c.b16 %v4424, %v4416
    %v4889 = vpack.c.b16 %v4425, %v4417
    %v4890 = vpack.c.b16 %v4426, %v4418
    %v4891 = vpack.c.b16 %v4427, %v4419
    %v4892 = vpack.c.b16 %v4428, %v4420
    %v4893 = vpack.c.b16 %v4429, %v4421
    %v4894 = vpack.c.b16 %v4438, %v4430
    %v4895 = vpack.c.b16 %v4439, %v4431
    %v4896 = vpack.c.b16 %v4440, %v4432
    %v4897 = vpack.c.b16 %v4441, %v4433
    %v4898 = vpack.c.b16 %v4442, %v4434
    %v4899 = vpack.c.b16 %v4443, %v4435
    %v4900 = vpack.c.b16 %v4444, %v4436
    %v4901 = vpack.c.b16 %v4445, %v4437
    %v4902 = vpack.c.b16 %v4454, %v4446
    %v4903 = vpack.c.b16 %v4455, %v4447
    %v4904 = vpack.c.b16 %v4456, %v4448
    %v4905 = vpack.c.b16 %v4457, %v4449
    %v4906 = vpack.c.b16 %v4458, %v4450
    %v4907 = vpack.c.b16 %v4459, %v4451
    %v4908 = vpack.c.b16 %v4460, %v4452
    %v4909 = vpack.c.b16 %v4461, %v4453
    %v4910 = vpack.c.b16 %v4470, %v4462
    %v4911 = vpack.c.b16 %v4471, %v4463
    %v4912 = vpack.c.b16 %v4472, %v4464
    %v4913 = vpack.c.b16 %v4473, %v4465
    %v4914 = vpack.c.b16 %v4474, %v4466
    %v4915 = vpack.c.b16 %v4475, %v4467
    %v4916 = vpack.c.b16 %v4476, %v4468
    %v4917 = vpack.c.b16 %v4477, %v4469
    %v4918 = vpack.c.b16 %v4486, %v4478
    %v4919 = vpack.c.b16 %v4487, %v4479
    %v4920 = vpack.c.b16 %v4488, %v4480
    %v4921 = vpack.c.b16 %v4489, %v4481
    %v4922 = vpack.c.b16 %v4490, %v4482
    %v4923 = vpack.c.b16 %v4491, %v4483
    %v4924 = vpack.c.b16 %v4492, %v4484
    %v4925 = vpack.c.b16 %v4493, %v4485
    %v4926 = vpack.c.b16 %v4502, %v4494
    %v4927 = vpack.c.b16 %v4503, %v4495
    %v4928 = vpack.c.b16 %v4504, %v4496
    %v4929 = vpack.c.b16 %v4505, %v4497
    %v4930 = vpack.c.b16 %v4506, %v4498
    %v4931 = vpack.c.b16 %v4507, %v4499
    %v4932 = vpack.c.b16 %v4508, %v4500
    %v4933 = vpack.c.b16 %v4509, %v4501
    %v4934 = vpack.c.b16 %v4518, %v4510
    %v4935 = vpack.c.b16 %v4519, %v4511
    %v4936 = vpack.c.b16 %v4520, %v4512
    %v4937 = vpack.c.b16 %v4521, %v4513
    %v4938 = vpack.c.b16 %v4522, %v4514
    %v4939 = vpack.c.b16 %v4523, %v4515
    %v4940 = vpack.c.b16 %v4524, %v4516
    %v4941 = vpack.c.b16 %v4525, %v4517
    %v4942 = vpack.c.b16 %v4534, %v4526
    %v4943 = vpack.c.b16 %v4535, %v4527
    %v4944 = vpack.c.b16 %v4536, %v4528
    %v4945 = vpack.c.b16 %v4537, %v4529
    %v4946 = vpack.c.b16 %v4538, %v4530
    %v4947 = vpack.c.b16 %v4539, %v4531
    %v4948 = vpack.c.b16 %v4540, %v4532
    %v4949 = vpack.c.b16 %v4541, %v4533
    %v4950 = vpack.c.b16 %v4550, %v4542
    %v4951 = vpack.c.b16 %v4551, %v4543
    %v4952 = vpack.c.b16 %v4552, %v4544
    %v4953 = vpack.c.b16 %v4553, %v4545
    %v4954 = vpack.c.b16 %v4554, %v4546
    %v4955 = vpack.c.b16 %v4555, %v4547
    %v4956 = vpack.c.b16 %v4556, %v4548
    %v4957 = vpack.c.b16 %v4557, %v4549
    %v4958 = vpack.c.b16 %v4566, %v4558
    %v4959 = vpack.c.b16 %v4567, %v4559
    %v4960 = vpack.c.b16 %v4568, %v4560
    %v4961 = vpack.c.b16 %v4569, %v4561
    %v4962 = vpack.c.b16 %v4570, %v4562
    %v4963 = vpack.c.b16 %v4571, %v4563
    %v4964 = vpack.c.b16 %v4572, %v4564
    %v4965 = vpack.c.b16 %v4573, %v4565
    %v4966 = vpack.c.b16 %v4582, %v4574
    %v4967 = vpack.c.b16 %v4583, %v4575
    %v4968 = vpack.c.b16 %v4584, %v4576
    %v4969 = vpack.c.b16 %v4585, %v4577
    %v4970 = vpack.c.b16 %v4586, %v4578
    %v4971 = vpack.c.b16 %v4587, %v4579
    %v4972 = vpack.c.b16 %v4588, %v4580
    %v4973 = vpack.c.b16 %v4589, %v4581
    %5358 = vmatpush.bf16.msra.mxu0 %v4646
    %5359 = vmatpush.bf16.msra.mxu0 %v4638
    %5360 = vmatpush.bf16.msra.mxu0 %v4630
    %5361 = vmatpush.bf16.msra.mxu0 %v4622
    %5362 = vmatpush.bf16.msra.mxu0 %v4614
    %5363 = vmatpush.bf16.msra.mxu0 %v4606
    %5364 = vmatpush.bf16.msra.mxu0 %v4598
    %5365 = vmatpush.bf16.msra.mxu0 %v4590
    %5366 = vmatmul.bf16.gmra.mxu0 %v3018
    %v5367 = vpop.f32.mrf.mxu0
    %v5368 = vadd.f32 %v3422, %v5367
    %v5369 = vpop.f32.mrf.mxu0
    %v5370 = vadd.f32 %v3422, %v5369
    %5371 = vdwg.mxu0
    %5372 = vmatpush.bf16.msra.mxu0 %v4710
    %5373 = vmatpush.bf16.msra.mxu0 %v4702
    %5374 = vmatpush.bf16.msra.mxu0 %v4694
    %5375 = vmatpush.bf16.msra.mxu0 %v4686
    %5376 = vmatpush.bf16.msra.mxu0 %v4678
    %5377 = vmatpush.bf16.msra.mxu0 %v4670
    %5378 = vmatpush.bf16.msra.mxu0 %v4662
    %5379 = vmatpush.bf16.msra.mxu0 %v4654
    %5380 = vmatmul.bf16.gmra.mxu0 %v3019
    %v5381 = vpop.f32.mrf.mxu0
    %v5382 = vadd.f32 %v5368, %v5381
    %v5383 = vpop.f32.mrf.mxu0
    %v5384 = vadd.f32 %v5370, %v5383
    %5385 = vdwg.mxu0
    %5386 = vmatpush.bf16.msra.mxu0 %v4774
    %5387 = vmatpush.bf16.msra.mxu0 %v4766
    %5388 = vmatpush.bf16.msra.mxu0 %v4758
    %5389 = vmatpush.bf16.msra.mxu0 %v4750
    %5390 = vmatpush.bf16.msra.mxu0 %v4742
    %5391 = vmatpush.bf16.msra.mxu0 %v4734
    %5392 = vmatpush.bf16.msra.mxu0 %v4726
    %5393 = vmatpush.bf16.msra.mxu0 %v4718
    %5394 = vmatmul.bf16.gmra.mxu0 %v3020
    %v5395 = vpop.f32.mrf.mxu0
    %v5396 = vadd.f32 %v5382, %v5395
    %v5397 = vpop.f32.mrf.mxu0
    %v5398 = vadd.f32 %v5384, %v5397
    %5399 = vdwg.mxu0
    %5400 = vmatpush.bf16.msra.mxu0 %v4838
    %5401 = vmatpush.bf16.msra.mxu0 %v4830
    %5402 = vmatpush.bf16.msra.mxu0 %v4822
    %5403 = vmatpush.bf16.msra.mxu0 %v4814
    %5404 = vmatpush.bf16.msra.mxu0 %v4806
    %5405 = vmatpush.bf16.msra.mxu0 %v4798
    %5406 = vmatpush.bf16.msra.mxu0 %v4790
    %5407 = vmatpush.bf16.msra.mxu0 %v4782
    %5408 = vmatmul.bf16.gmra.mxu0 %v3021
    %v5409 = vpop.f32.mrf.mxu0
    %v5410 = vadd.f32 %v5396, %v5409
    %v5411 = vpop.f32.mrf.mxu0
    %v5412 = vadd.f32 %v5398, %v5411
    %5413 = vdwg.mxu0
    %5414 = vmatpush.bf16.msra.mxu0 %v4902
    %5415 = vmatpush.bf16.msra.mxu0 %v4894
    %5416 = vmatpush.bf16.msra.mxu0 %v4886
    %5417 = vmatpush.bf16.msra.mxu0 %v4878
    %5418 = vmatpush.bf16.msra.mxu0 %v4870
    %5419 = vmatpush.bf16.msra.mxu0 %v4862
    %5420 = vmatpush.bf16.msra.mxu0 %v4854
    %5421 = vmatpush.bf16.msra.mxu0 %v4846
    %5422 = vmatmul.bf16.gmra.mxu0 %v3022
    %v5423 = vpop.f32.mrf.mxu0
    %v5424 = vadd.f32 %v5410, %v5423
    %v5425 = vpop.f32.mrf.mxu0
    %v5426 = vadd.f32 %v5412, %v5425
    %5427 = vdwg.mxu0
    %5428 = vmatpush.bf16.msra.mxu0 %v4966
    %5429 = vmatpush.bf16.msra.mxu0 %v4958
    %5430 = vmatpush.bf16.msra.mxu0 %v4950
    %5431 = vmatpush.bf16.msra.mxu0 %v4942
    %5432 = vmatpush.bf16.msra.mxu0 %v4934
    %5433 = vmatpush.bf16.msra.mxu0 %v4926
    %5434 = vmatpush.bf16.msra.mxu0 %v4918
    %5435 = vmatpush.bf16.msra.mxu0 %v4910
    %5436 = vmatmul.bf16.gmra.mxu0 %v3023
    %v5437 = vpop.f32.mrf.mxu0
    %v5438 = vadd.f32 %v5424, %v5437
    %v5439 = vpop.f32.mrf.mxu0
    %v5440 = vadd.f32 %v5426, %v5439
    %5441 = vdwg.mxu0
    %5442 = vmatpush.bf16.msra.mxu0 %v4647
    %5443 = vmatpush.bf16.msra.mxu0 %v4639
    %5444 = vmatpush.bf16.msra.mxu0 %v4631
    %5445 = vmatpush.bf16.msra.mxu0 %v4623
    %5446 = vmatpush.bf16.msra.mxu0 %v4615
    %5447 = vmatpush.bf16.msra.mxu0 %v4607
    %5448 = vmatpush.bf16.msra.mxu0 %v4599
    %5449 = vmatpush.bf16.msra.mxu0 %v4591
    %5450 = vmatmul.bf16.gmra.mxu0 %v3018
    %v5451 = vpop.f32.mrf.mxu0
    %v5452 = vadd.f32 %v3423, %v5451
    %v5453 = vpop.f32.mrf.mxu0
    %v5454 = vadd.f32 %v3423, %v5453
    %5455 = vdwg.mxu0
    %5456 = vmatpush.bf16.msra.mxu0 %v4711
    %5457 = vmatpush.bf16.msra.mxu0 %v4703
    %5458 = vmatpush.bf16.msra.mxu0 %v4695
    %5459 = vmatpush.bf16.msra.mxu0 %v4687
    %5460 = vmatpush.bf16.msra.mxu0 %v4679
    %5461 = vmatpush.bf16.msra.mxu0 %v4671
    %5462 = vmatpush.bf16.msra.mxu0 %v4663
    %5463 = vmatpush.bf16.msra.mxu0 %v4655
    %5464 = vmatmul.bf16.gmra.mxu0 %v3019
    %v5465 = vpop.f32.mrf.mxu0
    %v5466 = vadd.f32 %v5452, %v5465
    %v5467 = vpop.f32.mrf.mxu0
    %v5468 = vadd.f32 %v5454, %v5467
    %5469 = vdwg.mxu0
    %5470 = vmatpush.bf16.msra.mxu0 %v4775
    %5471 = vmatpush.bf16.msra.mxu0 %v4767
    %5472 = vmatpush.bf16.msra.mxu0 %v4759
    %5473 = vmatpush.bf16.msra.mxu0 %v4751
    %5474 = vmatpush.bf16.msra.mxu0 %v4743
    %5475 = vmatpush.bf16.msra.mxu0 %v4735
    %5476 = vmatpush.bf16.msra.mxu0 %v4727
    %5477 = vmatpush.bf16.msra.mxu0 %v4719
    %5478 = vmatmul.bf16.gmra.mxu0 %v3020
    %v5479 = vpop.f32.mrf.mxu0
    %v5480 = vadd.f32 %v5466, %v5479
    %v5481 = vpop.f32.mrf.mxu0
    %v5482 = vadd.f32 %v5468, %v5481
    %5483 = vdwg.mxu0
    %5484 = vmatpush.bf16.msra.mxu0 %v4839
    %5485 = vmatpush.bf16.msra.mxu0 %v4831
    %5486 = vmatpush.bf16.msra.mxu0 %v4823
    %5487 = vmatpush.bf16.msra.mxu0 %v4815
    %5488 = vmatpush.bf16.msra.mxu0 %v4807
    %5489 = vmatpush.bf16.msra.mxu0 %v4799
    %5490 = vmatpush.bf16.msra.mxu0 %v4791
    %5491 = vmatpush.bf16.msra.mxu0 %v4783
    %5492 = vmatmul.bf16.gmra.mxu0 %v3021
    %v5493 = vpop.f32.mrf.mxu0
    %v5494 = vadd.f32 %v5480, %v5493
    %v5495 = vpop.f32.mrf.mxu0
    %v5496 = vadd.f32 %v5482, %v5495
    %5497 = vdwg.mxu0
    %5498 = vmatpush.bf16.msra.mxu0 %v4903
    %5499 = vmatpush.bf16.msra.mxu0 %v4895
    %5500 = vmatpush.bf16.msra.mxu0 %v4887
    %5501 = vmatpush.bf16.msra.mxu0 %v4879
    %5502 = vmatpush.bf16.msra.mxu0 %v4871
    %5503 = vmatpush.bf16.msra.mxu0 %v4863
    %5504 = vmatpush.bf16.msra.mxu0 %v4855
    %5505 = vmatpush.bf16.msra.mxu0 %v4847
    %5506 = vmatmul.bf16.gmra.mxu0 %v3022
    %v5507 = vpop.f32.mrf.mxu0
    %v5508 = vadd.f32 %v5494, %v5507
    %v5509 = vpop.f32.mrf.mxu0
    %v5510 = vadd.f32 %v5496, %v5509
    %5511 = vdwg.mxu0
    %5512 = vmatpush.bf16.msra.mxu0 %v4967
    %5513 = vmatpush.bf16.msra.mxu0 %v4959
    %5514 = vmatpush.bf16.msra.mxu0 %v4951
    %5515 = vmatpush.bf16.msra.mxu0 %v4943
    %5516 = vmatpush.bf16.msra.mxu0 %v4935
    %5517 = vmatpush.bf16.msra.mxu0 %v4927
    %5518 = vmatpush.bf16.msra.mxu0 %v4919
    %5519 = vmatpush.bf16.msra.mxu0 %v4911
    %5520 = vmatmul.bf16.gmra.mxu0 %v3023
    %v5521 = vpop.f32.mrf.mxu0
    %v5522 = vadd.f32 %v5508, %v5521
    %v5523 = vpop.f32.mrf.mxu0
    %v5524 = vadd.f32 %v5510, %v5523
    %5525 = vdwg.mxu0
    %5526 = vmatpush.bf16.msra.mxu0 %v4648
    %5527 = vmatpush.bf16.msra.mxu0 %v4640
    %5528 = vmatpush.bf16.msra.mxu0 %v4632
    %5529 = vmatpush.bf16.msra.mxu0 %v4624
    %5530 = vmatpush.bf16.msra.mxu0 %v4616
    %5531 = vmatpush.bf16.msra.mxu0 %v4608
    %5532 = vmatpush.bf16.msra.mxu0 %v4600
    %5533 = vmatpush.bf16.msra.mxu0 %v4592
    %5534 = vmatmul.bf16.gmra.mxu0 %v3018
    %v5535 = vpop.f32.mrf.mxu0
    %v5536 = vadd.f32 %v3424, %v5535
    %v5537 = vpop.f32.mrf.mxu0
    %v5538 = vadd.f32 %v3424, %v5537
    %5539 = vdwg.mxu0
    %5540 = vmatpush.bf16.msra.mxu0 %v4712
    %5541 = vmatpush.bf16.msra.mxu0 %v4704
    %5542 = vmatpush.bf16.msra.mxu0 %v4696
    %5543 = vmatpush.bf16.msra.mxu0 %v4688
    %5544 = vmatpush.bf16.msra.mxu0 %v4680
    %5545 = vmatpush.bf16.msra.mxu0 %v4672
    %5546 = vmatpush.bf16.msra.mxu0 %v4664
    %5547 = vmatpush.bf16.msra.mxu0 %v4656
    %5548 = vmatmul.bf16.gmra.mxu0 %v3019
    %v5549 = vpop.f32.mrf.mxu0
    %v5550 = vadd.f32 %v5536, %v5549
    %v5551 = vpop.f32.mrf.mxu0
    %v5552 = vadd.f32 %v5538, %v5551
    %5553 = vdwg.mxu0
    %5554 = vmatpush.bf16.msra.mxu0 %v4776
    %5555 = vmatpush.bf16.msra.mxu0 %v4768
    %5556 = vmatpush.bf16.msra.mxu0 %v4760
    %5557 = vmatpush.bf16.msra.mxu0 %v4752
    %5558 = vmatpush.bf16.msra.mxu0 %v4744
    %5559 = vmatpush.bf16.msra.mxu0 %v4736
    %5560 = vmatpush.bf16.msra.mxu0 %v4728
    %5561 = vmatpush.bf16.msra.mxu0 %v4720
    %5562 = vmatmul.bf16.gmra.mxu0 %v3020
    %v5563 = vpop.f32.mrf.mxu0
    %v5564 = vadd.f32 %v5550, %v5563
    %v5565 = vpop.f32.mrf.mxu0
    %v5566 = vadd.f32 %v5552, %v5565
    %5567 = vdwg.mxu0
    %5568 = vmatpush.bf16.msra.mxu0 %v4840
    %5569 = vmatpush.bf16.msra.mxu0 %v4832
    %5570 = vmatpush.bf16.msra.mxu0 %v4824
    %5571 = vmatpush.bf16.msra.mxu0 %v4816
    %5572 = vmatpush.bf16.msra.mxu0 %v4808
    %5573 = vmatpush.bf16.msra.mxu0 %v4800
    %5574 = vmatpush.bf16.msra.mxu0 %v4792
    %5575 = vmatpush.bf16.msra.mxu0 %v4784
    %5576 = vmatmul.bf16.gmra.mxu0 %v3021
    %v5577 = vpop.f32.mrf.mxu0
    %v5578 = vadd.f32 %v5564, %v5577
    %v5579 = vpop.f32.mrf.mxu0
    %v5580 = vadd.f32 %v5566, %v5579
    %5581 = vdwg.mxu0
    %5582 = vmatpush.bf16.msra.mxu0 %v4904
    %5583 = vmatpush.bf16.msra.mxu0 %v4896
    %5584 = vmatpush.bf16.msra.mxu0 %v4888
    %5585 = vmatpush.bf16.msra.mxu0 %v4880
    %5586 = vmatpush.bf16.msra.mxu0 %v4872
    %5587 = vmatpush.bf16.msra.mxu0 %v4864
    %5588 = vmatpush.bf16.msra.mxu0 %v4856
    %5589 = vmatpush.bf16.msra.mxu0 %v4848
    %5590 = vmatmul.bf16.gmra.mxu0 %v3022
    %v5591 = vpop.f32.mrf.mxu0
    %v5592 = vadd.f32 %v5578, %v5591
    %v5593 = vpop.f32.mrf.mxu0
    %v5594 = vadd.f32 %v5580, %v5593
    %5595 = vdwg.mxu0
    %5596 = vmatpush.bf16.msra.mxu0 %v4968
    %5597 = vmatpush.bf16.msra.mxu0 %v4960
    %5598 = vmatpush.bf16.msra.mxu0 %v4952
    %5599 = vmatpush.bf16.msra.mxu0 %v4944
    %5600 = vmatpush.bf16.msra.mxu0 %v4936
    %5601 = vmatpush.bf16.msra.mxu0 %v4928
    %5602 = vmatpush.bf16.msra.mxu0 %v4920
    %5603 = vmatpush.bf16.msra.mxu0 %v4912
    %5604 = vmatmul.bf16.gmra.mxu0 %v3023
    %v5605 = vpop.f32.mrf.mxu0
    %v5606 = vadd.f32 %v5592, %v5605
    %v5607 = vpop.f32.mrf.mxu0
    %v5608 = vadd.f32 %v5594, %v5607
    %5609 = vdwg.mxu0
    %5610 = vmatpush.bf16.msra.mxu0 %v4649
    %5611 = vmatpush.bf16.msra.mxu0 %v4641
    %5612 = vmatpush.bf16.msra.mxu0 %v4633
    %5613 = vmatpush.bf16.msra.mxu0 %v4625
    %5614 = vmatpush.bf16.msra.mxu0 %v4617
    %5615 = vmatpush.bf16.msra.mxu0 %v4609
    %5616 = vmatpush.bf16.msra.mxu0 %v4601
    %5617 = vmatpush.bf16.msra.mxu0 %v4593
    %5618 = vmatmul.bf16.gmra.mxu0 %v3018
    %v5619 = vpop.f32.mrf.mxu0
    %v5620 = vadd.f32 %v3425, %v5619
    %v5621 = vpop.f32.mrf.mxu0
    %v5622 = vadd.f32 %v3425, %v5621
    %5623 = vdwg.mxu0
    %5624 = vmatpush.bf16.msra.mxu0 %v4713
    %5625 = vmatpush.bf16.msra.mxu0 %v4705
    %5626 = vmatpush.bf16.msra.mxu0 %v4697
    %5627 = vmatpush.bf16.msra.mxu0 %v4689
    %5628 = vmatpush.bf16.msra.mxu0 %v4681
    %5629 = vmatpush.bf16.msra.mxu0 %v4673
    %5630 = vmatpush.bf16.msra.mxu0 %v4665
    %5631 = vmatpush.bf16.msra.mxu0 %v4657
    %5632 = vmatmul.bf16.gmra.mxu0 %v3019
    %v5633 = vpop.f32.mrf.mxu0
    %v5634 = vadd.f32 %v5620, %v5633
    %v5635 = vpop.f32.mrf.mxu0
    %v5636 = vadd.f32 %v5622, %v5635
    %5637 = vdwg.mxu0
    %5638 = vmatpush.bf16.msra.mxu0 %v4777
    %5639 = vmatpush.bf16.msra.mxu0 %v4769
    %5640 = vmatpush.bf16.msra.mxu0 %v4761
    %5641 = vmatpush.bf16.msra.mxu0 %v4753
    %5642 = vmatpush.bf16.msra.mxu0 %v4745
    %5643 = vmatpush.bf16.msra.mxu0 %v4737
    %5644 = vmatpush.bf16.msra.mxu0 %v4729
    %5645 = vmatpush.bf16.msra.mxu0 %v4721
    %5646 = vmatmul.bf16.gmra.mxu0 %v3020
    %v5647 = vpop.f32.mrf.mxu0
    %v5648 = vadd.f32 %v5634, %v5647
    %v5649 = vpop.f32.mrf.mxu0
    %v5650 = vadd.f32 %v5636, %v5649
    %5651 = vdwg.mxu0
    %5652 = vmatpush.bf16.msra.mxu0 %v4841
    %5653 = vmatpush.bf16.msra.mxu0 %v4833
    %5654 = vmatpush.bf16.msra.mxu0 %v4825
    %5655 = vmatpush.bf16.msra.mxu0 %v4817
    %5656 = vmatpush.bf16.msra.mxu0 %v4809
    %5657 = vmatpush.bf16.msra.mxu0 %v4801
    %5658 = vmatpush.bf16.msra.mxu0 %v4793
    %5659 = vmatpush.bf16.msra.mxu0 %v4785
    %5660 = vmatmul.bf16.gmra.mxu0 %v3021
    %v5661 = vpop.f32.mrf.mxu0
    %v5662 = vadd.f32 %v5648, %v5661
    %v5663 = vpop.f32.mrf.mxu0
    %v5664 = vadd.f32 %v5650, %v5663
    %5665 = vdwg.mxu0
    %5666 = vmatpush.bf16.msra.mxu0 %v4905
    %5667 = vmatpush.bf16.msra.mxu0 %v4897
    %5668 = vmatpush.bf16.msra.mxu0 %v4889
    %5669 = vmatpush.bf16.msra.mxu0 %v4881
    %5670 = vmatpush.bf16.msra.mxu0 %v4873
    %5671 = vmatpush.bf16.msra.mxu0 %v4865
    %5672 = vmatpush.bf16.msra.mxu0 %v4857
    %5673 = vmatpush.bf16.msra.mxu0 %v4849
    %5674 = vmatmul.bf16.gmra.mxu0 %v3022
    %v5675 = vpop.f32.mrf.mxu0
    %v5676 = vadd.f32 %v5662, %v5675
    %v5677 = vpop.f32.mrf.mxu0
    %v5678 = vadd.f32 %v5664, %v5677
    %5679 = vdwg.mxu0
    %5680 = vmatpush.bf16.msra.mxu0 %v4969
    %5681 = vmatpush.bf16.msra.mxu0 %v4961
    %5682 = vmatpush.bf16.msra.mxu0 %v4953
    %5683 = vmatpush.bf16.msra.mxu0 %v4945
    %5684 = vmatpush.bf16.msra.mxu0 %v4937
    %5685 = vmatpush.bf16.msra.mxu0 %v4929
    %5686 = vmatpush.bf16.msra.mxu0 %v4921
    %5687 = vmatpush.bf16.msra.mxu0 %v4913
    %5688 = vmatmul.bf16.gmra.mxu0 %v3023
    %v5689 = vpop.f32.mrf.mxu0
    %v5690 = vadd.f32 %v5676, %v5689
    %v5691 = vpop.f32.mrf.mxu0
    %v5692 = vadd.f32 %v5678, %v5691
    %5693 = vdwg.mxu0
    %5694 = vmatpush.bf16.msra.mxu0 %v4650
    %5695 = vmatpush.bf16.msra.mxu0 %v4642
    %5696 = vmatpush.bf16.msra.mxu0 %v4634
    %5697 = vmatpush.bf16.msra.mxu0 %v4626
    %5698 = vmatpush.bf16.msra.mxu0 %v4618
    %5699 = vmatpush.bf16.msra.mxu0 %v4610
    %5700 = vmatpush.bf16.msra.mxu0 %v4602
    %5701 = vmatpush.bf16.msra.mxu0 %v4594
    %5702 = vmatmul.bf16.gmra.mxu0 %v3018
    %v5703 = vpop.f32.mrf.mxu0
    %v5704 = vadd.f32 %v3426, %v5703
    %v5705 = vpop.f32.mrf.mxu0
    %v5706 = vadd.f32 %v3426, %v5705
    %5707 = vdwg.mxu0
    %5708 = vmatpush.bf16.msra.mxu0 %v4714
    %5709 = vmatpush.bf16.msra.mxu0 %v4706
    %5710 = vmatpush.bf16.msra.mxu0 %v4698
    %5711 = vmatpush.bf16.msra.mxu0 %v4690
    %5712 = vmatpush.bf16.msra.mxu0 %v4682
    %5713 = vmatpush.bf16.msra.mxu0 %v4674
    %5714 = vmatpush.bf16.msra.mxu0 %v4666
    %5715 = vmatpush.bf16.msra.mxu0 %v4658
    %5716 = vmatmul.bf16.gmra.mxu0 %v3019
    %v5717 = vpop.f32.mrf.mxu0
    %v5718 = vadd.f32 %v5704, %v5717
    %v5719 = vpop.f32.mrf.mxu0
    %v5720 = vadd.f32 %v5706, %v5719
    %5721 = vdwg.mxu0
    %5722 = vmatpush.bf16.msra.mxu0 %v4778
    %5723 = vmatpush.bf16.msra.mxu0 %v4770
    %5724 = vmatpush.bf16.msra.mxu0 %v4762
    %5725 = vmatpush.bf16.msra.mxu0 %v4754
    %5726 = vmatpush.bf16.msra.mxu0 %v4746
    %5727 = vmatpush.bf16.msra.mxu0 %v4738
    %5728 = vmatpush.bf16.msra.mxu0 %v4730
    %5729 = vmatpush.bf16.msra.mxu0 %v4722
    %5730 = vmatmul.bf16.gmra.mxu0 %v3020
    %v5731 = vpop.f32.mrf.mxu0
    %v5732 = vadd.f32 %v5718, %v5731
    %v5733 = vpop.f32.mrf.mxu0
    %v5734 = vadd.f32 %v5720, %v5733
    %5735 = vdwg.mxu0
    %5736 = vmatpush.bf16.msra.mxu0 %v4842
    %5737 = vmatpush.bf16.msra.mxu0 %v4834
    %5738 = vmatpush.bf16.msra.mxu0 %v4826
    %5739 = vmatpush.bf16.msra.mxu0 %v4818
    %5740 = vmatpush.bf16.msra.mxu0 %v4810
    %5741 = vmatpush.bf16.msra.mxu0 %v4802
    %5742 = vmatpush.bf16.msra.mxu0 %v4794
    %5743 = vmatpush.bf16.msra.mxu0 %v4786
    %5744 = vmatmul.bf16.gmra.mxu0 %v3021
    %v5745 = vpop.f32.mrf.mxu0
    %v5746 = vadd.f32 %v5732, %v5745
    %v5747 = vpop.f32.mrf.mxu0
    %v5748 = vadd.f32 %v5734, %v5747
    %5749 = vdwg.mxu0
    %5750 = vmatpush.bf16.msra.mxu0 %v4906
    %5751 = vmatpush.bf16.msra.mxu0 %v4898
    %5752 = vmatpush.bf16.msra.mxu0 %v4890
    %5753 = vmatpush.bf16.msra.mxu0 %v4882
    %5754 = vmatpush.bf16.msra.mxu0 %v4874
    %5755 = vmatpush.bf16.msra.mxu0 %v4866
    %5756 = vmatpush.bf16.msra.mxu0 %v4858
    %5757 = vmatpush.bf16.msra.mxu0 %v4850
    %5758 = vmatmul.bf16.gmra.mxu0 %v3022
    %v5759 = vpop.f32.mrf.mxu0
    %v5760 = vadd.f32 %v5746, %v5759
    %v5761 = vpop.f32.mrf.mxu0
    %v5762 = vadd.f32 %v5748, %v5761
    %5763 = vdwg.mxu0
    %5764 = vmatpush.bf16.msra.mxu0 %v4970
    %5765 = vmatpush.bf16.msra.mxu0 %v4962
    %5766 = vmatpush.bf16.msra.mxu0 %v4954
    %5767 = vmatpush.bf16.msra.mxu0 %v4946
    %5768 = vmatpush.bf16.msra.mxu0 %v4938
    %5769 = vmatpush.bf16.msra.mxu0 %v4930
    %5770 = vmatpush.bf16.msra.mxu0 %v4922
    %5771 = vmatpush.bf16.msra.mxu0 %v4914
    %5772 = vmatmul.bf16.gmra.mxu0 %v3023
    %v5773 = vpop.f32.mrf.mxu0
    %v5774 = vadd.f32 %v5760, %v5773
    %v5775 = vpop.f32.mrf.mxu0
    %v5776 = vadd.f32 %v5762, %v5775
    %5777 = vdwg.mxu0
    %5778 = vmatpush.bf16.msra.mxu0 %v4651
    %5779 = vmatpush.bf16.msra.mxu0 %v4643
    %5780 = vmatpush.bf16.msra.mxu0 %v4635
    %5781 = vmatpush.bf16.msra.mxu0 %v4627
    %5782 = vmatpush.bf16.msra.mxu0 %v4619
    %5783 = vmatpush.bf16.msra.mxu0 %v4611
    %5784 = vmatpush.bf16.msra.mxu0 %v4603
    %5785 = vmatpush.bf16.msra.mxu0 %v4595
    %5786 = vmatmul.bf16.gmra.mxu0 %v3018
    %v5787 = vpop.f32.mrf.mxu0
    %v5788 = vadd.f32 %v3427, %v5787
    %v5789 = vpop.f32.mrf.mxu0
    %v5790 = vadd.f32 %v3427, %v5789
    %5791 = vdwg.mxu0
    %5792 = vmatpush.bf16.msra.mxu0 %v4715
    %5793 = vmatpush.bf16.msra.mxu0 %v4707
    %5794 = vmatpush.bf16.msra.mxu0 %v4699
    %5795 = vmatpush.bf16.msra.mxu0 %v4691
    %5796 = vmatpush.bf16.msra.mxu0 %v4683
    %5797 = vmatpush.bf16.msra.mxu0 %v4675
    %5798 = vmatpush.bf16.msra.mxu0 %v4667
    %5799 = vmatpush.bf16.msra.mxu0 %v4659
    %5800 = vmatmul.bf16.gmra.mxu0 %v3019
    %v5801 = vpop.f32.mrf.mxu0
    %v5802 = vadd.f32 %v5788, %v5801
    %v5803 = vpop.f32.mrf.mxu0
    %v5804 = vadd.f32 %v5790, %v5803
    %5805 = vdwg.mxu0
    %5806 = vmatpush.bf16.msra.mxu0 %v4779
    %5807 = vmatpush.bf16.msra.mxu0 %v4771
    %5808 = vmatpush.bf16.msra.mxu0 %v4763
    %5809 = vmatpush.bf16.msra.mxu0 %v4755
    %5810 = vmatpush.bf16.msra.mxu0 %v4747
    %5811 = vmatpush.bf16.msra.mxu0 %v4739
    %5812 = vmatpush.bf16.msra.mxu0 %v4731
    %5813 = vmatpush.bf16.msra.mxu0 %v4723
    %5814 = vmatmul.bf16.gmra.mxu0 %v3020
    %v5815 = vpop.f32.mrf.mxu0
    %v5816 = vadd.f32 %v5802, %v5815
    %v5817 = vpop.f32.mrf.mxu0
    %v5818 = vadd.f32 %v5804, %v5817
    %5819 = vdwg.mxu0
    %5820 = vmatpush.bf16.msra.mxu0 %v4843
    %5821 = vmatpush.bf16.msra.mxu0 %v4835
    %5822 = vmatpush.bf16.msra.mxu0 %v4827
    %5823 = vmatpush.bf16.msra.mxu0 %v4819
    %5824 = vmatpush.bf16.msra.mxu0 %v4811
    %5825 = vmatpush.bf16.msra.mxu0 %v4803
    %5826 = vmatpush.bf16.msra.mxu0 %v4795
    %5827 = vmatpush.bf16.msra.mxu0 %v4787
    %5828 = vmatmul.bf16.gmra.mxu0 %v3021
    %v5829 = vpop.f32.mrf.mxu0
    %v5830 = vadd.f32 %v5816, %v5829
    %v5831 = vpop.f32.mrf.mxu0
    %v5832 = vadd.f32 %v5818, %v5831
    %5833 = vdwg.mxu0
    %5834 = vmatpush.bf16.msra.mxu0 %v4907
    %5835 = vmatpush.bf16.msra.mxu0 %v4899
    %5836 = vmatpush.bf16.msra.mxu0 %v4891
    %5837 = vmatpush.bf16.msra.mxu0 %v4883
    %5838 = vmatpush.bf16.msra.mxu0 %v4875
    %5839 = vmatpush.bf16.msra.mxu0 %v4867
    %5840 = vmatpush.bf16.msra.mxu0 %v4859
    %5841 = vmatpush.bf16.msra.mxu0 %v4851
    %5842 = vmatmul.bf16.gmra.mxu0 %v3022
    %v5843 = vpop.f32.mrf.mxu0
    %v5844 = vadd.f32 %v5830, %v5843
    %v5845 = vpop.f32.mrf.mxu0
    %v5846 = vadd.f32 %v5832, %v5845
    %5847 = vdwg.mxu0
    %5848 = vmatpush.bf16.msra.mxu0 %v4971
    %5849 = vmatpush.bf16.msra.mxu0 %v4963
    %5850 = vmatpush.bf16.msra.mxu0 %v4955
    %5851 = vmatpush.bf16.msra.mxu0 %v4947
    %5852 = vmatpush.bf16.msra.mxu0 %v4939
    %5853 = vmatpush.bf16.msra.mxu0 %v4931
    %5854 = vmatpush.bf16.msra.mxu0 %v4923
    %5855 = vmatpush.bf16.msra.mxu0 %v4915
    %5856 = vmatmul.bf16.gmra.mxu0 %v3023
    %v5857 = vpop.f32.mrf.mxu0
    %v5858 = vadd.f32 %v5844, %v5857
    %v5859 = vpop.f32.mrf.mxu0
    %v5860 = vadd.f32 %v5846, %v5859
    %5861 = vdwg.mxu0
    %5862 = vmatpush.bf16.msra.mxu0 %v4652
    %5863 = vmatpush.bf16.msra.mxu0 %v4644
    %5864 = vmatpush.bf16.msra.mxu0 %v4636
    %5865 = vmatpush.bf16.msra.mxu0 %v4628
    %5866 = vmatpush.bf16.msra.mxu0 %v4620
    %5867 = vmatpush.bf16.msra.mxu0 %v4612
    %5868 = vmatpush.bf16.msra.mxu0 %v4604
    %5869 = vmatpush.bf16.msra.mxu0 %v4596
    %5870 = vmatmul.bf16.gmra.mxu0 %v3018
    %v5871 = vpop.f32.mrf.mxu0
    %v5872 = vadd.f32 %v3428, %v5871
    %v5873 = vpop.f32.mrf.mxu0
    %v5874 = vadd.f32 %v3428, %v5873
    %5875 = vdwg.mxu0
    %5876 = vmatpush.bf16.msra.mxu0 %v4716
    %5877 = vmatpush.bf16.msra.mxu0 %v4708
    %5878 = vmatpush.bf16.msra.mxu0 %v4700
    %5879 = vmatpush.bf16.msra.mxu0 %v4692
    %5880 = vmatpush.bf16.msra.mxu0 %v4684
    %5881 = vmatpush.bf16.msra.mxu0 %v4676
    %5882 = vmatpush.bf16.msra.mxu0 %v4668
    %5883 = vmatpush.bf16.msra.mxu0 %v4660
    %5884 = vmatmul.bf16.gmra.mxu0 %v3019
    %v5885 = vpop.f32.mrf.mxu0
    %v5886 = vadd.f32 %v5872, %v5885
    %v5887 = vpop.f32.mrf.mxu0
    %v5888 = vadd.f32 %v5874, %v5887
    %5889 = vdwg.mxu0
    %5890 = vmatpush.bf16.msra.mxu0 %v4780
    %5891 = vmatpush.bf16.msra.mxu0 %v4772
    %5892 = vmatpush.bf16.msra.mxu0 %v4764
    %5893 = vmatpush.bf16.msra.mxu0 %v4756
    %5894 = vmatpush.bf16.msra.mxu0 %v4748
    %5895 = vmatpush.bf16.msra.mxu0 %v4740
    %5896 = vmatpush.bf16.msra.mxu0 %v4732
    %5897 = vmatpush.bf16.msra.mxu0 %v4724
    %5898 = vmatmul.bf16.gmra.mxu0 %v3020
    %v5899 = vpop.f32.mrf.mxu0
    %v5900 = vadd.f32 %v5886, %v5899
    %v5901 = vpop.f32.mrf.mxu0
    %v5902 = vadd.f32 %v5888, %v5901
    %5903 = vdwg.mxu0
    %5904 = vmatpush.bf16.msra.mxu0 %v4844
    %5905 = vmatpush.bf16.msra.mxu0 %v4836
    %5906 = vmatpush.bf16.msra.mxu0 %v4828
    %5907 = vmatpush.bf16.msra.mxu0 %v4820
    %5908 = vmatpush.bf16.msra.mxu0 %v4812
    %5909 = vmatpush.bf16.msra.mxu0 %v4804
    %5910 = vmatpush.bf16.msra.mxu0 %v4796
    %5911 = vmatpush.bf16.msra.mxu0 %v4788
    %5912 = vmatmul.bf16.gmra.mxu0 %v3021
    %v5913 = vpop.f32.mrf.mxu0
    %v5914 = vadd.f32 %v5900, %v5913
    %v5915 = vpop.f32.mrf.mxu0
    %v5916 = vadd.f32 %v5902, %v5915
    %5917 = vdwg.mxu0
    %5918 = vmatpush.bf16.msra.mxu0 %v4908
    %5919 = vmatpush.bf16.msra.mxu0 %v4900
    %5920 = vmatpush.bf16.msra.mxu0 %v4892
    %5921 = vmatpush.bf16.msra.mxu0 %v4884
    %5922 = vmatpush.bf16.msra.mxu0 %v4876
    %5923 = vmatpush.bf16.msra.mxu0 %v4868
    %5924 = vmatpush.bf16.msra.mxu0 %v4860
    %5925 = vmatpush.bf16.msra.mxu0 %v4852
    %5926 = vmatmul.bf16.gmra.mxu0 %v3022
    %v5927 = vpop.f32.mrf.mxu0
    %v5928 = vadd.f32 %v5914, %v5927
    %v5929 = vpop.f32.mrf.mxu0
    %v5930 = vadd.f32 %v5916, %v5929
    %5931 = vdwg.mxu0
    %5932 = vmatpush.bf16.msra.mxu0 %v4972
    %5933 = vmatpush.bf16.msra.mxu0 %v4964
    %5934 = vmatpush.bf16.msra.mxu0 %v4956
    %5935 = vmatpush.bf16.msra.mxu0 %v4948
    %5936 = vmatpush.bf16.msra.mxu0 %v4940
    %5937 = vmatpush.bf16.msra.mxu0 %v4932
    %5938 = vmatpush.bf16.msra.mxu0 %v4924
    %5939 = vmatpush.bf16.msra.mxu0 %v4916
    %5940 = vmatmul.bf16.gmra.mxu0 %v3023
    %v5941 = vpop.f32.mrf.mxu0
    %v5942 = vadd.f32 %v5928, %v5941
    %v5943 = vpop.f32.mrf.mxu0
    %v5944 = vadd.f32 %v5930, %v5943
    %5945 = vdwg.mxu0
    %5946 = vmatpush.bf16.msra.mxu0 %v4653
    %5947 = vmatpush.bf16.msra.mxu0 %v4645
    %5948 = vmatpush.bf16.msra.mxu0 %v4637
    %5949 = vmatpush.bf16.msra.mxu0 %v4629
    %5950 = vmatpush.bf16.msra.mxu0 %v4621
    %5951 = vmatpush.bf16.msra.mxu0 %v4613
    %5952 = vmatpush.bf16.msra.mxu0 %v4605
    %5953 = vmatpush.bf16.msra.mxu0 %v4597
    %5954 = vmatmul.bf16.gmra.mxu0 %v3018
    %v5955 = vpop.f32.mrf.mxu0
    %v5956 = vadd.f32 %v3429, %v5955
    %v5957 = vpop.f32.mrf.mxu0
    %v5958 = vadd.f32 %v3429, %v5957
    %5959 = vdwg.mxu0
    %5960 = vmatpush.bf16.msra.mxu0 %v4717
    %5961 = vmatpush.bf16.msra.mxu0 %v4709
    %5962 = vmatpush.bf16.msra.mxu0 %v4701
    %5963 = vmatpush.bf16.msra.mxu0 %v4693
    %5964 = vmatpush.bf16.msra.mxu0 %v4685
    %5965 = vmatpush.bf16.msra.mxu0 %v4677
    %5966 = vmatpush.bf16.msra.mxu0 %v4669
    %5967 = vmatpush.bf16.msra.mxu0 %v4661
    %5968 = vmatmul.bf16.gmra.mxu0 %v3019
    %v5969 = vpop.f32.mrf.mxu0
    %v5970 = vadd.f32 %v5956, %v5969
    %v5971 = vpop.f32.mrf.mxu0
    %v5972 = vadd.f32 %v5958, %v5971
    %5973 = vdwg.mxu0
    %5974 = vmatpush.bf16.msra.mxu0 %v4781
    %5975 = vmatpush.bf16.msra.mxu0 %v4773
    %5976 = vmatpush.bf16.msra.mxu0 %v4765
    %5977 = vmatpush.bf16.msra.mxu0 %v4757
    %5978 = vmatpush.bf16.msra.mxu0 %v4749
    %5979 = vmatpush.bf16.msra.mxu0 %v4741
    %5980 = vmatpush.bf16.msra.mxu0 %v4733
    %5981 = vmatpush.bf16.msra.mxu0 %v4725
    %5982 = vmatmul.bf16.gmra.mxu0 %v3020
    %v5983 = vpop.f32.mrf.mxu0
    %v5984 = vadd.f32 %v5970, %v5983
    %v5985 = vpop.f32.mrf.mxu0
    %v5986 = vadd.f32 %v5972, %v5985
    %5987 = vdwg.mxu0
    %5988 = vmatpush.bf16.msra.mxu0 %v4845
    %5989 = vmatpush.bf16.msra.mxu0 %v4837
    %5990 = vmatpush.bf16.msra.mxu0 %v4829
    %5991 = vmatpush.bf16.msra.mxu0 %v4821
    %5992 = vmatpush.bf16.msra.mxu0 %v4813
    %5993 = vmatpush.bf16.msra.mxu0 %v4805
    %5994 = vmatpush.bf16.msra.mxu0 %v4797
    %5995 = vmatpush.bf16.msra.mxu0 %v4789
    %5996 = vmatmul.bf16.gmra.mxu0 %v3021
    %v5997 = vpop.f32.mrf.mxu0
    %v5998 = vadd.f32 %v5984, %v5997
    %v5999 = vpop.f32.mrf.mxu0
    %v6000 = vadd.f32 %v5986, %v5999
    %6001 = vdwg.mxu0
    %6002 = vmatpush.bf16.msra.mxu0 %v4909
    %6003 = vmatpush.bf16.msra.mxu0 %v4901
    %6004 = vmatpush.bf16.msra.mxu0 %v4893
    %6005 = vmatpush.bf16.msra.mxu0 %v4885
    %6006 = vmatpush.bf16.msra.mxu0 %v4877
    %6007 = vmatpush.bf16.msra.mxu0 %v4869
    %6008 = vmatpush.bf16.msra.mxu0 %v4861
    %6009 = vmatpush.bf16.msra.mxu0 %v4853
    %6010 = vmatmul.bf16.gmra.mxu0 %v3022
    %v6011 = vpop.f32.mrf.mxu0
    %v6012 = vadd.f32 %v5998, %v6011
    %v6013 = vpop.f32.mrf.mxu0
    %v6014 = vadd.f32 %v6000, %v6013
    %6015 = vdwg.mxu0
    %6016 = vmatpush.bf16.msra.mxu0 %v4973
    %6017 = vmatpush.bf16.msra.mxu0 %v4965
    %6018 = vmatpush.bf16.msra.mxu0 %v4957
    %6019 = vmatpush.bf16.msra.mxu0 %v4949
    %6020 = vmatpush.bf16.msra.mxu0 %v4941
    %6021 = vmatpush.bf16.msra.mxu0 %v4933
    %6022 = vmatpush.bf16.msra.mxu0 %v4925
    %6023 = vmatpush.bf16.msra.mxu0 %v4917
    %6024 = vmatmul.bf16.gmra.mxu0 %v3023
    %v6025 = vpop.f32.mrf.mxu0
    %v6026 = vadd.f32 %v6012, %v6025
    %v6027 = vpop.f32.mrf.mxu0
    %v6028 = vadd.f32 %v6014, %v6027
    %6029 = vdwg.mxu0
    %v6030 = vmul.f32 %v5438, %v5438
    %v6031 = vmul.f32 %v5522, %v5522
    %v6032 = vmul.f32 %v5606, %v5606
    %v6033 = vmul.f32 %v5690, %v5690
    %v6034 = vmul.f32 %v5774, %v5774
    %v6035 = vmul.f32 %v5858, %v5858
    %v6036 = vmul.f32 %v5942, %v5942
    %v6037 = vmul.f32 %v6026, %v6026
    %v6038 = vmul.f32 %v5440, %v5440
    %v6039 = vmul.f32 %v5524, %v5524
    %v6040 = vmul.f32 %v5608, %v5608
    %v6041 = vmul.f32 %v5692, %v5692
    %v6042 = vmul.f32 %v5776, %v5776
    %v6043 = vmul.f32 %v5860, %v5860
    %v6044 = vmul.f32 %v5944, %v5944
    %v6045 = vmul.f32 %v6028, %v6028
    %v6046 = vmul.f32 %v5438, %v6030
    %v6047 = vmul.f32 %v5522, %v6031
    %v6048 = vmul.f32 %v5606, %v6032
    %v6049 = vmul.f32 %v5690, %v6033
    %v6050 = vmul.f32 %v5774, %v6034
    %v6051 = vmul.f32 %v5858, %v6035
    %v6052 = vmul.f32 %v5942, %v6036
    %v6053 = vmul.f32 %v6026, %v6037
    %v6054 = vmul.f32 %v5440, %v6038
    %v6055 = vmul.f32 %v5524, %v6039
    %v6056 = vmul.f32 %v5608, %v6040
    %v6057 = vmul.f32 %v5692, %v6041
    %v6058 = vmul.f32 %v5776, %v6042
    %v6059 = vmul.f32 %v5860, %v6043
    %v6060 = vmul.f32 %v5944, %v6044
    %v6061 = vmul.f32 %v6028, %v6045
    %v6062 = vmul.f32 %v6046, 0.044715
    %v6063 = vmul.f32 %v6047, 0.044715
    %v6064 = vmul.f32 %v6048, 0.044715
    %v6065 = vmul.f32 %v6049, 0.044715
    %v6066 = vmul.f32 %v6050, 0.044715
    %v6067 = vmul.f32 %v6051, 0.044715
    %v6068 = vmul.f32 %v6052, 0.044715
    %v6069 = vmul.f32 %v6053, 0.044715
    %v6070 = vmul.f32 %v6054, 0.044715
    %v6071 = vmul.f32 %v6055, 0.044715
    %v6072 = vmul.f32 %v6056, 0.044715
    %v6073 = vmul.f32 %v6057, 0.044715
    %v6074 = vmul.f32 %v6058, 0.044715
    %v6075 = vmul.f32 %v6059, 0.044715
    %v6076 = vmul.f32 %v6060, 0.044715
    %v6077 = vmul.f32 %v6061, 0.044715
    %v6078 = vadd.f32 %v5438, %v6062
    %v6079 = vadd.f32 %v5522, %v6063
    %v6080 = vadd.f32 %v5606, %v6064
    %v6081 = vadd.f32 %v5690, %v6065
    %v6082 = vadd.f32 %v5774, %v6066
    %v6083 = vadd.f32 %v5858, %v6067
    %v6084 = vadd.f32 %v5942, %v6068
    %v6085 = vadd.f32 %v6026, %v6069
    %v6086 = vadd.f32 %v5440, %v6070
    %v6087 = vadd.f32 %v5524, %v6071
    %v6088 = vadd.f32 %v5608, %v6072
    %v6089 = vadd.f32 %v5692, %v6073
    %v6090 = vadd.f32 %v5776, %v6074
    %v6091 = vadd.f32 %v5860, %v6075
    %v6092 = vadd.f32 %v5944, %v6076
    %v6093 = vadd.f32 %v6028, %v6077
    %v6094 = vmul.f32 %v6078, 0.7978846
    %v6095 = vmul.f32 %v6079, 0.7978846
    %v6096 = vmul.f32 %v6080, 0.7978846
    %v6097 = vmul.f32 %v6081, 0.7978846
    %v6098 = vmul.f32 %v6082, 0.7978846
    %v6099 = vmul.f32 %v6083, 0.7978846
    %v6100 = vmul.f32 %v6084, 0.7978846
    %v6101 = vmul.f32 %v6085, 0.7978846
    %v6102 = vmul.f32 %v6086, 0.7978846
    %v6103 = vmul.f32 %v6087, 0.7978846
    %v6104 = vmul.f32 %v6088, 0.7978846
    %v6105 = vmul.f32 %v6089, 0.7978846
    %v6106 = vmul.f32 %v6090, 0.7978846
    %v6107 = vmul.f32 %v6091, 0.7978846
    %v6108 = vmul.f32 %v6092, 0.7978846
    %v6109 = vmul.f32 %v6093, 0.7978846
    %v6110 = vtanh.pop %v6094
    %v6111 = vtanh.pop %v6095
    %v6112 = vtanh.pop %v6096
    %v6113 = vtanh.pop %v6097
    %v6114 = vtanh.pop %v6098
    %v6115 = vtanh.pop %v6099
    %v6116 = vtanh.pop %v6100
    %v6117 = vtanh.pop %v6101
    %v6118 = vtanh.pop %v6102
    %v6119 = vtanh.pop %v6103
    %v6120 = vtanh.pop %v6104
    %v6121 = vtanh.pop %v6105
    %v6122 = vtanh.pop %v6106
    %v6123 = vtanh.pop %v6107
    %v6124 = vtanh.pop %v6108
    %v6125 = vtanh.pop %v6109
    %v6126 = vadd.f32 %v6110, 1.0
    %v6127 = vadd.f32 %v6111, 1.0
    %v6128 = vadd.f32 %v6112, 1.0
    %v6129 = vadd.f32 %v6113, 1.0
    %v6130 = vadd.f32 %v6114, 1.0
    %v6131 = vadd.f32 %v6115, 1.0
    %v6132 = vadd.f32 %v6116, 1.0
    %v6133 = vadd.f32 %v6117, 1.0
    %v6134 = vadd.f32 %v6118, 1.0
    %v6135 = vadd.f32 %v6119, 1.0
    %v6136 = vadd.f32 %v6120, 1.0
    %v6137 = vadd.f32 %v6121, 1.0
    %v6138 = vadd.f32 %v6122, 1.0
    %v6139 = vadd.f32 %v6123, 1.0
    %v6140 = vadd.f32 %v6124, 1.0
    %v6141 = vadd.f32 %v6125, 1.0
    %v6142 = vmul.f32 %v6126, 0.5
    %v6143 = vmul.f32 %v6127, 0.5
    %v6144 = vmul.f32 %v6128, 0.5
    %v6145 = vmul.f32 %v6129, 0.5
    %v6146 = vmul.f32 %v6130, 0.5
    %v6147 = vmul.f32 %v6131, 0.5
    %v6148 = vmul.f32 %v6132, 0.5
    %v6149 = vmul.f32 %v6133, 0.5
    %v6150 = vmul.f32 %v6134, 0.5
    %v6151 = vmul.f32 %v6135, 0.5
    %v6152 = vmul.f32 %v6136, 0.5
    %v6153 = vmul.f32 %v6137, 0.5
    %v6154 = vmul.f32 %v6138, 0.5
    %v6155 = vmul.f32 %v6139, 0.5
    %v6156 = vmul.f32 %v6140, 0.5
    %v6157 = vmul.f32 %v6141, 0.5
    %v6158 = vmul.f32 %v5438, %v6142
    %v6159 = vmul.f32 %v5522, %v6143
    %v6160 = vmul.f32 %v5606, %v6144
    %v6161 = vmul.f32 %v5690, %v6145
    %v6162 = vmul.f32 %v5774, %v6146
    %v6163 = vmul.f32 %v5858, %v6147
    %v6164 = vmul.f32 %v5942, %v6148
    %v6165 = vmul.f32 %v6026, %v6149
    %v6166 = vmul.f32 %v5440, %v6150
    %v6167 = vmul.f32 %v5524, %v6151
    %v6168 = vmul.f32 %v5608, %v6152
    %v6169 = vmul.f32 %v5692, %v6153
    %v6170 = vmul.f32 %v5776, %v6154
    %v6171 = vmul.f32 %v5860, %v6155
    %v6172 = vmul.f32 %v5944, %v6156
    %v6173 = vmul.f32 %v6028, %v6157
    %v6174 = vpack.c.bf16 %v6166, %v6158
    %v6175 = vpack.c.bf16 %v6167, %v6159
    %v6176 = vpack.c.bf16 %v6168, %v6160
    %v6177 = vpack.c.bf16 %v6169, %v6161
    %v6178 = vpack.c.bf16 %v6170, %v6162
    %v6179 = vpack.c.bf16 %v6171, %v6163
    %v6180 = vpack.c.bf16 %v6172, %v6164
    %v6181 = vpack.c.bf16 %v6173, %v6165
    %v6182 = vld [vmem:[#allocation19] sm:$0xf]
    %v6183 = vld [vmem:[#allocation19 + $0x4] sm:$0xf]
    %v6184 = vld [vmem:[#allocation19 + $0x8] sm:$0xf]
    %v6185 = vld [vmem:[#allocation19 + $0xc] sm:$0xf]
    %v6186 = vld [vmem:[#allocation19 + $0x10] sm:$0xf]
    %v6187 = vld [vmem:[#allocation19 + $0x14] sm:$0xf]
    %v6188 = vld [vmem:[#allocation19 + $0x18] sm:$0xf]
    %v6189 = vld [vmem:[#allocation19 + $0x1c] sm:$0xf]
    %v6190 = vld [vmem:[#allocation19 + $0x20] sm:$0xf]
    %v6191 = vld [vmem:[#allocation19 + $0x24] sm:$0xf]
    %v6192 = vld [vmem:[#allocation19 + $0x28] sm:$0xf]
    %v6193 = vld [vmem:[#allocation19 + $0x2c] sm:$0xf]
    %v6194 = vld [vmem:[#allocation19 + $0x30] sm:$0xf]
    %v6195 = vld [vmem:[#allocation19 + $0x34] sm:$0xf]
    %v6196 = vld [vmem:[#allocation19 + $0x38] sm:$0xf]
    %v6197 = vld [vmem:[#allocation19 + $0x3c] sm:$0xf]
    %v6198 = vld [vmem:[#allocation19 + $0x40] sm:$0xf]
    %v6199 = vld [vmem:[#allocation19 + $0x44] sm:$0xf]
    %v6200 = vld [vmem:[#allocation19 + $0x48] sm:$0xf]
    %v6201 = vld [vmem:[#allocation19 + $0x4c] sm:$0xf]
    %v6202 = vld [vmem:[#allocation19 + $0x50] sm:$0xf]
    %v6203 = vld [vmem:[#allocation19 + $0x54] sm:$0xf]
    %v6204 = vld [vmem:[#allocation19 + $0x58] sm:$0xf]
    %v6205 = vld [vmem:[#allocation19 + $0x5c] sm:$0xf]
    %v6206 = vld [vmem:[#allocation19 + $0x60] sm:$0xf]
    %v6207 = vld [vmem:[#allocation19 + $0x64] sm:$0xf]
    %v6208 = vld [vmem:[#allocation19 + $0x68] sm:$0xf]
    %v6209 = vld [vmem:[#allocation19 + $0x6c] sm:$0xf]
    %v6210 = vld [vmem:[#allocation19 + $0x70] sm:$0xf]
    %v6211 = vld [vmem:[#allocation19 + $0x74] sm:$0xf]
    %v6212 = vld [vmem:[#allocation19 + $0x78] sm:$0xf]
    %v6213 = vld [vmem:[#allocation19 + $0x7c] sm:$0xf]
    %v6214 = vld [vmem:[#allocation19 + $0x80] sm:$0xf]
    %v6215 = vld [vmem:[#allocation19 + $0x84] sm:$0xf]
    %v6216 = vld [vmem:[#allocation19 + $0x88] sm:$0xf]
    %v6217 = vld [vmem:[#allocation19 + $0x8c] sm:$0xf]
    %v6218 = vld [vmem:[#allocation19 + $0x90] sm:$0xf]
    %v6219 = vld [vmem:[#allocation19 + $0x94] sm:$0xf]
    %v6220 = vld [vmem:[#allocation19 + $0x98] sm:$0xf]
    %v6221 = vld [vmem:[#allocation19 + $0x9c] sm:$0xf]
    %v6222 = vld [vmem:[#allocation19 + $0xa0] sm:$0xf]
    %v6223 = vld [vmem:[#allocation19 + $0xa4] sm:$0xf]
    %v6224 = vld [vmem:[#allocation19 + $0xa8] sm:$0xf]
    %v6225 = vld [vmem:[#allocation19 + $0xac] sm:$0xf]
    %v6226 = vld [vmem:[#allocation19 + $0xb0] sm:$0xf]
    %v6227 = vld [vmem:[#allocation19 + $0xb4] sm:$0xf]
    %v6228 = vld [vmem:[#allocation19 + $0xb8] sm:$0xf]
    %v6229 = vld [vmem:[#allocation19 + $0xbc] sm:$0xf]
    %v6230 = vld [vmem:[#allocation19 + $0xc0] sm:$0xf]
    %v6231 = vld [vmem:[#allocation19 + $0xc4] sm:$0xf]
    %v6232 = vld [vmem:[#allocation19 + $0xc8] sm:$0xf]
    %v6233 = vld [vmem:[#allocation19 + $0xcc] sm:$0xf]
    %v6234 = vld [vmem:[#allocation19 + $0xd0] sm:$0xf]
    %v6235 = vld [vmem:[#allocation19 + $0xd4] sm:$0xf]
    %v6236 = vld [vmem:[#allocation19 + $0xd8] sm:$0xf]
    %v6237 = vld [vmem:[#allocation19 + $0xdc] sm:$0xf]
    %v6238 = vld [vmem:[#allocation19 + $0xe0] sm:$0xf]
    %v6239 = vld [vmem:[#allocation19 + $0xe4] sm:$0xf]
    %v6240 = vld [vmem:[#allocation19 + $0xe8] sm:$0xf]
    %v6241 = vld [vmem:[#allocation19 + $0xec] sm:$0xf]
    %v6242 = vld [vmem:[#allocation19 + $0xf0] sm:$0xf]
    %v6243 = vld [vmem:[#allocation19 + $0xf4] sm:$0xf]
    %v6244 = vld [vmem:[#allocation19 + $0xf8] sm:$0xf]
    %v6245 = vld [vmem:[#allocation19 + $0xfc] sm:$0xf]
    %v6246 = vld [vmem:[#allocation19 + $0x100] sm:$0xf]
    %v6247 = vld [vmem:[#allocation19 + $0x104] sm:$0xf]
    %v6248 = vld [vmem:[#allocation19 + $0x108] sm:$0xf]
    %v6249 = vld [vmem:[#allocation19 + $0x10c] sm:$0xf]
    %v6250 = vld [vmem:[#allocation19 + $0x110] sm:$0xf]
    %v6251 = vld [vmem:[#allocation19 + $0x114] sm:$0xf]
    %v6252 = vld [vmem:[#allocation19 + $0x118] sm:$0xf]
    %v6253 = vld [vmem:[#allocation19 + $0x11c] sm:$0xf]
    %v6254 = vld [vmem:[#allocation19 + $0x120] sm:$0xf]
    %v6255 = vld [vmem:[#allocation19 + $0x124] sm:$0xf]
    %v6256 = vld [vmem:[#allocation19 + $0x128] sm:$0xf]
    %v6257 = vld [vmem:[#allocation19 + $0x12c] sm:$0xf]
    %v6258 = vld [vmem:[#allocation19 + $0x130] sm:$0xf]
    %v6259 = vld [vmem:[#allocation19 + $0x134] sm:$0xf]
    %v6260 = vld [vmem:[#allocation19 + $0x138] sm:$0xf]
    %v6261 = vld [vmem:[#allocation19 + $0x13c] sm:$0xf]
    %v6262 = vld [vmem:[#allocation19 + $0x140] sm:$0xf]
    %v6263 = vld [vmem:[#allocation19 + $0x144] sm:$0xf]
    %v6264 = vld [vmem:[#allocation19 + $0x148] sm:$0xf]
    %v6265 = vld [vmem:[#allocation19 + $0x14c] sm:$0xf]
    %v6266 = vld [vmem:[#allocation19 + $0x150] sm:$0xf]
    %v6267 = vld [vmem:[#allocation19 + $0x154] sm:$0xf]
    %v6268 = vld [vmem:[#allocation19 + $0x158] sm:$0xf]
    %v6269 = vld [vmem:[#allocation19 + $0x15c] sm:$0xf]
    %v6270 = vld [vmem:[#allocation19 + $0x160] sm:$0xf]
    %v6271 = vld [vmem:[#allocation19 + $0x164] sm:$0xf]
    %v6272 = vld [vmem:[#allocation19 + $0x168] sm:$0xf]
    %v6273 = vld [vmem:[#allocation19 + $0x16c] sm:$0xf]
    %v6274 = vld [vmem:[#allocation19 + $0x170] sm:$0xf]
    %v6275 = vld [vmem:[#allocation19 + $0x174] sm:$0xf]
    %v6276 = vld [vmem:[#allocation19 + $0x178] sm:$0xf]
    %v6277 = vld [vmem:[#allocation19 + $0x17c] sm:$0xf]
    %v6278 = vld [vmem:[#allocation19 + $0x180] sm:$0xf]
    %v6279 = vld [vmem:[#allocation19 + $0x184] sm:$0xf]
    %v6280 = vld [vmem:[#allocation19 + $0x188] sm:$0xf]
    %v6281 = vld [vmem:[#allocation19 + $0x18c] sm:$0xf]
    %v6282 = vld [vmem:[#allocation19 + $0x190] sm:$0xf]
    %v6283 = vld [vmem:[#allocation19 + $0x194] sm:$0xf]
    %v6284 = vld [vmem:[#allocation19 + $0x198] sm:$0xf]
    %v6285 = vld [vmem:[#allocation19 + $0x19c] sm:$0xf]
    %v6286 = vld [vmem:[#allocation19 + $0x1a0] sm:$0xf]
    %v6287 = vld [vmem:[#allocation19 + $0x1a4] sm:$0xf]
    %v6288 = vld [vmem:[#allocation19 + $0x1a8] sm:$0xf]
    %v6289 = vld [vmem:[#allocation19 + $0x1ac] sm:$0xf]
    %v6290 = vld [vmem:[#allocation19 + $0x1b0] sm:$0xf]
    %v6291 = vld [vmem:[#allocation19 + $0x1b4] sm:$0xf]
    %v6292 = vld [vmem:[#allocation19 + $0x1b8] sm:$0xf]
    %v6293 = vld [vmem:[#allocation19 + $0x1bc] sm:$0xf]
    %v6294 = vld [vmem:[#allocation19 + $0x1c0] sm:$0xf]
    %v6295 = vld [vmem:[#allocation19 + $0x1c4] sm:$0xf]
    %v6296 = vld [vmem:[#allocation19 + $0x1c8] sm:$0xf]
    %v6297 = vld [vmem:[#allocation19 + $0x1cc] sm:$0xf]
    %v6298 = vld [vmem:[#allocation19 + $0x1d0] sm:$0xf]
    %v6299 = vld [vmem:[#allocation19 + $0x1d4] sm:$0xf]
    %v6300 = vld [vmem:[#allocation19 + $0x1d8] sm:$0xf]
    %v6301 = vld [vmem:[#allocation19 + $0x1dc] sm:$0xf]
    %v6302 = vld [vmem:[#allocation19 + $0x1e0] sm:$0xf]
    %v6303 = vld [vmem:[#allocation19 + $0x1e4] sm:$0xf]
    %v6304 = vld [vmem:[#allocation19 + $0x1e8] sm:$0xf]
    %v6305 = vld [vmem:[#allocation19 + $0x1ec] sm:$0xf]
    %v6306 = vld [vmem:[#allocation19 + $0x1f0] sm:$0xf]
    %v6307 = vld [vmem:[#allocation19 + $0x1f4] sm:$0xf]
    %v6308 = vld [vmem:[#allocation19 + $0x1f8] sm:$0xf]
    %v6309 = vld [vmem:[#allocation19 + $0x1fc] sm:$0xf]
    %v6310 = vld [vmem:[#allocation20] sm:$0x1]
    %v6312 = vperm.slane %v6310, 0
    %v6442 = vunpack.c.l.b16 %v6182
    %v6443 = vunpack.c.l.b16 %v6183
    %v6444 = vunpack.c.l.b16 %v6184
    %v6445 = vunpack.c.l.b16 %v6185
    %v6446 = vunpack.c.l.b16 %v6186
    %v6447 = vunpack.c.l.b16 %v6187
    %v6448 = vunpack.c.l.b16 %v6188
    %v6449 = vunpack.c.l.b16 %v6189
    %v6450 = vunpack.c.l.b16 %v6190
    %v6451 = vunpack.c.l.b16 %v6191
    %v6452 = vunpack.c.l.b16 %v6192
    %v6453 = vunpack.c.l.b16 %v6193
    %v6454 = vunpack.c.l.b16 %v6194
    %v6455 = vunpack.c.l.b16 %v6195
    %v6456 = vunpack.c.l.b16 %v6196
    %v6457 = vunpack.c.l.b16 %v6197
    %v6458 = vunpack.c.l.b16 %v6198
    %v6459 = vunpack.c.l.b16 %v6199
    %v6460 = vunpack.c.l.b16 %v6200
    %v6461 = vunpack.c.l.b16 %v6201
    %v6462 = vunpack.c.l.b16 %v6202
    %v6463 = vunpack.c.l.b16 %v6203
    %v6464 = vunpack.c.l.b16 %v6204
    %v6465 = vunpack.c.l.b16 %v6205
    %v6466 = vunpack.c.l.b16 %v6206
    %v6467 = vunpack.c.l.b16 %v6207
    %v6468 = vunpack.c.l.b16 %v6208
    %v6469 = vunpack.c.l.b16 %v6209
    %v6470 = vunpack.c.l.b16 %v6210
    %v6471 = vunpack.c.l.b16 %v6211
    %v6472 = vunpack.c.l.b16 %v6212
    %v6473 = vunpack.c.l.b16 %v6213
    %v6474 = vunpack.c.l.b16 %v6214
    %v6475 = vunpack.c.l.b16 %v6215
    %v6476 = vunpack.c.l.b16 %v6216
    %v6477 = vunpack.c.l.b16 %v6217
    %v6478 = vunpack.c.l.b16 %v6218
    %v6479 = vunpack.c.l.b16 %v6219
    %v6480 = vunpack.c.l.b16 %v6220
    %v6481 = vunpack.c.l.b16 %v6221
    %v6482 = vunpack.c.l.b16 %v6222
    %v6483 = vunpack.c.l.b16 %v6223
    %v6484 = vunpack.c.l.b16 %v6224
    %v6485 = vunpack.c.l.b16 %v6225
    %v6486 = vunpack.c.l.b16 %v6226
    %v6487 = vunpack.c.l.b16 %v6227
    %v6488 = vunpack.c.l.b16 %v6228
    %v6489 = vunpack.c.l.b16 %v6229
    %v6490 = vunpack.c.l.b16 %v6230
    %v6491 = vunpack.c.l.b16 %v6231
    %v6492 = vunpack.c.l.b16 %v6232
    %v6493 = vunpack.c.l.b16 %v6233
    %v6494 = vunpack.c.l.b16 %v6234
    %v6495 = vunpack.c.l.b16 %v6235
    %v6496 = vunpack.c.l.b16 %v6236
    %v6497 = vunpack.c.l.b16 %v6237
    %v6498 = vunpack.c.l.b16 %v6238
    %v6499 = vunpack.c.l.b16 %v6239
    %v6500 = vunpack.c.l.b16 %v6240
    %v6501 = vunpack.c.l.b16 %v6241
    %v6502 = vunpack.c.l.b16 %v6242
    %v6503 = vunpack.c.l.b16 %v6243
    %v6504 = vunpack.c.l.b16 %v6244
    %v6505 = vunpack.c.l.b16 %v6245
    %v6506 = vunpack.c.l.b16 %v6246
    %v6507 = vunpack.c.l.b16 %v6247
    %v6508 = vunpack.c.l.b16 %v6248
    %v6509 = vunpack.c.l.b16 %v6249
    %v6510 = vunpack.c.l.b16 %v6250
    %v6511 = vunpack.c.l.b16 %v6251
    %v6512 = vunpack.c.l.b16 %v6252
    %v6513 = vunpack.c.l.b16 %v6253
    %v6514 = vunpack.c.l.b16 %v6254
    %v6515 = vunpack.c.l.b16 %v6255
    %v6516 = vunpack.c.l.b16 %v6256
    %v6517 = vunpack.c.l.b16 %v6257
    %v6518 = vunpack.c.l.b16 %v6258
    %v6519 = vunpack.c.l.b16 %v6259
    %v6520 = vunpack.c.l.b16 %v6260
    %v6521 = vunpack.c.l.b16 %v6261
    %v6522 = vunpack.c.l.b16 %v6262
    %v6523 = vunpack.c.l.b16 %v6263
    %v6524 = vunpack.c.l.b16 %v6264
    %v6525 = vunpack.c.l.b16 %v6265
    %v6526 = vunpack.c.l.b16 %v6266
    %v6527 = vunpack.c.l.b16 %v6267
    %v6528 = vunpack.c.l.b16 %v6268
    %v6529 = vunpack.c.l.b16 %v6269
    %v6530 = vunpack.c.l.b16 %v6270
    %v6531 = vunpack.c.l.b16 %v6271
    %v6532 = vunpack.c.l.b16 %v6272
    %v6533 = vunpack.c.l.b16 %v6273
    %v6534 = vunpack.c.l.b16 %v6274
    %v6535 = vunpack.c.l.b16 %v6275
    %v6536 = vunpack.c.l.b16 %v6276
    %v6537 = vunpack.c.l.b16 %v6277
    %v6538 = vunpack.c.l.b16 %v6278
    %v6539 = vunpack.c.l.b16 %v6279
    %v6540 = vunpack.c.l.b16 %v6280
    %v6541 = vunpack.c.l.b16 %v6281
    %v6542 = vunpack.c.l.b16 %v6282
    %v6543 = vunpack.c.l.b16 %v6283
    %v6544 = vunpack.c.l.b16 %v6284
    %v6545 = vunpack.c.l.b16 %v6285
    %v6546 = vunpack.c.l.b16 %v6286
    %v6547 = vunpack.c.l.b16 %v6287
    %v6548 = vunpack.c.l.b16 %v6288
    %v6549 = vunpack.c.l.b16 %v6289
    %v6550 = vunpack.c.l.b16 %v6290
    %v6551 = vunpack.c.l.b16 %v6291
    %v6552 = vunpack.c.l.b16 %v6292
    %v6553 = vunpack.c.l.b16 %v6293
    %v6554 = vunpack.c.l.b16 %v6294
    %v6555 = vunpack.c.l.b16 %v6295
    %v6556 = vunpack.c.l.b16 %v6296
    %v6557 = vunpack.c.l.b16 %v6297
    %v6558 = vunpack.c.l.b16 %v6298
    %v6559 = vunpack.c.l.b16 %v6299
    %v6560 = vunpack.c.l.b16 %v6300
    %v6561 = vunpack.c.l.b16 %v6301
    %v6562 = vunpack.c.l.b16 %v6302
    %v6563 = vunpack.c.l.b16 %v6303
    %v6564 = vunpack.c.l.b16 %v6304
    %v6565 = vunpack.c.l.b16 %v6305
    %v6566 = vunpack.c.l.b16 %v6306
    %v6567 = vunpack.c.l.b16 %v6307
    %v6568 = vunpack.c.l.b16 %v6308
    %v6569 = vunpack.c.l.b16 %v6309
    %v6570 = vpack.c.b16 %v6443, %v6442
    %v6571 = vpack.c.b16 %v6445, %v6444
    %v6572 = vpack.c.b16 %v6447, %v6446
    %v6573 = vpack.c.b16 %v6449, %v6448
    %v6574 = vpack.c.b16 %v6451, %v6450
    %v6575 = vpack.c.b16 %v6453, %v6452
    %v6576 = vpack.c.b16 %v6455, %v6454
    %v6577 = vpack.c.b16 %v6457, %v6456
    %v6578 = vpack.c.b16 %v6459, %v6458
    %v6579 = vpack.c.b16 %v6461, %v6460
    %v6580 = vpack.c.b16 %v6463, %v6462
    %v6581 = vpack.c.b16 %v6465, %v6464
    %v6582 = vpack.c.b16 %v6467, %v6466
    %v6583 = vpack.c.b16 %v6469, %v6468
    %v6584 = vpack.c.b16 %v6471, %v6470
    %v6585 = vpack.c.b16 %v6473, %v6472
    %v6586 = vpack.c.b16 %v6475, %v6474
    %v6587 = vpack.c.b16 %v6477, %v6476
    %v6588 = vpack.c.b16 %v6479, %v6478
    %v6589 = vpack.c.b16 %v6481, %v6480
    %v6590 = vpack.c.b16 %v6483, %v6482
    %v6591 = vpack.c.b16 %v6485, %v6484
    %v6592 = vpack.c.b16 %v6487, %v6486
    %v6593 = vpack.c.b16 %v6489, %v6488
    %v6594 = vpack.c.b16 %v6491, %v6490
    %v6595 = vpack.c.b16 %v6493, %v6492
    %v6596 = vpack.c.b16 %v6495, %v6494
    %v6597 = vpack.c.b16 %v6497, %v6496
    %v6598 = vpack.c.b16 %v6499, %v6498
    %v6599 = vpack.c.b16 %v6501, %v6500
    %v6600 = vpack.c.b16 %v6503, %v6502
    %v6601 = vpack.c.b16 %v6505, %v6504
    %v6602 = vpack.c.b16 %v6507, %v6506
    %v6603 = vpack.c.b16 %v6509, %v6508
    %v6604 = vpack.c.b16 %v6511, %v6510
    %v6605 = vpack.c.b16 %v6513, %v6512
    %v6606 = vpack.c.b16 %v6515, %v6514
    %v6607 = vpack.c.b16 %v6517, %v6516
    %v6608 = vpack.c.b16 %v6519, %v6518
    %v6609 = vpack.c.b16 %v6521, %v6520
    %v6610 = vpack.c.b16 %v6523, %v6522
    %v6611 = vpack.c.b16 %v6525, %v6524
    %v6612 = vpack.c.b16 %v6527, %v6526
    %v6613 = vpack.c.b16 %v6529, %v6528
    %v6614 = vpack.c.b16 %v6531, %v6530
    %v6615 = vpack.c.b16 %v6533, %v6532
    %v6616 = vpack.c.b16 %v6535, %v6534
    %v6617 = vpack.c.b16 %v6537, %v6536
    %v6618 = vpack.c.b16 %v6539, %v6538
    %v6619 = vpack.c.b16 %v6541, %v6540
    %v6620 = vpack.c.b16 %v6543, %v6542
    %v6621 = vpack.c.b16 %v6545, %v6544
    %v6622 = vpack.c.b16 %v6547, %v6546
    %v6623 = vpack.c.b16 %v6549, %v6548
    %v6624 = vpack.c.b16 %v6551, %v6550
    %v6625 = vpack.c.b16 %v6553, %v6552
    %v6626 = vpack.c.b16 %v6555, %v6554
    %v6627 = vpack.c.b16 %v6557, %v6556
    %v6628 = vpack.c.b16 %v6559, %v6558
    %v6629 = vpack.c.b16 %v6561, %v6560
    %v6630 = vpack.c.b16 %v6563, %v6562
    %v6631 = vpack.c.b16 %v6565, %v6564
    %v6632 = vpack.c.b16 %v6567, %v6566
    %v6633 = vpack.c.b16 %v6569, %v6568
    %6698 = vmatpush.bf16.msra.mxu0 %v6577
    %6699 = vmatpush.bf16.msra.mxu0 %v6576
    %6700 = vmatpush.bf16.msra.mxu0 %v6575
    %6701 = vmatpush.bf16.msra.mxu0 %v6574
    %6702 = vmatpush.bf16.msra.mxu0 %v6573
    %6703 = vmatpush.bf16.msra.mxu0 %v6572
    %6704 = vmatpush.bf16.msra.mxu0 %v6571
    %6705 = vmatpush.bf16.msra.mxu0 %v6570
    %6706 = vmatmul.bf16.gmra.mxu0 %v6174
    %v6707 = vpop.f32.mrf.mxu0
    %v6708 = vadd.f32 %v6312, %v6707
    %v6709 = vpop.f32.mrf.mxu0
    %v6710 = vadd.f32 %v6312, %v6709
    %6711 = vdwg.mxu0
    %6712 = vmatpush.bf16.msra.mxu0 %v6585
    %6713 = vmatpush.bf16.msra.mxu0 %v6584
    %6714 = vmatpush.bf16.msra.mxu0 %v6583
    %6715 = vmatpush.bf16.msra.mxu0 %v6582
    %6716 = vmatpush.bf16.msra.mxu0 %v6581
    %6717 = vmatpush.bf16.msra.mxu0 %v6580
    %6718 = vmatpush.bf16.msra.mxu0 %v6579
    %6719 = vmatpush.bf16.msra.mxu0 %v6578
    %6720 = vmatmul.bf16.gmra.mxu0 %v6175
    %v6721 = vpop.f32.mrf.mxu0
    %v6722 = vadd.f32 %v6708, %v6721
    %v6723 = vpop.f32.mrf.mxu0
    %v6724 = vadd.f32 %v6710, %v6723
    %6725 = vdwg.mxu0
    %6726 = vmatpush.bf16.msra.mxu0 %v6593
    %6727 = vmatpush.bf16.msra.mxu0 %v6592
    %6728 = vmatpush.bf16.msra.mxu0 %v6591
    %6729 = vmatpush.bf16.msra.mxu0 %v6590
    %6730 = vmatpush.bf16.msra.mxu0 %v6589
    %6731 = vmatpush.bf16.msra.mxu0 %v6588
    %6732 = vmatpush.bf16.msra.mxu0 %v6587
    %6733 = vmatpush.bf16.msra.mxu0 %v6586
    %6734 = vmatmul.bf16.gmra.mxu0 %v6176
    %v6735 = vpop.f32.mrf.mxu0
    %v6736 = vadd.f32 %v6722, %v6735
    %v6737 = vpop.f32.mrf.mxu0
    %v6738 = vadd.f32 %v6724, %v6737
    %6739 = vdwg.mxu0
    %6740 = vmatpush.bf16.msra.mxu0 %v6601
    %6741 = vmatpush.bf16.msra.mxu0 %v6600
    %6742 = vmatpush.bf16.msra.mxu0 %v6599
    %6743 = vmatpush.bf16.msra.mxu0 %v6598
    %6744 = vmatpush.bf16.msra.mxu0 %v6597
    %6745 = vmatpush.bf16.msra.mxu0 %v6596
    %6746 = vmatpush.bf16.msra.mxu0 %v6595
    %6747 = vmatpush.bf16.msra.mxu0 %v6594
    %6748 = vmatmul.bf16.gmra.mxu0 %v6177
    %v6749 = vpop.f32.mrf.mxu0
    %v6750 = vadd.f32 %v6736, %v6749
    %v6751 = vpop.f32.mrf.mxu0
    %v6752 = vadd.f32 %v6738, %v6751
    %6753 = vdwg.mxu0
    %6754 = vmatpush.bf16.msra.mxu0 %v6609
    %6755 = vmatpush.bf16.msra.mxu0 %v6608
    %6756 = vmatpush.bf16.msra.mxu0 %v6607
    %6757 = vmatpush.bf16.msra.mxu0 %v6606
    %6758 = vmatpush.bf16.msra.mxu0 %v6605
    %6759 = vmatpush.bf16.msra.mxu0 %v6604
    %6760 = vmatpush.bf16.msra.mxu0 %v6603
    %6761 = vmatpush.bf16.msra.mxu0 %v6602
    %6762 = vmatmul.bf16.gmra.mxu0 %v6178
    %v6763 = vpop.f32.mrf.mxu0
    %v6764 = vadd.f32 %v6750, %v6763
    %v6765 = vpop.f32.mrf.mxu0
    %v6766 = vadd.f32 %v6752, %v6765
    %6767 = vdwg.mxu0
    %6768 = vmatpush.bf16.msra.mxu0 %v6617
    %6769 = vmatpush.bf16.msra.mxu0 %v6616
    %6770 = vmatpush.bf16.msra.mxu0 %v6615
    %6771 = vmatpush.bf16.msra.mxu0 %v6614
    %6772 = vmatpush.bf16.msra.mxu0 %v6613
    %6773 = vmatpush.bf16.msra.mxu0 %v6612
    %6774 = vmatpush.bf16.msra.mxu0 %v6611
    %6775 = vmatpush.bf16.msra.mxu0 %v6610
    %6776 = vmatmul.bf16.gmra.mxu0 %v6179
    %v6777 = vpop.f32.mrf.mxu0
    %v6778 = vadd.f32 %v6764, %v6777
    %v6779 = vpop.f32.mrf.mxu0
    %v6780 = vadd.f32 %v6766, %v6779
    %6781 = vdwg.mxu0
    %6782 = vmatpush.bf16.msra.mxu0 %v6625
    %6783 = vmatpush.bf16.msra.mxu0 %v6624
    %6784 = vmatpush.bf16.msra.mxu0 %v6623
    %6785 = vmatpush.bf16.msra.mxu0 %v6622
    %6786 = vmatpush.bf16.msra.mxu0 %v6621
    %6787 = vmatpush.bf16.msra.mxu0 %v6620
    %6788 = vmatpush.bf16.msra.mxu0 %v6619
    %6789 = vmatpush.bf16.msra.mxu0 %v6618
    %6790 = vmatmul.bf16.gmra.mxu0 %v6180
    %v6791 = vpop.f32.mrf.mxu0
    %v6792 = vadd.f32 %v6778, %v6791
    %v6793 = vpop.f32.mrf.mxu0
    %v6794 = vadd.f32 %v6780, %v6793
    %6795 = vdwg.mxu0
    %6796 = vmatpush.bf16.msra.mxu0 %v6633
    %6797 = vmatpush.bf16.msra.mxu0 %v6632
    %6798 = vmatpush.bf16.msra.mxu0 %v6631
    %6799 = vmatpush.bf16.msra.mxu0 %v6630
    %6800 = vmatpush.bf16.msra.mxu0 %v6629
    %6801 = vmatpush.bf16.msra.mxu0 %v6628
    %6802 = vmatpush.bf16.msra.mxu0 %v6627
    %6803 = vmatpush.bf16.msra.mxu0 %v6626
    %6804 = vmatmul.bf16.gmra.mxu0 %v6181
    %v6805 = vpop.f32.mrf.mxu0
    %v6806 = vadd.f32 %v6792, %v6805
    %v6807 = vpop.f32.mrf.mxu0
    %v6808 = vadd.f32 %v6794, %v6807
    %6809 = vdwg.mxu0
    %v6810 = vld [vmem:[#allocation22] sm:$0xff]
    %v6811 = vld [vmem:[#allocation22 + $0x8] sm:$0xff]
    %v6812 = vld [vmem:[#allocation22 + $0x10] sm:$0xff]
    %v6813 = vld [vmem:[#allocation22 + $0x18] sm:$0xff]
    %v6814 = vld [vmem:[#allocation22 + $0x20] sm:$0xff]
    %v6815 = vld [vmem:[#allocation22 + $0x28] sm:$0xff]
    %v6816 = vld [vmem:[#allocation22 + $0x30] sm:$0xff]
    %v6817 = vld [vmem:[#allocation22 + $0x38] sm:$0xff]
    %v6818 = vld [vmem:[#allocation22 + $0x40] sm:$0xff]
    %v6819 = vld [vmem:[#allocation22 + $0x48] sm:$0xff]
    %v6820 = vld [vmem:[#allocation22 + $0x50] sm:$0xff]
    %v6821 = vld [vmem:[#allocation22 + $0x58] sm:$0xff]
    %v6822 = vld [vmem:[#allocation22 + $0x60] sm:$0xff]
    %v6823 = vld [vmem:[#allocation22 + $0x68] sm:$0xff]
    %v6824 = vld [vmem:[#allocation22 + $0x70] sm:$0xff]
    %v6825 = vld [vmem:[#allocation22 + $0x78] sm:$0xff]
    %v6826 = vld [vmem:[#allocation22 + $0x80] sm:$0xff]
    %v6827 = vld [vmem:[#allocation22 + $0x88] sm:$0xff]
    %v6828 = vld [vmem:[#allocation22 + $0x90] sm:$0xff]
    %v6829 = vld [vmem:[#allocation22 + $0x98] sm:$0xff]
    %v6830 = vld [vmem:[#allocation22 + $0xa0] sm:$0xff]
    %v6831 = vld [vmem:[#allocation22 + $0xa8] sm:$0xff]
    %v6832 = vld [vmem:[#allocation22 + $0xb0] sm:$0xff]
    %v6833 = vld [vmem:[#allocation22 + $0xb8] sm:$0xff]
    %v6834 = vld [vmem:[#allocation22 + $0xc0] sm:$0xff]
    %v6835 = vld [vmem:[#allocation22 + $0xc8] sm:$0xff]
    %v6836 = vld [vmem:[#allocation22 + $0xd0] sm:$0xff]
    %v6837 = vld [vmem:[#allocation22 + $0xd8] sm:$0xff]
    %v6838 = vld [vmem:[#allocation22 + $0xe0] sm:$0xff]
    %v6839 = vld [vmem:[#allocation22 + $0xe8] sm:$0xff]
    %v6840 = vld [vmem:[#allocation22 + $0xf0] sm:$0xff]
    %v6841 = vld [vmem:[#allocation22 + $0xf8] sm:$0xff]
    %v6842 = vld [vmem:[#allocation22 + $0x100] sm:$0xff]
    %v6843 = vld [vmem:[#allocation22 + $0x108] sm:$0xff]
    %v6844 = vld [vmem:[#allocation22 + $0x110] sm:$0xff]
    %v6845 = vld [vmem:[#allocation22 + $0x118] sm:$0xff]
    %v6846 = vld [vmem:[#allocation22 + $0x120] sm:$0xff]
    %v6847 = vld [vmem:[#allocation22 + $0x128] sm:$0xff]
    %v6848 = vld [vmem:[#allocation22 + $0x130] sm:$0xff]
    %v6849 = vld [vmem:[#allocation22 + $0x138] sm:$0xff]
    %v6850 = vld [vmem:[#allocation22 + $0x140] sm:$0xff]
    %v6851 = vld [vmem:[#allocation22 + $0x148] sm:$0xff]
    %v6852 = vld [vmem:[#allocation22 + $0x150] sm:$0xff]
    %v6853 = vld [vmem:[#allocation22 + $0x158] sm:$0xff]
    %v6854 = vld [vmem:[#allocation22 + $0x160] sm:$0xff]
    %v6855 = vld [vmem:[#allocation22 + $0x168] sm:$0xff]
    %v6856 = vld [vmem:[#allocation22 + $0x170] sm:$0xff]
    %v6857 = vld [vmem:[#allocation22 + $0x178] sm:$0xff]
    %v6858 = vld [vmem:[#allocation22 + $0x180] sm:$0xff]
    %v6859 = vld [vmem:[#allocation22 + $0x188] sm:$0xff]
    %v6860 = vld [vmem:[#allocation22 + $0x190] sm:$0xff]
    %v6861 = vld [vmem:[#allocation22 + $0x198] sm:$0xff]
    %v6862 = vld [vmem:[#allocation22 + $0x1a0] sm:$0xff]
    %v6863 = vld [vmem:[#allocation22 + $0x1a8] sm:$0xff]
    %v6864 = vld [vmem:[#allocation22 + $0x1b0] sm:$0xff]
    %v6865 = vld [vmem:[#allocation22 + $0x1b8] sm:$0xff]
    %v6866 = vld [vmem:[#allocation22 + $0x1c0] sm:$0xff]
    %v6867 = vld [vmem:[#allocation22 + $0x1c8] sm:$0xff]
    %v6868 = vld [vmem:[#allocation22 + $0x1d0] sm:$0xff]
    %v6869 = vld [vmem:[#allocation22 + $0x1d8] sm:$0xff]
    %v6870 = vld [vmem:[#allocation22 + $0x1e0] sm:$0xff]
    %v6871 = vld [vmem:[#allocation22 + $0x1e8] sm:$0xff]
    %v6872 = vld [vmem:[#allocation22 + $0x1f0] sm:$0xff]
    %v6873 = vld [vmem:[#allocation22 + $0x1f8] sm:$0xff]
    %v6874 = vld [vmem:[#allocation22 + $0x200] sm:$0xff]
    %v6875 = vld [vmem:[#allocation22 + $0x208] sm:$0xff]
    %v6876 = vld [vmem:[#allocation22 + $0x210] sm:$0xff]
    %v6877 = vld [vmem:[#allocation22 + $0x218] sm:$0xff]
    %v6878 = vld [vmem:[#allocation22 + $0x220] sm:$0xff]
    %v6879 = vld [vmem:[#allocation22 + $0x228] sm:$0xff]
    %v6880 = vld [vmem:[#allocation22 + $0x230] sm:$0xff]
    %v6881 = vld [vmem:[#allocation22 + $0x238] sm:$0xff]
    %v6882 = vld [vmem:[#allocation22 + $0x240] sm:$0xff]
    %v6883 = vld [vmem:[#allocation22 + $0x248] sm:$0xff]
    %v6884 = vld [vmem:[#allocation22 + $0x250] sm:$0xff]
    %v6885 = vld [vmem:[#allocation22 + $0x258] sm:$0xff]
    %v6886 = vld [vmem:[#allocation22 + $0x260] sm:$0xff]
    %v6887 = vld [vmem:[#allocation22 + $0x268] sm:$0xff]
    %v6888 = vld [vmem:[#allocation22 + $0x270] sm:$0xff]
    %v6889 = vld [vmem:[#allocation22 + $0x278] sm:$0xff]
    %v6890 = vld [vmem:[#allocation22 + $0x280] sm:$0xff]
    %v6891 = vld [vmem:[#allocation22 + $0x288] sm:$0xff]
    %v6892 = vld [vmem:[#allocation22 + $0x290] sm:$0xff]
    %v6893 = vld [vmem:[#allocation22 + $0x298] sm:$0xff]
    %v6894 = vld [vmem:[#allocation22 + $0x2a0] sm:$0xff]
    %v6895 = vld [vmem:[#allocation22 + $0x2a8] sm:$0xff]
    %v6896 = vld [vmem:[#allocation22 + $0x2b0] sm:$0xff]
    %v6897 = vld [vmem:[#allocation22 + $0x2b8] sm:$0xff]
    %v6898 = vld [vmem:[#allocation22 + $0x2c0] sm:$0xff]
    %v6899 = vld [vmem:[#allocation22 + $0x2c8] sm:$0xff]
    %v6900 = vld [vmem:[#allocation22 + $0x2d0] sm:$0xff]
    %v6901 = vld [vmem:[#allocation22 + $0x2d8] sm:$0xff]
    %v6902 = vld [vmem:[#allocation22 + $0x2e0] sm:$0xff]
    %v6903 = vld [vmem:[#allocation22 + $0x2e8] sm:$0xff]
    %v6904 = vld [vmem:[#allocation22 + $0x2f0] sm:$0xff]
    %v6905 = vld [vmem:[#allocation22 + $0x2f8] sm:$0xff]
    %v6906 = vld [vmem:[#allocation22 + $0x300] sm:$0xff]
    %v6907 = vld [vmem:[#allocation22 + $0x308] sm:$0xff]
    %v6908 = vld [vmem:[#allocation22 + $0x310] sm:$0xff]
    %v6909 = vld [vmem:[#allocation22 + $0x318] sm:$0xff]
    %v6910 = vld [vmem:[#allocation22 + $0x320] sm:$0xff]
    %v6911 = vld [vmem:[#allocation22 + $0x328] sm:$0xff]
    %v6912 = vld [vmem:[#allocation22 + $0x330] sm:$0xff]
    %v6913 = vld [vmem:[#allocation22 + $0x338] sm:$0xff]
    %v6914 = vld [vmem:[#allocation22 + $0x340] sm:$0xff]
    %v6915 = vld [vmem:[#allocation22 + $0x348] sm:$0xff]
    %v6916 = vld [vmem:[#allocation22 + $0x350] sm:$0xff]
    %v6917 = vld [vmem:[#allocation22 + $0x358] sm:$0xff]
    %v6918 = vld [vmem:[#allocation22 + $0x360] sm:$0xff]
    %v6919 = vld [vmem:[#allocation22 + $0x368] sm:$0xff]
    %v6920 = vld [vmem:[#allocation22 + $0x370] sm:$0xff]
    %v6921 = vld [vmem:[#allocation22 + $0x378] sm:$0xff]
    %v6922 = vld [vmem:[#allocation22 + $0x380] sm:$0xff]
    %v6923 = vld [vmem:[#allocation22 + $0x388] sm:$0xff]
    %v6924 = vld [vmem:[#allocation22 + $0x390] sm:$0xff]
    %v6925 = vld [vmem:[#allocation22 + $0x398] sm:$0xff]
    %v6926 = vld [vmem:[#allocation22 + $0x3a0] sm:$0xff]
    %v6927 = vld [vmem:[#allocation22 + $0x3a8] sm:$0xff]
    %v6928 = vld [vmem:[#allocation22 + $0x3b0] sm:$0xff]
    %v6929 = vld [vmem:[#allocation22 + $0x3b8] sm:$0xff]
    %v6930 = vld [vmem:[#allocation22 + $0x3c0] sm:$0xff]
    %v6931 = vld [vmem:[#allocation22 + $0x3c8] sm:$0xff]
    %v6932 = vld [vmem:[#allocation22 + $0x3d0] sm:$0xff]
    %v6933 = vld [vmem:[#allocation22 + $0x3d8] sm:$0xff]
    %v6934 = vld [vmem:[#allocation22 + $0x3e0] sm:$0xff]
    %v6935 = vld [vmem:[#allocation22 + $0x3e8] sm:$0xff]
    %v6936 = vld [vmem:[#allocation22 + $0x3f0] sm:$0xff]
    %v6937 = vld [vmem:[#allocation22 + $0x3f8] sm:$0xff]
    %v6938 = vld [vmem:[#allocation22 + $0x400] sm:$0xff]
    %v6939 = vld [vmem:[#allocation22 + $0x408] sm:$0xff]
    %v6940 = vld [vmem:[#allocation22 + $0x410] sm:$0xff]
    %v6941 = vld [vmem:[#allocation22 + $0x418] sm:$0xff]
    %v6942 = vld [vmem:[#allocation22 + $0x420] sm:$0xff]
    %v6943 = vld [vmem:[#allocation22 + $0x428] sm:$0xff]
    %v6944 = vld [vmem:[#allocation22 + $0x430] sm:$0xff]
    %v6945 = vld [vmem:[#allocation22 + $0x438] sm:$0xff]
    %v6946 = vld [vmem:[#allocation22 + $0x440] sm:$0xff]
    %v6947 = vld [vmem:[#allocation22 + $0x448] sm:$0xff]
    %v6948 = vld [vmem:[#allocation22 + $0x450] sm:$0xff]
    %v6949 = vld [vmem:[#allocation22 + $0x458] sm:$0xff]
    %v6950 = vld [vmem:[#allocation22 + $0x460] sm:$0xff]
    %v6951 = vld [vmem:[#allocation22 + $0x468] sm:$0xff]
    %v6952 = vld [vmem:[#allocation22 + $0x470] sm:$0xff]
    %v6953 = vld [vmem:[#allocation22 + $0x478] sm:$0xff]
    %v6954 = vld [vmem:[#allocation22 + $0x480] sm:$0xff]
    %v6955 = vld [vmem:[#allocation22 + $0x488] sm:$0xff]
    %v6956 = vld [vmem:[#allocation22 + $0x490] sm:$0xff]
    %v6957 = vld [vmem:[#allocation22 + $0x498] sm:$0xff]
    %v6958 = vld [vmem:[#allocation22 + $0x4a0] sm:$0xff]
    %v6959 = vld [vmem:[#allocation22 + $0x4a8] sm:$0xff]
    %v6960 = vld [vmem:[#allocation22 + $0x4b0] sm:$0xff]
    %v6961 = vld [vmem:[#allocation22 + $0x4b8] sm:$0xff]
    %v6962 = vld [vmem:[#allocation22 + $0x4c0] sm:$0xff]
    %v6963 = vld [vmem:[#allocation22 + $0x4c8] sm:$0xff]
    %v6964 = vld [vmem:[#allocation22 + $0x4d0] sm:$0xff]
    %v6965 = vld [vmem:[#allocation22 + $0x4d8] sm:$0xff]
    %v6966 = vld [vmem:[#allocation22 + $0x4e0] sm:$0xff]
    %v6967 = vld [vmem:[#allocation22 + $0x4e8] sm:$0xff]
    %v6968 = vld [vmem:[#allocation22 + $0x4f0] sm:$0xff]
    %v6969 = vld [vmem:[#allocation22 + $0x4f8] sm:$0xff]
    %v6970 = vld [vmem:[#allocation22 + $0x500] sm:$0xff]
    %v6971 = vld [vmem:[#allocation22 + $0x508] sm:$0xff]
    %v6972 = vld [vmem:[#allocation22 + $0x510] sm:$0xff]
    %v6973 = vld [vmem:[#allocation22 + $0x518] sm:$0xff]
    %v6974 = vld [vmem:[#allocation22 + $0x520] sm:$0xff]
    %v6975 = vld [vmem:[#allocation22 + $0x528] sm:$0xff]
    %v6976 = vld [vmem:[#allocation22 + $0x530] sm:$0xff]
    %v6977 = vld [vmem:[#allocation22 + $0x538] sm:$0xff]
    %v6978 = vld [vmem:[#allocation22 + $0x540] sm:$0xff]
    %v6979 = vld [vmem:[#allocation22 + $0x548] sm:$0xff]
    %v6980 = vld [vmem:[#allocation22 + $0x550] sm:$0xff]
    %v6981 = vld [vmem:[#allocation22 + $0x558] sm:$0xff]
    %v6982 = vld [vmem:[#allocation22 + $0x560] sm:$0xff]
    %v6983 = vld [vmem:[#allocation22 + $0x568] sm:$0xff]
    %v6984 = vld [vmem:[#allocation22 + $0x570] sm:$0xff]
    %v6985 = vld [vmem:[#allocation22 + $0x578] sm:$0xff]
    %v6986 = vld [vmem:[#allocation22 + $0x580] sm:$0xff]
    %v6987 = vld [vmem:[#allocation22 + $0x588] sm:$0xff]
    %v6988 = vld [vmem:[#allocation22 + $0x590] sm:$0xff]
    %v6989 = vld [vmem:[#allocation22 + $0x598] sm:$0xff]
    %v6990 = vld [vmem:[#allocation22 + $0x5a0] sm:$0xff]
    %v6991 = vld [vmem:[#allocation22 + $0x5a8] sm:$0xff]
    %v6992 = vld [vmem:[#allocation22 + $0x5b0] sm:$0xff]
    %v6993 = vld [vmem:[#allocation22 + $0x5b8] sm:$0xff]
    %v6994 = vld [vmem:[#allocation22 + $0x5c0] sm:$0xff]
    %v6995 = vld [vmem:[#allocation22 + $0x5c8] sm:$0xff]
    %v6996 = vld [vmem:[#allocation22 + $0x5d0] sm:$0xff]
    %v6997 = vld [vmem:[#allocation22 + $0x5d8] sm:$0xff]
    %v6998 = vld [vmem:[#allocation22 + $0x5e0] sm:$0xff]
    %v6999 = vld [vmem:[#allocation22 + $0x5e8] sm:$0xff]
    %v7000 = vld [vmem:[#allocation22 + $0x5f0] sm:$0xff]
    %v7001 = vld [vmem:[#allocation22 + $0x5f8] sm:$0xff]
    %v7002 = vld [vmem:[#allocation22 + $0x600] sm:$0xff]
    %v7003 = vld [vmem:[#allocation22 + $0x608] sm:$0xff]
    %v7004 = vld [vmem:[#allocation22 + $0x610] sm:$0xff]
    %v7005 = vld [vmem:[#allocation22 + $0x618] sm:$0xff]
    %v7006 = vld [vmem:[#allocation22 + $0x620] sm:$0xff]
    %v7007 = vld [vmem:[#allocation22 + $0x628] sm:$0xff]
    %v7008 = vld [vmem:[#allocation22 + $0x630] sm:$0xff]
    %v7009 = vld [vmem:[#allocation22 + $0x638] sm:$0xff]
    %v7010 = vld [vmem:[#allocation22 + $0x640] sm:$0xff]
    %v7011 = vld [vmem:[#allocation22 + $0x648] sm:$0xff]
    %v7012 = vld [vmem:[#allocation22 + $0x650] sm:$0xff]
    %v7013 = vld [vmem:[#allocation22 + $0x658] sm:$0xff]
    %v7014 = vld [vmem:[#allocation22 + $0x660] sm:$0xff]
    %v7015 = vld [vmem:[#allocation22 + $0x668] sm:$0xff]
    %v7016 = vld [vmem:[#allocation22 + $0x670] sm:$0xff]
    %v7017 = vld [vmem:[#allocation22 + $0x678] sm:$0xff]
    %v7018 = vld [vmem:[#allocation22 + $0x680] sm:$0xff]
    %v7019 = vld [vmem:[#allocation22 + $0x688] sm:$0xff]
    %v7020 = vld [vmem:[#allocation22 + $0x690] sm:$0xff]
    %v7021 = vld [vmem:[#allocation22 + $0x698] sm:$0xff]
    %v7022 = vld [vmem:[#allocation22 + $0x6a0] sm:$0xff]
    %v7023 = vld [vmem:[#allocation22 + $0x6a8] sm:$0xff]
    %v7024 = vld [vmem:[#allocation22 + $0x6b0] sm:$0xff]
    %v7025 = vld [vmem:[#allocation22 + $0x6b8] sm:$0xff]
    %v7026 = vld [vmem:[#allocation22 + $0x6c0] sm:$0xff]
    %v7027 = vld [vmem:[#allocation22 + $0x6c8] sm:$0xff]
    %v7028 = vld [vmem:[#allocation22 + $0x6d0] sm:$0xff]
    %v7029 = vld [vmem:[#allocation22 + $0x6d8] sm:$0xff]
    %v7030 = vld [vmem:[#allocation22 + $0x6e0] sm:$0xff]
    %v7031 = vld [vmem:[#allocation22 + $0x6e8] sm:$0xff]
    %v7032 = vld [vmem:[#allocation22 + $0x6f0] sm:$0xff]
    %v7033 = vld [vmem:[#allocation22 + $0x6f8] sm:$0xff]
    %v7034 = vld [vmem:[#allocation22 + $0x700] sm:$0xff]
    %v7035 = vld [vmem:[#allocation22 + $0x708] sm:$0xff]
    %v7036 = vld [vmem:[#allocation22 + $0x710] sm:$0xff]
    %v7037 = vld [vmem:[#allocation22 + $0x718] sm:$0xff]
    %v7038 = vld [vmem:[#allocation22 + $0x720] sm:$0xff]
    %v7039 = vld [vmem:[#allocation22 + $0x728] sm:$0xff]
    %v7040 = vld [vmem:[#allocation22 + $0x730] sm:$0xff]
    %v7041 = vld [vmem:[#allocation22 + $0x738] sm:$0xff]
    %v7042 = vld [vmem:[#allocation22 + $0x740] sm:$0xff]
    %v7043 = vld [vmem:[#allocation22 + $0x748] sm:$0xff]
    %v7044 = vld [vmem:[#allocation22 + $0x750] sm:$0xff]
    %v7045 = vld [vmem:[#allocation22 + $0x758] sm:$0xff]
    %v7046 = vld [vmem:[#allocation22 + $0x760] sm:$0xff]
    %v7047 = vld [vmem:[#allocation22 + $0x768] sm:$0xff]
    %v7048 = vld [vmem:[#allocation22 + $0x770] sm:$0xff]
    %v7049 = vld [vmem:[#allocation22 + $0x778] sm:$0xff]
    %v7050 = vld [vmem:[#allocation22 + $0x780] sm:$0xff]
    %v7051 = vld [vmem:[#allocation22 + $0x788] sm:$0xff]
    %v7052 = vld [vmem:[#allocation22 + $0x790] sm:$0xff]
    %v7053 = vld [vmem:[#allocation22 + $0x798] sm:$0xff]
    %v7054 = vld [vmem:[#allocation22 + $0x7a0] sm:$0xff]
    %v7055 = vld [vmem:[#allocation22 + $0x7a8] sm:$0xff]
    %v7056 = vld [vmem:[#allocation22 + $0x7b0] sm:$0xff]
    %v7057 = vld [vmem:[#allocation22 + $0x7b8] sm:$0xff]
    %v7058 = vld [vmem:[#allocation22 + $0x7c0] sm:$0xff]
    %v7059 = vld [vmem:[#allocation22 + $0x7c8] sm:$0xff]
    %v7060 = vld [vmem:[#allocation22 + $0x7d0] sm:$0xff]
    %v7061 = vld [vmem:[#allocation22 + $0x7d8] sm:$0xff]
    %v7062 = vld [vmem:[#allocation22 + $0x7e0] sm:$0xff]
    %v7063 = vld [vmem:[#allocation22 + $0x7e8] sm:$0xff]
    %v7064 = vld [vmem:[#allocation22 + $0x7f0] sm:$0xff]
    %v7065 = vld [vmem:[#allocation22 + $0x7f8] sm:$0xff]
    %v7066 = vld [vmem:[#allocation23] sm:$0xff]
    %v7068 = vperm.slane %v7066, 0
    %v7069 = vperm.slane %v7066, 1
    %v7070 = vperm.slane %v7066, 2
    %v7071 = vperm.slane %v7066, 3
    %v7072 = vperm.slane %v7066, 4
    %v7073 = vperm.slane %v7066, 5
    %v7074 = vperm.slane %v7066, 6
    %v7075 = vperm.slane %v7066, 7
    %v7340 = vunpack.c.l.b16 %v6810
    %v7341 = vunpack.c.h.b16 %v6810
    %v7342 = vunpack.c.l.b16 %v6811
    %v7343 = vunpack.c.h.b16 %v6811
    %v7344 = vunpack.c.l.b16 %v6812
    %v7345 = vunpack.c.h.b16 %v6812
    %v7346 = vunpack.c.l.b16 %v6813
    %v7347 = vunpack.c.h.b16 %v6813
    %v7348 = vunpack.c.l.b16 %v6814
    %v7349 = vunpack.c.h.b16 %v6814
    %v7350 = vunpack.c.l.b16 %v6815
    %v7351 = vunpack.c.h.b16 %v6815
    %v7352 = vunpack.c.l.b16 %v6816
    %v7353 = vunpack.c.h.b16 %v6816
    %v7354 = vunpack.c.l.b16 %v6817
    %v7355 = vunpack.c.h.b16 %v6817
    %v7356 = vunpack.c.l.b16 %v6818
    %v7357 = vunpack.c.h.b16 %v6818
    %v7358 = vunpack.c.l.b16 %v6819
    %v7359 = vunpack.c.h.b16 %v6819
    %v7360 = vunpack.c.l.b16 %v6820
    %v7361 = vunpack.c.h.b16 %v6820
    %v7362 = vunpack.c.l.b16 %v6821
    %v7363 = vunpack.c.h.b16 %v6821
    %v7364 = vunpack.c.l.b16 %v6822
    %v7365 = vunpack.c.h.b16 %v6822
    %v7366 = vunpack.c.l.b16 %v6823
    %v7367 = vunpack.c.h.b16 %v6823
    %v7368 = vunpack.c.l.b16 %v6824
    %v7369 = vunpack.c.h.b16 %v6824
    %v7370 = vunpack.c.l.b16 %v6825
    %v7371 = vunpack.c.h.b16 %v6825
    %v7372 = vunpack.c.l.b16 %v6826
    %v7373 = vunpack.c.h.b16 %v6826
    %v7374 = vunpack.c.l.b16 %v6827
    %v7375 = vunpack.c.h.b16 %v6827
    %v7376 = vunpack.c.l.b16 %v6828
    %v7377 = vunpack.c.h.b16 %v6828
    %v7378 = vunpack.c.l.b16 %v6829
    %v7379 = vunpack.c.h.b16 %v6829
    %v7380 = vunpack.c.l.b16 %v6830
    %v7381 = vunpack.c.h.b16 %v6830
    %v7382 = vunpack.c.l.b16 %v6831
    %v7383 = vunpack.c.h.b16 %v6831
    %v7384 = vunpack.c.l.b16 %v6832
    %v7385 = vunpack.c.h.b16 %v6832
    %v7386 = vunpack.c.l.b16 %v6833
    %v7387 = vunpack.c.h.b16 %v6833
    %v7388 = vunpack.c.l.b16 %v6834
    %v7389 = vunpack.c.h.b16 %v6834
    %v7390 = vunpack.c.l.b16 %v6835
    %v7391 = vunpack.c.h.b16 %v6835
    %v7392 = vunpack.c.l.b16 %v6836
    %v7393 = vunpack.c.h.b16 %v6836
    %v7394 = vunpack.c.l.b16 %v6837
    %v7395 = vunpack.c.h.b16 %v6837
    %v7396 = vunpack.c.l.b16 %v6838
    %v7397 = vunpack.c.h.b16 %v6838
    %v7398 = vunpack.c.l.b16 %v6839
    %v7399 = vunpack.c.h.b16 %v6839
    %v7400 = vunpack.c.l.b16 %v6840
    %v7401 = vunpack.c.h.b16 %v6840
    %v7402 = vunpack.c.l.b16 %v6841
    %v7403 = vunpack.c.h.b16 %v6841
    %v7404 = vunpack.c.l.b16 %v6842
    %v7405 = vunpack.c.h.b16 %v6842
    %v7406 = vunpack.c.l.b16 %v6843
    %v7407 = vunpack.c.h.b16 %v6843
    %v7408 = vunpack.c.l.b16 %v6844
    %v7409 = vunpack.c.h.b16 %v6844
    %v7410 = vunpack.c.l.b16 %v6845
    %v7411 = vunpack.c.h.b16 %v6845
    %v7412 = vunpack.c.l.b16 %v6846
    %v7413 = vunpack.c.h.b16 %v6846
    %v7414 = vunpack.c.l.b16 %v6847
    %v7415 = vunpack.c.h.b16 %v6847
    %v7416 = vunpack.c.l.b16 %v6848
    %v7417 = vunpack.c.h.b16 %v6848
    %v7418 = vunpack.c.l.b16 %v6849
    %v7419 = vunpack.c.h.b16 %v6849
    %v7420 = vunpack.c.l.b16 %v6850
    %v7421 = vunpack.c.h.b16 %v6850
    %v7422 = vunpack.c.l.b16 %v6851
    %v7423 = vunpack.c.h.b16 %v6851
    %v7424 = vunpack.c.l.b16 %v6852
    %v7425 = vunpack.c.h.b16 %v6852
    %v7426 = vunpack.c.l.b16 %v6853
    %v7427 = vunpack.c.h.b16 %v6853
    %v7428 = vunpack.c.l.b16 %v6854
    %v7429 = vunpack.c.h.b16 %v6854
    %v7430 = vunpack.c.l.b16 %v6855
    %v7431 = vunpack.c.h.b16 %v6855
    %v7432 = vunpack.c.l.b16 %v6856
    %v7433 = vunpack.c.h.b16 %v6856
    %v7434 = vunpack.c.l.b16 %v6857
    %v7435 = vunpack.c.h.b16 %v6857
    %v7436 = vunpack.c.l.b16 %v6858
    %v7437 = vunpack.c.h.b16 %v6858
    %v7438 = vunpack.c.l.b16 %v6859
    %v7439 = vunpack.c.h.b16 %v6859
    %v7440 = vunpack.c.l.b16 %v6860
    %v7441 = vunpack.c.h.b16 %v6860
    %v7442 = vunpack.c.l.b16 %v6861
    %v7443 = vunpack.c.h.b16 %v6861
    %v7444 = vunpack.c.l.b16 %v6862
    %v7445 = vunpack.c.h.b16 %v6862
    %v7446 = vunpack.c.l.b16 %v6863
    %v7447 = vunpack.c.h.b16 %v6863
    %v7448 = vunpack.c.l.b16 %v6864
    %v7449 = vunpack.c.h.b16 %v6864
    %v7450 = vunpack.c.l.b16 %v6865
    %v7451 = vunpack.c.h.b16 %v6865
    %v7452 = vunpack.c.l.b16 %v6866
    %v7453 = vunpack.c.h.b16 %v6866
    %v7454 = vunpack.c.l.b16 %v6867
    %v7455 = vunpack.c.h.b16 %v6867
    %v7456 = vunpack.c.l.b16 %v6868
    %v7457 = vunpack.c.h.b16 %v6868
    %v7458 = vunpack.c.l.b16 %v6869
    %v7459 = vunpack.c.h.b16 %v6869
    %v7460 = vunpack.c.l.b16 %v6870
    %v7461 = vunpack.c.h.b16 %v6870
    %v7462 = vunpack.c.l.b16 %v6871
    %v7463 = vunpack.c.h.b16 %v6871
    %v7464 = vunpack.c.l.b16 %v6872
    %v7465 = vunpack.c.h.b16 %v6872
    %v7466 = vunpack.c.l.b16 %v6873
    %v7467 = vunpack.c.h.b16 %v6873
    %v7468 = vunpack.c.l.b16 %v6874
    %v7469 = vunpack.c.h.b16 %v6874
    %v7470 = vunpack.c.l.b16 %v6875
    %v7471 = vunpack.c.h.b16 %v6875
    %v7472 = vunpack.c.l.b16 %v6876
    %v7473 = vunpack.c.h.b16 %v6876
    %v7474 = vunpack.c.l.b16 %v6877
    %v7475 = vunpack.c.h.b16 %v6877
    %v7476 = vunpack.c.l.b16 %v6878
    %v7477 = vunpack.c.h.b16 %v6878
    %v7478 = vunpack.c.l.b16 %v6879
    %v7479 = vunpack.c.h.b16 %v6879
    %v7480 = vunpack.c.l.b16 %v6880
    %v7481 = vunpack.c.h.b16 %v6880
    %v7482 = vunpack.c.l.b16 %v6881
    %v7483 = vunpack.c.h.b16 %v6881
    %v7484 = vunpack.c.l.b16 %v6882
    %v7485 = vunpack.c.h.b16 %v6882
    %v7486 = vunpack.c.l.b16 %v6883
    %v7487 = vunpack.c.h.b16 %v6883
    %v7488 = vunpack.c.l.b16 %v6884
    %v7489 = vunpack.c.h.b16 %v6884
    %v7490 = vunpack.c.l.b16 %v6885
    %v7491 = vunpack.c.h.b16 %v6885
    %v7492 = vunpack.c.l.b16 %v6886
    %v7493 = vunpack.c.h.b16 %v6886
    %v7494 = vunpack.c.l.b16 %v6887
    %v7495 = vunpack.c.h.b16 %v6887
    %v7496 = vunpack.c.l.b16 %v6888
    %v7497 = vunpack.c.h.b16 %v6888
    %v7498 = vunpack.c.l.b16 %v6889
    %v7499 = vunpack.c.h.b16 %v6889
    %v7500 = vunpack.c.l.b16 %v6890
    %v7501 = vunpack.c.h.b16 %v6890
    %v7502 = vunpack.c.l.b16 %v6891
    %v7503 = vunpack.c.h.b16 %v6891
    %v7504 = vunpack.c.l.b16 %v6892
    %v7505 = vunpack.c.h.b16 %v6892
    %v7506 = vunpack.c.l.b16 %v6893
    %v7507 = vunpack.c.h.b16 %v6893
    %v7508 = vunpack.c.l.b16 %v6894
    %v7509 = vunpack.c.h.b16 %v6894
    %v7510 = vunpack.c.l.b16 %v6895
    %v7511 = vunpack.c.h.b16 %v6895
    %v7512 = vunpack.c.l.b16 %v6896
    %v7513 = vunpack.c.h.b16 %v6896
    %v7514 = vunpack.c.l.b16 %v6897
    %v7515 = vunpack.c.h.b16 %v6897
    %v7516 = vunpack.c.l.b16 %v6898
    %v7517 = vunpack.c.h.b16 %v6898
    %v7518 = vunpack.c.l.b16 %v6899
    %v7519 = vunpack.c.h.b16 %v6899
    %v7520 = vunpack.c.l.b16 %v6900
    %v7521 = vunpack.c.h.b16 %v6900
    %v7522 = vunpack.c.l.b16 %v6901
    %v7523 = vunpack.c.h.b16 %v6901
    %v7524 = vunpack.c.l.b16 %v6902
    %v7525 = vunpack.c.h.b16 %v6902
    %v7526 = vunpack.c.l.b16 %v6903
    %v7527 = vunpack.c.h.b16 %v6903
    %v7528 = vunpack.c.l.b16 %v6904
    %v7529 = vunpack.c.h.b16 %v6904
    %v7530 = vunpack.c.l.b16 %v6905
    %v7531 = vunpack.c.h.b16 %v6905
    %v7532 = vunpack.c.l.b16 %v6906
    %v7533 = vunpack.c.h.b16 %v6906
    %v7534 = vunpack.c.l.b16 %v6907
    %v7535 = vunpack.c.h.b16 %v6907
    %v7536 = vunpack.c.l.b16 %v6908
    %v7537 = vunpack.c.h.b16 %v6908
    %v7538 = vunpack.c.l.b16 %v6909
    %v7539 = vunpack.c.h.b16 %v6909
    %v7540 = vunpack.c.l.b16 %v6910
    %v7541 = vunpack.c.h.b16 %v6910
    %v7542 = vunpack.c.l.b16 %v6911
    %v7543 = vunpack.c.h.b16 %v6911
    %v7544 = vunpack.c.l.b16 %v6912
    %v7545 = vunpack.c.h.b16 %v6912
    %v7546 = vunpack.c.l.b16 %v6913
    %v7547 = vunpack.c.h.b16 %v6913
    %v7548 = vunpack.c.l.b16 %v6914
    %v7549 = vunpack.c.h.b16 %v6914
    %v7550 = vunpack.c.l.b16 %v6915
    %v7551 = vunpack.c.h.b16 %v6915
    %v7552 = vunpack.c.l.b16 %v6916
    %v7553 = vunpack.c.h.b16 %v6916
    %v7554 = vunpack.c.l.b16 %v6917
    %v7555 = vunpack.c.h.b16 %v6917
    %v7556 = vunpack.c.l.b16 %v6918
    %v7557 = vunpack.c.h.b16 %v6918
    %v7558 = vunpack.c.l.b16 %v6919
    %v7559 = vunpack.c.h.b16 %v6919
    %v7560 = vunpack.c.l.b16 %v6920
    %v7561 = vunpack.c.h.b16 %v6920
    %v7562 = vunpack.c.l.b16 %v6921
    %v7563 = vunpack.c.h.b16 %v6921
    %v7564 = vunpack.c.l.b16 %v6922
    %v7565 = vunpack.c.h.b16 %v6922
    %v7566 = vunpack.c.l.b16 %v6923
    %v7567 = vunpack.c.h.b16 %v6923
    %v7568 = vunpack.c.l.b16 %v6924
    %v7569 = vunpack.c.h.b16 %v6924
    %v7570 = vunpack.c.l.b16 %v6925
    %v7571 = vunpack.c.h.b16 %v6925
    %v7572 = vunpack.c.l.b16 %v6926
    %v7573 = vunpack.c.h.b16 %v6926
    %v7574 = vunpack.c.l.b16 %v6927
    %v7575 = vunpack.c.h.b16 %v6927
    %v7576 = vunpack.c.l.b16 %v6928
    %v7577 = vunpack.c.h.b16 %v6928
    %v7578 = vunpack.c.l.b16 %v6929
    %v7579 = vunpack.c.h.b16 %v6929
    %v7580 = vunpack.c.l.b16 %v6930
    %v7581 = vunpack.c.h.b16 %v6930
    %v7582 = vunpack.c.l.b16 %v6931
    %v7583 = vunpack.c.h.b16 %v6931
    %v7584 = vunpack.c.l.b16 %v6932
    %v7585 = vunpack.c.h.b16 %v6932
    %v7586 = vunpack.c.l.b16 %v6933
    %v7587 = vunpack.c.h.b16 %v6933
    %v7588 = vunpack.c.l.b16 %v6934
    %v7589 = vunpack.c.h.b16 %v6934
    %v7590 = vunpack.c.l.b16 %v6935
    %v7591 = vunpack.c.h.b16 %v6935
    %v7592 = vunpack.c.l.b16 %v6936
    %v7593 = vunpack.c.h.b16 %v6936
    %v7594 = vunpack.c.l.b16 %v6937
    %v7595 = vunpack.c.h.b16 %v6937
    %v7596 = vunpack.c.l.b16 %v6938
    %v7597 = vunpack.c.h.b16 %v6938
    %v7598 = vunpack.c.l.b16 %v6939
    %v7599 = vunpack.c.h.b16 %v6939
    %v7600 = vunpack.c.l.b16 %v6940
    %v7601 = vunpack.c.h.b16 %v6940
    %v7602 = vunpack.c.l.b16 %v6941
    %v7603 = vunpack.c.h.b16 %v6941
    %v7604 = vunpack.c.l.b16 %v6942
    %v7605 = vunpack.c.h.b16 %v6942
    %v7606 = vunpack.c.l.b16 %v6943
    %v7607 = vunpack.c.h.b16 %v6943
    %v7608 = vunpack.c.l.b16 %v6944
    %v7609 = vunpack.c.h.b16 %v6944
    %v7610 = vunpack.c.l.b16 %v6945
    %v7611 = vunpack.c.h.b16 %v6945
    %v7612 = vunpack.c.l.b16 %v6946
    %v7613 = vunpack.c.h.b16 %v6946
    %v7614 = vunpack.c.l.b16 %v6947
    %v7615 = vunpack.c.h.b16 %v6947
    %v7616 = vunpack.c.l.b16 %v6948
    %v7617 = vunpack.c.h.b16 %v6948
    %v7618 = vunpack.c.l.b16 %v6949
    %v7619 = vunpack.c.h.b16 %v6949
    %v7620 = vunpack.c.l.b16 %v6950
    %v7621 = vunpack.c.h.b16 %v6950
    %v7622 = vunpack.c.l.b16 %v6951
    %v7623 = vunpack.c.h.b16 %v6951
    %v7624 = vunpack.c.l.b16 %v6952
    %v7625 = vunpack.c.h.b16 %v6952
    %v7626 = vunpack.c.l.b16 %v6953
    %v7627 = vunpack.c.h.b16 %v6953
    %v7628 = vunpack.c.l.b16 %v6954
    %v7629 = vunpack.c.h.b16 %v6954
    %v7630 = vunpack.c.l.b16 %v6955
    %v7631 = vunpack.c.h.b16 %v6955
    %v7632 = vunpack.c.l.b16 %v6956
    %v7633 = vunpack.c.h.b16 %v6956
    %v7634 = vunpack.c.l.b16 %v6957
    %v7635 = vunpack.c.h.b16 %v6957
    %v7636 = vunpack.c.l.b16 %v6958
    %v7637 = vunpack.c.h.b16 %v6958
    %v7638 = vunpack.c.l.b16 %v6959
    %v7639 = vunpack.c.h.b16 %v6959
    %v7640 = vunpack.c.l.b16 %v6960
    %v7641 = vunpack.c.h.b16 %v6960
    %v7642 = vunpack.c.l.b16 %v6961
    %v7643 = vunpack.c.h.b16 %v6961
    %v7644 = vunpack.c.l.b16 %v6962
    %v7645 = vunpack.c.h.b16 %v6962
    %v7646 = vunpack.c.l.b16 %v6963
    %v7647 = vunpack.c.h.b16 %v6963
    %v7648 = vunpack.c.l.b16 %v6964
    %v7649 = vunpack.c.h.b16 %v6964
    %v7650 = vunpack.c.l.b16 %v6965
    %v7651 = vunpack.c.h.b16 %v6965
    %v7652 = vunpack.c.l.b16 %v6966
    %v7653 = vunpack.c.h.b16 %v6966
    %v7654 = vunpack.c.l.b16 %v6967
    %v7655 = vunpack.c.h.b16 %v6967
    %v7656 = vunpack.c.l.b16 %v6968
    %v7657 = vunpack.c.h.b16 %v6968
    %v7658 = vunpack.c.l.b16 %v6969
    %v7659 = vunpack.c.h.b16 %v6969
    %v7660 = vunpack.c.l.b16 %v6970
    %v7661 = vunpack.c.h.b16 %v6970
    %v7662 = vunpack.c.l.b16 %v6971
    %v7663 = vunpack.c.h.b16 %v6971
    %v7664 = vunpack.c.l.b16 %v6972
    %v7665 = vunpack.c.h.b16 %v6972
    %v7666 = vunpack.c.l.b16 %v6973
    %v7667 = vunpack.c.h.b16 %v6973
    %v7668 = vunpack.c.l.b16 %v6974
    %v7669 = vunpack.c.h.b16 %v6974
    %v7670 = vunpack.c.l.b16 %v6975
    %v7671 = vunpack.c.h.b16 %v6975
    %v7672 = vunpack.c.l.b16 %v6976
    %v7673 = vunpack.c.h.b16 %v6976
    %v7674 = vunpack.c.l.b16 %v6977
    %v7675 = vunpack.c.h.b16 %v6977
    %v7676 = vunpack.c.l.b16 %v6978
    %v7677 = vunpack.c.h.b16 %v6978
    %v7678 = vunpack.c.l.b16 %v6979
    %v7679 = vunpack.c.h.b16 %v6979
    %v7680 = vunpack.c.l.b16 %v6980
    %v7681 = vunpack.c.h.b16 %v6980
    %v7682 = vunpack.c.l.b16 %v6981
    %v7683 = vunpack.c.h.b16 %v6981
    %v7684 = vunpack.c.l.b16 %v6982
    %v7685 = vunpack.c.h.b16 %v6982
    %v7686 = vunpack.c.l.b16 %v6983
    %v7687 = vunpack.c.h.b16 %v6983
    %v7688 = vunpack.c.l.b16 %v6984
    %v7689 = vunpack.c.h.b16 %v6984
    %v7690 = vunpack.c.l.b16 %v6985
    %v7691 = vunpack.c.h.b16 %v6985
    %v7692 = vunpack.c.l.b16 %v6986
    %v7693 = vunpack.c.h.b16 %v6986
    %v7694 = vunpack.c.l.b16 %v6987
    %v7695 = vunpack.c.h.b16 %v6987
    %v7696 = vunpack.c.l.b16 %v6988
    %v7697 = vunpack.c.h.b16 %v6988
    %v7698 = vunpack.c.l.b16 %v6989
    %v7699 = vunpack.c.h.b16 %v6989
    %v7700 = vunpack.c.l.b16 %v6990
    %v7701 = vunpack.c.h.b16 %v6990
    %v7702 = vunpack.c.l.b16 %v6991
    %v7703 = vunpack.c.h.b16 %v6991
    %v7704 = vunpack.c.l.b16 %v6992
    %v7705 = vunpack.c.h.b16 %v6992
    %v7706 = vunpack.c.l.b16 %v6993
    %v7707 = vunpack.c.h.b16 %v6993
    %v7708 = vunpack.c.l.b16 %v6994
    %v7709 = vunpack.c.h.b16 %v6994
    %v7710 = vunpack.c.l.b16 %v6995
    %v7711 = vunpack.c.h.b16 %v6995
    %v7712 = vunpack.c.l.b16 %v6996
    %v7713 = vunpack.c.h.b16 %v6996
    %v7714 = vunpack.c.l.b16 %v6997
    %v7715 = vunpack.c.h.b16 %v6997
    %v7716 = vunpack.c.l.b16 %v6998
    %v7717 = vunpack.c.h.b16 %v6998
    %v7718 = vunpack.c.l.b16 %v6999
    %v7719 = vunpack.c.h.b16 %v6999
    %v7720 = vunpack.c.l.b16 %v7000
    %v7721 = vunpack.c.h.b16 %v7000
    %v7722 = vunpack.c.l.b16 %v7001
    %v7723 = vunpack.c.h.b16 %v7001
    %v7724 = vunpack.c.l.b16 %v7002
    %v7725 = vunpack.c.h.b16 %v7002
    %v7726 = vunpack.c.l.b16 %v7003
    %v7727 = vunpack.c.h.b16 %v7003
    %v7728 = vunpack.c.l.b16 %v7004
    %v7729 = vunpack.c.h.b16 %v7004
    %v7730 = vunpack.c.l.b16 %v7005
    %v7731 = vunpack.c.h.b16 %v7005
    %v7732 = vunpack.c.l.b16 %v7006
    %v7733 = vunpack.c.h.b16 %v7006
    %v7734 = vunpack.c.l.b16 %v7007
    %v7735 = vunpack.c.h.b16 %v7007
    %v7736 = vunpack.c.l.b16 %v7008
    %v7737 = vunpack.c.h.b16 %v7008
    %v7738 = vunpack.c.l.b16 %v7009
    %v7739 = vunpack.c.h.b16 %v7009
    %v7740 = vunpack.c.l.b16 %v7010
    %v7741 = vunpack.c.h.b16 %v7010
    %v7742 = vunpack.c.l.b16 %v7011
    %v7743 = vunpack.c.h.b16 %v7011
    %v7744 = vunpack.c.l.b16 %v7012
    %v7745 = vunpack.c.h.b16 %v7012
    %v7746 = vunpack.c.l.b16 %v7013
    %v7747 = vunpack.c.h.b16 %v7013
    %v7748 = vunpack.c.l.b16 %v7014
    %v7749 = vunpack.c.h.b16 %v7014
    %v7750 = vunpack.c.l.b16 %v7015
    %v7751 = vunpack.c.h.b16 %v7015
    %v7752 = vunpack.c.l.b16 %v7016
    %v7753 = vunpack.c.h.b16 %v7016
    %v7754 = vunpack.c.l.b16 %v7017
    %v7755 = vunpack.c.h.b16 %v7017
    %v7756 = vunpack.c.l.b16 %v7018
    %v7757 = vunpack.c.h.b16 %v7018
    %v7758 = vunpack.c.l.b16 %v7019
    %v7759 = vunpack.c.h.b16 %v7019
    %v7760 = vunpack.c.l.b16 %v7020
    %v7761 = vunpack.c.h.b16 %v7020
    %v7762 = vunpack.c.l.b16 %v7021
    %v7763 = vunpack.c.h.b16 %v7021
    %v7764 = vunpack.c.l.b16 %v7022
    %v7765 = vunpack.c.h.b16 %v7022
    %v7766 = vunpack.c.l.b16 %v7023
    %v7767 = vunpack.c.h.b16 %v7023
    %v7768 = vunpack.c.l.b16 %v7024
    %v7769 = vunpack.c.h.b16 %v7024
    %v7770 = vunpack.c.l.b16 %v7025
    %v7771 = vunpack.c.h.b16 %v7025
    %v7772 = vunpack.c.l.b16 %v7026
    %v7773 = vunpack.c.h.b16 %v7026
    %v7774 = vunpack.c.l.b16 %v7027
    %v7775 = vunpack.c.h.b16 %v7027
    %v7776 = vunpack.c.l.b16 %v7028
    %v7777 = vunpack.c.h.b16 %v7028
    %v7778 = vunpack.c.l.b16 %v7029
    %v7779 = vunpack.c.h.b16 %v7029
    %v7780 = vunpack.c.l.b16 %v7030
    %v7781 = vunpack.c.h.b16 %v7030
    %v7782 = vunpack.c.l.b16 %v7031
    %v7783 = vunpack.c.h.b16 %v7031
    %v7784 = vunpack.c.l.b16 %v7032
    %v7785 = vunpack.c.h.b16 %v7032
    %v7786 = vunpack.c.l.b16 %v7033
    %v7787 = vunpack.c.h.b16 %v7033
    %v7788 = vunpack.c.l.b16 %v7034
    %v7789 = vunpack.c.h.b16 %v7034
    %v7790 = vunpack.c.l.b16 %v7035
    %v7791 = vunpack.c.h.b16 %v7035
    %v7792 = vunpack.c.l.b16 %v7036
    %v7793 = vunpack.c.h.b16 %v7036
    %v7794 = vunpack.c.l.b16 %v7037
    %v7795 = vunpack.c.h.b16 %v7037
    %v7796 = vunpack.c.l.b16 %v7038
    %v7797 = vunpack.c.h.b16 %v7038
    %v7798 = vunpack.c.l.b16 %v7039
    %v7799 = vunpack.c.h.b16 %v7039
    %v7800 = vunpack.c.l.b16 %v7040
    %v7801 = vunpack.c.h.b16 %v7040
    %v7802 = vunpack.c.l.b16 %v7041
    %v7803 = vunpack.c.h.b16 %v7041
    %v7804 = vunpack.c.l.b16 %v7042
    %v7805 = vunpack.c.h.b16 %v7042
    %v7806 = vunpack.c.l.b16 %v7043
    %v7807 = vunpack.c.h.b16 %v7043
    %v7808 = vunpack.c.l.b16 %v7044
    %v7809 = vunpack.c.h.b16 %v7044
    %v7810 = vunpack.c.l.b16 %v7045
    %v7811 = vunpack.c.h.b16 %v7045
    %v7812 = vunpack.c.l.b16 %v7046
    %v7813 = vunpack.c.h.b16 %v7046
    %v7814 = vunpack.c.l.b16 %v7047
    %v7815 = vunpack.c.h.b16 %v7047
    %v7816 = vunpack.c.l.b16 %v7048
    %v7817 = vunpack.c.h.b16 %v7048
    %v7818 = vunpack.c.l.b16 %v7049
    %v7819 = vunpack.c.h.b16 %v7049
    %v7820 = vunpack.c.l.b16 %v7050
    %v7821 = vunpack.c.h.b16 %v7050
    %v7822 = vunpack.c.l.b16 %v7051
    %v7823 = vunpack.c.h.b16 %v7051
    %v7824 = vunpack.c.l.b16 %v7052
    %v7825 = vunpack.c.h.b16 %v7052
    %v7826 = vunpack.c.l.b16 %v7053
    %v7827 = vunpack.c.h.b16 %v7053
    %v7828 = vunpack.c.l.b16 %v7054
    %v7829 = vunpack.c.h.b16 %v7054
    %v7830 = vunpack.c.l.b16 %v7055
    %v7831 = vunpack.c.h.b16 %v7055
    %v7832 = vunpack.c.l.b16 %v7056
    %v7833 = vunpack.c.h.b16 %v7056
    %v7834 = vunpack.c.l.b16 %v7057
    %v7835 = vunpack.c.h.b16 %v7057
    %v7836 = vunpack.c.l.b16 %v7058
    %v7837 = vunpack.c.h.b16 %v7058
    %v7838 = vunpack.c.l.b16 %v7059
    %v7839 = vunpack.c.h.b16 %v7059
    %v7840 = vunpack.c.l.b16 %v7060
    %v7841 = vunpack.c.h.b16 %v7060
    %v7842 = vunpack.c.l.b16 %v7061
    %v7843 = vunpack.c.h.b16 %v7061
    %v7844 = vunpack.c.l.b16 %v7062
    %v7845 = vunpack.c.h.b16 %v7062
    %v7846 = vunpack.c.l.b16 %v7063
    %v7847 = vunpack.c.h.b16 %v7063
    %v7848 = vunpack.c.l.b16 %v7064
    %v7849 = vunpack.c.h.b16 %v7064
    %v7850 = vunpack.c.l.b16 %v7065
    %v7851 = vunpack.c.h.b16 %v7065
    %v7852 = vpack.c.b16 %v7348, %v7340
    %v7853 = vpack.c.b16 %v7349, %v7341
    %v7854 = vpack.c.b16 %v7350, %v7342
    %v7855 = vpack.c.b16 %v7351, %v7343
    %v7856 = vpack.c.b16 %v7352, %v7344
    %v7857 = vpack.c.b16 %v7353, %v7345
    %v7858 = vpack.c.b16 %v7354, %v7346
    %v7859 = vpack.c.b16 %v7355, %v7347
    %v7860 = vpack.c.b16 %v7364, %v7356
    %v7861 = vpack.c.b16 %v7365, %v7357
    %v7862 = vpack.c.b16 %v7366, %v7358
    %v7863 = vpack.c.b16 %v7367, %v7359
    %v7864 = vpack.c.b16 %v7368, %v7360
    %v7865 = vpack.c.b16 %v7369, %v7361
    %v7866 = vpack.c.b16 %v7370, %v7362
    %v7867 = vpack.c.b16 %v7371, %v7363
    %v7868 = vpack.c.b16 %v7380, %v7372
    %v7869 = vpack.c.b16 %v7381, %v7373
    %v7870 = vpack.c.b16 %v7382, %v7374
    %v7871 = vpack.c.b16 %v7383, %v7375
    %v7872 = vpack.c.b16 %v7384, %v7376
    %v7873 = vpack.c.b16 %v7385, %v7377
    %v7874 = vpack.c.b16 %v7386, %v7378
    %v7875 = vpack.c.b16 %v7387, %v7379
    %v7876 = vpack.c.b16 %v7396, %v7388
    %v7877 = vpack.c.b16 %v7397, %v7389
    %v7878 = vpack.c.b16 %v7398, %v7390
    %v7879 = vpack.c.b16 %v7399, %v7391
    %v7880 = vpack.c.b16 %v7400, %v7392
    %v7881 = vpack.c.b16 %v7401, %v7393
    %v7882 = vpack.c.b16 %v7402, %v7394
    %v7883 = vpack.c.b16 %v7403, %v7395
    %v7884 = vpack.c.b16 %v7412, %v7404
    %v7885 = vpack.c.b16 %v7413, %v7405
    %v7886 = vpack.c.b16 %v7414, %v7406
    %v7887 = vpack.c.b16 %v7415, %v7407
    %v7888 = vpack.c.b16 %v7416, %v7408
    %v7889 = vpack.c.b16 %v7417, %v7409
    %v7890 = vpack.c.b16 %v7418, %v7410
    %v7891 = vpack.c.b16 %v7419, %v7411
    %v7892 = vpack.c.b16 %v7428, %v7420
    %v7893 = vpack.c.b16 %v7429, %v7421
    %v7894 = vpack.c.b16 %v7430, %v7422
    %v7895 = vpack.c.b16 %v7431, %v7423
    %v7896 = vpack.c.b16 %v7432, %v7424
    %v7897 = vpack.c.b16 %v7433, %v7425
    %v7898 = vpack.c.b16 %v7434, %v7426
    %v7899 = vpack.c.b16 %v7435, %v7427
    %v7900 = vpack.c.b16 %v7444, %v7436
    %v7901 = vpack.c.b16 %v7445, %v7437
    %v7902 = vpack.c.b16 %v7446, %v7438
    %v7903 = vpack.c.b16 %v7447, %v7439
    %v7904 = vpack.c.b16 %v7448, %v7440
    %v7905 = vpack.c.b16 %v7449, %v7441
    %v7906 = vpack.c.b16 %v7450, %v7442
    %v7907 = vpack.c.b16 %v7451, %v7443
    %v7908 = vpack.c.b16 %v7460, %v7452
    %v7909 = vpack.c.b16 %v7461, %v7453
    %v7910 = vpack.c.b16 %v7462, %v7454
    %v7911 = vpack.c.b16 %v7463, %v7455
    %v7912 = vpack.c.b16 %v7464, %v7456
    %v7913 = vpack.c.b16 %v7465, %v7457
    %v7914 = vpack.c.b16 %v7466, %v7458
    %v7915 = vpack.c.b16 %v7467, %v7459
    %v7916 = vpack.c.b16 %v7476, %v7468
    %v7917 = vpack.c.b16 %v7477, %v7469
    %v7918 = vpack.c.b16 %v7478, %v7470
    %v7919 = vpack.c.b16 %v7479, %v7471
    %v7920 = vpack.c.b16 %v7480, %v7472
    %v7921 = vpack.c.b16 %v7481, %v7473
    %v7922 = vpack.c.b16 %v7482, %v7474
    %v7923 = vpack.c.b16 %v7483, %v7475
    %v7924 = vpack.c.b16 %v7492, %v7484
    %v7925 = vpack.c.b16 %v7493, %v7485
    %v7926 = vpack.c.b16 %v7494, %v7486
    %v7927 = vpack.c.b16 %v7495, %v7487
    %v7928 = vpack.c.b16 %v7496, %v7488
    %v7929 = vpack.c.b16 %v7497, %v7489
    %v7930 = vpack.c.b16 %v7498, %v7490
    %v7931 = vpack.c.b16 %v7499, %v7491
    %v7932 = vpack.c.b16 %v7508, %v7500
    %v7933 = vpack.c.b16 %v7509, %v7501
    %v7934 = vpack.c.b16 %v7510, %v7502
    %v7935 = vpack.c.b16 %v7511, %v7503
    %v7936 = vpack.c.b16 %v7512, %v7504
    %v7937 = vpack.c.b16 %v7513, %v7505
    %v7938 = vpack.c.b16 %v7514, %v7506
    %v7939 = vpack.c.b16 %v7515, %v7507
    %v7940 = vpack.c.b16 %v7524, %v7516
    %v7941 = vpack.c.b16 %v7525, %v7517
    %v7942 = vpack.c.b16 %v7526, %v7518
    %v7943 = vpack.c.b16 %v7527, %v7519
    %v7944 = vpack.c.b16 %v7528, %v7520
    %v7945 = vpack.c.b16 %v7529, %v7521
    %v7946 = vpack.c.b16 %v7530, %v7522
    %v7947 = vpack.c.b16 %v7531, %v7523
    %v7948 = vpack.c.b16 %v7540, %v7532
    %v7949 = vpack.c.b16 %v7541, %v7533
    %v7950 = vpack.c.b16 %v7542, %v7534
    %v7951 = vpack.c.b16 %v7543, %v7535
    %v7952 = vpack.c.b16 %v7544, %v7536
    %v7953 = vpack.c.b16 %v7545, %v7537
    %v7954 = vpack.c.b16 %v7546, %v7538
    %v7955 = vpack.c.b16 %v7547, %v7539
    %v7956 = vpack.c.b16 %v7556, %v7548
    %v7957 = vpack.c.b16 %v7557, %v7549
    %v7958 = vpack.c.b16 %v7558, %v7550
    %v7959 = vpack.c.b16 %v7559, %v7551
    %v7960 = vpack.c.b16 %v7560, %v7552
    %v7961 = vpack.c.b16 %v7561, %v7553
    %v7962 = vpack.c.b16 %v7562, %v7554
    %v7963 = vpack.c.b16 %v7563, %v7555
    %v7964 = vpack.c.b16 %v7572, %v7564
    %v7965 = vpack.c.b16 %v7573, %v7565
    %v7966 = vpack.c.b16 %v7574, %v7566
    %v7967 = vpack.c.b16 %v7575, %v7567
    %v7968 = vpack.c.b16 %v7576, %v7568
    %v7969 = vpack.c.b16 %v7577, %v7569
    %v7970 = vpack.c.b16 %v7578, %v7570
    %v7971 = vpack.c.b16 %v7579, %v7571
    %v7972 = vpack.c.b16 %v7588, %v7580
    %v7973 = vpack.c.b16 %v7589, %v7581
    %v7974 = vpack.c.b16 %v7590, %v7582
    %v7975 = vpack.c.b16 %v7591, %v7583
    %v7976 = vpack.c.b16 %v7592, %v7584
    %v7977 = vpack.c.b16 %v7593, %v7585
    %v7978 = vpack.c.b16 %v7594, %v7586
    %v7979 = vpack.c.b16 %v7595, %v7587
    %v7980 = vpack.c.b16 %v7604, %v7596
    %v7981 = vpack.c.b16 %v7605, %v7597
    %v7982 = vpack.c.b16 %v7606, %v7598
    %v7983 = vpack.c.b16 %v7607, %v7599
    %v7984 = vpack.c.b16 %v7608, %v7600
    %v7985 = vpack.c.b16 %v7609, %v7601
    %v7986 = vpack.c.b16 %v7610, %v7602
    %v7987 = vpack.c.b16 %v7611, %v7603
    %v7988 = vpack.c.b16 %v7620, %v7612
    %v7989 = vpack.c.b16 %v7621, %v7613
    %v7990 = vpack.c.b16 %v7622, %v7614
    %v7991 = vpack.c.b16 %v7623, %v7615
    %v7992 = vpack.c.b16 %v7624, %v7616
    %v7993 = vpack.c.b16 %v7625, %v7617
    %v7994 = vpack.c.b16 %v7626, %v7618
    %v7995 = vpack.c.b16 %v7627, %v7619
    %v7996 = vpack.c.b16 %v7636, %v7628
    %v7997 = vpack.c.b16 %v7637, %v7629
    %v7998 = vpack.c.b16 %v7638, %v7630
    %v7999 = vpack.c.b16 %v7639, %v7631
    %v8000 = vpack.c.b16 %v7640, %v7632
    %v8001 = vpack.c.b16 %v7641, %v7633
    %v8002 = vpack.c.b16 %v7642, %v7634
    %v8003 = vpack.c.b16 %v7643, %v7635
    %v8004 = vpack.c.b16 %v7652, %v7644
    %v8005 = vpack.c.b16 %v7653, %v7645
    %v8006 = vpack.c.b16 %v7654, %v7646
    %v8007 = vpack.c.b16 %v7655, %v7647
    %v8008 = vpack.c.b16 %v7656, %v7648
    %v8009 = vpack.c.b16 %v7657, %v7649
    %v8010 = vpack.c.b16 %v7658, %v7650
    %v8011 = vpack.c.b16 %v7659, %v7651
    %v8012 = vpack.c.b16 %v7668, %v7660
    %v8013 = vpack.c.b16 %v7669, %v7661
    %v8014 = vpack.c.b16 %v7670, %v7662
    %v8015 = vpack.c.b16 %v7671, %v7663
    %v8016 = vpack.c.b16 %v7672, %v7664
    %v8017 = vpack.c.b16 %v7673, %v7665
    %v8018 = vpack.c.b16 %v7674, %v7666
    %v8019 = vpack.c.b16 %v7675, %v7667
    %v8020 = vpack.c.b16 %v7684, %v7676
    %v8021 = vpack.c.b16 %v7685, %v7677
    %v8022 = vpack.c.b16 %v7686, %v7678
    %v8023 = vpack.c.b16 %v7687, %v7679
    %v8024 = vpack.c.b16 %v7688, %v7680
    %v8025 = vpack.c.b16 %v7689, %v7681
    %v8026 = vpack.c.b16 %v7690, %v7682
    %v8027 = vpack.c.b16 %v7691, %v7683
    %v8028 = vpack.c.b16 %v7700, %v7692
    %v8029 = vpack.c.b16 %v7701, %v7693
    %v8030 = vpack.c.b16 %v7702, %v7694
    %v8031 = vpack.c.b16 %v7703, %v7695
    %v8032 = vpack.c.b16 %v7704, %v7696
    %v8033 = vpack.c.b16 %v7705, %v7697
    %v8034 = vpack.c.b16 %v7706, %v7698
    %v8035 = vpack.c.b16 %v7707, %v7699
    %v8036 = vpack.c.b16 %v7716, %v7708
    %v8037 = vpack.c.b16 %v7717, %v7709
    %v8038 = vpack.c.b16 %v7718, %v7710
    %v8039 = vpack.c.b16 %v7719, %v7711
    %v8040 = vpack.c.b16 %v7720, %v7712
    %v8041 = vpack.c.b16 %v7721, %v7713
    %v8042 = vpack.c.b16 %v7722, %v7714
    %v8043 = vpack.c.b16 %v7723, %v7715
    %v8044 = vpack.c.b16 %v7732, %v7724
    %v8045 = vpack.c.b16 %v7733, %v7725
    %v8046 = vpack.c.b16 %v7734, %v7726
    %v8047 = vpack.c.b16 %v7735, %v7727
    %v8048 = vpack.c.b16 %v7736, %v7728
    %v8049 = vpack.c.b16 %v7737, %v7729
    %v8050 = vpack.c.b16 %v7738, %v7730
    %v8051 = vpack.c.b16 %v7739, %v7731
    %v8052 = vpack.c.b16 %v7748, %v7740
    %v8053 = vpack.c.b16 %v7749, %v7741
    %v8054 = vpack.c.b16 %v7750, %v7742
    %v8055 = vpack.c.b16 %v7751, %v7743
    %v8056 = vpack.c.b16 %v7752, %v7744
    %v8057 = vpack.c.b16 %v7753, %v7745
    %v8058 = vpack.c.b16 %v7754, %v7746
    %v8059 = vpack.c.b16 %v7755, %v7747
    %v8060 = vpack.c.b16 %v7764, %v7756
    %v8061 = vpack.c.b16 %v7765, %v7757
    %v8062 = vpack.c.b16 %v7766, %v7758
    %v8063 = vpack.c.b16 %v7767, %v7759
    %v8064 = vpack.c.b16 %v7768, %v7760
    %v8065 = vpack.c.b16 %v7769, %v7761
    %v8066 = vpack.c.b16 %v7770, %v7762
    %v8067 = vpack.c.b16 %v7771, %v7763
    %v8068 = vpack.c.b16 %v7780, %v7772
    %v8069 = vpack.c.b16 %v7781, %v7773
    %v8070 = vpack.c.b16 %v7782, %v7774
    %v8071 = vpack.c.b16 %v7783, %v7775
    %v8072 = vpack.c.b16 %v7784, %v7776
    %v8073 = vpack.c.b16 %v7785, %v7777
    %v8074 = vpack.c.b16 %v7786, %v7778
    %v8075 = vpack.c.b16 %v7787, %v7779
    %v8076 = vpack.c.b16 %v7796, %v7788
    %v8077 = vpack.c.b16 %v7797, %v7789
    %v8078 = vpack.c.b16 %v7798, %v7790
    %v8079 = vpack.c.b16 %v7799, %v7791
    %v8080 = vpack.c.b16 %v7800, %v7792
    %v8081 = vpack.c.b16 %v7801, %v7793
    %v8082 = vpack.c.b16 %v7802, %v7794
    %v8083 = vpack.c.b16 %v7803, %v7795
    %v8084 = vpack.c.b16 %v7812, %v7804
    %v8085 = vpack.c.b16 %v7813, %v7805
    %v8086 = vpack.c.b16 %v7814, %v7806
    %v8087 = vpack.c.b16 %v7815, %v7807
    %v8088 = vpack.c.b16 %v7816, %v7808
    %v8089 = vpack.c.b16 %v7817, %v7809
    %v8090 = vpack.c.b16 %v7818, %v7810
    %v8091 = vpack.c.b16 %v7819, %v7811
    %v8092 = vpack.c.b16 %v7828, %v7820
    %v8093 = vpack.c.b16 %v7829, %v7821
    %v8094 = vpack.c.b16 %v7830, %v7822
    %v8095 = vpack.c.b16 %v7831, %v7823
    %v8096 = vpack.c.b16 %v7832, %v7824
    %v8097 = vpack.c.b16 %v7833, %v7825
    %v8098 = vpack.c.b16 %v7834, %v7826
    %v8099 = vpack.c.b16 %v7835, %v7827
    %v8100 = vpack.c.b16 %v7844, %v7836
    %v8101 = vpack.c.b16 %v7845, %v7837
    %v8102 = vpack.c.b16 %v7846, %v7838
    %v8103 = vpack.c.b16 %v7847, %v7839
    %v8104 = vpack.c.b16 %v7848, %v7840
    %v8105 = vpack.c.b16 %v7849, %v7841
    %v8106 = vpack.c.b16 %v7850, %v7842
    %v8107 = vpack.c.b16 %v7851, %v7843
    %8364 = vmatpush.bf16.msra.mxu0 %v7908
    %8365 = vmatpush.bf16.msra.mxu0 %v7900
    %8366 = vmatpush.bf16.msra.mxu0 %v7892
    %8367 = vmatpush.bf16.msra.mxu0 %v7884
    %8368 = vmatpush.bf16.msra.mxu0 %v7876
    %8369 = vmatpush.bf16.msra.mxu0 %v7868
    %8370 = vmatpush.bf16.msra.mxu0 %v7860
    %8371 = vmatpush.bf16.msra.mxu0 %v7852
    %8372 = vmatmul.bf16.gmra.mxu0 %v3032
    %v8373 = vpop.f32.mrf.mxu0
    %v8374 = vadd.f32 %v7068, %v8373
    %v8375 = vpop.f32.mrf.mxu0
    %v8376 = vadd.f32 %v7068, %v8375
    %8377 = vdwg.mxu0
    %8378 = vmatpush.bf16.msra.mxu0 %v7972
    %8379 = vmatpush.bf16.msra.mxu0 %v7964
    %8380 = vmatpush.bf16.msra.mxu0 %v7956
    %8381 = vmatpush.bf16.msra.mxu0 %v7948
    %8382 = vmatpush.bf16.msra.mxu0 %v7940
    %8383 = vmatpush.bf16.msra.mxu0 %v7932
    %8384 = vmatpush.bf16.msra.mxu0 %v7924
    %8385 = vmatpush.bf16.msra.mxu0 %v7916
    %8386 = vmatmul.bf16.gmra.mxu0 %v3033
    %v8387 = vpop.f32.mrf.mxu0
    %v8388 = vadd.f32 %v8374, %v8387
    %v8389 = vpop.f32.mrf.mxu0
    %v8390 = vadd.f32 %v8376, %v8389
    %8391 = vdwg.mxu0
    %8392 = vmatpush.bf16.msra.mxu0 %v8036
    %8393 = vmatpush.bf16.msra.mxu0 %v8028
    %8394 = vmatpush.bf16.msra.mxu0 %v8020
    %8395 = vmatpush.bf16.msra.mxu0 %v8012
    %8396 = vmatpush.bf16.msra.mxu0 %v8004
    %8397 = vmatpush.bf16.msra.mxu0 %v7996
    %8398 = vmatpush.bf16.msra.mxu0 %v7988
    %8399 = vmatpush.bf16.msra.mxu0 %v7980
    %8400 = vmatmul.bf16.gmra.mxu0 %v3034
    %v8401 = vpop.f32.mrf.mxu0
    %v8402 = vadd.f32 %v8388, %v8401
    %v8403 = vpop.f32.mrf.mxu0
    %v8404 = vadd.f32 %v8390, %v8403
    %8405 = vdwg.mxu0
    %8406 = vmatpush.bf16.msra.mxu0 %v8100
    %8407 = vmatpush.bf16.msra.mxu0 %v8092
    %8408 = vmatpush.bf16.msra.mxu0 %v8084
    %8409 = vmatpush.bf16.msra.mxu0 %v8076
    %8410 = vmatpush.bf16.msra.mxu0 %v8068
    %8411 = vmatpush.bf16.msra.mxu0 %v8060
    %8412 = vmatpush.bf16.msra.mxu0 %v8052
    %8413 = vmatpush.bf16.msra.mxu0 %v8044
    %8414 = vmatmul.bf16.gmra.mxu0 %v3035
    %v8415 = vpop.f32.mrf.mxu0
    %v8416 = vadd.f32 %v8402, %v8415
    %v8417 = vpop.f32.mrf.mxu0
    %v8418 = vadd.f32 %v8404, %v8417
    %8419 = vdwg.mxu0
    %8420 = vmatpush.bf16.msra.mxu0 %v7909
    %8421 = vmatpush.bf16.msra.mxu0 %v7901
    %8422 = vmatpush.bf16.msra.mxu0 %v7893
    %8423 = vmatpush.bf16.msra.mxu0 %v7885
    %8424 = vmatpush.bf16.msra.mxu0 %v7877
    %8425 = vmatpush.bf16.msra.mxu0 %v7869
    %8426 = vmatpush.bf16.msra.mxu0 %v7861
    %8427 = vmatpush.bf16.msra.mxu0 %v7853
    %8428 = vmatmul.bf16.gmra.mxu0 %v3032
    %v8429 = vpop.f32.mrf.mxu0
    %v8430 = vadd.f32 %v7069, %v8429
    %v8431 = vpop.f32.mrf.mxu0
    %v8432 = vadd.f32 %v7069, %v8431
    %8433 = vdwg.mxu0
    %8434 = vmatpush.bf16.msra.mxu0 %v7973
    %8435 = vmatpush.bf16.msra.mxu0 %v7965
    %8436 = vmatpush.bf16.msra.mxu0 %v7957
    %8437 = vmatpush.bf16.msra.mxu0 %v7949
    %8438 = vmatpush.bf16.msra.mxu0 %v7941
    %8439 = vmatpush.bf16.msra.mxu0 %v7933
    %8440 = vmatpush.bf16.msra.mxu0 %v7925
    %8441 = vmatpush.bf16.msra.mxu0 %v7917
    %8442 = vmatmul.bf16.gmra.mxu0 %v3033
    %v8443 = vpop.f32.mrf.mxu0
    %v8444 = vadd.f32 %v8430, %v8443
    %v8445 = vpop.f32.mrf.mxu0
    %v8446 = vadd.f32 %v8432, %v8445
    %8447 = vdwg.mxu0
    %8448 = vmatpush.bf16.msra.mxu0 %v8037
    %8449 = vmatpush.bf16.msra.mxu0 %v8029
    %8450 = vmatpush.bf16.msra.mxu0 %v8021
    %8451 = vmatpush.bf16.msra.mxu0 %v8013
    %8452 = vmatpush.bf16.msra.mxu0 %v8005
    %8453 = vmatpush.bf16.msra.mxu0 %v7997
    %8454 = vmatpush.bf16.msra.mxu0 %v7989
    %8455 = vmatpush.bf16.msra.mxu0 %v7981
    %8456 = vmatmul.bf16.gmra.mxu0 %v3034
    %v8457 = vpop.f32.mrf.mxu0
    %v8458 = vadd.f32 %v8444, %v8457
    %v8459 = vpop.f32.mrf.mxu0
    %v8460 = vadd.f32 %v8446, %v8459
    %8461 = vdwg.mxu0
    %8462 = vmatpush.bf16.msra.mxu0 %v8101
    %8463 = vmatpush.bf16.msra.mxu0 %v8093
    %8464 = vmatpush.bf16.msra.mxu0 %v8085
    %8465 = vmatpush.bf16.msra.mxu0 %v8077
    %8466 = vmatpush.bf16.msra.mxu0 %v8069
    %8467 = vmatpush.bf16.msra.mxu0 %v8061
    %8468 = vmatpush.bf16.msra.mxu0 %v8053
    %8469 = vmatpush.bf16.msra.mxu0 %v8045
    %8470 = vmatmul.bf16.gmra.mxu0 %v3035
    %v8471 = vpop.f32.mrf.mxu0
    %v8472 = vadd.f32 %v8458, %v8471
    %v8473 = vpop.f32.mrf.mxu0
    %v8474 = vadd.f32 %v8460, %v8473
    %8475 = vdwg.mxu0
    %8476 = vmatpush.bf16.msra.mxu0 %v7910
    %8477 = vmatpush.bf16.msra.mxu0 %v7902
    %8478 = vmatpush.bf16.msra.mxu0 %v7894
    %8479 = vmatpush.bf16.msra.mxu0 %v7886
    %8480 = vmatpush.bf16.msra.mxu0 %v7878
    %8481 = vmatpush.bf16.msra.mxu0 %v7870
    %8482 = vmatpush.bf16.msra.mxu0 %v7862
    %8483 = vmatpush.bf16.msra.mxu0 %v7854
    %8484 = vmatmul.bf16.gmra.mxu0 %v3032
    %v8485 = vpop.f32.mrf.mxu0
    %v8486 = vadd.f32 %v7070, %v8485
    %v8487 = vpop.f32.mrf.mxu0
    %v8488 = vadd.f32 %v7070, %v8487
    %8489 = vdwg.mxu0
    %8490 = vmatpush.bf16.msra.mxu0 %v7974
    %8491 = vmatpush.bf16.msra.mxu0 %v7966
    %8492 = vmatpush.bf16.msra.mxu0 %v7958
    %8493 = vmatpush.bf16.msra.mxu0 %v7950
    %8494 = vmatpush.bf16.msra.mxu0 %v7942
    %8495 = vmatpush.bf16.msra.mxu0 %v7934
    %8496 = vmatpush.bf16.msra.mxu0 %v7926
    %8497 = vmatpush.bf16.msra.mxu0 %v7918
    %8498 = vmatmul.bf16.gmra.mxu0 %v3033
    %v8499 = vpop.f32.mrf.mxu0
    %v8500 = vadd.f32 %v8486, %v8499
    %v8501 = vpop.f32.mrf.mxu0
    %v8502 = vadd.f32 %v8488, %v8501
    %8503 = vdwg.mxu0
    %8504 = vmatpush.bf16.msra.mxu0 %v8038
    %8505 = vmatpush.bf16.msra.mxu0 %v8030
    %8506 = vmatpush.bf16.msra.mxu0 %v8022
    %8507 = vmatpush.bf16.msra.mxu0 %v8014
    %8508 = vmatpush.bf16.msra.mxu0 %v8006
    %8509 = vmatpush.bf16.msra.mxu0 %v7998
    %8510 = vmatpush.bf16.msra.mxu0 %v7990
    %8511 = vmatpush.bf16.msra.mxu0 %v7982
    %8512 = vmatmul.bf16.gmra.mxu0 %v3034
    %v8513 = vpop.f32.mrf.mxu0
    %v8514 = vadd.f32 %v8500, %v8513
    %v8515 = vpop.f32.mrf.mxu0
    %v8516 = vadd.f32 %v8502, %v8515
    %8517 = vdwg.mxu0
    %8518 = vmatpush.bf16.msra.mxu0 %v8102
    %8519 = vmatpush.bf16.msra.mxu0 %v8094
    %8520 = vmatpush.bf16.msra.mxu0 %v8086
    %8521 = vmatpush.bf16.msra.mxu0 %v8078
    %8522 = vmatpush.bf16.msra.mxu0 %v8070
    %8523 = vmatpush.bf16.msra.mxu0 %v8062
    %8524 = vmatpush.bf16.msra.mxu0 %v8054
    %8525 = vmatpush.bf16.msra.mxu0 %v8046
    %8526 = vmatmul.bf16.gmra.mxu0 %v3035
    %v8527 = vpop.f32.mrf.mxu0
    %v8528 = vadd.f32 %v8514, %v8527
    %v8529 = vpop.f32.mrf.mxu0
    %v8530 = vadd.f32 %v8516, %v8529
    %8531 = vdwg.mxu0
    %8532 = vmatpush.bf16.msra.mxu0 %v7911
    %8533 = vmatpush.bf16.msra.mxu0 %v7903
    %8534 = vmatpush.bf16.msra.mxu0 %v7895
    %8535 = vmatpush.bf16.msra.mxu0 %v7887
    %8536 = vmatpush.bf16.msra.mxu0 %v7879
    %8537 = vmatpush.bf16.msra.mxu0 %v7871
    %8538 = vmatpush.bf16.msra.mxu0 %v7863
    %8539 = vmatpush.bf16.msra.mxu0 %v7855
    %8540 = vmatmul.bf16.gmra.mxu0 %v3032
    %v8541 = vpop.f32.mrf.mxu0
    %v8542 = vadd.f32 %v7071, %v8541
    %v8543 = vpop.f32.mrf.mxu0
    %v8544 = vadd.f32 %v7071, %v8543
    %8545 = vdwg.mxu0
    %8546 = vmatpush.bf16.msra.mxu0 %v7975
    %8547 = vmatpush.bf16.msra.mxu0 %v7967
    %8548 = vmatpush.bf16.msra.mxu0 %v7959
    %8549 = vmatpush.bf16.msra.mxu0 %v7951
    %8550 = vmatpush.bf16.msra.mxu0 %v7943
    %8551 = vmatpush.bf16.msra.mxu0 %v7935
    %8552 = vmatpush.bf16.msra.mxu0 %v7927
    %8553 = vmatpush.bf16.msra.mxu0 %v7919
    %8554 = vmatmul.bf16.gmra.mxu0 %v3033
    %v8555 = vpop.f32.mrf.mxu0
    %v8556 = vadd.f32 %v8542, %v8555
    %v8557 = vpop.f32.mrf.mxu0
    %v8558 = vadd.f32 %v8544, %v8557
    %8559 = vdwg.mxu0
    %8560 = vmatpush.bf16.msra.mxu0 %v8039
    %8561 = vmatpush.bf16.msra.mxu0 %v8031
    %8562 = vmatpush.bf16.msra.mxu0 %v8023
    %8563 = vmatpush.bf16.msra.mxu0 %v8015
    %8564 = vmatpush.bf16.msra.mxu0 %v8007
    %8565 = vmatpush.bf16.msra.mxu0 %v7999
    %8566 = vmatpush.bf16.msra.mxu0 %v7991
    %8567 = vmatpush.bf16.msra.mxu0 %v7983
    %8568 = vmatmul.bf16.gmra.mxu0 %v3034
    %v8569 = vpop.f32.mrf.mxu0
    %v8570 = vadd.f32 %v8556, %v8569
    %v8571 = vpop.f32.mrf.mxu0
    %v8572 = vadd.f32 %v8558, %v8571
    %8573 = vdwg.mxu0
    %8574 = vmatpush.bf16.msra.mxu0 %v8103
    %8575 = vmatpush.bf16.msra.mxu0 %v8095
    %8576 = vmatpush.bf16.msra.mxu0 %v8087
    %8577 = vmatpush.bf16.msra.mxu0 %v8079
    %8578 = vmatpush.bf16.msra.mxu0 %v8071
    %8579 = vmatpush.bf16.msra.mxu0 %v8063
    %8580 = vmatpush.bf16.msra.mxu0 %v8055
    %8581 = vmatpush.bf16.msra.mxu0 %v8047
    %8582 = vmatmul.bf16.gmra.mxu0 %v3035
    %v8583 = vpop.f32.mrf.mxu0
    %v8584 = vadd.f32 %v8570, %v8583
    %v8585 = vpop.f32.mrf.mxu0
    %v8586 = vadd.f32 %v8572, %v8585
    %8587 = vdwg.mxu0
    %8588 = vmatpush.bf16.msra.mxu0 %v7912
    %8589 = vmatpush.bf16.msra.mxu0 %v7904
    %8590 = vmatpush.bf16.msra.mxu0 %v7896
    %8591 = vmatpush.bf16.msra.mxu0 %v7888
    %8592 = vmatpush.bf16.msra.mxu0 %v7880
    %8593 = vmatpush.bf16.msra.mxu0 %v7872
    %8594 = vmatpush.bf16.msra.mxu0 %v7864
    %8595 = vmatpush.bf16.msra.mxu0 %v7856
    %8596 = vmatmul.bf16.gmra.mxu0 %v3032
    %v8597 = vpop.f32.mrf.mxu0
    %v8598 = vadd.f32 %v7072, %v8597
    %v8599 = vpop.f32.mrf.mxu0
    %v8600 = vadd.f32 %v7072, %v8599
    %8601 = vdwg.mxu0
    %8602 = vmatpush.bf16.msra.mxu0 %v7976
    %8603 = vmatpush.bf16.msra.mxu0 %v7968
    %8604 = vmatpush.bf16.msra.mxu0 %v7960
    %8605 = vmatpush.bf16.msra.mxu0 %v7952
    %8606 = vmatpush.bf16.msra.mxu0 %v7944
    %8607 = vmatpush.bf16.msra.mxu0 %v7936
    %8608 = vmatpush.bf16.msra.mxu0 %v7928
    %8609 = vmatpush.bf16.msra.mxu0 %v7920
    %8610 = vmatmul.bf16.gmra.mxu0 %v3033
    %v8611 = vpop.f32.mrf.mxu0
    %v8612 = vadd.f32 %v8598, %v8611
    %v8613 = vpop.f32.mrf.mxu0
    %v8614 = vadd.f32 %v8600, %v8613
    %8615 = vdwg.mxu0
    %8616 = vmatpush.bf16.msra.mxu0 %v8040
    %8617 = vmatpush.bf16.msra.mxu0 %v8032
    %8618 = vmatpush.bf16.msra.mxu0 %v8024
    %8619 = vmatpush.bf16.msra.mxu0 %v8016
    %8620 = vmatpush.bf16.msra.mxu0 %v8008
    %8621 = vmatpush.bf16.msra.mxu0 %v8000
    %8622 = vmatpush.bf16.msra.mxu0 %v7992
    %8623 = vmatpush.bf16.msra.mxu0 %v7984
    %8624 = vmatmul.bf16.gmra.mxu0 %v3034
    %v8625 = vpop.f32.mrf.mxu0
    %v8626 = vadd.f32 %v8612, %v8625
    %v8627 = vpop.f32.mrf.mxu0
    %v8628 = vadd.f32 %v8614, %v8627
    %8629 = vdwg.mxu0
    %8630 = vmatpush.bf16.msra.mxu0 %v8104
    %8631 = vmatpush.bf16.msra.mxu0 %v8096
    %8632 = vmatpush.bf16.msra.mxu0 %v8088
    %8633 = vmatpush.bf16.msra.mxu0 %v8080
    %8634 = vmatpush.bf16.msra.mxu0 %v8072
    %8635 = vmatpush.bf16.msra.mxu0 %v8064
    %8636 = vmatpush.bf16.msra.mxu0 %v8056
    %8637 = vmatpush.bf16.msra.mxu0 %v8048
    %8638 = vmatmul.bf16.gmra.mxu0 %v3035
    %v8639 = vpop.f32.mrf.mxu0
    %v8640 = vadd.f32 %v8626, %v8639
    %v8641 = vpop.f32.mrf.mxu0
    %v8642 = vadd.f32 %v8628, %v8641
    %8643 = vdwg.mxu0
    %8644 = vmatpush.bf16.msra.mxu0 %v7913
    %8645 = vmatpush.bf16.msra.mxu0 %v7905
    %8646 = vmatpush.bf16.msra.mxu0 %v7897
    %8647 = vmatpush.bf16.msra.mxu0 %v7889
    %8648 = vmatpush.bf16.msra.mxu0 %v7881
    %8649 = vmatpush.bf16.msra.mxu0 %v7873
    %8650 = vmatpush.bf16.msra.mxu0 %v7865
    %8651 = vmatpush.bf16.msra.mxu0 %v7857
    %8652 = vmatmul.bf16.gmra.mxu0 %v3032
    %v8653 = vpop.f32.mrf.mxu0
    %v8654 = vadd.f32 %v7073, %v8653
    %v8655 = vpop.f32.mrf.mxu0
    %v8656 = vadd.f32 %v7073, %v8655
    %8657 = vdwg.mxu0
    %8658 = vmatpush.bf16.msra.mxu0 %v7977
    %8659 = vmatpush.bf16.msra.mxu0 %v7969
    %8660 = vmatpush.bf16.msra.mxu0 %v7961
    %8661 = vmatpush.bf16.msra.mxu0 %v7953
    %8662 = vmatpush.bf16.msra.mxu0 %v7945
    %8663 = vmatpush.bf16.msra.mxu0 %v7937
    %8664 = vmatpush.bf16.msra.mxu0 %v7929
    %8665 = vmatpush.bf16.msra.mxu0 %v7921
    %8666 = vmatmul.bf16.gmra.mxu0 %v3033
    %v8667 = vpop.f32.mrf.mxu0
    %v8668 = vadd.f32 %v8654, %v8667
    %v8669 = vpop.f32.mrf.mxu0
    %v8670 = vadd.f32 %v8656, %v8669
    %8671 = vdwg.mxu0
    %8672 = vmatpush.bf16.msra.mxu0 %v8041
    %8673 = vmatpush.bf16.msra.mxu0 %v8033
    %8674 = vmatpush.bf16.msra.mxu0 %v8025
    %8675 = vmatpush.bf16.msra.mxu0 %v8017
    %8676 = vmatpush.bf16.msra.mxu0 %v8009
    %8677 = vmatpush.bf16.msra.mxu0 %v8001
    %8678 = vmatpush.bf16.msra.mxu0 %v7993
    %8679 = vmatpush.bf16.msra.mxu0 %v7985
    %8680 = vmatmul.bf16.gmra.mxu0 %v3034
    %v8681 = vpop.f32.mrf.mxu0
    %v8682 = vadd.f32 %v8668, %v8681
    %v8683 = vpop.f32.mrf.mxu0
    %v8684 = vadd.f32 %v8670, %v8683
    %8685 = vdwg.mxu0
    %8686 = vmatpush.bf16.msra.mxu0 %v8105
    %8687 = vmatpush.bf16.msra.mxu0 %v8097
    %8688 = vmatpush.bf16.msra.mxu0 %v8089
    %8689 = vmatpush.bf16.msra.mxu0 %v8081
    %8690 = vmatpush.bf16.msra.mxu0 %v8073
    %8691 = vmatpush.bf16.msra.mxu0 %v8065
    %8692 = vmatpush.bf16.msra.mxu0 %v8057
    %8693 = vmatpush.bf16.msra.mxu0 %v8049
    %8694 = vmatmul.bf16.gmra.mxu0 %v3035
    %v8695 = vpop.f32.mrf.mxu0
    %v8696 = vadd.f32 %v8682, %v8695
    %v8697 = vpop.f32.mrf.mxu0
    %v8698 = vadd.f32 %v8684, %v8697
    %8699 = vdwg.mxu0
    %8700 = vmatpush.bf16.msra.mxu0 %v7914
    %8701 = vmatpush.bf16.msra.mxu0 %v7906
    %8702 = vmatpush.bf16.msra.mxu0 %v7898
    %8703 = vmatpush.bf16.msra.mxu0 %v7890
    %8704 = vmatpush.bf16.msra.mxu0 %v7882
    %8705 = vmatpush.bf16.msra.mxu0 %v7874
    %8706 = vmatpush.bf16.msra.mxu0 %v7866
    %8707 = vmatpush.bf16.msra.mxu0 %v7858
    %8708 = vmatmul.bf16.gmra.mxu0 %v3032
    %v8709 = vpop.f32.mrf.mxu0
    %v8710 = vadd.f32 %v7074, %v8709
    %v8711 = vpop.f32.mrf.mxu0
    %v8712 = vadd.f32 %v7074, %v8711
    %8713 = vdwg.mxu0
    %8714 = vmatpush.bf16.msra.mxu0 %v7978
    %8715 = vmatpush.bf16.msra.mxu0 %v7970
    %8716 = vmatpush.bf16.msra.mxu0 %v7962
    %8717 = vmatpush.bf16.msra.mxu0 %v7954
    %8718 = vmatpush.bf16.msra.mxu0 %v7946
    %8719 = vmatpush.bf16.msra.mxu0 %v7938
    %8720 = vmatpush.bf16.msra.mxu0 %v7930
    %8721 = vmatpush.bf16.msra.mxu0 %v7922
    %8722 = vmatmul.bf16.gmra.mxu0 %v3033
    %v8723 = vpop.f32.mrf.mxu0
    %v8724 = vadd.f32 %v8710, %v8723
    %v8725 = vpop.f32.mrf.mxu0
    %v8726 = vadd.f32 %v8712, %v8725
    %8727 = vdwg.mxu0
    %8728 = vmatpush.bf16.msra.mxu0 %v8042
    %8729 = vmatpush.bf16.msra.mxu0 %v8034
    %8730 = vmatpush.bf16.msra.mxu0 %v8026
    %8731 = vmatpush.bf16.msra.mxu0 %v8018
    %8732 = vmatpush.bf16.msra.mxu0 %v8010
    %8733 = vmatpush.bf16.msra.mxu0 %v8002
    %8734 = vmatpush.bf16.msra.mxu0 %v7994
    %8735 = vmatpush.bf16.msra.mxu0 %v7986
    %8736 = vmatmul.bf16.gmra.mxu0 %v3034
    %v8737 = vpop.f32.mrf.mxu0
    %v8738 = vadd.f32 %v8724, %v8737
    %v8739 = vpop.f32.mrf.mxu0
    %v8740 = vadd.f32 %v8726, %v8739
    %8741 = vdwg.mxu0
    %8742 = vmatpush.bf16.msra.mxu0 %v8106
    %8743 = vmatpush.bf16.msra.mxu0 %v8098
    %8744 = vmatpush.bf16.msra.mxu0 %v8090
    %8745 = vmatpush.bf16.msra.mxu0 %v8082
    %8746 = vmatpush.bf16.msra.mxu0 %v8074
    %8747 = vmatpush.bf16.msra.mxu0 %v8066
    %8748 = vmatpush.bf16.msra.mxu0 %v8058
    %8749 = vmatpush.bf16.msra.mxu0 %v8050
    %8750 = vmatmul.bf16.gmra.mxu0 %v3035
    %v8751 = vpop.f32.mrf.mxu0
    %v8752 = vadd.f32 %v8738, %v8751
    %v8753 = vpop.f32.mrf.mxu0
    %v8754 = vadd.f32 %v8740, %v8753
    %8755 = vdwg.mxu0
    %8756 = vmatpush.bf16.msra.mxu0 %v7915
    %8757 = vmatpush.bf16.msra.mxu0 %v7907
    %8758 = vmatpush.bf16.msra.mxu0 %v7899
    %8759 = vmatpush.bf16.msra.mxu0 %v7891
    %8760 = vmatpush.bf16.msra.mxu0 %v7883
    %8761 = vmatpush.bf16.msra.mxu0 %v7875
    %8762 = vmatpush.bf16.msra.mxu0 %v7867
    %8763 = vmatpush.bf16.msra.mxu0 %v7859
    %8764 = vmatmul.bf16.gmra.mxu0 %v3032
    %v8765 = vpop.f32.mrf.mxu0
    %v8766 = vadd.f32 %v7075, %v8765
    %v8767 = vpop.f32.mrf.mxu0
    %v8768 = vadd.f32 %v7075, %v8767
    %8769 = vdwg.mxu0
    %8770 = vmatpush.bf16.msra.mxu0 %v7979
    %8771 = vmatpush.bf16.msra.mxu0 %v7971
    %8772 = vmatpush.bf16.msra.mxu0 %v7963
    %8773 = vmatpush.bf16.msra.mxu0 %v7955
    %8774 = vmatpush.bf16.msra.mxu0 %v7947
    %8775 = vmatpush.bf16.msra.mxu0 %v7939
    %8776 = vmatpush.bf16.msra.mxu0 %v7931
    %8777 = vmatpush.bf16.msra.mxu0 %v7923
    %8778 = vmatmul.bf16.gmra.mxu0 %v3033
    %v8779 = vpop.f32.mrf.mxu0
    %v8780 = vadd.f32 %v8766, %v8779
    %v8781 = vpop.f32.mrf.mxu0
    %v8782 = vadd.f32 %v8768, %v8781
    %8783 = vdwg.mxu0
    %8784 = vmatpush.bf16.msra.mxu0 %v8043
    %8785 = vmatpush.bf16.msra.mxu0 %v8035
    %8786 = vmatpush.bf16.msra.mxu0 %v8027
    %8787 = vmatpush.bf16.msra.mxu0 %v8019
    %8788 = vmatpush.bf16.msra.mxu0 %v8011
    %8789 = vmatpush.bf16.msra.mxu0 %v8003
    %8790 = vmatpush.bf16.msra.mxu0 %v7995
    %8791 = vmatpush.bf16.msra.mxu0 %v7987
    %8792 = vmatmul.bf16.gmra.mxu0 %v3034
    %v8793 = vpop.f32.mrf.mxu0
    %v8794 = vadd.f32 %v8780, %v8793
    %v8795 = vpop.f32.mrf.mxu0
    %v8796 = vadd.f32 %v8782, %v8795
    %8797 = vdwg.mxu0
    %8798 = vmatpush.bf16.msra.mxu0 %v8107
    %8799 = vmatpush.bf16.msra.mxu0 %v8099
    %8800 = vmatpush.bf16.msra.mxu0 %v8091
    %8801 = vmatpush.bf16.msra.mxu0 %v8083
    %8802 = vmatpush.bf16.msra.mxu0 %v8075
    %8803 = vmatpush.bf16.msra.mxu0 %v8067
    %8804 = vmatpush.bf16.msra.mxu0 %v8059
    %8805 = vmatpush.bf16.msra.mxu0 %v8051
    %8806 = vmatmul.bf16.gmra.mxu0 %v3035
    %v8807 = vpop.f32.mrf.mxu0
    %v8808 = vadd.f32 %v8794, %v8807
    %v8809 = vpop.f32.mrf.mxu0
    %v8810 = vadd.f32 %v8796, %v8809
    %8811 = vdwg.mxu0
    %v8812 = vmul.f32 %v8416, %v8416
    %v8813 = vmul.f32 %v8472, %v8472
    %v8814 = vmul.f32 %v8528, %v8528
    %v8815 = vmul.f32 %v8584, %v8584
    %v8816 = vmul.f32 %v8640, %v8640
    %v8817 = vmul.f32 %v8696, %v8696
    %v8818 = vmul.f32 %v8752, %v8752
    %v8819 = vmul.f32 %v8808, %v8808
    %v8820 = vmul.f32 %v8418, %v8418
    %v8821 = vmul.f32 %v8474, %v8474
    %v8822 = vmul.f32 %v8530, %v8530
    %v8823 = vmul.f32 %v8586, %v8586
    %v8824 = vmul.f32 %v8642, %v8642
    %v8825 = vmul.f32 %v8698, %v8698
    %v8826 = vmul.f32 %v8754, %v8754
    %v8827 = vmul.f32 %v8810, %v8810
    %v8828 = vmul.f32 %v8416, %v8812
    %v8829 = vmul.f32 %v8472, %v8813
    %v8830 = vmul.f32 %v8528, %v8814
    %v8831 = vmul.f32 %v8584, %v8815
    %v8832 = vmul.f32 %v8640, %v8816
    %v8833 = vmul.f32 %v8696, %v8817
    %v8834 = vmul.f32 %v8752, %v8818
    %v8835 = vmul.f32 %v8808, %v8819
    %v8836 = vmul.f32 %v8418, %v8820
    %v8837 = vmul.f32 %v8474, %v8821
    %v8838 = vmul.f32 %v8530, %v8822
    %v8839 = vmul.f32 %v8586, %v8823
    %v8840 = vmul.f32 %v8642, %v8824
    %v8841 = vmul.f32 %v8698, %v8825
    %v8842 = vmul.f32 %v8754, %v8826
    %v8843 = vmul.f32 %v8810, %v8827
    %v8844 = vmul.f32 %v8828, 0.044715
    %v8845 = vmul.f32 %v8829, 0.044715
    %v8846 = vmul.f32 %v8830, 0.044715
    %v8847 = vmul.f32 %v8831, 0.044715
    %v8848 = vmul.f32 %v8832, 0.044715
    %v8849 = vmul.f32 %v8833, 0.044715
    %v8850 = vmul.f32 %v8834, 0.044715
    %v8851 = vmul.f32 %v8835, 0.044715
    %v8852 = vmul.f32 %v8836, 0.044715
    %v8853 = vmul.f32 %v8837, 0.044715
    %v8854 = vmul.f32 %v8838, 0.044715
    %v8855 = vmul.f32 %v8839, 0.044715
    %v8856 = vmul.f32 %v8840, 0.044715
    %v8857 = vmul.f32 %v8841, 0.044715
    %v8858 = vmul.f32 %v8842, 0.044715
    %v8859 = vmul.f32 %v8843, 0.044715
    %v8860 = vadd.f32 %v8416, %v8844
    %v8861 = vadd.f32 %v8472, %v8845
    %v8862 = vadd.f32 %v8528, %v8846
    %v8863 = vadd.f32 %v8584, %v8847
    %v8864 = vadd.f32 %v8640, %v8848
    %v8865 = vadd.f32 %v8696, %v8849
    %v8866 = vadd.f32 %v8752, %v8850
    %v8867 = vadd.f32 %v8808, %v8851
    %v8868 = vadd.f32 %v8418, %v8852
    %v8869 = vadd.f32 %v8474, %v8853
    %v8870 = vadd.f32 %v8530, %v8854
    %v8871 = vadd.f32 %v8586, %v8855
    %v8872 = vadd.f32 %v8642, %v8856
    %v8873 = vadd.f32 %v8698, %v8857
    %v8874 = vadd.f32 %v8754, %v8858
    %v8875 = vadd.f32 %v8810, %v8859
    %v8876 = vmul.f32 %v8860, 0.7978846
    %v8877 = vmul.f32 %v8861, 0.7978846
    %v8878 = vmul.f32 %v8862, 0.7978846
    %v8879 = vmul.f32 %v8863, 0.7978846
    %v8880 = vmul.f32 %v8864, 0.7978846
    %v8881 = vmul.f32 %v8865, 0.7978846
    %v8882 = vmul.f32 %v8866, 0.7978846
    %v8883 = vmul.f32 %v8867, 0.7978846
    %v8884 = vmul.f32 %v8868, 0.7978846
    %v8885 = vmul.f32 %v8869, 0.7978846
    %v8886 = vmul.f32 %v8870, 0.7978846
    %v8887 = vmul.f32 %v8871, 0.7978846
    %v8888 = vmul.f32 %v8872, 0.7978846
    %v8889 = vmul.f32 %v8873, 0.7978846
    %v8890 = vmul.f32 %v8874, 0.7978846
    %v8891 = vmul.f32 %v8875, 0.7978846
    %v8892 = vtanh.pop %v8876
    %v8893 = vtanh.pop %v8877
    %v8894 = vtanh.pop %v8878
    %v8895 = vtanh.pop %v8879
    %v8896 = vtanh.pop %v8880
    %v8897 = vtanh.pop %v8881
    %v8898 = vtanh.pop %v8882
    %v8899 = vtanh.pop %v8883
    %v8900 = vtanh.pop %v8884
    %v8901 = vtanh.pop %v8885
    %v8902 = vtanh.pop %v8886
    %v8903 = vtanh.pop %v8887
    %v8904 = vtanh.pop %v8888
    %v8905 = vtanh.pop %v8889
    %v8906 = vtanh.pop %v8890
    %v8907 = vtanh.pop %v8891
    %v8908 = vadd.f32 %v8892, 1.0
    %v8909 = vadd.f32 %v8893, 1.0
    %v8910 = vadd.f32 %v8894, 1.0
    %v8911 = vadd.f32 %v8895, 1.0
    %v8912 = vadd.f32 %v8896, 1.0
    %v8913 = vadd.f32 %v8897, 1.0
    %v8914 = vadd.f32 %v8898, 1.0
    %v8915 = vadd.f32 %v8899, 1.0
    %v8916 = vadd.f32 %v8900, 1.0
    %v8917 = vadd.f32 %v8901, 1.0
    %v8918 = vadd.f32 %v8902, 1.0
    %v8919 = vadd.f32 %v8903, 1.0
    %v8920 = vadd.f32 %v8904, 1.0
    %v8921 = vadd.f32 %v8905, 1.0
    %v8922 = vadd.f32 %v8906, 1.0
    %v8923 = vadd.f32 %v8907, 1.0
    %v8924 = vmul.f32 %v8908, 0.5
    %v8925 = vmul.f32 %v8909, 0.5
    %v8926 = vmul.f32 %v8910, 0.5
    %v8927 = vmul.f32 %v8911, 0.5
    %v8928 = vmul.f32 %v8912, 0.5
    %v8929 = vmul.f32 %v8913, 0.5
    %v8930 = vmul.f32 %v8914, 0.5
    %v8931 = vmul.f32 %v8915, 0.5
    %v8932 = vmul.f32 %v8916, 0.5
    %v8933 = vmul.f32 %v8917, 0.5
    %v8934 = vmul.f32 %v8918, 0.5
    %v8935 = vmul.f32 %v8919, 0.5
    %v8936 = vmul.f32 %v8920, 0.5
    %v8937 = vmul.f32 %v8921, 0.5
    %v8938 = vmul.f32 %v8922, 0.5
    %v8939 = vmul.f32 %v8923, 0.5
    %v8940 = vmul.f32 %v8416, %v8924
    %v8941 = vmul.f32 %v8472, %v8925
    %v8942 = vmul.f32 %v8528, %v8926
    %v8943 = vmul.f32 %v8584, %v8927
    %v8944 = vmul.f32 %v8640, %v8928
    %v8945 = vmul.f32 %v8696, %v8929
    %v8946 = vmul.f32 %v8752, %v8930
    %v8947 = vmul.f32 %v8808, %v8931
    %v8948 = vmul.f32 %v8418, %v8932
    %v8949 = vmul.f32 %v8474, %v8933
    %v8950 = vmul.f32 %v8530, %v8934
    %v8951 = vmul.f32 %v8586, %v8935
    %v8952 = vmul.f32 %v8642, %v8936
    %v8953 = vmul.f32 %v8698, %v8937
    %v8954 = vmul.f32 %v8754, %v8938
    %v8955 = vmul.f32 %v8810, %v8939
    %v8956 = vpack.c.bf16 %v8948, %v8940
    %v8957 = vpack.c.bf16 %v8949, %v8941
    %v8958 = vpack.c.bf16 %v8950, %v8942
    %v8959 = vpack.c.bf16 %v8951, %v8943
    %v8960 = vpack.c.bf16 %v8952, %v8944
    %v8961 = vpack.c.bf16 %v8953, %v8945
    %v8962 = vpack.c.bf16 %v8954, %v8946
    %v8963 = vpack.c.bf16 %v8955, %v8947
    %v8964 = vld [vmem:[#allocation25] sm:$0xf]
    %v8965 = vld [vmem:[#allocation25 + $0x4] sm:$0xf]
    %v8966 = vld [vmem:[#allocation25 + $0x8] sm:$0xf]
    %v8967 = vld [vmem:[#allocation25 + $0xc] sm:$0xf]
    %v8968 = vld [vmem:[#allocation25 + $0x10] sm:$0xf]
    %v8969 = vld [vmem:[#allocation25 + $0x14] sm:$0xf]
    %v8970 = vld [vmem:[#allocation25 + $0x18] sm:$0xf]
    %v8971 = vld [vmem:[#allocation25 + $0x1c] sm:$0xf]
    %v8972 = vld [vmem:[#allocation25 + $0x20] sm:$0xf]
    %v8973 = vld [vmem:[#allocation25 + $0x24] sm:$0xf]
    %v8974 = vld [vmem:[#allocation25 + $0x28] sm:$0xf]
    %v8975 = vld [vmem:[#allocation25 + $0x2c] sm:$0xf]
    %v8976 = vld [vmem:[#allocation25 + $0x30] sm:$0xf]
    %v8977 = vld [vmem:[#allocation25 + $0x34] sm:$0xf]
    %v8978 = vld [vmem:[#allocation25 + $0x38] sm:$0xf]
    %v8979 = vld [vmem:[#allocation25 + $0x3c] sm:$0xf]
    %v8980 = vld [vmem:[#allocation25 + $0x40] sm:$0xf]
    %v8981 = vld [vmem:[#allocation25 + $0x44] sm:$0xf]
    %v8982 = vld [vmem:[#allocation25 + $0x48] sm:$0xf]
    %v8983 = vld [vmem:[#allocation25 + $0x4c] sm:$0xf]
    %v8984 = vld [vmem:[#allocation25 + $0x50] sm:$0xf]
    %v8985 = vld [vmem:[#allocation25 + $0x54] sm:$0xf]
    %v8986 = vld [vmem:[#allocation25 + $0x58] sm:$0xf]
    %v8987 = vld [vmem:[#allocation25 + $0x5c] sm:$0xf]
    %v8988 = vld [vmem:[#allocation25 + $0x60] sm:$0xf]
    %v8989 = vld [vmem:[#allocation25 + $0x64] sm:$0xf]
    %v8990 = vld [vmem:[#allocation25 + $0x68] sm:$0xf]
    %v8991 = vld [vmem:[#allocation25 + $0x6c] sm:$0xf]
    %v8992 = vld [vmem:[#allocation25 + $0x70] sm:$0xf]
    %v8993 = vld [vmem:[#allocation25 + $0x74] sm:$0xf]
    %v8994 = vld [vmem:[#allocation25 + $0x78] sm:$0xf]
    %v8995 = vld [vmem:[#allocation25 + $0x7c] sm:$0xf]
    %v8996 = vld [vmem:[#allocation25 + $0x80] sm:$0xf]
    %v8997 = vld [vmem:[#allocation25 + $0x84] sm:$0xf]
    %v8998 = vld [vmem:[#allocation25 + $0x88] sm:$0xf]
    %v8999 = vld [vmem:[#allocation25 + $0x8c] sm:$0xf]
    %v9000 = vld [vmem:[#allocation25 + $0x90] sm:$0xf]
    %v9001 = vld [vmem:[#allocation25 + $0x94] sm:$0xf]
    %v9002 = vld [vmem:[#allocation25 + $0x98] sm:$0xf]
    %v9003 = vld [vmem:[#allocation25 + $0x9c] sm:$0xf]
    %v9004 = vld [vmem:[#allocation25 + $0xa0] sm:$0xf]
    %v9005 = vld [vmem:[#allocation25 + $0xa4] sm:$0xf]
    %v9006 = vld [vmem:[#allocation25 + $0xa8] sm:$0xf]
    %v9007 = vld [vmem:[#allocation25 + $0xac] sm:$0xf]
    %v9008 = vld [vmem:[#allocation25 + $0xb0] sm:$0xf]
    %v9009 = vld [vmem:[#allocation25 + $0xb4] sm:$0xf]
    %v9010 = vld [vmem:[#allocation25 + $0xb8] sm:$0xf]
    %v9011 = vld [vmem:[#allocation25 + $0xbc] sm:$0xf]
    %v9012 = vld [vmem:[#allocation25 + $0xc0] sm:$0xf]
    %v9013 = vld [vmem:[#allocation25 + $0xc4] sm:$0xf]
    %v9014 = vld [vmem:[#allocation25 + $0xc8] sm:$0xf]
    %v9015 = vld [vmem:[#allocation25 + $0xcc] sm:$0xf]
    %v9016 = vld [vmem:[#allocation25 + $0xd0] sm:$0xf]
    %v9017 = vld [vmem:[#allocation25 + $0xd4] sm:$0xf]
    %v9018 = vld [vmem:[#allocation25 + $0xd8] sm:$0xf]
    %v9019 = vld [vmem:[#allocation25 + $0xdc] sm:$0xf]
    %v9020 = vld [vmem:[#allocation25 + $0xe0] sm:$0xf]
    %v9021 = vld [vmem:[#allocation25 + $0xe4] sm:$0xf]
    %v9022 = vld [vmem:[#allocation25 + $0xe8] sm:$0xf]
    %v9023 = vld [vmem:[#allocation25 + $0xec] sm:$0xf]
    %v9024 = vld [vmem:[#allocation25 + $0xf0] sm:$0xf]
    %v9025 = vld [vmem:[#allocation25 + $0xf4] sm:$0xf]
    %v9026 = vld [vmem:[#allocation25 + $0xf8] sm:$0xf]
    %v9027 = vld [vmem:[#allocation25 + $0xfc] sm:$0xf]
    %v9028 = vld [vmem:[#allocation25 + $0x100] sm:$0xf]
    %v9029 = vld [vmem:[#allocation25 + $0x104] sm:$0xf]
    %v9030 = vld [vmem:[#allocation25 + $0x108] sm:$0xf]
    %v9031 = vld [vmem:[#allocation25 + $0x10c] sm:$0xf]
    %v9032 = vld [vmem:[#allocation25 + $0x110] sm:$0xf]
    %v9033 = vld [vmem:[#allocation25 + $0x114] sm:$0xf]
    %v9034 = vld [vmem:[#allocation25 + $0x118] sm:$0xf]
    %v9035 = vld [vmem:[#allocation25 + $0x11c] sm:$0xf]
    %v9036 = vld [vmem:[#allocation25 + $0x120] sm:$0xf]
    %v9037 = vld [vmem:[#allocation25 + $0x124] sm:$0xf]
    %v9038 = vld [vmem:[#allocation25 + $0x128] sm:$0xf]
    %v9039 = vld [vmem:[#allocation25 + $0x12c] sm:$0xf]
    %v9040 = vld [vmem:[#allocation25 + $0x130] sm:$0xf]
    %v9041 = vld [vmem:[#allocation25 + $0x134] sm:$0xf]
    %v9042 = vld [vmem:[#allocation25 + $0x138] sm:$0xf]
    %v9043 = vld [vmem:[#allocation25 + $0x13c] sm:$0xf]
    %v9044 = vld [vmem:[#allocation25 + $0x140] sm:$0xf]
    %v9045 = vld [vmem:[#allocation25 + $0x144] sm:$0xf]
    %v9046 = vld [vmem:[#allocation25 + $0x148] sm:$0xf]
    %v9047 = vld [vmem:[#allocation25 + $0x14c] sm:$0xf]
    %v9048 = vld [vmem:[#allocation25 + $0x150] sm:$0xf]
    %v9049 = vld [vmem:[#allocation25 + $0x154] sm:$0xf]
    %v9050 = vld [vmem:[#allocation25 + $0x158] sm:$0xf]
    %v9051 = vld [vmem:[#allocation25 + $0x15c] sm:$0xf]
    %v9052 = vld [vmem:[#allocation25 + $0x160] sm:$0xf]
    %v9053 = vld [vmem:[#allocation25 + $0x164] sm:$0xf]
    %v9054 = vld [vmem:[#allocation25 + $0x168] sm:$0xf]
    %v9055 = vld [vmem:[#allocation25 + $0x16c] sm:$0xf]
    %v9056 = vld [vmem:[#allocation25 + $0x170] sm:$0xf]
    %v9057 = vld [vmem:[#allocation25 + $0x174] sm:$0xf]
    %v9058 = vld [vmem:[#allocation25 + $0x178] sm:$0xf]
    %v9059 = vld [vmem:[#allocation25 + $0x17c] sm:$0xf]
    %v9060 = vld [vmem:[#allocation25 + $0x180] sm:$0xf]
    %v9061 = vld [vmem:[#allocation25 + $0x184] sm:$0xf]
    %v9062 = vld [vmem:[#allocation25 + $0x188] sm:$0xf]
    %v9063 = vld [vmem:[#allocation25 + $0x18c] sm:$0xf]
    %v9064 = vld [vmem:[#allocation25 + $0x190] sm:$0xf]
    %v9065 = vld [vmem:[#allocation25 + $0x194] sm:$0xf]
    %v9066 = vld [vmem:[#allocation25 + $0x198] sm:$0xf]
    %v9067 = vld [vmem:[#allocation25 + $0x19c] sm:$0xf]
    %v9068 = vld [vmem:[#allocation25 + $0x1a0] sm:$0xf]
    %v9069 = vld [vmem:[#allocation25 + $0x1a4] sm:$0xf]
    %v9070 = vld [vmem:[#allocation25 + $0x1a8] sm:$0xf]
    %v9071 = vld [vmem:[#allocation25 + $0x1ac] sm:$0xf]
    %v9072 = vld [vmem:[#allocation25 + $0x1b0] sm:$0xf]
    %v9073 = vld [vmem:[#allocation25 + $0x1b4] sm:$0xf]
    %v9074 = vld [vmem:[#allocation25 + $0x1b8] sm:$0xf]
    %v9075 = vld [vmem:[#allocation25 + $0x1bc] sm:$0xf]
    %v9076 = vld [vmem:[#allocation25 + $0x1c0] sm:$0xf]
    %v9077 = vld [vmem:[#allocation25 + $0x1c4] sm:$0xf]
    %v9078 = vld [vmem:[#allocation25 + $0x1c8] sm:$0xf]
    %v9079 = vld [vmem:[#allocation25 + $0x1cc] sm:$0xf]
    %v9080 = vld [vmem:[#allocation25 + $0x1d0] sm:$0xf]
    %v9081 = vld [vmem:[#allocation25 + $0x1d4] sm:$0xf]
    %v9082 = vld [vmem:[#allocation25 + $0x1d8] sm:$0xf]
    %v9083 = vld [vmem:[#allocation25 + $0x1dc] sm:$0xf]
    %v9084 = vld [vmem:[#allocation25 + $0x1e0] sm:$0xf]
    %v9085 = vld [vmem:[#allocation25 + $0x1e4] sm:$0xf]
    %v9086 = vld [vmem:[#allocation25 + $0x1e8] sm:$0xf]
    %v9087 = vld [vmem:[#allocation25 + $0x1ec] sm:$0xf]
    %v9088 = vld [vmem:[#allocation25 + $0x1f0] sm:$0xf]
    %v9089 = vld [vmem:[#allocation25 + $0x1f4] sm:$0xf]
    %v9090 = vld [vmem:[#allocation25 + $0x1f8] sm:$0xf]
    %v9091 = vld [vmem:[#allocation25 + $0x1fc] sm:$0xf]
    %v9092 = vld [vmem:[#allocation26] sm:$0x1]
    %v9094 = vperm.slane %v9092, 0
    %v9224 = vunpack.c.l.b16 %v8964
    %v9225 = vunpack.c.l.b16 %v8965
    %v9226 = vunpack.c.l.b16 %v8966
    %v9227 = vunpack.c.l.b16 %v8967
    %v9228 = vunpack.c.l.b16 %v8968
    %v9229 = vunpack.c.l.b16 %v8969
    %v9230 = vunpack.c.l.b16 %v8970
    %v9231 = vunpack.c.l.b16 %v8971
    %v9232 = vunpack.c.l.b16 %v8972
    %v9233 = vunpack.c.l.b16 %v8973
    %v9234 = vunpack.c.l.b16 %v8974
    %v9235 = vunpack.c.l.b16 %v8975
    %v9236 = vunpack.c.l.b16 %v8976
    %v9237 = vunpack.c.l.b16 %v8977
    %v9238 = vunpack.c.l.b16 %v8978
    %v9239 = vunpack.c.l.b16 %v8979
    %v9240 = vunpack.c.l.b16 %v8980
    %v9241 = vunpack.c.l.b16 %v8981
    %v9242 = vunpack.c.l.b16 %v8982
    %v9243 = vunpack.c.l.b16 %v8983
    %v9244 = vunpack.c.l.b16 %v8984
    %v9245 = vunpack.c.l.b16 %v8985
    %v9246 = vunpack.c.l.b16 %v8986
    %v9247 = vunpack.c.l.b16 %v8987
    %v9248 = vunpack.c.l.b16 %v8988
    %v9249 = vunpack.c.l.b16 %v8989
    %v9250 = vunpack.c.l.b16 %v8990
    %v9251 = vunpack.c.l.b16 %v8991
    %v9252 = vunpack.c.l.b16 %v8992
    %v9253 = vunpack.c.l.b16 %v8993
    %v9254 = vunpack.c.l.b16 %v8994
    %v9255 = vunpack.c.l.b16 %v8995
    %v9256 = vunpack.c.l.b16 %v8996
    %v9257 = vunpack.c.l.b16 %v8997
    %v9258 = vunpack.c.l.b16 %v8998
    %v9259 = vunpack.c.l.b16 %v8999
    %v9260 = vunpack.c.l.b16 %v9000
    %v9261 = vunpack.c.l.b16 %v9001
    %v9262 = vunpack.c.l.b16 %v9002
    %v9263 = vunpack.c.l.b16 %v9003
    %v9264 = vunpack.c.l.b16 %v9004
    %v9265 = vunpack.c.l.b16 %v9005
    %v9266 = vunpack.c.l.b16 %v9006
    %v9267 = vunpack.c.l.b16 %v9007
    %v9268 = vunpack.c.l.b16 %v9008
    %v9269 = vunpack.c.l.b16 %v9009
    %v9270 = vunpack.c.l.b16 %v9010
    %v9271 = vunpack.c.l.b16 %v9011
    %v9272 = vunpack.c.l.b16 %v9012
    %v9273 = vunpack.c.l.b16 %v9013
    %v9274 = vunpack.c.l.b16 %v9014
    %v9275 = vunpack.c.l.b16 %v9015
    %v9276 = vunpack.c.l.b16 %v9016
    %v9277 = vunpack.c.l.b16 %v9017
    %v9278 = vunpack.c.l.b16 %v9018
    %v9279 = vunpack.c.l.b16 %v9019
    %v9280 = vunpack.c.l.b16 %v9020
    %v9281 = vunpack.c.l.b16 %v9021
    %v9282 = vunpack.c.l.b16 %v9022
    %v9283 = vunpack.c.l.b16 %v9023
    %v9284 = vunpack.c.l.b16 %v9024
    %v9285 = vunpack.c.l.b16 %v9025
    %v9286 = vunpack.c.l.b16 %v9026
    %v9287 = vunpack.c.l.b16 %v9027
    %v9288 = vunpack.c.l.b16 %v9028
    %v9289 = vunpack.c.l.b16 %v9029
    %v9290 = vunpack.c.l.b16 %v9030
    %v9291 = vunpack.c.l.b16 %v9031
    %v9292 = vunpack.c.l.b16 %v9032
    %v9293 = vunpack.c.l.b16 %v9033
    %v9294 = vunpack.c.l.b16 %v9034
    %v9295 = vunpack.c.l.b16 %v9035
    %v9296 = vunpack.c.l.b16 %v9036
    %v9297 = vunpack.c.l.b16 %v9037
    %v9298 = vunpack.c.l.b16 %v9038
    %v9299 = vunpack.c.l.b16 %v9039
    %v9300 = vunpack.c.l.b16 %v9040
    %v9301 = vunpack.c.l.b16 %v9041
    %v9302 = vunpack.c.l.b16 %v9042
    %v9303 = vunpack.c.l.b16 %v9043
    %v9304 = vunpack.c.l.b16 %v9044
    %v9305 = vunpack.c.l.b16 %v9045
    %v9306 = vunpack.c.l.b16 %v9046
    %v9307 = vunpack.c.l.b16 %v9047
    %v9308 = vunpack.c.l.b16 %v9048
    %v9309 = vunpack.c.l.b16 %v9049
    %v9310 = vunpack.c.l.b16 %v9050
    %v9311 = vunpack.c.l.b16 %v9051
    %v9312 = vunpack.c.l.b16 %v9052
    %v9313 = vunpack.c.l.b16 %v9053
    %v9314 = vunpack.c.l.b16 %v9054
    %v9315 = vunpack.c.l.b16 %v9055
    %v9316 = vunpack.c.l.b16 %v9056
    %v9317 = vunpack.c.l.b16 %v9057
    %v9318 = vunpack.c.l.b16 %v9058
    %v9319 = vunpack.c.l.b16 %v9059
    %v9320 = vunpack.c.l.b16 %v9060
    %v9321 = vunpack.c.l.b16 %v9061
    %v9322 = vunpack.c.l.b16 %v9062
    %v9323 = vunpack.c.l.b16 %v9063
    %v9324 = vunpack.c.l.b16 %v9064
    %v9325 = vunpack.c.l.b16 %v9065
    %v9326 = vunpack.c.l.b16 %v9066
    %v9327 = vunpack.c.l.b16 %v9067
    %v9328 = vunpack.c.l.b16 %v9068
    %v9329 = vunpack.c.l.b16 %v9069
    %v9330 = vunpack.c.l.b16 %v9070
    %v9331 = vunpack.c.l.b16 %v9071
    %v9332 = vunpack.c.l.b16 %v9072
    %v9333 = vunpack.c.l.b16 %v9073
    %v9334 = vunpack.c.l.b16 %v9074
    %v9335 = vunpack.c.l.b16 %v9075
    %v9336 = vunpack.c.l.b16 %v9076
    %v9337 = vunpack.c.l.b16 %v9077
    %v9338 = vunpack.c.l.b16 %v9078
    %v9339 = vunpack.c.l.b16 %v9079
    %v9340 = vunpack.c.l.b16 %v9080
    %v9341 = vunpack.c.l.b16 %v9081
    %v9342 = vunpack.c.l.b16 %v9082
    %v9343 = vunpack.c.l.b16 %v9083
    %v9344 = vunpack.c.l.b16 %v9084
    %v9345 = vunpack.c.l.b16 %v9085
    %v9346 = vunpack.c.l.b16 %v9086
    %v9347 = vunpack.c.l.b16 %v9087
    %v9348 = vunpack.c.l.b16 %v9088
    %v9349 = vunpack.c.l.b16 %v9089
    %v9350 = vunpack.c.l.b16 %v9090
    %v9351 = vunpack.c.l.b16 %v9091
    %v9352 = vpack.c.b16 %v9225, %v9224
    %v9353 = vpack.c.b16 %v9227, %v9226
    %v9354 = vpack.c.b16 %v9229, %v9228
    %v9355 = vpack.c.b16 %v9231, %v9230
    %v9356 = vpack.c.b16 %v9233, %v9232
    %v9357 = vpack.c.b16 %v9235, %v9234
    %v9358 = vpack.c.b16 %v9237, %v9236
    %v9359 = vpack.c.b16 %v9239, %v9238
    %v9360 = vpack.c.b16 %v9241, %v9240
    %v9361 = vpack.c.b16 %v9243, %v9242
    %v9362 = vpack.c.b16 %v9245, %v9244
    %v9363 = vpack.c.b16 %v9247, %v9246
    %v9364 = vpack.c.b16 %v9249, %v9248
    %v9365 = vpack.c.b16 %v9251, %v9250
    %v9366 = vpack.c.b16 %v9253, %v9252
    %v9367 = vpack.c.b16 %v9255, %v9254
    %v9368 = vpack.c.b16 %v9257, %v9256
    %v9369 = vpack.c.b16 %v9259, %v9258
    %v9370 = vpack.c.b16 %v9261, %v9260
    %v9371 = vpack.c.b16 %v9263, %v9262
    %v9372 = vpack.c.b16 %v9265, %v9264
    %v9373 = vpack.c.b16 %v9267, %v9266
    %v9374 = vpack.c.b16 %v9269, %v9268
    %v9375 = vpack.c.b16 %v9271, %v9270
    %v9376 = vpack.c.b16 %v9273, %v9272
    %v9377 = vpack.c.b16 %v9275, %v9274
    %v9378 = vpack.c.b16 %v9277, %v9276
    %v9379 = vpack.c.b16 %v9279, %v9278
    %v9380 = vpack.c.b16 %v9281, %v9280
    %v9381 = vpack.c.b16 %v9283, %v9282
    %v9382 = vpack.c.b16 %v9285, %v9284
    %v9383 = vpack.c.b16 %v9287, %v9286
    %v9384 = vpack.c.b16 %v9289, %v9288
    %v9385 = vpack.c.b16 %v9291, %v9290
    %v9386 = vpack.c.b16 %v9293, %v9292
    %v9387 = vpack.c.b16 %v9295, %v9294
    %v9388 = vpack.c.b16 %v9297, %v9296
    %v9389 = vpack.c.b16 %v9299, %v9298
    %v9390 = vpack.c.b16 %v9301, %v9300
    %v9391 = vpack.c.b16 %v9303, %v9302
    %v9392 = vpack.c.b16 %v9305, %v9304
    %v9393 = vpack.c.b16 %v9307, %v9306
    %v9394 = vpack.c.b16 %v9309, %v9308
    %v9395 = vpack.c.b16 %v9311, %v9310
    %v9396 = vpack.c.b16 %v9313, %v9312
    %v9397 = vpack.c.b16 %v9315, %v9314
    %v9398 = vpack.c.b16 %v9317, %v9316
    %v9399 = vpack.c.b16 %v9319, %v9318
    %v9400 = vpack.c.b16 %v9321, %v9320
    %v9401 = vpack.c.b16 %v9323, %v9322
    %v9402 = vpack.c.b16 %v9325, %v9324
    %v9403 = vpack.c.b16 %v9327, %v9326
    %v9404 = vpack.c.b16 %v9329, %v9328
    %v9405 = vpack.c.b16 %v9331, %v9330
    %v9406 = vpack.c.b16 %v9333, %v9332
    %v9407 = vpack.c.b16 %v9335, %v9334
    %v9408 = vpack.c.b16 %v9337, %v9336
    %v9409 = vpack.c.b16 %v9339, %v9338
    %v9410 = vpack.c.b16 %v9341, %v9340
    %v9411 = vpack.c.b16 %v9343, %v9342
    %v9412 = vpack.c.b16 %v9345, %v9344
    %v9413 = vpack.c.b16 %v9347, %v9346
    %v9414 = vpack.c.b16 %v9349, %v9348
    %v9415 = vpack.c.b16 %v9351, %v9350
    %9480 = vmatpush.bf16.msra.mxu0 %v9359
    %9481 = vmatpush.bf16.msra.mxu0 %v9358
    %9482 = vmatpush.bf16.msra.mxu0 %v9357
    %9483 = vmatpush.bf16.msra.mxu0 %v9356
    %9484 = vmatpush.bf16.msra.mxu0 %v9355
    %9485 = vmatpush.bf16.msra.mxu0 %v9354
    %9486 = vmatpush.bf16.msra.mxu0 %v9353
    %9487 = vmatpush.bf16.msra.mxu0 %v9352
    %9488 = vmatmul.bf16.gmra.mxu0 %v8956
    %v9489 = vpop.f32.mrf.mxu0
    %v9490 = vadd.f32 %v9094, %v9489
    %v9491 = vpop.f32.mrf.mxu0
    %v9492 = vadd.f32 %v9094, %v9491
    %9493 = vdwg.mxu0
    %9494 = vmatpush.bf16.msra.mxu0 %v9367
    %9495 = vmatpush.bf16.msra.mxu0 %v9366
    %9496 = vmatpush.bf16.msra.mxu0 %v9365
    %9497 = vmatpush.bf16.msra.mxu0 %v9364
    %9498 = vmatpush.bf16.msra.mxu0 %v9363
    %9499 = vmatpush.bf16.msra.mxu0 %v9362
    %9500 = vmatpush.bf16.msra.mxu0 %v9361
    %9501 = vmatpush.bf16.msra.mxu0 %v9360
    %9502 = vmatmul.bf16.gmra.mxu0 %v8957
    %v9503 = vpop.f32.mrf.mxu0
    %v9504 = vadd.f32 %v9490, %v9503
    %v9505 = vpop.f32.mrf.mxu0
    %v9506 = vadd.f32 %v9492, %v9505
    %9507 = vdwg.mxu0
    %9508 = vmatpush.bf16.msra.mxu0 %v9375
    %9509 = vmatpush.bf16.msra.mxu0 %v9374
    %9510 = vmatpush.bf16.msra.mxu0 %v9373
    %9511 = vmatpush.bf16.msra.mxu0 %v9372
    %9512 = vmatpush.bf16.msra.mxu0 %v9371
    %9513 = vmatpush.bf16.msra.mxu0 %v9370
    %9514 = vmatpush.bf16.msra.mxu0 %v9369
    %9515 = vmatpush.bf16.msra.mxu0 %v9368
    %9516 = vmatmul.bf16.gmra.mxu0 %v8958
    %v9517 = vpop.f32.mrf.mxu0
    %v9518 = vadd.f32 %v9504, %v9517
    %v9519 = vpop.f32.mrf.mxu0
    %v9520 = vadd.f32 %v9506, %v9519
    %9521 = vdwg.mxu0
    %9522 = vmatpush.bf16.msra.mxu0 %v9383
    %9523 = vmatpush.bf16.msra.mxu0 %v9382
    %9524 = vmatpush.bf16.msra.mxu0 %v9381
    %9525 = vmatpush.bf16.msra.mxu0 %v9380
    %9526 = vmatpush.bf16.msra.mxu0 %v9379
    %9527 = vmatpush.bf16.msra.mxu0 %v9378
    %9528 = vmatpush.bf16.msra.mxu0 %v9377
    %9529 = vmatpush.bf16.msra.mxu0 %v9376
    %9530 = vmatmul.bf16.gmra.mxu0 %v8959
    %v9531 = vpop.f32.mrf.mxu0
    %v9532 = vadd.f32 %v9518, %v9531
    %v9533 = vpop.f32.mrf.mxu0
    %v9534 = vadd.f32 %v9520, %v9533
    %9535 = vdwg.mxu0
    %9536 = vmatpush.bf16.msra.mxu0 %v9391
    %9537 = vmatpush.bf16.msra.mxu0 %v9390
    %9538 = vmatpush.bf16.msra.mxu0 %v9389
    %9539 = vmatpush.bf16.msra.mxu0 %v9388
    %9540 = vmatpush.bf16.msra.mxu0 %v9387
    %9541 = vmatpush.bf16.msra.mxu0 %v9386
    %9542 = vmatpush.bf16.msra.mxu0 %v9385
    %9543 = vmatpush.bf16.msra.mxu0 %v9384
    %9544 = vmatmul.bf16.gmra.mxu0 %v8960
    %v9545 = vpop.f32.mrf.mxu0
    %v9546 = vadd.f32 %v9532, %v9545
    %v9547 = vpop.f32.mrf.mxu0
    %v9548 = vadd.f32 %v9534, %v9547
    %9549 = vdwg.mxu0
    %9550 = vmatpush.bf16.msra.mxu0 %v9399
    %9551 = vmatpush.bf16.msra.mxu0 %v9398
    %9552 = vmatpush.bf16.msra.mxu0 %v9397
    %9553 = vmatpush.bf16.msra.mxu0 %v9396
    %9554 = vmatpush.bf16.msra.mxu0 %v9395
    %9555 = vmatpush.bf16.msra.mxu0 %v9394
    %9556 = vmatpush.bf16.msra.mxu0 %v9393
    %9557 = vmatpush.bf16.msra.mxu0 %v9392
    %9558 = vmatmul.bf16.gmra.mxu0 %v8961
    %v9559 = vpop.f32.mrf.mxu0
    %v9560 = vadd.f32 %v9546, %v9559
    %v9561 = vpop.f32.mrf.mxu0
    %v9562 = vadd.f32 %v9548, %v9561
    %9563 = vdwg.mxu0
    %9564 = vmatpush.bf16.msra.mxu0 %v9407
    %9565 = vmatpush.bf16.msra.mxu0 %v9406
    %9566 = vmatpush.bf16.msra.mxu0 %v9405
    %9567 = vmatpush.bf16.msra.mxu0 %v9404
    %9568 = vmatpush.bf16.msra.mxu0 %v9403
    %9569 = vmatpush.bf16.msra.mxu0 %v9402
    %9570 = vmatpush.bf16.msra.mxu0 %v9401
    %9571 = vmatpush.bf16.msra.mxu0 %v9400
    %9572 = vmatmul.bf16.gmra.mxu0 %v8962
    %v9573 = vpop.f32.mrf.mxu0
    %v9574 = vadd.f32 %v9560, %v9573
    %v9575 = vpop.f32.mrf.mxu0
    %v9576 = vadd.f32 %v9562, %v9575
    %9577 = vdwg.mxu0
    %9578 = vmatpush.bf16.msra.mxu0 %v9415
    %9579 = vmatpush.bf16.msra.mxu0 %v9414
    %9580 = vmatpush.bf16.msra.mxu0 %v9413
    %9581 = vmatpush.bf16.msra.mxu0 %v9412
    %9582 = vmatpush.bf16.msra.mxu0 %v9411
    %9583 = vmatpush.bf16.msra.mxu0 %v9410
    %9584 = vmatpush.bf16.msra.mxu0 %v9409
    %9585 = vmatpush.bf16.msra.mxu0 %v9408
    %9586 = vmatmul.bf16.gmra.mxu0 %v8963
    %v9587 = vpop.f32.mrf.mxu0
    %v9588 = vadd.f32 %v9574, %v9587
    %v9589 = vpop.f32.mrf.mxu0
    %v9590 = vadd.f32 %v9576, %v9589
    %9591 = vdwg.mxu0
    %v9592 = vld [vmem:[#allocation28] sm:$0xf]
    %v9593 = vld [vmem:[#allocation28 + $0x4] sm:$0xf]
    %v9594 = vld [vmem:[#allocation28 + $0x8] sm:$0xf]
    %v9595 = vld [vmem:[#allocation28 + $0xc] sm:$0xf]
    %v9596 = vld [vmem:[#allocation28 + $0x10] sm:$0xf]
    %v9597 = vld [vmem:[#allocation28 + $0x14] sm:$0xf]
    %v9598 = vld [vmem:[#allocation28 + $0x18] sm:$0xf]
    %v9599 = vld [vmem:[#allocation28 + $0x1c] sm:$0xf]
    %v9600 = vld [vmem:[#allocation28 + $0x20] sm:$0xf]
    %v9601 = vld [vmem:[#allocation28 + $0x24] sm:$0xf]
    %v9602 = vld [vmem:[#allocation28 + $0x28] sm:$0xf]
    %v9603 = vld [vmem:[#allocation28 + $0x2c] sm:$0xf]
    %v9604 = vld [vmem:[#allocation28 + $0x30] sm:$0xf]
    %v9605 = vld [vmem:[#allocation28 + $0x34] sm:$0xf]
    %v9606 = vld [vmem:[#allocation28 + $0x38] sm:$0xf]
    %v9607 = vld [vmem:[#allocation28 + $0x3c] sm:$0xf]
    %s9608 = scalar_lea.vmem [#allocation28], 64
    %v9609 = vld [vmem:[%s9608] sm:$0xf]
    %v9610 = vld [vmem:[%s9608 + $0x4] sm:$0xf]
    %v9611 = vld [vmem:[%s9608 + $0x8] sm:$0xf]
    %v9612 = vld [vmem:[%s9608 + $0xc] sm:$0xf]
    %v9613 = vld [vmem:[%s9608 + $0x10] sm:$0xf]
    %v9614 = vld [vmem:[%s9608 + $0x14] sm:$0xf]
    %v9615 = vld [vmem:[%s9608 + $0x18] sm:$0xf]
    %v9616 = vld [vmem:[%s9608 + $0x1c] sm:$0xf]
    %v9617 = vld [vmem:[%s9608 + $0x20] sm:$0xf]
    %v9618 = vld [vmem:[%s9608 + $0x24] sm:$0xf]
    %v9619 = vld [vmem:[%s9608 + $0x28] sm:$0xf]
    %v9620 = vld [vmem:[%s9608 + $0x2c] sm:$0xf]
    %v9621 = vld [vmem:[%s9608 + $0x30] sm:$0xf]
    %v9622 = vld [vmem:[%s9608 + $0x34] sm:$0xf]
    %v9623 = vld [vmem:[%s9608 + $0x38] sm:$0xf]
    %v9624 = vld [vmem:[%s9608 + $0x3c] sm:$0xf]
    %s9625 = scalar_lea.vmem [#allocation28], 128
    %v9626 = vld [vmem:[%s9625] sm:$0xf]
    %v9627 = vld [vmem:[%s9625 + $0x4] sm:$0xf]
    %v9628 = vld [vmem:[%s9625 + $0x8] sm:$0xf]
    %v9629 = vld [vmem:[%s9625 + $0xc] sm:$0xf]
    %v9630 = vld [vmem:[%s9625 + $0x10] sm:$0xf]
    %v9631 = vld [vmem:[%s9625 + $0x14] sm:$0xf]
    %v9632 = vld [vmem:[%s9625 + $0x18] sm:$0xf]
    %v9633 = vld [vmem:[%s9625 + $0x1c] sm:$0xf]
    %v9634 = vld [vmem:[%s9625 + $0x20] sm:$0xf]
    %v9635 = vld [vmem:[%s9625 + $0x24] sm:$0xf]
    %v9636 = vld [vmem:[%s9625 + $0x28] sm:$0xf]
    %v9637 = vld [vmem:[%s9625 + $0x2c] sm:$0xf]
    %v9638 = vld [vmem:[%s9625 + $0x30] sm:$0xf]
    %v9639 = vld [vmem:[%s9625 + $0x34] sm:$0xf]
    %v9640 = vld [vmem:[%s9625 + $0x38] sm:$0xf]
    %v9641 = vld [vmem:[%s9625 + $0x3c] sm:$0xf]
    %s9642 = scalar_lea.vmem [#allocation28], 192
    %v9643 = vld [vmem:[%s9642] sm:$0xf]
    %v9644 = vld [vmem:[%s9642 + $0x4] sm:$0xf]
    %v9645 = vld [vmem:[%s9642 + $0x8] sm:$0xf]
    %v9646 = vld [vmem:[%s9642 + $0xc] sm:$0xf]
    %v9647 = vld [vmem:[%s9642 + $0x10] sm:$0xf]
    %v9648 = vld [vmem:[%s9642 + $0x14] sm:$0xf]
    %v9649 = vld [vmem:[%s9642 + $0x18] sm:$0xf]
    %v9650 = vld [vmem:[%s9642 + $0x1c] sm:$0xf]
    %v9651 = vld [vmem:[%s9642 + $0x20] sm:$0xf]
    %v9652 = vld [vmem:[%s9642 + $0x24] sm:$0xf]
    %v9653 = vld [vmem:[%s9642 + $0x28] sm:$0xf]
    %v9654 = vld [vmem:[%s9642 + $0x2c] sm:$0xf]
    %v9655 = vld [vmem:[%s9642 + $0x30] sm:$0xf]
    %v9656 = vld [vmem:[%s9642 + $0x34] sm:$0xf]
    %v9657 = vld [vmem:[%s9642 + $0x38] sm:$0xf]
    %v9658 = vld [vmem:[%s9642 + $0x3c] sm:$0xf]
    %v9659 = vld [vmem:[#allocation29] sm:$0x1]
    %v9660 = vld [vmem:[#allocation29 + $0x1] sm:$0x1]
    %v9661 = vld [vmem:[#allocation29 + $0x2] sm:$0x1]
    %v9662 = vld [vmem:[#allocation29 + $0x3] sm:$0x1]
    %v9663 = vld [vmem:[#allocation31] sm:$0xf]
    %v9664 = vld [vmem:[#allocation31 + $0x4] sm:$0xf]
    %v9665 = vld [vmem:[#allocation31 + $0x8] sm:$0xf]
    %v9666 = vld [vmem:[#allocation31 + $0xc] sm:$0xf]
    %v9667 = vld [vmem:[#allocation31 + $0x10] sm:$0xf]
    %v9668 = vld [vmem:[#allocation31 + $0x14] sm:$0xf]
    %v9669 = vld [vmem:[#allocation31 + $0x18] sm:$0xf]
    %v9670 = vld [vmem:[#allocation31 + $0x1c] sm:$0xf]
    %v9671 = vld [vmem:[#allocation31 + $0x20] sm:$0xf]
    %v9672 = vld [vmem:[#allocation31 + $0x24] sm:$0xf]
    %v9673 = vld [vmem:[#allocation31 + $0x28] sm:$0xf]
    %v9674 = vld [vmem:[#allocation31 + $0x2c] sm:$0xf]
    %v9675 = vld [vmem:[#allocation31 + $0x30] sm:$0xf]
    %v9676 = vld [vmem:[#allocation31 + $0x34] sm:$0xf]
    %v9677 = vld [vmem:[#allocation31 + $0x38] sm:$0xf]
    %v9678 = vld [vmem:[#allocation31 + $0x3c] sm:$0xf]
    %v9679 = vld [vmem:[#allocation32] sm:$0x1]
    %v9680 = vpack.c.bf16 %v6808, %v6806
    %v9681 = vpack.c.bf16 %v9590, %v9588
    %v9682 = vperm.slane %v9660, 0
    %v9699 = vunpack.c.l.b16 %v9609
    %v9700 = vunpack.c.l.b16 %v9610
    %v9701 = vunpack.c.l.b16 %v9611
    %v9702 = vunpack.c.l.b16 %v9612
    %v9703 = vunpack.c.l.b16 %v9613
    %v9704 = vunpack.c.l.b16 %v9614
    %v9705 = vunpack.c.l.b16 %v9615
    %v9706 = vunpack.c.l.b16 %v9616
    %v9707 = vunpack.c.l.b16 %v9617
    %v9708 = vunpack.c.l.b16 %v9618
    %v9709 = vunpack.c.l.b16 %v9619
    %v9710 = vunpack.c.l.b16 %v9620
    %v9711 = vunpack.c.l.b16 %v9621
    %v9712 = vunpack.c.l.b16 %v9622
    %v9713 = vunpack.c.l.b16 %v9623
    %v9714 = vunpack.c.l.b16 %v9624
    %v9715 = vpack.c.b16 %v9700, %v9699
    %v9716 = vpack.c.b16 %v9702, %v9701
    %v9717 = vpack.c.b16 %v9704, %v9703
    %v9718 = vpack.c.b16 %v9706, %v9705
    %v9719 = vpack.c.b16 %v9708, %v9707
    %v9720 = vpack.c.b16 %v9710, %v9709
    %v9721 = vpack.c.b16 %v9712, %v9711
    %v9722 = vpack.c.b16 %v9714, %v9713
    %9731 = vmatpush.bf16.msra.mxu0 %v9722
    %9732 = vmatpush.bf16.msra.mxu0 %v9721
    %9733 = vmatpush.bf16.msra.mxu0 %v9720
    %9734 = vmatpush.bf16.msra.mxu0 %v9719
    %9735 = vmatpush.bf16.msra.mxu0 %v9718
    %9736 = vmatpush.bf16.msra.mxu0 %v9717
    %9737 = vmatpush.bf16.msra.mxu0 %v9716
    %9738 = vmatpush.bf16.msra.mxu0 %v9715
    %9739 = vmatmul.bf16.gmra.mxu0 %v9680
    %v9740 = vpop.f32.mrf.mxu0
    %v9741 = vadd.f32 %v9682, %v9740
    %v9742 = vpop.f32.mrf.mxu0
    %v9743 = vadd.f32 %v9682, %v9742
    %9744 = vmatmul.bf16.gmra.mxu0 %v9681
    %v9745 = vpop.f32.mrf.mxu0
    %v9746 = vadd.f32 %v9682, %v9745
    %v9747 = vpop.f32.mrf.mxu0
    %v9748 = vadd.f32 %v9682, %v9747
    %9749 = vdwg.mxu0
    %v9750 = vperm.slane %v9661, 0
    %v9767 = vunpack.c.l.b16 %v9626
    %v9768 = vunpack.c.l.b16 %v9627
    %v9769 = vunpack.c.l.b16 %v9628
    %v9770 = vunpack.c.l.b16 %v9629
    %v9771 = vunpack.c.l.b16 %v9630
    %v9772 = vunpack.c.l.b16 %v9631
    %v9773 = vunpack.c.l.b16 %v9632
    %v9774 = vunpack.c.l.b16 %v9633
    %v9775 = vunpack.c.l.b16 %v9634
    %v9776 = vunpack.c.l.b16 %v9635
    %v9777 = vunpack.c.l.b16 %v9636
    %v9778 = vunpack.c.l.b16 %v9637
    %v9779 = vunpack.c.l.b16 %v9638
    %v9780 = vunpack.c.l.b16 %v9639
    %v9781 = vunpack.c.l.b16 %v9640
    %v9782 = vunpack.c.l.b16 %v9641
    %v9783 = vpack.c.b16 %v9768, %v9767
    %v9784 = vpack.c.b16 %v9770, %v9769
    %v9785 = vpack.c.b16 %v9772, %v9771
    %v9786 = vpack.c.b16 %v9774, %v9773
    %v9787 = vpack.c.b16 %v9776, %v9775
    %v9788 = vpack.c.b16 %v9778, %v9777
    %v9789 = vpack.c.b16 %v9780, %v9779
    %v9790 = vpack.c.b16 %v9782, %v9781
    %9799 = vmatpush.bf16.msra.mxu0 %v9790
    %9800 = vmatpush.bf16.msra.mxu0 %v9789
    %9801 = vmatpush.bf16.msra.mxu0 %v9788
    %9802 = vmatpush.bf16.msra.mxu0 %v9787
    %9803 = vmatpush.bf16.msra.mxu0 %v9786
    %9804 = vmatpush.bf16.msra.mxu0 %v9785
    %9805 = vmatpush.bf16.msra.mxu0 %v9784
    %9806 = vmatpush.bf16.msra.mxu0 %v9783
    %9807 = vmatmul.bf16.gmra.mxu0 %v9680
    %v9808 = vpop.f32.mrf.mxu0
    %v9809 = vadd.f32 %v9750, %v9808
    %v9810 = vpop.f32.mrf.mxu0
    %v9811 = vadd.f32 %v9750, %v9810
    %9812 = vmatmul.bf16.gmra.mxu0 %v9681
    %v9813 = vpop.f32.mrf.mxu0
    %v9814 = vadd.f32 %v9750, %v9813
    %v9815 = vpop.f32.mrf.mxu0
    %v9816 = vadd.f32 %v9750, %v9815
    %9817 = vdwg.mxu0
    %v9819 = vrot.slane %v1681, 7
    %v9822 = vrot.slane %v2335, 6
    %v9825 = vrot.slane %v2989, 5
    %vm9827 = vcmask 1040384
    %v9828 = vsel %vm9827, %v1027, %v9819
    %v9829 = vsel %vm1012, %v9828, %v9822
    %vm9830 = vcmask 1042432
    %v9831 = vsel %vm9830, %v9829, %v9825
    %v9833 = vrot.slane %v1697, 7
    %v9836 = vrot.slane %v2351, 6
    %v9839 = vrot.slane %v3005, 5
    %v9841 = vsel %vm9827, %v1043, %v9833
    %v9842 = vsel %vm1012, %v9841, %v9836
    %v9843 = vsel %vm9830, %v9842, %v9839
    %9844 = vst [vmem:[#allocation34] sm:$0xf] %v9831
    %9845 = vst [vmem:[%s22] sm:$0xf] %v9843
    %v9846 = vpack.c.bf16 %v9843, %v9843
    %v9847 = vperm.slane %v9659, 0
    %v9864 = vunpack.c.l.b16 %v9592
    %v9865 = vunpack.c.l.b16 %v9593
    %v9866 = vunpack.c.l.b16 %v9594
    %v9867 = vunpack.c.l.b16 %v9595
    %v9868 = vunpack.c.l.b16 %v9596
    %v9869 = vunpack.c.l.b16 %v9597
    %v9870 = vunpack.c.l.b16 %v9598
    %v9871 = vunpack.c.l.b16 %v9599
    %v9872 = vunpack.c.l.b16 %v9600
    %v9873 = vunpack.c.l.b16 %v9601
    %v9874 = vunpack.c.l.b16 %v9602
    %v9875 = vunpack.c.l.b16 %v9603
    %v9876 = vunpack.c.l.b16 %v9604
    %v9877 = vunpack.c.l.b16 %v9605
    %v9878 = vunpack.c.l.b16 %v9606
    %v9879 = vunpack.c.l.b16 %v9607
    %v9880 = vpack.c.b16 %v9865, %v9864
    %v9881 = vpack.c.b16 %v9867, %v9866
    %v9882 = vpack.c.b16 %v9869, %v9868
    %v9883 = vpack.c.b16 %v9871, %v9870
    %v9884 = vpack.c.b16 %v9873, %v9872
    %v9885 = vpack.c.b16 %v9875, %v9874
    %v9886 = vpack.c.b16 %v9877, %v9876
    %v9887 = vpack.c.b16 %v9879, %v9878
    %9896 = vmatpush.bf16.msra.mxu0 %v9887
    %9897 = vmatpush.bf16.msra.mxu0 %v9886
    %9898 = vmatpush.bf16.msra.mxu0 %v9885
    %9899 = vmatpush.bf16.msra.mxu0 %v9884
    %9900 = vmatpush.bf16.msra.mxu0 %v9883
    %9901 = vmatpush.bf16.msra.mxu0 %v9882
    %9902 = vmatpush.bf16.msra.mxu0 %v9881
    %9903 = vmatpush.bf16.msra.mxu0 %v9880
    %9904 = vmatmul.bf16.gmra.mxu0 %v9846
    %v9905 = vpop.f32.mrf.mxu0
    %v9906 = vadd.f32 %v9847, %v9905
    %v9907 = vpop.f32.mrf.mxu0
    %9908 = vdwg.mxu0
    %v9909 = vpack.c.bf16 %v9906, %v9906
    %v9910 = vpack.c.bf16 %v9746, %v9741
    %9911 = vmatpush.bf16.xpose.msra.mxu0 0
    %9912 = vmatpush.bf16.xpose.msra.mxu0 0
    %9913 = vmatpush.bf16.xpose.msra.mxu0 0
    %9914 = vmatpush.bf16.xpose.msra.mxu0 0
    %9915 = vmatpush.bf16.xpose.msra.mxu0 0
    %9916 = vmatpush.bf16.xpose.msra.mxu0 0
    %9917 = vmatpush.bf16.xpose.msra.mxu0 0
    %9918 = vmatpush.bf16.xpose.msra.mxu0 %v9910
    %9919 = vmatmul.bf16.gmra.mxu0 %v9909
    %v9920 = vpop.f32.mrf.mxu0
    %v9921 = vadd.f32 0.0, %v9920
    %v9922 = vpop.f32.mrf.mxu0
    %9923 = vdwg.mxu0
    %v9924 = vmul.f32 %v9921, 0.088388346
    %vm9925 = vcmask 125952
    %v9926 = vsel %vm9925, %v9924, -inf
    %9927 = vmax.xlane.f32.xlu0 %v9926
    %v9928 = vpop.xlane.xlu0 %9927
    %v9929 = vsub.f32 %v9924, %v9928
    %v9930 = vmul.f32 %v9929, 1.442695
    %v9931 = vpow.pop %v9930
    %v9932 = vsel %vm9925, %v9931, 0.0
    %9933 = vadd.xlane.f32.xlu0 %v9932
    %v9934 = vpop.xlane.xlu0 %9933
    %v9935 = vrcp.pop %v9934
    %v9936 = vmul.f32 %v9931, %v9935
    %v9937 = vpack.c.bf16 %v9936, %v9936
    %v9938 = vpack.c.bf16 %v9814, %v9809
    %vm9939 = vcmask 130048
    %v9941 = vsel %vm9939, %v9937, 0
    %9943 = vmatpush.bf16.msra.mxu0 0
    %9944 = vmatpush.bf16.msra.mxu0 0
    %9945 = vmatpush.bf16.msra.mxu0 0
    %9946 = vmatpush.bf16.msra.mxu0 0
    %9947 = vmatpush.bf16.msra.mxu0 0
    %9948 = vmatpush.bf16.msra.mxu0 0
    %9949 = vmatpush.bf16.msra.mxu0 0
    %9950 = vmatpush.bf16.msra.mxu0 %v9938
    %9951 = vmatmul.bf16.gmra.mxu0 %v9941
    %v9952 = vpop.f32.mrf.mxu0
    %v9953 = vadd.f32 0.0, %v9952
    %v9954 = vpop.f32.mrf.mxu0
    %9955 = vdwg.mxu0
    %v9956 = vpack.c.bf16 %v9953, %v9953
    %v9957 = vperm.slane %v9662, 0
    %v9974 = vunpack.c.l.b16 %v9643
    %v9975 = vunpack.c.l.b16 %v9644
    %v9976 = vunpack.c.l.b16 %v9645
    %v9977 = vunpack.c.l.b16 %v9646
    %v9978 = vunpack.c.l.b16 %v9647
    %v9979 = vunpack.c.l.b16 %v9648
    %v9980 = vunpack.c.l.b16 %v9649
    %v9981 = vunpack.c.l.b16 %v9650
    %v9982 = vunpack.c.l.b16 %v9651
    %v9983 = vunpack.c.l.b16 %v9652
    %v9984 = vunpack.c.l.b16 %v9653
    %v9985 = vunpack.c.l.b16 %v9654
    %v9986 = vunpack.c.l.b16 %v9655
    %v9987 = vunpack.c.l.b16 %v9656
    %v9988 = vunpack.c.l.b16 %v9657
    %v9989 = vunpack.c.l.b16 %v9658
    %v9990 = vpack.c.b16 %v9975, %v9974
    %v9991 = vpack.c.b16 %v9977, %v9976
    %v9992 = vpack.c.b16 %v9979, %v9978
    %v9993 = vpack.c.b16 %v9981, %v9980
    %v9994 = vpack.c.b16 %v9983, %v9982
    %v9995 = vpack.c.b16 %v9985, %v9984
    %v9996 = vpack.c.b16 %v9987, %v9986
    %v9997 = vpack.c.b16 %v9989, %v9988
    %10006 = vmatpush.bf16.msra.mxu0 %v9997
    %10007 = vmatpush.bf16.msra.mxu0 %v9996
    %10008 = vmatpush.bf16.msra.mxu0 %v9995
    %10009 = vmatpush.bf16.msra.mxu0 %v9994
    %10010 = vmatpush.bf16.msra.mxu0 %v9993
    %10011 = vmatpush.bf16.msra.mxu0 %v9992
    %10012 = vmatpush.bf16.msra.mxu0 %v9991
    %10013 = vmatpush.bf16.msra.mxu0 %v9990
    %10014 = vmatmul.bf16.gmra.mxu0 %v9956
    %v10015 = vpop.f32.mrf.mxu0
    %v10016 = vadd.f32 %v9957, %v10015
    %v10017 = vpop.f32.mrf.mxu0
    %10018 = vdwg.mxu0
    %v10019 = vadd.f32 %v9843, %v10016
    %v10020 = vpack.c.bf16 %v10019, %v10019
    %v10022 = vperm.slane %v9679, 0
    %v10040 = vunpack.c.l.b16 %v9663
    %v10041 = vunpack.c.l.b16 %v9664
    %v10042 = vunpack.c.l.b16 %v9665
    %v10043 = vunpack.c.l.b16 %v9666
    %v10044 = vunpack.c.l.b16 %v9667
    %v10045 = vunpack.c.l.b16 %v9668
    %v10046 = vunpack.c.l.b16 %v9669
    %v10047 = vunpack.c.l.b16 %v9670
    %v10048 = vunpack.c.l.b16 %v9671
    %v10049 = vunpack.c.l.b16 %v9672
    %v10050 = vunpack.c.l.b16 %v9673
    %v10051 = vunpack.c.l.b16 %v9674
    %v10052 = vunpack.c.l.b16 %v9675
    %v10053 = vunpack.c.l.b16 %v9676
    %v10054 = vunpack.c.l.b16 %v9677
    %v10055 = vunpack.c.l.b16 %v9678
    %v10056 = vpack.c.b16 %v10041, %v10040
    %v10057 = vpack.c.b16 %v10043, %v10042
    %v10058 = vpack.c.b16 %v10045, %v10044
    %v10059 = vpack.c.b16 %v10047, %v10046
    %v10060 = vpack.c.b16 %v10049, %v10048
    %v10061 = vpack.c.b16 %v10051, %v10050
    %v10062 = vpack.c.b16 %v10053, %v10052
    %v10063 = vpack.c.b16 %v10055, %v10054
    %10072 = vmatpush.bf16.msra.mxu0 %v10063
    %10073 = vmatpush.bf16.msra.mxu0 %v10062
    %10074 = vmatpush.bf16.msra.mxu0 %v10061
    %10075 = vmatpush.bf16.msra.mxu0 %v10060
    %10076 = vmatpush.bf16.msra.mxu0 %v10059
    %10077 = vmatpush.bf16.msra.mxu0 %v10058
    %10078 = vmatpush.bf16.msra.mxu0 %v10057
    %10079 = vmatpush.bf16.msra.mxu0 %v10056
    %10080 = vmatmul.bf16.gmra.mxu0 %v10020
    %v10081 = vpop.f32.mrf.mxu0
    %v10082 = vadd.f32 %v10022, %v10081
    %v10083 = vpop.f32.mrf.mxu0
    %10084 = vdwg.mxu0
    %v10085 = vmul.f32 %v10082, %v10082
    %vm10086 = vcmask 1043456
    %v10087 = vsel %vm10086, %v10085, 0.0
    %10088 = vadd.xlane.f32.xlu0 %v10087
    %v10089 = vpop.xlane.xlu0 %10088
    %v10090 = vmax.f32 %v10089, 1e-24
    %v10091 = vrsqrt.pop %v10090
    %v10092 = vmul.f32 %v10091, %v10090
    %v10093 = vmul.f32 %v10092, %v10091
    %v10094 = vmul.f32 0.5, %v10093
    %v10095 = vsub.f32 1.5, %v10094
    %v10096 = vmul.f32 %v10091, %v10095
    %vm10097 = vweird.f32 %v10090
    %vm10098 = vweird.f32 %v10091
    %vm10099 = vmor %vm10097, %vm10098
    %v10100 = vsel %vm10099, %v10091, %v10096
    %v10101 = vmul.f32 %v10082, %v10100
    %10102 = vst [vmem:[%s20] sm:$0xf] %v10101
    %v10104 = vrot.slane %v1027, 1
    %v10106 = vrot.slane %v2335, 7
    %v10108 = vrot.slane %v2989, 6
    %v10110 = vsel %vm9827, %v10104, %v1681
    %v10111 = vsel %vm1012, %v10110, %v10106
    %v10112 = vsel %vm9830, %v10111, %v10108
    %v10114 = vrot.slane %v1043, 1
    %v10116 = vrot.slane %v2351, 7
    %v10118 = vrot.slane %v3005, 6
    %v10120 = vsel %vm9827, %v10114, %v1697
    %v10121 = vsel %vm1012, %v10120, %v10116
    %v10122 = vsel %vm9830, %v10121, %v10118
    %s10123 = scalar_lea.vmem [#allocation34], 4
    %10124 = vst [vmem:[%s10123] sm:$0xf] %v10112
    %s10125 = scalar_lea.vmem %s22, 4
    %10126 = vst [vmem:[%s10125] sm:$0xf] %v10122
    %v10127 = vpack.c.bf16 %v10122, %v10122
    %10128 = vmatpush.bf16.msra.mxu0 %v9887
    %10129 = vmatpush.bf16.msra.mxu0 %v9886
    %10130 = vmatpush.bf16.msra.mxu0 %v9885
    %10131 = vmatpush.bf16.msra.mxu0 %v9884
    %10132 = vmatpush.bf16.msra.mxu0 %v9883
    %10133 = vmatpush.bf16.msra.mxu0 %v9882
    %10134 = vmatpush.bf16.msra.mxu0 %v9881
    %10135 = vmatpush.bf16.msra.mxu0 %v9880
    %10136 = vmatmul.bf16.gmra.mxu0 %v10127
    %v10137 = vpop.f32.mrf.mxu0
    %v10138 = vadd.f32 %v9847, %v10137
    %v10139 = vpop.f32.mrf.mxu0
    %10140 = vdwg.mxu0
    %v10141 = vpack.c.bf16 %v10138, %v10138
    %v10142 = vpack.c.bf16 %v9748, %v9743
    %10143 = vmatpush.bf16.xpose.msra.mxu0 0
    %10144 = vmatpush.bf16.xpose.msra.mxu0 0
    %10145 = vmatpush.bf16.xpose.msra.mxu0 0
    %10146 = vmatpush.bf16.xpose.msra.mxu0 0
    %10147 = vmatpush.bf16.xpose.msra.mxu0 0
    %10148 = vmatpush.bf16.xpose.msra.mxu0 0
    %10149 = vmatpush.bf16.xpose.msra.mxu0 0
    %10150 = vmatpush.bf16.xpose.msra.mxu0 %v10142
    %10151 = vmatmul.bf16.gmra.mxu0 %v10141
    %v10152 = vpop.f32.mrf.mxu0
    %v10153 = vadd.f32 0.0, %v10152
    %v10154 = vpop.f32.mrf.mxu0
    %10155 = vdwg.mxu0
    %v10156 = vmul.f32 %v10153, 0.088388346
    %v10157 = vsel %vm9925, %v10156, -inf
    %10158 = vmax.xlane.f32.xlu0 %v10157
    %v10159 = vpop.xlane.xlu0 %10158
    %v10160 = vsub.f32 %v10156, %v10159
    %v10161 = vmul.f32 %v10160, 1.442695
    %v10162 = vpow.pop %v10161
    %v10163 = vsel %vm9925, %v10162, 0.0
    %10164 = vadd.xlane.f32.xlu0 %v10163
    %v10165 = vpop.xlane.xlu0 %10164
    %v10166 = vrcp.pop %v10165
    %v10167 = vmul.f32 %v10162, %v10166
    %v10168 = vpack.c.bf16 %v10167, %v10167
    %v10169 = vpack.c.bf16 %v9816, %v9811
    %v10171 = vsel %vm9939, %v10168, 0
    %10173 = vmatpush.bf16.msra.mxu0 0
    %10174 = vmatpush.bf16.msra.mxu0 0
    %10175 = vmatpush.bf16.msra.mxu0 0
    %10176 = vmatpush.bf16.msra.mxu0 0
    %10177 = vmatpush.bf16.msra.mxu0 0
    %10178 = vmatpush.bf16.msra.mxu0 0
    %10179 = vmatpush.bf16.msra.mxu0 0
    %10180 = vmatpush.bf16.msra.mxu0 %v10169
    %10181 = vmatmul.bf16.gmra.mxu0 %v10171
    %v10182 = vpop.f32.mrf.mxu0
    %v10183 = vadd.f32 0.0, %v10182
    %v10184 = vpop.f32.mrf.mxu0
    %10185 = vdwg.mxu0
    %v10186 = vpack.c.bf16 %v10183, %v10183
    %10187 = vmatpush.bf16.msra.mxu0 %v9997
    %10188 = vmatpush.bf16.msra.mxu0 %v9996
    %10189 = vmatpush.bf16.msra.mxu0 %v9995
    %10190 = vmatpush.bf16.msra.mxu0 %v9994
    %10191 = vmatpush.bf16.msra.mxu0 %v9993
    %10192 = vmatpush.bf16.msra.mxu0 %v9992
    %10193 = vmatpush.bf16.msra.mxu0 %v9991
    %10194 = vmatpush.bf16.msra.mxu0 %v9990
    %10195 = vmatmul.bf16.gmra.mxu0 %v10186
    %v10196 = vpop.f32.mrf.mxu0
    %v10197 = vadd.f32 %v9957, %v10196
    %v10198 = vpop.f32.mrf.mxu0
    %10199 = vdwg.mxu0
    %v10200 = vadd.f32 %v10122, %v10197
    %v10201 = vpack.c.bf16 %v10200, %v10200
    %10202 = vmatpush.bf16.msra.mxu0 %v10063
    %10203 = vmatpush.bf16.msra.mxu0 %v10062
    %10204 = vmatpush.bf16.msra.mxu0 %v10061
    %10205 = vmatpush.bf16.msra.mxu0 %v10060
    %10206 = vmatpush.bf16.msra.mxu0 %v10059
    %10207 = vmatpush.bf16.msra.mxu0 %v10058
    %10208 = vmatpush.bf16.msra.mxu0 %v10057
    %10209 = vmatpush.bf16.msra.mxu0 %v10056
    %10210 = vmatmul.bf16.gmra.mxu0 %v10201
    %v10211 = vpop.f32.mrf.mxu0
    %v10212 = vadd.f32 %v10022, %v10211
    %v10213 = vpop.f32.mrf.mxu0
    %10214 = vdwg.mxu0
    %v10215 = vmul.f32 %v10212, %v10212
    %v10216 = vsel %vm10086, %v10215, 0.0
    %10217 = vadd.xlane.f32.xlu0 %v10216
    %v10218 = vpop.xlane.xlu0 %10217
    %v10219 = vmax.f32 %v10218, 1e-24
    %v10220 = vrsqrt.pop %v10219
    %v10221 = vmul.f32 %v10220, %v10219
    %v10222 = vmul.f32 %v10221, %v10220
    %v10223 = vmul.f32 0.5, %v10222
    %v10224 = vsub.f32 1.5, %v10223
    %v10225 = vmul.f32 %v10220, %v10224
    %vm10226 = vweird.f32 %v10219
    %vm10227 = vweird.f32 %v10220
    %vm10228 = vmor %vm10226, %vm10227
    %v10229 = vsel %vm10228, %v10220, %v10225
    %v10230 = vmul.f32 %v10212, %v10229
    %s10231 = scalar_lea.vmem %s20, 4
    %10232 = vst [vmem:[%s10231] sm:$0xf] %v10230
    // Predicated region
    $region162: #{ip_retrieval_forward.2} parent=1 // pred_check
      _
    $region163: #{ip_retrieval_forward.2} parent=1 // pred_check_branch
      %10234 = sbr.rel (0) target = $region165
    $region164: #{ip_retrieval_forward.2} parent=1 // pred_region
      _
    $region165: #{ip_retrieval_forward.2} parent=1 // pred_fallthru
      _
    // Predicated region
    $region166: #{ip_retrieval_forward.2} parent=1 // pred_check
      _
    $region167: #{ip_retrieval_forward.2} parent=1 // pred_check_branch
      %10236 = sbr.rel (0) target = $region169
    $region168: #{ip_retrieval_forward.2} parent=1 // pred_region
      %10238 = vsyncadd [#allocation4], 0
      %s10239 = sshll.u32 [#allocation34], 4
      %s10240 = int_to_ptr.vmem [resolvable:$true] %s10239
      %s10241 = sshll.u32 %s21, 4
      %s10242 = int_to_ptr.hbm [resolvable:$true] %s10241
      %10247 = dma.vmem_to_hbm [thread:$0]  %s10240, 128, %s10242, [#allocation4], 64, 64, 4
    $region169: #{ip_retrieval_forward.2} parent=1 // pred_fallthru
      _
    // Predicated region
    $region170: #{ip_retrieval_forward.2} parent=1 // pred_check
      _
    $region171: #{ip_retrieval_forward.2} parent=1 // pred_check_branch
      %10249 = sbr.rel (0) target = $region173
    $region172: #{ip_retrieval_forward.2} parent=1 // pred_region
      _
    $region173: #{ip_retrieval_forward.2} parent=1 // pred_fallthru
      _
    // Predicated region
    $region174: #{ip_retrieval_forward.2} parent=1 // pred_check
      _
    $region175: #{ip_retrieval_forward.2} parent=1 // pred_check_branch
      %10251 = sbr.rel (0) target = $region177
    $region176: #{ip_retrieval_forward.2} parent=1 // pred_region
      _
    $region177: #{ip_retrieval_forward.2} parent=1 // pred_fallthru
      _
    // Predicated region
    $region178: #{ip_retrieval_forward.2} parent=1 // pred_check
      _
    $region179: #{ip_retrieval_forward.2} parent=1 // pred_check_branch
      %10253 = sbr.rel (0) target = $region181
    $region180: #{ip_retrieval_forward.2} parent=1 // pred_region
      %10255 = dma.done [#allocation4], 128
    $region181: #{ip_retrieval_forward.2} parent=1 // pred_fallthru
      _
    // Predicated region
    $region182: #{ip_retrieval_forward.2} parent=1 // pred_check
      _
    $region183: #{ip_retrieval_forward.2} parent=1 // pred_check_branch
      %10257 = sbr.rel (0) target = $region185
    $region184: #{ip_retrieval_forward.2} parent=1 // pred_region
      _
    $region185: #{ip_retrieval_forward.2} parent=1 // pred_fallthru
      _
    %10258 = vsyncpa [#allocation3], 1
    %10259 = vsyncpa [#allocation6], 1
    %10260 = vsyncpa [#allocation9], 1
    %10261 = vsyncpa [#allocation12], 1
    %10262 = vsyncpa [#allocation15], 1
    %10263 = vsyncpa [#allocation18], 1
    %10264 = vsyncpa [#allocation21], 1
    %10265 = vsyncpa [#allocation24], 1
    %10266 = vsyncpa [#allocation27], 1
    %10267 = vsyncpa [#allocation30], 1
    %10268 = vsyncpa [#allocation33], 1
    %10269 = vsyncpa [#allocation4], 1

</llo_original>
